<compile_context>
chip_gen: v6e
topology: v6e:2x2x1
jax: 0.10.0
libtpu: 0.0.40
codegen_flags: <defaults>
</compile_context>

<pallas_src>
import math

import jax
import jax.numpy as jnp
from jax import lax
from jax.experimental import pallas as pl
from jax.experimental.pallas import tpu as pltpu

LANE = 128
# TODO(synk): the `block` class was not provided in the source file; the standard
# 1D BasicBlock (expansion=1, two k=3 convs + GroupNorm(affine=False) + residual)
# is assumed, and simple random init replaces modelutils.initialize_weights.
BLOCK_EXPANSION = 1


def _rup(n, m=LANE):
    return ((n + m - 1) // m) * m


# ---------------------------------------------------------------------------
# Weight packing (done ONCE at parameter-init time)
# ---------------------------------------------------------------------------
def pack_conv_weight(w, stride, groups, e):
    """Pack a PyTorch-layout Conv1d weight (Cout, Cin_g, K) into tap-major matmul
    form (Kq, s*CinP, CoutP) bf16, block-diagonal over groups, with per-group
    channels zero-padded to lane (128) multiples.  `e` is the offset of the real
    data inside the consumed halo buffer minus the conv padding, folded into the
    tap positions so the kernel never needs an HBM padding pass."""
    cout, cin_g, K = w.shape
    cog = cout // groups
    s = stride
    cin_pg, cout_pg = _rup(cin_g), _rup(cog)
    cinP, coutP = groups * cin_pg, groups * cout_pg
    kq = (K - 1 + e) // s + 1
    packed = jnp.zeros((kq, s * cinP, coutP), jnp.float32)
    for k in range(K):
        q, r = divmod(k + e, s)
        for g in range(groups):
            wg = jnp.transpose(w[g * cog:(g + 1) * cog, :, k], (1, 0))  # (cin_g, cog)
            packed = packed.at[q,
                               r * cinP + g * cin_pg: r * cinP + g * cin_pg + cin_g,
                               g * cout_pg: g * cout_pg + cog].set(wg)
    return packed.astype(jnp.bfloat16)


def _out_len(l, c):
    return (l + 2 * c["p"] - c["K"]) // c["s"] + 1


def _fold(buf, conv):
    """Free HBM reshape folding the conv stride into the lane dim."""
    s = conv["s"]
    if s == 1:
        return buf
    n, lb, c = buf.shape
    assert lb % s == 0
    return buf.reshape(n, lb // s, s * c)


def _buffer_halos(l_true, consumers):
    """Zero halo rows a producing kernel must write around its l_true data rows so
    every consumer conv can read it directly (no wrapper-side jnp.pad)."""
    if not consumers:
        return 0, 0
    offs = {c["p"] + c["e"] for c in consumers}
    assert len(offs) == 1, offs
    halo_lo = offs.pop()
    s_all = max(c["s"] for c in consumers)
    need = halo_lo + l_true
    for c in consumers:
        lo = (l_true + 2 * c["p"] - c["K"]) // c["s"] + 1
        kq = (c["K"] - 1 + c["e"]) // c["s"] + 1
        need = max(need, c["s"] * (lo + kq - 1))
    halo_hi = need - halo_lo - l_true
    while (halo_lo + l_true + halo_hi) % s_all:
        halo_hi += 1
    return halo_lo, halo_hi


def pick_batch_tile(n, cap=8):
    """Largest divisor of n (<= cap) that still leaves >=2 grid steps, keeping
    both v7x TensorCores busy via the 'parallel' batch axis."""
    best = 1
    for d in range(1, n + 1):
        if n % d == 0 and d <= cap and n // d >= min(2, n):
            best = d
    return best


def _pad_channels_grouped(x, groups, cg_true, cg_pad):
    """(N, L, groups*cg_true) -> (N, L, groups*cg_pad), zero-padding each group's
    channel slab to a lane-aligned width (one-time, on the tiny network input)."""
    n, l, c = x.shape
    assert c == groups * cg_true, (c, groups, cg_true)
    if cg_pad == cg_true:
        return x
    xg = x.reshape(n, l, groups, cg_true)
    xg = jnp.pad(xg, ((0, 0), (0, 0), (0, 0), (0, cg_pad - cg_true)))
    return xg.reshape(n, l, groups * cg_pad)


# ---------------------------------------------------------------------------
# Fused Conv1d + GroupNorm (+ residual) (+ ReLU) (+ avg-pool) kernel
# ---------------------------------------------------------------------------
def fused_conv_gn(x, conv, *, lout, groups, relu, halo=(0, 0), residual=None,
                  res_off=0, pool=False, batch_tile=1, eps=1e-5):
    """Conv1d(bias=False) -> GroupNorm(groups, affine=False) [-> +residual]
    [-> ReLU] [-> global avg-pool], one Pallas call over a batch-tiled grid.

    x: (N, Lr, sCinP) bf16 channels-last halo buffer (stride already folded into
    lanes for s>1).  Output: (N, halo_lo+lout+halo_hi, CoutP) bf16 with zeroed
    halo rows and zeroed padding lanes, or (N, 1, CoutP) f32 means if pool."""
    N, Lr, lane_in = x.shape
    w = conv["w"]
    Kq, sCinP, CoutP = w.shape
    assert lane_in == sCinP, (lane_in, sCinP)
    assert Kq - 1 + lout <= Lr, (Kq, lout, Lr)
    bt = batch_tile
    assert N % bt == 0
    halo_lo, halo_hi = halo
    rows_out = halo_lo + lout + halo_hi
    cg_pad = CoutP // groups
    cg_true = conv["cout"] // groups
    inv_cnt = 1.0 / float(lout * cg_true)
    has_res = residual is not None
    if has_res:
        assert residual.shape[2] == CoutP
        assert residual.shape[1] >= res_off + lout

    def kernel(*refs):
        x_ref, w_ref = refs[0], refs[1]
        res_ref = refs[2] if has_res else None
        o_ref = refs[-1]

        # ---- Conv1d: Kq shifted tap matmuls, bf16 x bf16 -> f32 on the MXU ----
        acc = None
        for q in range(Kq):
            if bt == 1:
                xs = x_ref[0, q:q + lout, :]                       # (lout, sCinP)
            else:
                xs = x_ref[:, q:q + lout, :].reshape(bt * lout, sCinP)
            d = jnp.dot(xs, w_ref[q], preferred_element_type=jnp.float32)
            acc = d if acc is None else acc + d
        acc = acc.reshape(bt, lout, CoutP)

        # ---- GroupNorm(affine=False): one pass of E[x], E[x^2].  Padded lanes
        #      hold exact zeros, so full-width sums equal true-channel sums. ----
        if groups == 1:
            s1 = jnp.sum(jnp.sum(acc, axis=2, keepdims=True), axis=1, keepdims=True)
            s2 = jnp.sum(jnp.sum(acc * acc, axis=2, keepdims=True),
                         axis=1, keepdims=True)
            m = s1 * inv_cnt
            v = s2 * inv_cnt - m * m
            y = (acc - m) * lax.rsqrt(v + eps)
        else:
            ag = acc.reshape(bt, lout, groups, cg_pad)
            s1 = jnp.sum(jnp.sum(ag, axis=3, keepdims=True), axis=1, keepdims=True)
            s2 = jnp.sum(jnp.sum(ag * ag, axis=3, keepdims=True),
                         axis=1, keepdims=True)
            m = s1 * inv_cnt
            v = s2 * inv_cnt - m * m
            y = ((ag - m) * lax.rsqrt(v + eps)).reshape(bt, lout, CoutP)

        # keep the padded lanes exactly zero (invariant every consumer relies on)
        if cg_true != cg_pad:
            lane = lax.broadcasted_iota(jnp.int32, (bt, lout, CoutP), 2)
            keep = lane < cg_true if groups == 1 else (lane % cg_pad) < cg_true
            y = jnp.where(keep, y, 0.0)

        if has_res:
            y = y + res_ref[:, res_off:res_off + lout, :].astype(jnp.float32)
        if relu:
            y = jnp.maximum(y, 0.0)

        if pool:                                    # fused AdaptiveAvgPool1d(1)
            o_ref[...] = jnp.sum(y, axis=1, keepdims=True) * (1.0 / lout)
        else:
            if halo_lo:
                o_ref[:, 0:halo_lo, :] = jnp.zeros((bt, halo_lo, CoutP), o_ref.dtype)
            if halo_hi:
                o_ref[:, halo_lo + lout:rows_out, :] = jnp.zeros(
                    (bt, halo_hi, CoutP), o_ref.dtype)
            o_ref[:, halo_lo:halo_lo + lout, :] = y.astype(o_ref.dtype)

    in_specs = [pl.BlockSpec((bt, Lr, sCinP), lambda n: (n, 0, 0)),
                pl.BlockSpec((Kq, sCinP, CoutP), lambda n: (0, 0, 0))]
    args = [x, w]
    if has_res:
        res_rows = residual.shape[1]
        in_specs.append(pl.BlockSpec((bt, res_rows, CoutP), lambda n: (n, 0, 0)))
        args.append(residual)
    if pool:
        out_shape = jax.ShapeDtypeStruct((N, 1, CoutP), jnp.float32)
        out_spec = pl.BlockSpec((bt, 1, CoutP), lambda n: (n, 0, 0))
    else:
        out_shape = jax.ShapeDtypeStruct((N, rows_out, CoutP), jnp.bfloat16)
        out_spec = pl.BlockSpec((bt, rows_out, CoutP), lambda n: (n, 0, 0))

    # scoped-VMEM bound from the actual block footprint (double-buffered blocks,
    # weight, f32 accumulator) -- matters on v5e's 16 MiB default scoped limit.
    est = (2 * bt * Lr * sCinP * 2 + 2 * Kq * sCinP * CoutP * 2
           + 2 * bt * rows_out * CoutP * 2
           + (2 * bt * residual.shape[1] * CoutP * 2 if has_res else 0)
           + 3 * bt * lout * CoutP * 4)
    vmem_cap = int(min(64 * 2 ** 20, max(32 * 2 ** 20, 2 * est)))

    return pl.pallas_call(
        kernel,
        out_shape=out_shape,
        grid=(N // bt,),
        in_specs=in_specs,
        out_specs=out_spec,
        compiler_params=pltpu.CompilerParams(
            dimension_semantics=("parallel",),
            vmem_limit_bytes=vmem_cap),
    )(*args)


# ---------------------------------------------------------------------------
# MaxPool1d(kernel=3, stride=2, padding=1), channels-last, fused in-kernel
# ---------------------------------------------------------------------------
def maxpool1d_k3s2p1(x, *, l_true, halo=(0, 0), batch_tile=1):
    """x: (N, Lb, Cp) bf16 halo buffer, real data in rows [0, l_true) (extra rows
    are zero).  The input is post-ReLU (>= 0), so zero padding == -inf padding.
    The even/odd de-interleave comes from a FREE HBM reshape into lane halves."""
    N, Lb, C = x.shape
    assert Lb % 2 == 0 and Lb >= l_true
    lout = (l_true - 1) // 2 + 1
    lh = Lb // 2
    assert lout <= lh
    halo_lo, halo_hi = halo
    rows_out = halo_lo + lout + halo_hi
    bt = batch_tile
    assert N % bt == 0
    xf = x.reshape(N, lh, 2 * C)                        # free reshape: rows -> lane halves

    def kernel(x_ref, o_ref):
        xb = x_ref[...]                                 # (bt, lh, 2C)
        lo = xb[:, 0:lout, 0:C]                         # x[2i]
        hi = xb[:, 0:lout, C:2 * C]                     # x[2i+1]
        m = jnp.maximum(lo, hi)
        if halo_lo:
            o_ref[:, 0:halo_lo, :] = jnp.zeros((bt, halo_lo, C), xb.dtype)
        if halo_hi:
            o_ref[:, halo_lo + lout:rows_out, :] = jnp.zeros((bt, halo_hi, C), xb.dtype)
        # out[0] = max(x[0], x[1])  (left pad tap drops out; input >= 0)
        o_ref[:, halo_lo:halo_lo + 1, :] = m[:, 0:1, :]
        # out[i] = max(x[2i-1], x[2i], x[2i+1]) = max(m[i], hi[i-1]) for i >= 1
        if lout > 1:
            o_ref[:, halo_lo + 1:halo_lo + lout, :] = jnp.maximum(
                m[:, 1:lout, :], hi[:, 0:lout - 1, :])

    return pl.pallas_call(
        kernel,
        out_shape=jax.ShapeDtypeStruct((N, rows_out, C), x.dtype),
        grid=(N // bt,),
        in_specs=[pl.BlockSpec((bt, lh, 2 * C), lambda n: (n, 0, 0))],
        out_specs=pl.BlockSpec((bt, rows_out, C), lambda n: (n, 0, 0)),
        compiler_params=pltpu.CompilerParams(dimension_semantics=("parallel",)),
    )(xf)


# ---------------------------------------------------------------------------
# Parameters
# ---------------------------------------------------------------------------
def make_params(key, layers, in_channels=3, nb_fils=32, num_classes=6, groups=1):
    keys = iter(jax.random.split(key, 512))

    def conv(cin, cout, k, s, p, e):
        cin_g = cin // groups
        std = math.sqrt(2.0 / (cin_g * k))
        w = jax.random.normal(next(keys), (cout, cin_g, k), jnp.float32) * std
        return {"w": pack_conv_weight(w, s, groups, e),
                "K": k, "s": s, "p": p, "e": e, "cin": cin, "cout": cout}

    params = {"conv1": conv(in_channels, nb_fils, 7, 2, 3, e=0)}
    inplanes = nb_fils
    blocks = []
    for planes, stride, nblk in zip(
            [nb_fils, nb_fils * 2, nb_fils * 4, nb_fils * 8], [1, 2, 2, 2], layers):
        for b in range(nblk):
            s = stride if b == 0 else 1
            bp = {"conv1": conv(inplanes, planes, 3, s, 1, e=0),
                  "conv2": conv(planes, planes, 3, 1, 1, e=0)}
            if s != 1 or inplanes != planes * BLOCK_EXPANSION:
                # the 1x1 downsample reads the same halo-1 block-input buffer as
                # conv1, so its packed taps carry the +1 data offset (e=1).
                bp["down"] = conv(inplanes, planes * BLOCK_EXPANSION, 1, s, 0, e=1)
            blocks.append(bp)
            inplanes = planes * BLOCK_EXPANSION
    params["blocks"] = blocks

    # FC rows scattered to the padded, group-contiguous channel positions.
    cg = inplanes // groups
    cgp = _rup(cg)
    fc_w = jax.random.normal(next(keys), (num_classes, inplanes), jnp.float32) * 0.05
    wpad = jnp.zeros((groups * cgp, num_classes), jnp.float32)
    for g in range(groups):
        wpad = wpad.at[g * cgp:g * cgp + cg, :].set(fc_w[:, g * cg:(g + 1) * cg].T)
    params["fc_w"] = wpad
    params["fc_b"] = jnp.zeros((num_classes,), jnp.float32)
    return params


# ---------------------------------------------------------------------------
# ResNet (1D) forward
# ---------------------------------------------------------------------------
def basic_block(x, l_in, bp, next_bp, groups, bt, pool):
    c1, c2 = bp["conv1"], bp["conv2"]
    lout = _out_len(l_in, c1)                     # conv2 output length == conv1's
    # conv1 -> GN -> ReLU (output halo sized for conv2)
    out1 = fused_conv_gn(_fold(x, c1), c1, lout=lout, groups=groups, relu=True,
                         halo=_buffer_halos(lout, [c2]), batch_tile=bt)
    # identity branch
    if "down" in bp:
        dn = bp["down"]
        identity = fused_conv_gn(_fold(x, dn), dn, lout=_out_len(l_in, dn),
                                 groups=groups, relu=False, halo=(0, 0),
                                 batch_tile=bt)
        res_off = 0
    else:
        identity = x
        res_off = c1["p"] + c1["e"]               # data offset inside the input buffer
    # conv2 -> GN -> +identity -> ReLU (and fused avg-pool for the final block)
    if pool:
        y = fused_conv_gn(_fold(out1, c2), c2, lout=lout, groups=groups, relu=True,
                          residual=identity, res_off=res_off, pool=True,
                          batch_tile=bt)
        return y, lout
    cons = [next_bp["conv1"]] + ([next_bp["down"]] if "down" in next_bp else [])
    y = fused_conv_gn(_fold(out1, c2), c2, lout=lout, groups=groups, relu=True,
                      residual=identity, res_off=res_off,
                      halo=_buffer_halos(lout, cons), batch_tile=bt)
    return y, lout


def resnet_forward(params, x, groups=1, repeat_input=1):
    N = x.shape[0]
    bt = pick_batch_tile(N)
    st = params["conv1"]

    # one-time input prep: NCL -> NLC, group-contiguous channel pad, bf16,
    # stem length pad + stride fold (the only wrapper-side jnp.pad left).
    x = jnp.tile(x, (1, repeat_input, 1))
    x = jnp.transpose(x, (0, 2, 1))
    cin_g = st["cin"] // groups
    x = _pad_channels_grouped(x, groups, cin_g, _rup(cin_g)).astype(jnp.bfloat16)
    L = x.shape[1]
    lout = _out_len(L, st)
    kq = st["w"].shape[0]
    lb = st["s"] * (lout + kq - 1)
    x = jnp.pad(x, ((0, 0), (st["p"], lb - L - st["p"]), (0, 0)))

    # stem: conv1 -> GroupNorm -> ReLU (extra zero row only if the pool needs it)
    y = fused_conv_gn(_fold(x, st), st, lout=lout, groups=groups, relu=True,
                      halo=(0, lout % 2), batch_tile=bt)
    L = lout

    # maxpool(kernel=3, stride=2, padding=1)
    lpool = (L - 1) // 2 + 1
    blk0 = params["blocks"][0]
    cons = [blk0["conv1"]] + ([blk0["down"]] if "down" in blk0 else [])
    y = maxpool1d_k3s2p1(y, l_true=L, halo=_buffer_halos(lpool, cons),
                         batch_tile=bt)
    L = lpool

    # residual blocks (flat list; the last one also does the global avg-pool)
    blocks = params["blocks"]
    for i, bp in enumerate(blocks):
        nxt = blocks[i + 1] if i + 1 < len(blocks) else None
        y, L = basic_block(y, L, bp, nxt, groups, bt, pool=(nxt is None))

    # flatten + /groups + fc (tiny (N,C)@(C,classes): left to XLA)
    feat = y.reshape(N, -1) * (1.0 / groups)
    return feat @ params["fc_w"] + params["fc_b"]


# ---------------------------------------------------------------------------
if __name__ == "__main__":
    # Small, module-consistent shapes: batch=4, in_channels=3, length=64,
    # nb_fils=8, layers=[1,1,1,1], num_classes=6, groups=1, repeat_input=1.
    batch, in_channels, length = 4, 3, 64
    nb_fils, num_classes, groups, repeat_input = 8, 6, 1, 1
    layers = [1, 1, 1, 1]

    key = jax.random.PRNGKey(0)
    k_in, k_par = jax.random.split(key)
    x = jax.random.normal(k_in, (batch, in_channels, length), jnp.float32)
    params = make_params(k_par, layers, in_channels, nb_fils, num_classes, groups)

    fwd = jax.jit(lambda inp: resnet_forward(params, inp, groups=groups,
                                             repeat_input=repeat_input))
    y = jax.block_until_ready(fwd(x))
    assert y.shape == (batch, num_classes), y.shape
    assert bool(jnp.all(jnp.isfinite(y))), "non-finite output"
    print("KERNEL_OK")
</pallas_src>

<mosaic_0001>
module attributes {stable_mosaic.version = 11 : i64} {
  func.func @kernel(%arg0: i32, %arg1: memref<2x35x256xbf16, #tpu.memory_space<vmem>>, %arg2: memref<4x256x128xbf16, #tpu.memory_space<vmem>>, %arg3: memref<2x32x128xbf16, #tpu.memory_space<vmem>>) attributes {dimension_semantics = [#tpu.dimension_semantics<parallel>], iteration_bounds = array<i64: 2>, scalar_prefetch = 0 : i64, scratch_operands = 0 : i64, tpu.core_type = #tpu.core_type<tc>, window_params = [{transform_indices = @transform_0, window_bounds = array<i64: 2, 35, 256>}, {pipeline_mode = #tpu.pipeline_mode<synchronous>, transform_indices = @transform_1, window_bounds = array<i64: 4, 256, 128>}, {transform_indices = @transform_2, window_bounds = array<i64: 2, 32, 128>}]} {
    %c0 = arith.constant 0 : index
    %c0_0 = arith.constant 0 : index
    %c0_1 = arith.constant 0 : index
    %0 = vector.load %arg1[%c0, %c0_0, %c0_1] : memref<2x35x256xbf16, #tpu.memory_space<vmem>>, vector<2x32x256xbf16>
    %1 = vector.shape_cast %0 : vector<2x32x256xbf16> to vector<64x256xbf16>
    %c0_2 = arith.constant 0 : index
    %c0_3 = arith.constant 0 : index
    %c0_4 = arith.constant 0 : index
    %2 = vector.load %arg2[%c0_2, %c0_3, %c0_4] : memref<4x256x128xbf16, #tpu.memory_space<vmem>>, vector<1x256x128xbf16>
    %3 = vector.shape_cast %2 : vector<1x256x128xbf16> to vector<256x128xbf16>
    %cst = arith.constant dense<0.000000e+00> : vector<64x128xf32>
    %4 = tpu.matmul %1, %3, %cst {dimension_numbers = #tpu.dot_dimension_numbers<[1], [0], [0], [1], [0, 0, 1, 1], [], []>} : vector<64x256xbf16>, vector<256x128xbf16>, vector<64x128xf32> -> vector<64x128xf32>
    %c0_5 = arith.constant 0 : index
    %c1 = arith.constant 1 : index
    %c0_6 = arith.constant 0 : index
    %5 = vector.load %arg1[%c0_5, %c1, %c0_6] : memref<2x35x256xbf16, #tpu.memory_space<vmem>>, vector<2x32x256xbf16>
    %6 = vector.shape_cast %5 : vector<2x32x256xbf16> to vector<64x256xbf16>
    %c1_7 = arith.constant 1 : index
    %c0_8 = arith.constant 0 : index
    %c0_9 = arith.constant 0 : index
    %7 = vector.load %arg2[%c1_7, %c0_8, %c0_9] : memref<4x256x128xbf16, #tpu.memory_space<vmem>>, vector<1x256x128xbf16>
    %8 = vector.shape_cast %7 : vector<1x256x128xbf16> to vector<256x128xbf16>
    %cst_10 = arith.constant dense<0.000000e+00> : vector<64x128xf32>
    %9 = tpu.matmul %6, %8, %cst_10 {dimension_numbers = #tpu.dot_dimension_numbers<[1], [0], [0], [1], [0, 0, 1, 1], [], []>} : vector<64x256xbf16>, vector<256x128xbf16>, vector<64x128xf32> -> vector<64x128xf32>
    %10 = arith.addf %4, %9 : vector<64x128xf32>
    %c0_11 = arith.constant 0 : index
    %c2 = arith.constant 2 : index
    %c0_12 = arith.constant 0 : index
    %11 = vector.load %arg1[%c0_11, %c2, %c0_12] : memref<2x35x256xbf16, #tpu.memory_space<vmem>>, vector<2x32x256xbf16>
    %12 = vector.shape_cast %11 : vector<2x32x256xbf16> to vector<64x256xbf16>
    %c2_13 = arith.constant 2 : index
    %c0_14 = arith.constant 0 : index
    %c0_15 = arith.constant 0 : index
    %13 = vector.load %arg2[%c2_13, %c0_14, %c0_15] : memref<4x256x128xbf16, #tpu.memory_space<vmem>>, vector<1x256x128xbf16>
    %14 = vector.shape_cast %13 : vector<1x256x128xbf16> to vector<256x128xbf16>
    %cst_16 = arith.constant dense<0.000000e+00> : vector<64x128xf32>
    %15 = tpu.matmul %12, %14, %cst_16 {dimension_numbers = #tpu.dot_dimension_numbers<[1], [0], [0], [1], [0, 0, 1, 1], [], []>} : vector<64x256xbf16>, vector<256x128xbf16>, vector<64x128xf32> -> vector<64x128xf32>
    %16 = arith.addf %10, %15 : vector<64x128xf32>
    %c0_17 = arith.constant 0 : index
    %c3 = arith.constant 3 : index
    %c0_18 = arith.constant 0 : index
    %17 = vector.load %arg1[%c0_17, %c3, %c0_18] : memref<2x35x256xbf16, #tpu.memory_space<vmem>>, vector<2x32x256xbf16>
    %18 = vector.shape_cast %17 : vector<2x32x256xbf16> to vector<64x256xbf16>
    %c3_19 = arith.constant 3 : index
    %c0_20 = arith.constant 0 : index
    %c0_21 = arith.constant 0 : index
    %19 = vector.load %arg2[%c3_19, %c0_20, %c0_21] : memref<4x256x128xbf16, #tpu.memory_space<vmem>>, vector<1x256x128xbf16>
    %20 = vector.shape_cast %19 : vector<1x256x128xbf16> to vector<256x128xbf16>
    %cst_22 = arith.constant dense<0.000000e+00> : vector<64x128xf32>
    %21 = tpu.matmul %18, %20, %cst_22 {dimension_numbers = #tpu.dot_dimension_numbers<[1], [0], [0], [1], [0, 0, 1, 1], [], []>} : vector<64x256xbf16>, vector<256x128xbf16>, vector<64x128xf32> -> vector<64x128xf32>
    %22 = arith.addf %16, %21 : vector<64x128xf32>
    %23 = vector.shape_cast %22 : vector<64x128xf32> to vector<2x32x128xf32>
    %cst_23 = arith.constant dense<0.000000e+00> : vector<2x32xf32>
    %24 = vector.multi_reduction <add>, %23, %cst_23 [2] : vector<2x32x128xf32> to vector<2x32xf32>
    %25 = vector.shape_cast %24 : vector<2x32xf32> to vector<2x32x1xf32>
    %cst_24 = arith.constant dense<0.000000e+00> : vector<2x1xf32>
    %26 = vector.multi_reduction <add>, %25, %cst_24 [1] : vector<2x32x1xf32> to vector<2x1xf32>
    %27 = vector.shape_cast %26 : vector<2x1xf32> to vector<2x1x1xf32>
    %28 = arith.mulf %23, %23 : vector<2x32x128xf32>
    %cst_25 = arith.constant dense<0.000000e+00> : vector<2x32xf32>
    %29 = vector.multi_reduction <add>, %28, %cst_25 [2] : vector<2x32x128xf32> to vector<2x32xf32>
    %30 = vector.shape_cast %29 : vector<2x32xf32> to vector<2x32x1xf32>
    %cst_26 = arith.constant dense<0.000000e+00> : vector<2x1xf32>
    %31 = vector.multi_reduction <add>, %30, %cst_26 [1] : vector<2x32x1xf32> to vector<2x1xf32>
    %32 = vector.shape_cast %31 : vector<2x1xf32> to vector<2x1x1xf32>
    %cst_27 = arith.constant 3.906250e-03 : f32
    %33 = vector.broadcast %cst_27 : f32 to vector<2x1x1xf32>
    %34 = arith.mulf %27, %33 : vector<2x1x1xf32>
    %cst_28 = arith.constant 3.906250e-03 : f32
    %35 = vector.broadcast %cst_28 : f32 to vector<2x1x1xf32>
    %36 = arith.mulf %32, %35 : vector<2x1x1xf32>
    %37 = arith.mulf %34, %34 : vector<2x1x1xf32>
    %38 = arith.subf %36, %37 : vector<2x1x1xf32>
    %39 = vector.broadcast %34 : vector<2x1x1xf32> to vector<2x32x128xf32>
    %40 = arith.subf %23, %39 : vector<2x32x128xf32>
    %cst_29 = arith.constant 9.99999974E-6 : f32
    %41 = vector.broadcast %cst_29 : f32 to vector<2x1x1xf32>
    %42 = arith.addf %38, %41 : vector<2x1x1xf32>
    %43 = math.rsqrt %42 : vector<2x1x1xf32>
    %44 = vector.broadcast %43 : vector<2x1x1xf32> to vector<2x32x128xf32>
    %45 = arith.mulf %40, %44 : vector<2x32x128xf32>
    %46 = tpu.iota {dimensions = array<i32: 2>} : vector<2x32x128xi32>
    %c8_i32 = arith.constant 8 : i32
    %47 = vector.broadcast %c8_i32 : i32 to vector<2x32x128xi32>
    %48 = arith.cmpi slt, %46, %47 : vector<2x32x128xi32>
    %cst_30 = arith.constant 0.000000e+00 : f32
    %49 = vector.broadcast %cst_30 : f32 to vector<2x32x128xf32>
    %50 = arith.select %48, %45, %49 : vector<2x32x128xi1>, vector<2x32x128xf32>
    %cst_31 = arith.constant 0.000000e+00 : f32
    %51 = vector.broadcast %cst_31 : f32 to vector<2x32x128xf32>
    %52 = arith.maximumf %50, %51 : vector<2x32x128xf32>
    %53 = arith.truncf %52 : vector<2x32x128xf32> to vector<2x32x128xbf16>
    %c0_32 = arith.constant 0 : index
    %c0_33 = arith.constant 0 : index
    %c0_34 = arith.constant 0 : index
    %54 = vector.load %arg3[%c0_32, %c0_33, %c0_34] : memref<2x32x128xbf16, #tpu.memory_space<vmem>>, vector<2x32x128xbf16>
    tpu.vector_store %arg3[%c0_32, %c0_33, %c0_34], %53 {strides = array<i32>} : memref<2x32x128xbf16, #tpu.memory_space<vmem>>, vector<2x32x128xbf16>,
    return
  }
  func.func @transform_0(%arg0: i32) -> (i32, i32, i32) {
    %c0_i32 = arith.constant 0 : i32
    %c0_i32_0 = arith.constant 0 : i32
    %c0_i32_1 = arith.constant 0 : i32
    return %arg0, %c0_i32, %c0_i32_0 : i32, i32, i32
  }
  func.func @transform_1(%arg0: i32) -> (i32, i32, i32) {
    %c0_i32 = arith.constant 0 : i32
    %c0_i32_0 = arith.constant 0 : i32
    %c0_i32_1 = arith.constant 0 : i32
    %c0_i32_2 = arith.constant 0 : i32
    return %c0_i32, %c0_i32_0, %c0_i32_1 : i32, i32, i32
  }
  func.func @transform_2(%arg0: i32) -> (i32, i32, i32) {
    %c0_i32 = arith.constant 0 : i32
    %c0_i32_0 = arith.constant 0 : i32
    %c0_i32_1 = arith.constant 0 : i32
    return %arg0, %c0_i32, %c0_i32_0 : i32, i32, i32
  }
}

module attributes {stable_mosaic.version = 11 : i64} {
  func.func @kernel(%arg0: i32, %arg1: memref<2x16x256xbf16, #tpu.memory_space<vmem>>, %arg2: memref<2x18x128xbf16, #tpu.memory_space<vmem>>) attributes {dimension_semantics = [#tpu.dimension_semantics<parallel>], iteration_bounds = array<i64: 2>, scalar_prefetch = 0 : i64, scratch_operands = 0 : i64, tpu.core_type = #tpu.core_type<tc>, window_params = [{transform_indices = @transform_0, window_bounds = array<i64: 2, 16, 256>}, {transform_indices = @transform_1, window_bounds = array<i64: 2, 18, 128>}]} {
    %c0 = arith.constant 0 : index
    %c0_0 = arith.constant 0 : index
    %c0_1 = arith.constant 0 : index
    %0 = vector.load %arg1[%c0, %c0_0, %c0_1] : memref<2x16x256xbf16, #tpu.memory_space<vmem>>, vector<2x16x256xbf16>
    %1 = vector.extract_strided_slice %0 {offsets = [0, 0, 0], sizes = [2, 16, 128], strides = [1, 1, 1]} : vector<2x16x256xbf16> to vector<2x16x128xbf16>
    %2 = vector.extract_strided_slice %0 {offsets = [0, 0, 128], sizes = [2, 16, 128], strides = [1, 1, 1]} : vector<2x16x256xbf16> to vector<2x16x128xbf16>
    %3 = arith.maximumf %1, %2 : vector<2x16x128xbf16>
    %cst = arith.constant 0.000000e+00 : bf16
    %4 = vector.broadcast %cst : bf16 to vector<2x1x128xbf16>
    %c0_2 = arith.constant 0 : index
    %c0_3 = arith.constant 0 : index
    %c0_4 = arith.constant 0 : index
    %5 = vector.load %arg2[%c0_2, %c0_3, %c0_4] : memref<2x18x128xbf16, #tpu.memory_space<vmem>>, vector<2x1x128xbf16>
    tpu.vector_store %arg2[%c0_2, %c0_3, %c0_4], %4 {strides = array<i32>} : memref<2x18x128xbf16, #tpu.memory_space<vmem>>, vector<2x1x128xbf16>,
    %cst_5 = arith.constant 0.000000e+00 : bf16
    %6 = vector.broadcast %cst_5 : bf16 to vector<2x1x128xbf16>
    %c0_6 = arith.constant 0 : index
    %c17 = arith.constant 17 : index
    %c0_7 = arith.constant 0 : index
    %7 = vector.load %arg2[%c0_6, %c17, %c0_7] : memref<2x18x128xbf16, #tpu.memory_space<vmem>>, vector<2x1x128xbf16>
    tpu.vector_store %arg2[%c0_6, %c17, %c0_7], %6 {strides = array<i32>} : memref<2x18x128xbf16, #tpu.memory_space<vmem>>, vector<2x1x128xbf16>,
    %8 = vector.extract_strided_slice %3 {offsets = [0, 0, 0], sizes = [2, 1, 128], strides = [1, 1, 1]} : vector<2x16x128xbf16> to vector<2x1x128xbf16>
    %c0_8 = arith.constant 0 : index
    %c1 = arith.constant 1 : index
    %c0_9 = arith.constant 0 : index
    %9 = vector.load %arg2[%c0_8, %c1, %c0_9] : memref<2x18x128xbf16, #tpu.memory_space<vmem>>, vector<2x1x128xbf16>
    tpu.vector_store %arg2[%c0_8, %c1, %c0_9], %8 {strides = array<i32>} : memref<2x18x128xbf16, #tpu.memory_space<vmem>>, vector<2x1x128xbf16>,
    %10 = vector.extract_strided_slice %3 {offsets = [0, 1, 0], sizes = [2, 15, 128], strides = [1, 1, 1]} : vector<2x16x128xbf16> to vector<2x15x128xbf16>
    %11 = vector.extract_strided_slice %2 {offsets = [0, 0, 0], sizes = [2, 15, 128], strides = [1, 1, 1]} : vector<2x16x128xbf16> to vector<2x15x128xbf16>
    %12 = arith.maximumf %10, %11 : vector<2x15x128xbf16>
    %c0_10 = arith.constant 0 : index
    %c2 = arith.constant 2 : index
    %c0_11 = arith.constant 0 : index
    %13 = vector.load %arg2[%c0_10, %c2, %c0_11] : memref<2x18x128xbf16, #tpu.memory_space<vmem>>, vector<2x15x128xbf16>
    tpu.vector_store %arg2[%c0_10, %c2, %c0_11], %12 {strides = array<i32>} : memref<2x18x128xbf16, #tpu.memory_space<vmem>>, vector<2x15x128xbf16>,
    return
  }
  func.func @transform_0(%arg0: i32) -> (i32, i32, i32) {
    %c0_i32 = arith.constant 0 : i32
    %c0_i32_0 = arith.constant 0 : i32
    %c0_i32_1 = arith.constant 0 : i32
    return %arg0, %c0_i32, %c0_i32_0 : i32, i32, i32
  }
  func.func @transform_1(%arg0: i32) -> (i32, i32, i32) {
    %c0_i32 = arith.constant 0 : i32
    %c0_i32_0 = arith.constant 0 : i32
    %c0_i32_1 = arith.constant 0 : i32
    return %arg0, %c0_i32, %c0_i32_0 : i32, i32, i32
  }
}

module attributes {stable_mosaic.version = 11 : i64} {
  func.func @kernel(%arg0: i32, %arg1: memref<2x18x128xbf16, #tpu.memory_space<vmem>>, %arg2: memref<3x128x128xbf16, #tpu.memory_space<vmem>>, %arg3: memref<2x18x128xbf16, #tpu.memory_space<vmem>>, %arg4: memref<2x18x128xbf16, #tpu.memory_space<vmem>>) attributes {dimension_semantics = [#tpu.dimension_semantics<parallel>], iteration_bounds = array<i64: 2>, scalar_prefetch = 0 : i64, scratch_operands = 0 : i64, tpu.core_type = #tpu.core_type<tc>, window_params = [{transform_indices = @transform_0, window_bounds = array<i64: 2, 18, 128>}, {pipeline_mode = #tpu.pipeline_mode<synchronous>, transform_indices = @transform_1, window_bounds = array<i64: 3, 128, 128>}, {transform_indices = @transform_2, window_bounds = array<i64: 2, 18, 128>}, {transform_indices = @transform_3, window_bounds = array<i64: 2, 18, 128>}]} {
    %c0 = arith.constant 0 : index
    %c0_0 = arith.constant 0 : index
    %c0_1 = arith.constant 0 : index
    %0 = vector.load %arg1[%c0, %c0_0, %c0_1] : memref<2x18x128xbf16, #tpu.memory_space<vmem>>, vector<2x16x128xbf16>
    %1 = vector.shape_cast %0 : vector<2x16x128xbf16> to vector<32x128xbf16>
    %c0_2 = arith.constant 0 : index
    %c0_3 = arith.constant 0 : index
    %c0_4 = arith.constant 0 : index
    %2 = vector.load %arg2[%c0_2, %c0_3, %c0_4] : memref<3x128x128xbf16, #tpu.memory_space<vmem>>, vector<1x128x128xbf16>
    %3 = vector.shape_cast %2 : vector<1x128x128xbf16> to vector<128x128xbf16>
    %cst = arith.constant dense<0.000000e+00> : vector<32x128xf32>
    %4 = tpu.matmul %1, %3, %cst {dimension_numbers = #tpu.dot_dimension_numbers<[1], [0], [0], [1], [0, 0, 1, 1], [], []>} : vector<32x128xbf16>, vector<128x128xbf16>, vector<32x128xf32> -> vector<32x128xf32>
    %c0_5 = arith.constant 0 : index
    %c1 = arith.constant 1 : index
    %c0_6 = arith.constant 0 : index
    %5 = vector.load %arg1[%c0_5, %c1, %c0_6] : memref<2x18x128xbf16, #tpu.memory_space<vmem>>, vector<2x16x128xbf16>
    %6 = vector.shape_cast %5 : vector<2x16x128xbf16> to vector<32x128xbf16>
    %c1_7 = arith.constant 1 : index
    %c0_8 = arith.constant 0 : index
    %c0_9 = arith.constant 0 : index
    %7 = vector.load %arg2[%c1_7, %c0_8, %c0_9] : memref<3x128x128xbf16, #tpu.memory_space<vmem>>, vector<1x128x128xbf16>
    %8 = vector.shape_cast %7 : vector<1x128x128xbf16> to vector<128x128xbf16>
    %cst_10 = arith.constant dense<0.000000e+00> : vector<32x128xf32>
    %9 = tpu.matmul %6, %8, %cst_10 {dimension_numbers = #tpu.dot_dimension_numbers<[1], [0], [0], [1], [0, 0, 1, 1], [], []>} : vector<32x128xbf16>, vector<128x128xbf16>, vector<32x128xf32> -> vector<32x128xf32>
    %10 = arith.addf %4, %9 : vector<32x128xf32>
    %c0_11 = arith.constant 0 : index
    %c2 = arith.constant 2 : index
    %c0_12 = arith.constant 0 : index
    %11 = vector.load %arg1[%c0_11, %c2, %c0_12] : memref<2x18x128xbf16, #tpu.memory_space<vmem>>, vector<2x16x128xbf16>
    %12 = vector.shape_cast %11 : vector<2x16x128xbf16> to vector<32x128xbf16>
    %c2_13 = arith.constant 2 : index
    %c0_14 = arith.constant 0 : index
    %c0_15 = arith.constant 0 : index
    %13 = vector.load %arg2[%c2_13, %c0_14, %c0_15] : memref<3x128x128xbf16, #tpu.memory_space<vmem>>, vector<1x128x128xbf16>
    %14 = vector.shape_cast %13 : vector<1x128x128xbf16> to vector<128x128xbf16>
    %cst_16 = arith.constant dense<0.000000e+00> : vector<32x128xf32>
    %15 = tpu.matmul %12, %14, %cst_16 {dimension_numbers = #tpu.dot_dimension_numbers<[1], [0], [0], [1], [0, 0, 1, 1], [], []>} : vector<32x128xbf16>, vector<128x128xbf16>, vector<32x128xf32> -> vector<32x128xf32>
    %16 = arith.addf %10, %15 : vector<32x128xf32>
    %17 = vector.shape_cast %16 : vector<32x128xf32> to vector<2x16x128xf32>
    %cst_17 = arith.constant dense<0.000000e+00> : vector<2x16xf32>
    %18 = vector.multi_reduction <add>, %17, %cst_17 [2] : vector<2x16x128xf32> to vector<2x16xf32>
    %19 = vector.shape_cast %18 : vector<2x16xf32> to vector<2x16x1xf32>
    %cst_18 = arith.constant dense<0.000000e+00> : vector<2x1xf32>
    %20 = vector.multi_reduction <add>, %19, %cst_18 [1] : vector<2x16x1xf32> to vector<2x1xf32>
    %21 = vector.shape_cast %20 : vector<2x1xf32> to vector<2x1x1xf32>
    %22 = arith.mulf %17, %17 : vector<2x16x128xf32>
    %cst_19 = arith.constant dense<0.000000e+00> : vector<2x16xf32>
    %23 = vector.multi_reduction <add>, %22, %cst_19 [2] : vector<2x16x128xf32> to vector<2x16xf32>
    %24 = vector.shape_cast %23 : vector<2x16xf32> to vector<2x16x1xf32>
    %cst_20 = arith.constant dense<0.000000e+00> : vector<2x1xf32>
    %25 = vector.multi_reduction <add>, %24, %cst_20 [1] : vector<2x16x1xf32> to vector<2x1xf32>
    %26 = vector.shape_cast %25 : vector<2x1xf32> to vector<2x1x1xf32>
    %cst_21 = arith.constant 7.812500e-03 : f32
    %27 = vector.broadcast %cst_21 : f32 to vector<2x1x1xf32>
    %28 = arith.mulf %21, %27 : vector<2x1x1xf32>
    %cst_22 = arith.constant 7.812500e-03 : f32
    %29 = vector.broadcast %cst_22 : f32 to vector<2x1x1xf32>
    %30 = arith.mulf %26, %29 : vector<2x1x1xf32>
    %31 = arith.mulf %28, %28 : vector<2x1x1xf32>
    %32 = arith.subf %30, %31 : vector<2x1x1xf32>
    %33 = vector.broadcast %28 : vector<2x1x1xf32> to vector<2x16x128xf32>
    %34 = arith.subf %17, %33 : vector<2x16x128xf32>
    %cst_23 = arith.constant 9.99999974E-6 : f32
    %35 = vector.broadcast %cst_23 : f32 to vector<2x1x1xf32>
    %36 = arith.addf %32, %35 : vector<2x1x1xf32>
    %37 = math.rsqrt %36 : vector<2x1x1xf32>
    %38 = vector.broadcast %37 : vector<2x1x1xf32> to vector<2x16x128xf32>
    %39 = arith.mulf %34, %38 : vector<2x16x128xf32>
    %40 = tpu.iota {dimensions = array<i32: 2>} : vector<2x16x128xi32>
    %c8_i32 = arith.constant 8 : i32
    %41 = vector.broadcast %c8_i32 : i32 to vector<2x16x128xi32>
    %42 = arith.cmpi slt, %40, %41 : vector<2x16x128xi32>
    %cst_24 = arith.constant 0.000000e+00 : f32
    %43 = vector.broadcast %cst_24 : f32 to vector<2x16x128xf32>
    %44 = arith.select %42, %39, %43 : vector<2x16x128xi1>, vector<2x16x128xf32>
    %c0_25 = arith.constant 0 : index
    %c1_26 = arith.constant 1 : index
    %c0_27 = arith.constant 0 : index
    %45 = vector.load %arg3[%c0_25, %c1_26, %c0_27] : memref<2x18x128xbf16, #tpu.memory_space<vmem>>, vector<2x16x128xbf16>
    %46 = arith.extf %45 : vector<2x16x128xbf16> to vector<2x16x128xf32>
    %47 = arith.addf %44, %46 : vector<2x16x128xf32>
    %cst_28 = arith.constant 0.000000e+00 : f32
    %48 = vector.broadcast %cst_28 : f32 to vector<2x16x128xf32>
    %49 = arith.maximumf %47, %48 : vector<2x16x128xf32>
    %cst_29 = arith.constant 0.000000e+00 : bf16
    %50 = vector.broadcast %cst_29 : bf16 to vector<2x1x128xbf16>
    %c0_30 = arith.constant 0 : index
    %c0_31 = arith.constant 0 : index
    %c0_32 = arith.constant 0 : index
    %51 = vector.load %arg4[%c0_30, %c0_31, %c0_32] : memref<2x18x128xbf16, #tpu.memory_space<vmem>>, vector<2x1x128xbf16>
    tpu.vector_store %arg4[%c0_30, %c0_31, %c0_32], %50 {strides = array<i32>} : memref<2x18x128xbf16, #tpu.memory_space<vmem>>, vector<2x1x128xbf16>,
    %cst_33 = arith.constant 0.000000e+00 : bf16
    %52 = vector.broadcast %cst_33 : bf16 to vector<2x1x128xbf16>
    %c0_34 = arith.constant 0 : index
    %c17 = arith.constant 17 : index
    %c0_35 = arith.constant 0 : index
    %53 = vector.load %arg4[%c0_34, %c17, %c0_35] : memref<2x18x128xbf16, #tpu.memory_space<vmem>>, vector<2x1x128xbf16>
    tpu.vector_store %arg4[%c0_34, %c17, %c0_35], %52 {strides = array<i32>} : memref<2x18x128xbf16, #tpu.memory_space<vmem>>, vector<2x1x128xbf16>,
    %54 = arith.truncf %49 : vector<2x16x128xf32> to vector<2x16x128xbf16>
    %c0_36 = arith.constant 0 : index
    %c1_37 = arith.constant 1 : index
    %c0_38 = arith.constant 0 : index
    %55 = vector.load %arg4[%c0_36, %c1_37, %c0_38] : memref<2x18x128xbf16, #tpu.memory_space<vmem>>, vector<2x16x128xbf16>
    tpu.vector_store %arg4[%c0_36, %c1_37, %c0_38], %54 {strides = array<i32>} : memref<2x18x128xbf16, #tpu.memory_space<vmem>>, vector<2x16x128xbf16>,
    return
  }
  func.func @transform_0(%arg0: i32) -> (i32, i32, i32) {
    %c0_i32 = arith.constant 0 : i32
    %c0_i32_0 = arith.constant 0 : i32
    %c0_i32_1 = arith.constant 0 : i32
    return %arg0, %c0_i32, %c0_i32_0 : i32, i32, i32
  }
  func.func @transform_1(%arg0: i32) -> (i32, i32, i32) {
    %c0_i32 = arith.constant 0 : i32
    %c0_i32_0 = arith.constant 0 : i32
    %c0_i32_1 = arith.constant 0 : i32
    %c0_i32_2 = arith.constant 0 : i32
    return %c0_i32, %c0_i32_0, %c0_i32_1 : i32, i32, i32
  }
  func.func @transform_2(%arg0: i32) -> (i32, i32, i32) {
    %c0_i32 = arith.constant 0 : i32
    %c0_i32_0 = arith.constant 0 : i32
    %c0_i32_1 = arith.constant 0 : i32
    return %arg0, %c0_i32, %c0_i32_0 : i32, i32, i32
  }
  func.func @transform_3(%arg0: i32) -> (i32, i32, i32) {
    %c0_i32 = arith.constant 0 : i32
    %c0_i32_0 = arith.constant 0 : i32
    %c0_i32_1 = arith.constant 0 : i32
    return %arg0, %c0_i32, %c0_i32_0 : i32, i32, i32
  }
}

module attributes {stable_mosaic.version = 11 : i64} {
  func.func @kernel(%arg0: i32, %arg1: memref<2x18x128xbf16, #tpu.memory_space<vmem>>, %arg2: memref<3x128x128xbf16, #tpu.memory_space<vmem>>, %arg3: memref<2x18x128xbf16, #tpu.memory_space<vmem>>) attributes {dimension_semantics = [#tpu.dimension_semantics<parallel>], iteration_bounds = array<i64: 2>, scalar_prefetch = 0 : i64, scratch_operands = 0 : i64, tpu.core_type = #tpu.core_type<tc>, window_params = [{transform_indices = @transform_0, window_bounds = array<i64: 2, 18, 128>}, {pipeline_mode = #tpu.pipeline_mode<synchronous>, transform_indices = @transform_1, window_bounds = array<i64: 3, 128, 128>}, {transform_indices = @transform_2, window_bounds = array<i64: 2, 18, 128>}]} {
    %c0 = arith.constant 0 : index
    %c0_0 = arith.constant 0 : index
    %c0_1 = arith.constant 0 : index
    %0 = vector.load %arg1[%c0, %c0_0, %c0_1] : memref<2x18x128xbf16, #tpu.memory_space<vmem>>, vector<2x16x128xbf16>
    %1 = vector.shape_cast %0 : vector<2x16x128xbf16> to vector<32x128xbf16>
    %c0_2 = arith.constant 0 : index
    %c0_3 = arith.constant 0 : index
    %c0_4 = arith.constant 0 : index
    %2 = vector.load %arg2[%c0_2, %c0_3, %c0_4] : memref<3x128x128xbf16, #tpu.memory_space<vmem>>, vector<1x128x128xbf16>
    %3 = vector.shape_cast %2 : vector<1x128x128xbf16> to vector<128x128xbf16>
    %cst = arith.constant dense<0.000000e+00> : vector<32x128xf32>
    %4 = tpu.matmul %1, %3, %cst {dimension_numbers = #tpu.dot_dimension_numbers<[1], [0], [0], [1], [0, 0, 1, 1], [], []>} : vector<32x128xbf16>, vector<128x128xbf16>, vector<32x128xf32> -> vector<32x128xf32>
    %c0_5 = arith.constant 0 : index
    %c1 = arith.constant 1 : index
    %c0_6 = arith.constant 0 : index
    %5 = vector.load %arg1[%c0_5, %c1, %c0_6] : memref<2x18x128xbf16, #tpu.memory_space<vmem>>, vector<2x16x128xbf16>
    %6 = vector.shape_cast %5 : vector<2x16x128xbf16> to vector<32x128xbf16>
    %c1_7 = arith.constant 1 : index
    %c0_8 = arith.constant 0 : index
    %c0_9 = arith.constant 0 : index
    %7 = vector.load %arg2[%c1_7, %c0_8, %c0_9] : memref<3x128x128xbf16, #tpu.memory_space<vmem>>, vector<1x128x128xbf16>
    %8 = vector.shape_cast %7 : vector<1x128x128xbf16> to vector<128x128xbf16>
    %cst_10 = arith.constant dense<0.000000e+00> : vector<32x128xf32>
    %9 = tpu.matmul %6, %8, %cst_10 {dimension_numbers = #tpu.dot_dimension_numbers<[1], [0], [0], [1], [0, 0, 1, 1], [], []>} : vector<32x128xbf16>, vector<128x128xbf16>, vector<32x128xf32> -> vector<32x128xf32>
    %10 = arith.addf %4, %9 : vector<32x128xf32>
    %c0_11 = arith.constant 0 : index
    %c2 = arith.constant 2 : index
    %c0_12 = arith.constant 0 : index
    %11 = vector.load %arg1[%c0_11, %c2, %c0_12] : memref<2x18x128xbf16, #tpu.memory_space<vmem>>, vector<2x16x128xbf16>
    %12 = vector.shape_cast %11 : vector<2x16x128xbf16> to vector<32x128xbf16>
    %c2_13 = arith.constant 2 : index
    %c0_14 = arith.constant 0 : index
    %c0_15 = arith.constant 0 : index
    %13 = vector.load %arg2[%c2_13, %c0_14, %c0_15] : memref<3x128x128xbf16, #tpu.memory_space<vmem>>, vector<1x128x128xbf16>
    %14 = vector.shape_cast %13 : vector<1x128x128xbf16> to vector<128x128xbf16>
    %cst_16 = arith.constant dense<0.000000e+00> : vector<32x128xf32>
    %15 = tpu.matmul %12, %14, %cst_16 {dimension_numbers = #tpu.dot_dimension_numbers<[1], [0], [0], [1], [0, 0, 1, 1], [], []>} : vector<32x128xbf16>, vector<128x128xbf16>, vector<32x128xf32> -> vector<32x128xf32>
    %16 = arith.addf %10, %15 : vector<32x128xf32>
    %17 = vector.shape_cast %16 : vector<32x128xf32> to vector<2x16x128xf32>
    %cst_17 = arith.constant dense<0.000000e+00> : vector<2x16xf32>
    %18 = vector.multi_reduction <add>, %17, %cst_17 [2] : vector<2x16x128xf32> to vector<2x16xf32>
    %19 = vector.shape_cast %18 : vector<2x16xf32> to vector<2x16x1xf32>
    %cst_18 = arith.constant dense<0.000000e+00> : vector<2x1xf32>
    %20 = vector.multi_reduction <add>, %19, %cst_18 [1] : vector<2x16x1xf32> to vector<2x1xf32>
    %21 = vector.shape_cast %20 : vector<2x1xf32> to vector<2x1x1xf32>
    %22 = arith.mulf %17, %17 : vector<2x16x128xf32>
    %cst_19 = arith.constant dense<0.000000e+00> : vector<2x16xf32>
    %23 = vector.multi_reduction <add>, %22, %cst_19 [2] : vector<2x16x128xf32> to vector<2x16xf32>
    %24 = vector.shape_cast %23 : vector<2x16xf32> to vector<2x16x1xf32>
    %cst_20 = arith.constant dense<0.000000e+00> : vector<2x1xf32>
    %25 = vector.multi_reduction <add>, %24, %cst_20 [1] : vector<2x16x1xf32> to vector<2x1xf32>
    %26 = vector.shape_cast %25 : vector<2x1xf32> to vector<2x1x1xf32>
    %cst_21 = arith.constant 7.812500e-03 : f32
    %27 = vector.broadcast %cst_21 : f32 to vector<2x1x1xf32>
    %28 = arith.mulf %21, %27 : vector<2x1x1xf32>
    %cst_22 = arith.constant 7.812500e-03 : f32
    %29 = vector.broadcast %cst_22 : f32 to vector<2x1x1xf32>
    %30 = arith.mulf %26, %29 : vector<2x1x1xf32>
    %31 = arith.mulf %28, %28 : vector<2x1x1xf32>
    %32 = arith.subf %30, %31 : vector<2x1x1xf32>
    %33 = vector.broadcast %28 : vector<2x1x1xf32> to vector<2x16x128xf32>
    %34 = arith.subf %17, %33 : vector<2x16x128xf32>
    %cst_23 = arith.constant 9.99999974E-6 : f32
    %35 = vector.broadcast %cst_23 : f32 to vector<2x1x1xf32>
    %36 = arith.addf %32, %35 : vector<2x1x1xf32>
    %37 = math.rsqrt %36 : vector<2x1x1xf32>
    %38 = vector.broadcast %37 : vector<2x1x1xf32> to vector<2x16x128xf32>
    %39 = arith.mulf %34, %38 : vector<2x16x128xf32>
    %40 = tpu.iota {dimensions = array<i32: 2>} : vector<2x16x128xi32>
    %c8_i32 = arith.constant 8 : i32
    %41 = vector.broadcast %c8_i32 : i32 to vector<2x16x128xi32>
    %42 = arith.cmpi slt, %40, %41 : vector<2x16x128xi32>
    %cst_24 = arith.constant 0.000000e+00 : f32
    %43 = vector.broadcast %cst_24 : f32 to vector<2x16x128xf32>
    %44 = arith.select %42, %39, %43 : vector<2x16x128xi1>, vector<2x16x128xf32>
    %cst_25 = arith.constant 0.000000e+00 : f32
    %45 = vector.broadcast %cst_25 : f32 to vector<2x16x128xf32>
    %46 = arith.maximumf %44, %45 : vector<2x16x128xf32>
    %cst_26 = arith.constant 0.000000e+00 : bf16
    %47 = vector.broadcast %cst_26 : bf16 to vector<2x1x128xbf16>
    %c0_27 = arith.constant 0 : index
    %c0_28 = arith.constant 0 : index
    %c0_29 = arith.constant 0 : index
    %48 = vector.load %arg3[%c0_27, %c0_28, %c0_29] : memref<2x18x128xbf16, #tpu.memory_space<vmem>>, vector<2x1x128xbf16>
    tpu.vector_store %arg3[%c0_27, %c0_28, %c0_29], %47 {strides = array<i32>} : memref<2x18x128xbf16, #tpu.memory_space<vmem>>, vector<2x1x128xbf16>,
    %cst_30 = arith.constant 0.000000e+00 : bf16
    %49 = vector.broadcast %cst_30 : bf16 to vector<2x1x128xbf16>
    %c0_31 = arith.constant 0 : index
    %c17 = arith.constant 17 : index
    %c0_32 = arith.constant 0 : index
    %50 = vector.load %arg3[%c0_31, %c17, %c0_32] : memref<2x18x128xbf16, #tpu.memory_space<vmem>>, vector<2x1x128xbf16>
    tpu.vector_store %arg3[%c0_31, %c17, %c0_32], %49 {strides = array<i32>} : memref<2x18x128xbf16, #tpu.memory_space<vmem>>, vector<2x1x128xbf16>,
    %51 = arith.truncf %46 : vector<2x16x128xf32> to vector<2x16x128xbf16>
    %c0_33 = arith.constant 0 : index
    %c1_34 = arith.constant 1 : index
    %c0_35 = arith.constant 0 : index
    %52 = vector.load %arg3[%c0_33, %c1_34, %c0_35] : memref<2x18x128xbf16, #tpu.memory_space<vmem>>, vector<2x16x128xbf16>
    tpu.vector_store %arg3[%c0_33, %c1_34, %c0_35], %51 {strides = array<i32>} : memref<2x18x128xbf16, #tpu.memory_space<vmem>>, vector<2x16x128xbf16>,
    return
  }
  func.func @transform_0(%arg0: i32) -> (i32, i32, i32) {
    %c0_i32 = arith.constant 0 : i32
    %c0_i32_0 = arith.constant 0 : i32
    %c0_i32_1 = arith.constant 0 : i32
    return %arg0, %c0_i32, %c0_i32_0 : i32, i32, i32
  }
  func.func @transform_1(%arg0: i32) -> (i32, i32, i32) {
    %c0_i32 = arith.constant 0 : i32
    %c0_i32_0 = arith.constant 0 : i32
    %c0_i32_1 = arith.constant 0 : i32
    %c0_i32_2 = arith.constant 0 : i32
    return %c0_i32, %c0_i32_0, %c0_i32_1 : i32, i32, i32
  }
  func.func @transform_2(%arg0: i32) -> (i32, i32, i32) {
    %c0_i32 = arith.constant 0 : i32
    %c0_i32_0 = arith.constant 0 : i32
    %c0_i32_1 = arith.constant 0 : i32
    return %arg0, %c0_i32, %c0_i32_0 : i32, i32, i32
  }
}

module attributes {stable_mosaic.version = 11 : i64} {
  func.func @kernel(%arg0: i32, %arg1: memref<2x9x256xbf16, #tpu.memory_space<vmem>>, %arg2: memref<1x256x128xbf16, #tpu.memory_space<vmem>>, %arg3: memref<2x8x128xbf16, #tpu.memory_space<vmem>>) attributes {dimension_semantics = [#tpu.dimension_semantics<parallel>], iteration_bounds = array<i64: 2>, scalar_prefetch = 0 : i64, scratch_operands = 0 : i64, tpu.core_type = #tpu.core_type<tc>, window_params = [{transform_indices = @transform_0, window_bounds = array<i64: 2, 9, 256>}, {pipeline_mode = #tpu.pipeline_mode<synchronous>, transform_indices = @transform_1, window_bounds = array<i64: 1, 256, 128>}, {transform_indices = @transform_2, window_bounds = array<i64: 2, 8, 128>}]} {
    %c0 = arith.constant 0 : index
    %c0_0 = arith.constant 0 : index
    %c0_1 = arith.constant 0 : index
    %0 = vector.load %arg1[%c0, %c0_0, %c0_1] : memref<2x9x256xbf16, #tpu.memory_space<vmem>>, vector<2x8x256xbf16>
    %1 = vector.shape_cast %0 : vector<2x8x256xbf16> to vector<16x256xbf16>
    %c0_2 = arith.constant 0 : index
    %c0_3 = arith.constant 0 : index
    %c0_4 = arith.constant 0 : index
    %2 = vector.load %arg2[%c0_2, %c0_3, %c0_4] : memref<1x256x128xbf16, #tpu.memory_space<vmem>>, vector<1x256x128xbf16>
    %3 = vector.shape_cast %2 : vector<1x256x128xbf16> to vector<256x128xbf16>
    %cst = arith.constant dense<0.000000e+00> : vector<16x128xf32>
    %4 = tpu.matmul %1, %3, %cst {dimension_numbers = #tpu.dot_dimension_numbers<[1], [0], [0], [1], [0, 0, 1, 1], [], []>} : vector<16x256xbf16>, vector<256x128xbf16>, vector<16x128xf32> -> vector<16x128xf32>
    %5 = vector.shape_cast %4 : vector<16x128xf32> to vector<2x8x128xf32>
    %cst_5 = arith.constant dense<0.000000e+00> : vector<2x8xf32>
    %6 = vector.multi_reduction <add>, %5, %cst_5 [2] : vector<2x8x128xf32> to vector<2x8xf32>
    %7 = vector.shape_cast %6 : vector<2x8xf32> to vector<2x8x1xf32>
    %cst_6 = arith.constant dense<0.000000e+00> : vector<2x1xf32>
    %8 = vector.multi_reduction <add>, %7, %cst_6 [1] : vector<2x8x1xf32> to vector<2x1xf32>
    %9 = vector.shape_cast %8 : vector<2x1xf32> to vector<2x1x1xf32>
    %10 = arith.mulf %5, %5 : vector<2x8x128xf32>
    %cst_7 = arith.constant dense<0.000000e+00> : vector<2x8xf32>
    %11 = vector.multi_reduction <add>, %10, %cst_7 [2] : vector<2x8x128xf32> to vector<2x8xf32>
    %12 = vector.shape_cast %11 : vector<2x8xf32> to vector<2x8x1xf32>
    %cst_8 = arith.constant dense<0.000000e+00> : vector<2x1xf32>
    %13 = vector.multi_reduction <add>, %12, %cst_8 [1] : vector<2x8x1xf32> to vector<2x1xf32>
    %14 = vector.shape_cast %13 : vector<2x1xf32> to vector<2x1x1xf32>
    %cst_9 = arith.constant 7.812500e-03 : f32
    %15 = vector.broadcast %cst_9 : f32 to vector<2x1x1xf32>
    %16 = arith.mulf %9, %15 : vector<2x1x1xf32>
    %cst_10 = arith.constant 7.812500e-03 : f32
    %17 = vector.broadcast %cst_10 : f32 to vector<2x1x1xf32>
    %18 = arith.mulf %14, %17 : vector<2x1x1xf32>
    %19 = arith.mulf %16, %16 : vector<2x1x1xf32>
    %20 = arith.subf %18, %19 : vector<2x1x1xf32>
    %21 = vector.broadcast %16 : vector<2x1x1xf32> to vector<2x8x128xf32>
    %22 = arith.subf %5, %21 : vector<2x8x128xf32>
    %cst_11 = arith.constant 9.99999974E-6 : f32
    %23 = vector.broadcast %cst_11 : f32 to vector<2x1x1xf32>
    %24 = arith.addf %20, %23 : vector<2x1x1xf32>
    %25 = math.rsqrt %24 : vector<2x1x1xf32>
    %26 = vector.broadcast %25 : vector<2x1x1xf32> to vector<2x8x128xf32>
    %27 = arith.mulf %22, %26 : vector<2x8x128xf32>
    %28 = tpu.iota {dimensions = array<i32: 2>} : vector<2x8x128xi32>
    %c16_i32 = arith.constant 16 : i32
    %29 = vector.broadcast %c16_i32 : i32 to vector<2x8x128xi32>
    %30 = arith.cmpi slt, %28, %29 : vector<2x8x128xi32>
    %cst_12 = arith.constant 0.000000e+00 : f32
    %31 = vector.broadcast %cst_12 : f32 to vector<2x8x128xf32>
    %32 = arith.select %30, %27, %31 : vector<2x8x128xi1>, vector<2x8x128xf32>
    %33 = arith.truncf %32 : vector<2x8x128xf32> to vector<2x8x128xbf16>
    %c0_13 = arith.constant 0 : index
    %c0_14 = arith.constant 0 : index
    %c0_15 = arith.constant 0 : index
    %34 = vector.load %arg3[%c0_13, %c0_14, %c0_15] : memref<2x8x128xbf16, #tpu.memory_space<vmem>>, vector<2x8x128xbf16>
    tpu.vector_store %arg3[%c0_13, %c0_14, %c0_15], %33 {strides = array<i32>} : memref<2x8x128xbf16, #tpu.memory_space<vmem>>, vector<2x8x128xbf16>,
    return
  }
  func.func @transform_0(%arg0: i32) -> (i32, i32, i32) {
    %c0_i32 = arith.constant 0 : i32
    %c0_i32_0 = arith.constant 0 : i32
    %c0_i32_1 = arith.constant 0 : i32
    return %arg0, %c0_i32, %c0_i32_0 : i32, i32, i32
  }
  func.func @transform_1(%arg0: i32) -> (i32, i32, i32) {
    %c0_i32 = arith.constant 0 : i32
    %c0_i32_0 = arith.constant 0 : i32
    %c0_i32_1 = arith.constant 0 : i32
    %c0_i32_2 = arith.constant 0 : i32
    return %c0_i32, %c0_i32_0, %c0_i32_1 : i32, i32, i32
  }
  func.func @transform_2(%arg0: i32) -> (i32, i32, i32) {
    %c0_i32 = arith.constant 0 : i32
    %c0_i32_0 = arith.constant 0 : i32
    %c0_i32_1 = arith.constant 0 : i32
    return %arg0, %c0_i32, %c0_i32_0 : i32, i32, i32
  }
}

module attributes {stable_mosaic.version = 11 : i64} {
  func.func @kernel(%arg0: i32, %arg1: memref<2x9x256xbf16, #tpu.memory_space<vmem>>, %arg2: memref<2x256x128xbf16, #tpu.memory_space<vmem>>, %arg3: memref<2x10x128xbf16, #tpu.memory_space<vmem>>) attributes {dimension_semantics = [#tpu.dimension_semantics<parallel>], iteration_bounds = array<i64: 2>, scalar_prefetch = 0 : i64, scratch_operands = 0 : i64, tpu.core_type = #tpu.core_type<tc>, window_params = [{transform_indices = @transform_0, window_bounds = array<i64: 2, 9, 256>}, {pipeline_mode = #tpu.pipeline_mode<synchronous>, transform_indices = @transform_1, window_bounds = array<i64: 2, 256, 128>}, {transform_indices = @transform_2, window_bounds = array<i64: 2, 10, 128>}]} {
    %c0 = arith.constant 0 : index
    %c0_0 = arith.constant 0 : index
    %c0_1 = arith.constant 0 : index
    %0 = vector.load %arg1[%c0, %c0_0, %c0_1] : memref<2x9x256xbf16, #tpu.memory_space<vmem>>, vector<2x8x256xbf16>
    %1 = vector.shape_cast %0 : vector<2x8x256xbf16> to vector<16x256xbf16>
    %c0_2 = arith.constant 0 : index
    %c0_3 = arith.constant 0 : index
    %c0_4 = arith.constant 0 : index
    %2 = vector.load %arg2[%c0_2, %c0_3, %c0_4] : memref<2x256x128xbf16, #tpu.memory_space<vmem>>, vector<1x256x128xbf16>
    %3 = vector.shape_cast %2 : vector<1x256x128xbf16> to vector<256x128xbf16>
    %cst = arith.constant dense<0.000000e+00> : vector<16x128xf32>
    %4 = tpu.matmul %1, %3, %cst {dimension_numbers = #tpu.dot_dimension_numbers<[1], [0], [0], [1], [0, 0, 1, 1], [], []>} : vector<16x256xbf16>, vector<256x128xbf16>, vector<16x128xf32> -> vector<16x128xf32>
    %c0_5 = arith.constant 0 : index
    %c1 = arith.constant 1 : index
    %c0_6 = arith.constant 0 : index
    %5 = vector.load %arg1[%c0_5, %c1, %c0_6] : memref<2x9x256xbf16, #tpu.memory_space<vmem>>, vector<2x8x256xbf16>
    %6 = vector.shape_cast %5 : vector<2x8x256xbf16> to vector<16x256xbf16>
    %c1_7 = arith.constant 1 : index
    %c0_8 = arith.constant 0 : index
    %c0_9 = arith.constant 0 : index
    %7 = vector.load %arg2[%c1_7, %c0_8, %c0_9] : memref<2x256x128xbf16, #tpu.memory_space<vmem>>, vector<1x256x128xbf16>
    %8 = vector.shape_cast %7 : vector<1x256x128xbf16> to vector<256x128xbf16>
    %cst_10 = arith.constant dense<0.000000e+00> : vector<16x128xf32>
    %9 = tpu.matmul %6, %8, %cst_10 {dimension_numbers = #tpu.dot_dimension_numbers<[1], [0], [0], [1], [0, 0, 1, 1], [], []>} : vector<16x256xbf16>, vector<256x128xbf16>, vector<16x128xf32> -> vector<16x128xf32>
    %10 = arith.addf %4, %9 : vector<16x128xf32>
    %11 = vector.shape_cast %10 : vector<16x128xf32> to vector<2x8x128xf32>
    %cst_11 = arith.constant dense<0.000000e+00> : vector<2x8xf32>
    %12 = vector.multi_reduction <add>, %11, %cst_11 [2] : vector<2x8x128xf32> to vector<2x8xf32>
    %13 = vector.shape_cast %12 : vector<2x8xf32> to vector<2x8x1xf32>
    %cst_12 = arith.constant dense<0.000000e+00> : vector<2x1xf32>
    %14 = vector.multi_reduction <add>, %13, %cst_12 [1] : vector<2x8x1xf32> to vector<2x1xf32>
    %15 = vector.shape_cast %14 : vector<2x1xf32> to vector<2x1x1xf32>
    %16 = arith.mulf %11, %11 : vector<2x8x128xf32>
    %cst_13 = arith.constant dense<0.000000e+00> : vector<2x8xf32>
    %17 = vector.multi_reduction <add>, %16, %cst_13 [2] : vector<2x8x128xf32> to vector<2x8xf32>
    %18 = vector.shape_cast %17 : vector<2x8xf32> to vector<2x8x1xf32>
    %cst_14 = arith.constant dense<0.000000e+00> : vector<2x1xf32>
    %19 = vector.multi_reduction <add>, %18, %cst_14 [1] : vector<2x8x1xf32> to vector<2x1xf32>
    %20 = vector.shape_cast %19 : vector<2x1xf32> to vector<2x1x1xf32>
    %cst_15 = arith.constant 7.812500e-03 : f32
    %21 = vector.broadcast %cst_15 : f32 to vector<2x1x1xf32>
    %22 = arith.mulf %15, %21 : vector<2x1x1xf32>
    %cst_16 = arith.constant 7.812500e-03 : f32
    %23 = vector.broadcast %cst_16 : f32 to vector<2x1x1xf32>
    %24 = arith.mulf %20, %23 : vector<2x1x1xf32>
    %25 = arith.mulf %22, %22 : vector<2x1x1xf32>
    %26 = arith.subf %24, %25 : vector<2x1x1xf32>
    %27 = vector.broadcast %22 : vector<2x1x1xf32> to vector<2x8x128xf32>
    %28 = arith.subf %11, %27 : vector<2x8x128xf32>
    %cst_17 = arith.constant 9.99999974E-6 : f32
    %29 = vector.broadcast %cst_17 : f32 to vector<2x1x1xf32>
    %30 = arith.addf %26, %29 : vector<2x1x1xf32>
    %31 = math.rsqrt %30 : vector<2x1x1xf32>
    %32 = vector.broadcast %31 : vector<2x1x1xf32> to vector<2x8x128xf32>
    %33 = arith.mulf %28, %32 : vector<2x8x128xf32>
    %34 = tpu.iota {dimensions = array<i32: 2>} : vector<2x8x128xi32>
    %c16_i32 = arith.constant 16 : i32
    %35 = vector.broadcast %c16_i32 : i32 to vector<2x8x128xi32>
    %36 = arith.cmpi slt, %34, %35 : vector<2x8x128xi32>
    %cst_18 = arith.constant 0.000000e+00 : f32
    %37 = vector.broadcast %cst_18 : f32 to vector<2x8x128xf32>
    %38 = arith.select %36, %33, %37 : vector<2x8x128xi1>, vector<2x8x128xf32>
    %cst_19 = arith.constant 0.000000e+00 : f32
    %39 = vector.broadcast %cst_19 : f32 to vector<2x8x128xf32>
    %40 = arith.maximumf %38, %39 : vector<2x8x128xf32>
    %cst_20 = arith.constant 0.000000e+00 : bf16
    %41 = vector.broadcast %cst_20 : bf16 to vector<2x1x128xbf16>
    %c0_21 = arith.constant 0 : index
    %c0_22 = arith.constant 0 : index
    %c0_23 = arith.constant 0 : index
    %42 = vector.load %arg3[%c0_21, %c0_22, %c0_23] : memref<2x10x128xbf16, #tpu.memory_space<vmem>>, vector<2x1x128xbf16>
    tpu.vector_store %arg3[%c0_21, %c0_22, %c0_23], %41 {strides = array<i32>} : memref<2x10x128xbf16, #tpu.memory_space<vmem>>, vector<2x1x128xbf16>,
    %cst_24 = arith.constant 0.000000e+00 : bf16
    %43 = vector.broadcast %cst_24 : bf16 to vector<2x1x128xbf16>
    %c0_25 = arith.constant 0 : index
    %c9 = arith.constant 9 : index
    %c0_26 = arith.constant 0 : index
    %44 = vector.load %arg3[%c0_25, %c9, %c0_26] : memref<2x10x128xbf16, #tpu.memory_space<vmem>>, vector<2x1x128xbf16>
    tpu.vector_store %arg3[%c0_25, %c9, %c0_26], %43 {strides = array<i32>} : memref<2x10x128xbf16, #tpu.memory_space<vmem>>, vector<2x1x128xbf16>,
    %45 = arith.truncf %40 : vector<2x8x128xf32> to vector<2x8x128xbf16>
    %c0_27 = arith.constant 0 : index
    %c1_28 = arith.constant 1 : index
    %c0_29 = arith.constant 0 : index
    %46 = vector.load %arg3[%c0_27, %c1_28, %c0_29] : memref<2x10x128xbf16, #tpu.memory_space<vmem>>, vector<2x8x128xbf16>
    tpu.vector_store %arg3[%c0_27, %c1_28, %c0_29], %45 {strides = array<i32>} : memref<2x10x128xbf16, #tpu.memory_space<vmem>>, vector<2x8x128xbf16>,
    return
  }
  func.func @transform_0(%arg0: i32) -> (i32, i32, i32) {
    %c0_i32 = arith.constant 0 : i32
    %c0_i32_0 = arith.constant 0 : i32
    %c0_i32_1 = arith.constant 0 : i32
    return %arg0, %c0_i32, %c0_i32_0 : i32, i32, i32
  }
  func.func @transform_1(%arg0: i32) -> (i32, i32, i32) {
    %c0_i32 = arith.constant 0 : i32
    %c0_i32_0 = arith.constant 0 : i32
    %c0_i32_1 = arith.constant 0 : i32
    %c0_i32_2 = arith.constant 0 : i32
    return %c0_i32, %c0_i32_0, %c0_i32_1 : i32, i32, i32
  }
  func.func @transform_2(%arg0: i32) -> (i32, i32, i32) {
    %c0_i32 = arith.constant 0 : i32
    %c0_i32_0 = arith.constant 0 : i32
    %c0_i32_1 = arith.constant 0 : i32
    return %arg0, %c0_i32, %c0_i32_0 : i32, i32, i32
  }
}

module attributes {stable_mosaic.version = 11 : i64} {
  func.func @kernel(%arg0: i32, %arg1: memref<2x10x128xbf16, #tpu.memory_space<vmem>>, %arg2: memref<3x128x128xbf16, #tpu.memory_space<vmem>>, %arg3: memref<2x8x128xbf16, #tpu.memory_space<vmem>>, %arg4: memref<2x10x128xbf16, #tpu.memory_space<vmem>>) attributes {dimension_semantics = [#tpu.dimension_semantics<parallel>], iteration_bounds = array<i64: 2>, scalar_prefetch = 0 : i64, scratch_operands = 0 : i64, tpu.core_type = #tpu.core_type<tc>, window_params = [{transform_indices = @transform_0, window_bounds = array<i64: 2, 10, 128>}, {pipeline_mode = #tpu.pipeline_mode<synchronous>, transform_indices = @transform_1, window_bounds = array<i64: 3, 128, 128>}, {transform_indices = @transform_2, window_bounds = array<i64: 2, 8, 128>}, {transform_indices = @transform_3, window_bounds = array<i64: 2, 10, 128>}]} {
    %c0 = arith.constant 0 : index
    %c0_0 = arith.constant 0 : index
    %c0_1 = arith.constant 0 : index
    %0 = vector.load %arg1[%c0, %c0_0, %c0_1] : memref<2x10x128xbf16, #tpu.memory_space<vmem>>, vector<2x8x128xbf16>
    %1 = vector.shape_cast %0 : vector<2x8x128xbf16> to vector<16x128xbf16>
    %c0_2 = arith.constant 0 : index
    %c0_3 = arith.constant 0 : index
    %c0_4 = arith.constant 0 : index
    %2 = vector.load %arg2[%c0_2, %c0_3, %c0_4] : memref<3x128x128xbf16, #tpu.memory_space<vmem>>, vector<1x128x128xbf16>
    %3 = vector.shape_cast %2 : vector<1x128x128xbf16> to vector<128x128xbf16>
    %cst = arith.constant dense<0.000000e+00> : vector<16x128xf32>
    %4 = tpu.matmul %1, %3, %cst {dimension_numbers = #tpu.dot_dimension_numbers<[1], [0], [0], [1], [0, 0, 1, 1], [], []>} : vector<16x128xbf16>, vector<128x128xbf16>, vector<16x128xf32> -> vector<16x128xf32>
    %c0_5 = arith.constant 0 : index
    %c1 = arith.constant 1 : index
    %c0_6 = arith.constant 0 : index
    %5 = vector.load %arg1[%c0_5, %c1, %c0_6] : memref<2x10x128xbf16, #tpu.memory_space<vmem>>, vector<2x8x128xbf16>
    %6 = vector.shape_cast %5 : vector<2x8x128xbf16> to vector<16x128xbf16>
    %c1_7 = arith.constant 1 : index
    %c0_8 = arith.constant 0 : index
    %c0_9 = arith.constant 0 : index
    %7 = vector.load %arg2[%c1_7, %c0_8, %c0_9] : memref<3x128x128xbf16, #tpu.memory_space<vmem>>, vector<1x128x128xbf16>
    %8 = vector.shape_cast %7 : vector<1x128x128xbf16> to vector<128x128xbf16>
    %cst_10 = arith.constant dense<0.000000e+00> : vector<16x128xf32>
    %9 = tpu.matmul %6, %8, %cst_10 {dimension_numbers = #tpu.dot_dimension_numbers<[1], [0], [0], [1], [0, 0, 1, 1], [], []>} : vector<16x128xbf16>, vector<128x128xbf16>, vector<16x128xf32> -> vector<16x128xf32>
    %10 = arith.addf %4, %9 : vector<16x128xf32>
    %c0_11 = arith.constant 0 : index
    %c2 = arith.constant 2 : index
    %c0_12 = arith.constant 0 : index
    %11 = vector.load %arg1[%c0_11, %c2, %c0_12] : memref<2x10x128xbf16, #tpu.memory_space<vmem>>, vector<2x8x128xbf16>
    %12 = vector.shape_cast %11 : vector<2x8x128xbf16> to vector<16x128xbf16>
    %c2_13 = arith.constant 2 : index
    %c0_14 = arith.constant 0 : index
    %c0_15 = arith.constant 0 : index
    %13 = vector.load %arg2[%c2_13, %c0_14, %c0_15] : memref<3x128x128xbf16, #tpu.memory_space<vmem>>, vector<1x128x128xbf16>
    %14 = vector.shape_cast %13 : vector<1x128x128xbf16> to vector<128x128xbf16>
    %cst_16 = arith.constant dense<0.000000e+00> : vector<16x128xf32>
    %15 = tpu.matmul %12, %14, %cst_16 {dimension_numbers = #tpu.dot_dimension_numbers<[1], [0], [0], [1], [0, 0, 1, 1], [], []>} : vector<16x128xbf16>, vector<128x128xbf16>, vector<16x128xf32> -> vector<16x128xf32>
    %16 = arith.addf %10, %15 : vector<16x128xf32>
    %17 = vector.shape_cast %16 : vector<16x128xf32> to vector<2x8x128xf32>
    %cst_17 = arith.constant dense<0.000000e+00> : vector<2x8xf32>
    %18 = vector.multi_reduction <add>, %17, %cst_17 [2] : vector<2x8x128xf32> to vector<2x8xf32>
    %19 = vector.shape_cast %18 : vector<2x8xf32> to vector<2x8x1xf32>
    %cst_18 = arith.constant dense<0.000000e+00> : vector<2x1xf32>
    %20 = vector.multi_reduction <add>, %19, %cst_18 [1] : vector<2x8x1xf32> to vector<2x1xf32>
    %21 = vector.shape_cast %20 : vector<2x1xf32> to vector<2x1x1xf32>
    %22 = arith.mulf %17, %17 : vector<2x8x128xf32>
    %cst_19 = arith.constant dense<0.000000e+00> : vector<2x8xf32>
    %23 = vector.multi_reduction <add>, %22, %cst_19 [2] : vector<2x8x128xf32> to vector<2x8xf32>
    %24 = vector.shape_cast %23 : vector<2x8xf32> to vector<2x8x1xf32>
    %cst_20 = arith.constant dense<0.000000e+00> : vector<2x1xf32>
    %25 = vector.multi_reduction <add>, %24, %cst_20 [1] : vector<2x8x1xf32> to vector<2x1xf32>
    %26 = vector.shape_cast %25 : vector<2x1xf32> to vector<2x1x1xf32>
    %cst_21 = arith.constant 7.812500e-03 : f32
    %27 = vector.broadcast %cst_21 : f32 to vector<2x1x1xf32>
    %28 = arith.mulf %21, %27 : vector<2x1x1xf32>
    %cst_22 = arith.constant 7.812500e-03 : f32
    %29 = vector.broadcast %cst_22 : f32 to vector<2x1x1xf32>
    %30 = arith.mulf %26, %29 : vector<2x1x1xf32>
    %31 = arith.mulf %28, %28 : vector<2x1x1xf32>
    %32 = arith.subf %30, %31 : vector<2x1x1xf32>
    %33 = vector.broadcast %28 : vector<2x1x1xf32> to vector<2x8x128xf32>
    %34 = arith.subf %17, %33 : vector<2x8x128xf32>
    %cst_23 = arith.constant 9.99999974E-6 : f32
    %35 = vector.broadcast %cst_23 : f32 to vector<2x1x1xf32>
    %36 = arith.addf %32, %35 : vector<2x1x1xf32>
    %37 = math.rsqrt %36 : vector<2x1x1xf32>
    %38 = vector.broadcast %37 : vector<2x1x1xf32> to vector<2x8x128xf32>
    %39 = arith.mulf %34, %38 : vector<2x8x128xf32>
    %40 = tpu.iota {dimensions = array<i32: 2>} : vector<2x8x128xi32>
    %c16_i32 = arith.constant 16 : i32
    %41 = vector.broadcast %c16_i32 : i32 to vector<2x8x128xi32>
    %42 = arith.cmpi slt, %40, %41 : vector<2x8x128xi32>
    %cst_24 = arith.constant 0.000000e+00 : f32
    %43 = vector.broadcast %cst_24 : f32 to vector<2x8x128xf32>
    %44 = arith.select %42, %39, %43 : vector<2x8x128xi1>, vector<2x8x128xf32>
    %c0_25 = arith.constant 0 : index
    %c0_26 = arith.constant 0 : index
    %c0_27 = arith.constant 0 : index
    %45 = vector.load %arg3[%c0_25, %c0_26, %c0_27] : memref<2x8x128xbf16, #tpu.memory_space<vmem>>, vector<2x8x128xbf16>
    %46 = arith.extf %45 : vector<2x8x128xbf16> to vector<2x8x128xf32>
    %47 = arith.addf %44, %46 : vector<2x8x128xf32>
    %cst_28 = arith.constant 0.000000e+00 : f32
    %48 = vector.broadcast %cst_28 : f32 to vector<2x8x128xf32>
    %49 = arith.maximumf %47, %48 : vector<2x8x128xf32>
    %cst_29 = arith.constant 0.000000e+00 : bf16
    %50 = vector.broadcast %cst_29 : bf16 to vector<2x1x128xbf16>
    %c0_30 = arith.constant 0 : index
    %c0_31 = arith.constant 0 : index
    %c0_32 = arith.constant 0 : index
    %51 = vector.load %arg4[%c0_30, %c0_31, %c0_32] : memref<2x10x128xbf16, #tpu.memory_space<vmem>>, vector<2x1x128xbf16>
    tpu.vector_store %arg4[%c0_30, %c0_31, %c0_32], %50 {strides = array<i32>} : memref<2x10x128xbf16, #tpu.memory_space<vmem>>, vector<2x1x128xbf16>,
    %cst_33 = arith.constant 0.000000e+00 : bf16
    %52 = vector.broadcast %cst_33 : bf16 to vector<2x1x128xbf16>
    %c0_34 = arith.constant 0 : index
    %c9 = arith.constant 9 : index
    %c0_35 = arith.constant 0 : index
    %53 = vector.load %arg4[%c0_34, %c9, %c0_35] : memref<2x10x128xbf16, #tpu.memory_space<vmem>>, vector<2x1x128xbf16>
    tpu.vector_store %arg4[%c0_34, %c9, %c0_35], %52 {strides = array<i32>} : memref<2x10x128xbf16, #tpu.memory_space<vmem>>, vector<2x1x128xbf16>,
    %54 = arith.truncf %49 : vector<2x8x128xf32> to vector<2x8x128xbf16>
    %c0_36 = arith.constant 0 : index
    %c1_37 = arith.constant 1 : index
    %c0_38 = arith.constant 0 : index
    %55 = vector.load %arg4[%c0_36, %c1_37, %c0_38] : memref<2x10x128xbf16, #tpu.memory_space<vmem>>, vector<2x8x128xbf16>
    tpu.vector_store %arg4[%c0_36, %c1_37, %c0_38], %54 {strides = array<i32>} : memref<2x10x128xbf16, #tpu.memory_space<vmem>>, vector<2x8x128xbf16>,
    return
  }
  func.func @transform_0(%arg0: i32) -> (i32, i32, i32) {
    %c0_i32 = arith.constant 0 : i32
    %c0_i32_0 = arith.constant 0 : i32
    %c0_i32_1 = arith.constant 0 : i32
    return %arg0, %c0_i32, %c0_i32_0 : i32, i32, i32
  }
  func.func @transform_1(%arg0: i32) -> (i32, i32, i32) {
    %c0_i32 = arith.constant 0 : i32
    %c0_i32_0 = arith.constant 0 : i32
    %c0_i32_1 = arith.constant 0 : i32
    %c0_i32_2 = arith.constant 0 : i32
    return %c0_i32, %c0_i32_0, %c0_i32_1 : i32, i32, i32
  }
  func.func @transform_2(%arg0: i32) -> (i32, i32, i32) {
    %c0_i32 = arith.constant 0 : i32
    %c0_i32_0 = arith.constant 0 : i32
    %c0_i32_1 = arith.constant 0 : i32
    return %arg0, %c0_i32, %c0_i32_0 : i32, i32, i32
  }
  func.func @transform_3(%arg0: i32) -> (i32, i32, i32) {
    %c0_i32 = arith.constant 0 : i32
    %c0_i32_0 = arith.constant 0 : i32
    %c0_i32_1 = arith.constant 0 : i32
    return %arg0, %c0_i32, %c0_i32_0 : i32, i32, i32
  }
}

module attributes {stable_mosaic.version = 11 : i64} {
  func.func @kernel(%arg0: i32, %arg1: memref<2x5x256xbf16, #tpu.memory_space<vmem>>, %arg2: memref<1x256x128xbf16, #tpu.memory_space<vmem>>, %arg3: memref<2x4x128xbf16, #tpu.memory_space<vmem>>) attributes {dimension_semantics = [#tpu.dimension_semantics<parallel>], iteration_bounds = array<i64: 2>, scalar_prefetch = 0 : i64, scratch_operands = 0 : i64, tpu.core_type = #tpu.core_type<tc>, window_params = [{transform_indices = @transform_0, window_bounds = array<i64: 2, 5, 256>}, {pipeline_mode = #tpu.pipeline_mode<synchronous>, transform_indices = @transform_1, window_bounds = array<i64: 1, 256, 128>}, {transform_indices = @transform_2, window_bounds = array<i64: 2, 4, 128>}]} {
    %c0 = arith.constant 0 : index
    %c0_0 = arith.constant 0 : index
    %c0_1 = arith.constant 0 : index
    %0 = vector.load %arg1[%c0, %c0_0, %c0_1] : memref<2x5x256xbf16, #tpu.memory_space<vmem>>, vector<2x4x256xbf16>
    %1 = vector.shape_cast %0 : vector<2x4x256xbf16> to vector<8x256xbf16>
    %c0_2 = arith.constant 0 : index
    %c0_3 = arith.constant 0 : index
    %c0_4 = arith.constant 0 : index
    %2 = vector.load %arg2[%c0_2, %c0_3, %c0_4] : memref<1x256x128xbf16, #tpu.memory_space<vmem>>, vector<1x256x128xbf16>
    %3 = vector.shape_cast %2 : vector<1x256x128xbf16> to vector<256x128xbf16>
    %cst = arith.constant dense<0.000000e+00> : vector<8x128xf32>
    %4 = tpu.matmul %1, %3, %cst {dimension_numbers = #tpu.dot_dimension_numbers<[1], [0], [0], [1], [0, 0, 1, 1], [], []>} : vector<8x256xbf16>, vector<256x128xbf16>, vector<8x128xf32> -> vector<8x128xf32>
    %5 = vector.shape_cast %4 : vector<8x128xf32> to vector<2x4x128xf32>
    %cst_5 = arith.constant dense<0.000000e+00> : vector<2x4xf32>
    %6 = vector.multi_reduction <add>, %5, %cst_5 [2] : vector<2x4x128xf32> to vector<2x4xf32>
    %7 = vector.shape_cast %6 : vector<2x4xf32> to vector<2x4x1xf32>
    %cst_6 = arith.constant dense<0.000000e+00> : vector<2x1xf32>
    %8 = vector.multi_reduction <add>, %7, %cst_6 [1] : vector<2x4x1xf32> to vector<2x1xf32>
    %9 = vector.shape_cast %8 : vector<2x1xf32> to vector<2x1x1xf32>
    %10 = arith.mulf %5, %5 : vector<2x4x128xf32>
    %cst_7 = arith.constant dense<0.000000e+00> : vector<2x4xf32>
    %11 = vector.multi_reduction <add>, %10, %cst_7 [2] : vector<2x4x128xf32> to vector<2x4xf32>
    %12 = vector.shape_cast %11 : vector<2x4xf32> to vector<2x4x1xf32>
    %cst_8 = arith.constant dense<0.000000e+00> : vector<2x1xf32>
    %13 = vector.multi_reduction <add>, %12, %cst_8 [1] : vector<2x4x1xf32> to vector<2x1xf32>
    %14 = vector.shape_cast %13 : vector<2x1xf32> to vector<2x1x1xf32>
    %cst_9 = arith.constant 7.812500e-03 : f32
    %15 = vector.broadcast %cst_9 : f32 to vector<2x1x1xf32>
    %16 = arith.mulf %9, %15 : vector<2x1x1xf32>
    %cst_10 = arith.constant 7.812500e-03 : f32
    %17 = vector.broadcast %cst_10 : f32 to vector<2x1x1xf32>
    %18 = arith.mulf %14, %17 : vector<2x1x1xf32>
    %19 = arith.mulf %16, %16 : vector<2x1x1xf32>
    %20 = arith.subf %18, %19 : vector<2x1x1xf32>
    %21 = vector.broadcast %16 : vector<2x1x1xf32> to vector<2x4x128xf32>
    %22 = arith.subf %5, %21 : vector<2x4x128xf32>
    %cst_11 = arith.constant 9.99999974E-6 : f32
    %23 = vector.broadcast %cst_11 : f32 to vector<2x1x1xf32>
    %24 = arith.addf %20, %23 : vector<2x1x1xf32>
    %25 = math.rsqrt %24 : vector<2x1x1xf32>
    %26 = vector.broadcast %25 : vector<2x1x1xf32> to vector<2x4x128xf32>
    %27 = arith.mulf %22, %26 : vector<2x4x128xf32>
    %28 = tpu.iota {dimensions = array<i32: 2>} : vector<2x4x128xi32>
    %c32_i32 = arith.constant 32 : i32
    %29 = vector.broadcast %c32_i32 : i32 to vector<2x4x128xi32>
    %30 = arith.cmpi slt, %28, %29 : vector<2x4x128xi32>
    %cst_12 = arith.constant 0.000000e+00 : f32
    %31 = vector.broadcast %cst_12 : f32 to vector<2x4x128xf32>
    %32 = arith.select %30, %27, %31 : vector<2x4x128xi1>, vector<2x4x128xf32>
    %33 = arith.truncf %32 : vector<2x4x128xf32> to vector<2x4x128xbf16>
    %c0_13 = arith.constant 0 : index
    %c0_14 = arith.constant 0 : index
    %c0_15 = arith.constant 0 : index
    %34 = vector.load %arg3[%c0_13, %c0_14, %c0_15] : memref<2x4x128xbf16, #tpu.memory_space<vmem>>, vector<2x4x128xbf16>
    tpu.vector_store %arg3[%c0_13, %c0_14, %c0_15], %33 {strides = array<i32>} : memref<2x4x128xbf16, #tpu.memory_space<vmem>>, vector<2x4x128xbf16>,
    return
  }
  func.func @transform_0(%arg0: i32) -> (i32, i32, i32) {
    %c0_i32 = arith.constant 0 : i32
    %c0_i32_0 = arith.constant 0 : i32
    %c0_i32_1 = arith.constant 0 : i32
    return %arg0, %c0_i32, %c0_i32_0 : i32, i32, i32
  }
  func.func @transform_1(%arg0: i32) -> (i32, i32, i32) {
    %c0_i32 = arith.constant 0 : i32
    %c0_i32_0 = arith.constant 0 : i32
    %c0_i32_1 = arith.constant 0 : i32
    %c0_i32_2 = arith.constant 0 : i32
    return %c0_i32, %c0_i32_0, %c0_i32_1 : i32, i32, i32
  }
  func.func @transform_2(%arg0: i32) -> (i32, i32, i32) {
    %c0_i32 = arith.constant 0 : i32
    %c0_i32_0 = arith.constant 0 : i32
    %c0_i32_1 = arith.constant 0 : i32
    return %arg0, %c0_i32, %c0_i32_0 : i32, i32, i32
  }
}

module attributes {stable_mosaic.version = 11 : i64} {
  func.func @kernel(%arg0: i32, %arg1: memref<2x5x256xbf16, #tpu.memory_space<vmem>>, %arg2: memref<2x256x128xbf16, #tpu.memory_space<vmem>>, %arg3: memref<2x6x128xbf16, #tpu.memory_space<vmem>>) attributes {dimension_semantics = [#tpu.dimension_semantics<parallel>], iteration_bounds = array<i64: 2>, scalar_prefetch = 0 : i64, scratch_operands = 0 : i64, tpu.core_type = #tpu.core_type<tc>, window_params = [{transform_indices = @transform_0, window_bounds = array<i64: 2, 5, 256>}, {pipeline_mode = #tpu.pipeline_mode<synchronous>, transform_indices = @transform_1, window_bounds = array<i64: 2, 256, 128>}, {transform_indices = @transform_2, window_bounds = array<i64: 2, 6, 128>}]} {
    %c0 = arith.constant 0 : index
    %c0_0 = arith.constant 0 : index
    %c0_1 = arith.constant 0 : index
    %0 = vector.load %arg1[%c0, %c0_0, %c0_1] : memref<2x5x256xbf16, #tpu.memory_space<vmem>>, vector<2x4x256xbf16>
    %1 = vector.shape_cast %0 : vector<2x4x256xbf16> to vector<8x256xbf16>
    %c0_2 = arith.constant 0 : index
    %c0_3 = arith.constant 0 : index
    %c0_4 = arith.constant 0 : index
    %2 = vector.load %arg2[%c0_2, %c0_3, %c0_4] : memref<2x256x128xbf16, #tpu.memory_space<vmem>>, vector<1x256x128xbf16>
    %3 = vector.shape_cast %2 : vector<1x256x128xbf16> to vector<256x128xbf16>
    %cst = arith.constant dense<0.000000e+00> : vector<8x128xf32>
    %4 = tpu.matmul %1, %3, %cst {dimension_numbers = #tpu.dot_dimension_numbers<[1], [0], [0], [1], [0, 0, 1, 1], [], []>} : vector<8x256xbf16>, vector<256x128xbf16>, vector<8x128xf32> -> vector<8x128xf32>
    %c0_5 = arith.constant 0 : index
    %c1 = arith.constant 1 : index
    %c0_6 = arith.constant 0 : index
    %5 = vector.load %arg1[%c0_5, %c1, %c0_6] : memref<2x5x256xbf16, #tpu.memory_space<vmem>>, vector<2x4x256xbf16>
    %6 = vector.shape_cast %5 : vector<2x4x256xbf16> to vector<8x256xbf16>
    %c1_7 = arith.constant 1 : index
    %c0_8 = arith.constant 0 : index
    %c0_9 = arith.constant 0 : index
    %7 = vector.load %arg2[%c1_7, %c0_8, %c0_9] : memref<2x256x128xbf16, #tpu.memory_space<vmem>>, vector<1x256x128xbf16>
    %8 = vector.shape_cast %7 : vector<1x256x128xbf16> to vector<256x128xbf16>
    %cst_10 = arith.constant dense<0.000000e+00> : vector<8x128xf32>
    %9 = tpu.matmul %6, %8, %cst_10 {dimension_numbers = #tpu.dot_dimension_numbers<[1], [0], [0], [1], [0, 0, 1, 1], [], []>} : vector<8x256xbf16>, vector<256x128xbf16>, vector<8x128xf32> -> vector<8x128xf32>
    %10 = arith.addf %4, %9 : vector<8x128xf32>
    %11 = vector.shape_cast %10 : vector<8x128xf32> to vector<2x4x128xf32>
    %cst_11 = arith.constant dense<0.000000e+00> : vector<2x4xf32>
    %12 = vector.multi_reduction <add>, %11, %cst_11 [2] : vector<2x4x128xf32> to vector<2x4xf32>
    %13 = vector.shape_cast %12 : vector<2x4xf32> to vector<2x4x1xf32>
    %cst_12 = arith.constant dense<0.000000e+00> : vector<2x1xf32>
    %14 = vector.multi_reduction <add>, %13, %cst_12 [1] : vector<2x4x1xf32> to vector<2x1xf32>
    %15 = vector.shape_cast %14 : vector<2x1xf32> to vector<2x1x1xf32>
    %16 = arith.mulf %11, %11 : vector<2x4x128xf32>
    %cst_13 = arith.constant dense<0.000000e+00> : vector<2x4xf32>
    %17 = vector.multi_reduction <add>, %16, %cst_13 [2] : vector<2x4x128xf32> to vector<2x4xf32>
    %18 = vector.shape_cast %17 : vector<2x4xf32> to vector<2x4x1xf32>
    %cst_14 = arith.constant dense<0.000000e+00> : vector<2x1xf32>
    %19 = vector.multi_reduction <add>, %18, %cst_14 [1] : vector<2x4x1xf32> to vector<2x1xf32>
    %20 = vector.shape_cast %19 : vector<2x1xf32> to vector<2x1x1xf32>
    %cst_15 = arith.constant 7.812500e-03 : f32
    %21 = vector.broadcast %cst_15 : f32 to vector<2x1x1xf32>
    %22 = arith.mulf %15, %21 : vector<2x1x1xf32>
    %cst_16 = arith.constant 7.812500e-03 : f32
    %23 = vector.broadcast %cst_16 : f32 to vector<2x1x1xf32>
    %24 = arith.mulf %20, %23 : vector<2x1x1xf32>
    %25 = arith.mulf %22, %22 : vector<2x1x1xf32>
    %26 = arith.subf %24, %25 : vector<2x1x1xf32>
    %27 = vector.broadcast %22 : vector<2x1x1xf32> to vector<2x4x128xf32>
    %28 = arith.subf %11, %27 : vector<2x4x128xf32>
    %cst_17 = arith.constant 9.99999974E-6 : f32
    %29 = vector.broadcast %cst_17 : f32 to vector<2x1x1xf32>
    %30 = arith.addf %26, %29 : vector<2x1x1xf32>
    %31 = math.rsqrt %30 : vector<2x1x1xf32>
    %32 = vector.broadcast %31 : vector<2x1x1xf32> to vector<2x4x128xf32>
    %33 = arith.mulf %28, %32 : vector<2x4x128xf32>
    %34 = tpu.iota {dimensions = array<i32: 2>} : vector<2x4x128xi32>
    %c32_i32 = arith.constant 32 : i32
    %35 = vector.broadcast %c32_i32 : i32 to vector<2x4x128xi32>
    %36 = arith.cmpi slt, %34, %35 : vector<2x4x128xi32>
    %cst_18 = arith.constant 0.000000e+00 : f32
    %37 = vector.broadcast %cst_18 : f32 to vector<2x4x128xf32>
    %38 = arith.select %36, %33, %37 : vector<2x4x128xi1>, vector<2x4x128xf32>
    %cst_19 = arith.constant 0.000000e+00 : f32
    %39 = vector.broadcast %cst_19 : f32 to vector<2x4x128xf32>
    %40 = arith.maximumf %38, %39 : vector<2x4x128xf32>
    %cst_20 = arith.constant 0.000000e+00 : bf16
    %41 = vector.broadcast %cst_20 : bf16 to vector<2x1x128xbf16>
    %c0_21 = arith.constant 0 : index
    %c0_22 = arith.constant 0 : index
    %c0_23 = arith.constant 0 : index
    %42 = vector.load %arg3[%c0_21, %c0_22, %c0_23] : memref<2x6x128xbf16, #tpu.memory_space<vmem>>, vector<2x1x128xbf16>
    tpu.vector_store %arg3[%c0_21, %c0_22, %c0_23], %41 {strides = array<i32>} : memref<2x6x128xbf16, #tpu.memory_space<vmem>>, vector<2x1x128xbf16>,
    %cst_24 = arith.constant 0.000000e+00 : bf16
    %43 = vector.broadcast %cst_24 : bf16 to vector<2x1x128xbf16>
    %c0_25 = arith.constant 0 : index
    %c5 = arith.constant 5 : index
    %c0_26 = arith.constant 0 : index
    %44 = vector.load %arg3[%c0_25, %c5, %c0_26] : memref<2x6x128xbf16, #tpu.memory_space<vmem>>, vector<2x1x128xbf16>
    tpu.vector_store %arg3[%c0_25, %c5, %c0_26], %43 {strides = array<i32>} : memref<2x6x128xbf16, #tpu.memory_space<vmem>>, vector<2x1x128xbf16>,
    %45 = arith.truncf %40 : vector<2x4x128xf32> to vector<2x4x128xbf16>
    %c0_27 = arith.constant 0 : index
    %c1_28 = arith.constant 1 : index
    %c0_29 = arith.constant 0 : index
    %46 = vector.load %arg3[%c0_27, %c1_28, %c0_29] : memref<2x6x128xbf16, #tpu.memory_space<vmem>>, vector<2x4x128xbf16>
    tpu.vector_store %arg3[%c0_27, %c1_28, %c0_29], %45 {strides = array<i32>} : memref<2x6x128xbf16, #tpu.memory_space<vmem>>, vector<2x4x128xbf16>,
    return
  }
  func.func @transform_0(%arg0: i32) -> (i32, i32, i32) {
    %c0_i32 = arith.constant 0 : i32
    %c0_i32_0 = arith.constant 0 : i32
    %c0_i32_1 = arith.constant 0 : i32
    return %arg0, %c0_i32, %c0_i32_0 : i32, i32, i32
  }
  func.func @transform_1(%arg0: i32) -> (i32, i32, i32) {
    %c0_i32 = arith.constant 0 : i32
    %c0_i32_0 = arith.constant 0 : i32
    %c0_i32_1 = arith.constant 0 : i32
    %c0_i32_2 = arith.constant 0 : i32
    return %c0_i32, %c0_i32_0, %c0_i32_1 : i32, i32, i32
  }
  func.func @transform_2(%arg0: i32) -> (i32, i32, i32) {
    %c0_i32 = arith.constant 0 : i32
    %c0_i32_0 = arith.constant 0 : i32
    %c0_i32_1 = arith.constant 0 : i32
    return %arg0, %c0_i32, %c0_i32_0 : i32, i32, i32
  }
}

module attributes {stable_mosaic.version = 11 : i64} {
  func.func @kernel(%arg0: i32, %arg1: memref<2x6x128xbf16, #tpu.memory_space<vmem>>, %arg2: memref<3x128x128xbf16, #tpu.memory_space<vmem>>, %arg3: memref<2x4x128xbf16, #tpu.memory_space<vmem>>, %arg4: memref<2x6x128xbf16, #tpu.memory_space<vmem>>) attributes {dimension_semantics = [#tpu.dimension_semantics<parallel>], iteration_bounds = array<i64: 2>, scalar_prefetch = 0 : i64, scratch_operands = 0 : i64, tpu.core_type = #tpu.core_type<tc>, window_params = [{transform_indices = @transform_0, window_bounds = array<i64: 2, 6, 128>}, {pipeline_mode = #tpu.pipeline_mode<synchronous>, transform_indices = @transform_1, window_bounds = array<i64: 3, 128, 128>}, {transform_indices = @transform_2, window_bounds = array<i64: 2, 4, 128>}, {transform_indices = @transform_3, window_bounds = array<i64: 2, 6, 128>}]} {
    %c0 = arith.constant 0 : index
    %c0_0 = arith.constant 0 : index
    %c0_1 = arith.constant 0 : index
    %0 = vector.load %arg1[%c0, %c0_0, %c0_1] : memref<2x6x128xbf16, #tpu.memory_space<vmem>>, vector<2x4x128xbf16>
    %1 = vector.shape_cast %0 : vector<2x4x128xbf16> to vector<8x128xbf16>
    %c0_2 = arith.constant 0 : index
    %c0_3 = arith.constant 0 : index
    %c0_4 = arith.constant 0 : index
    %2 = vector.load %arg2[%c0_2, %c0_3, %c0_4] : memref<3x128x128xbf16, #tpu.memory_space<vmem>>, vector<1x128x128xbf16>
    %3 = vector.shape_cast %2 : vector<1x128x128xbf16> to vector<128x128xbf16>
    %cst = arith.constant dense<0.000000e+00> : vector<8x128xf32>
    %4 = tpu.matmul %1, %3, %cst {dimension_numbers = #tpu.dot_dimension_numbers<[1], [0], [0], [1], [0, 0, 1, 1], [], []>} : vector<8x128xbf16>, vector<128x128xbf16>, vector<8x128xf32> -> vector<8x128xf32>
    %c0_5 = arith.constant 0 : index
    %c1 = arith.constant 1 : index
    %c0_6 = arith.constant 0 : index
    %5 = vector.load %arg1[%c0_5, %c1, %c0_6] : memref<2x6x128xbf16, #tpu.memory_space<vmem>>, vector<2x4x128xbf16>
    %6 = vector.shape_cast %5 : vector<2x4x128xbf16> to vector<8x128xbf16>
    %c1_7 = arith.constant 1 : index
    %c0_8 = arith.constant 0 : index
    %c0_9 = arith.constant 0 : index
    %7 = vector.load %arg2[%c1_7, %c0_8, %c0_9] : memref<3x128x128xbf16, #tpu.memory_space<vmem>>, vector<1x128x128xbf16>
    %8 = vector.shape_cast %7 : vector<1x128x128xbf16> to vector<128x128xbf16>
    %cst_10 = arith.constant dense<0.000000e+00> : vector<8x128xf32>
    %9 = tpu.matmul %6, %8, %cst_10 {dimension_numbers = #tpu.dot_dimension_numbers<[1], [0], [0], [1], [0, 0, 1, 1], [], []>} : vector<8x128xbf16>, vector<128x128xbf16>, vector<8x128xf32> -> vector<8x128xf32>
    %10 = arith.addf %4, %9 : vector<8x128xf32>
    %c0_11 = arith.constant 0 : index
    %c2 = arith.constant 2 : index
    %c0_12 = arith.constant 0 : index
    %11 = vector.load %arg1[%c0_11, %c2, %c0_12] : memref<2x6x128xbf16, #tpu.memory_space<vmem>>, vector<2x4x128xbf16>
    %12 = vector.shape_cast %11 : vector<2x4x128xbf16> to vector<8x128xbf16>
    %c2_13 = arith.constant 2 : index
    %c0_14 = arith.constant 0 : index
    %c0_15 = arith.constant 0 : index
    %13 = vector.load %arg2[%c2_13, %c0_14, %c0_15] : memref<3x128x128xbf16, #tpu.memory_space<vmem>>, vector<1x128x128xbf16>
    %14 = vector.shape_cast %13 : vector<1x128x128xbf16> to vector<128x128xbf16>
    %cst_16 = arith.constant dense<0.000000e+00> : vector<8x128xf32>
    %15 = tpu.matmul %12, %14, %cst_16 {dimension_numbers = #tpu.dot_dimension_numbers<[1], [0], [0], [1], [0, 0, 1, 1], [], []>} : vector<8x128xbf16>, vector<128x128xbf16>, vector<8x128xf32> -> vector<8x128xf32>
    %16 = arith.addf %10, %15 : vector<8x128xf32>
    %17 = vector.shape_cast %16 : vector<8x128xf32> to vector<2x4x128xf32>
    %cst_17 = arith.constant dense<0.000000e+00> : vector<2x4xf32>
    %18 = vector.multi_reduction <add>, %17, %cst_17 [2] : vector<2x4x128xf32> to vector<2x4xf32>
    %19 = vector.shape_cast %18 : vector<2x4xf32> to vector<2x4x1xf32>
    %cst_18 = arith.constant dense<0.000000e+00> : vector<2x1xf32>
    %20 = vector.multi_reduction <add>, %19, %cst_18 [1] : vector<2x4x1xf32> to vector<2x1xf32>
    %21 = vector.shape_cast %20 : vector<2x1xf32> to vector<2x1x1xf32>
    %22 = arith.mulf %17, %17 : vector<2x4x128xf32>
    %cst_19 = arith.constant dense<0.000000e+00> : vector<2x4xf32>
    %23 = vector.multi_reduction <add>, %22, %cst_19 [2] : vector<2x4x128xf32> to vector<2x4xf32>
    %24 = vector.shape_cast %23 : vector<2x4xf32> to vector<2x4x1xf32>
    %cst_20 = arith.constant dense<0.000000e+00> : vector<2x1xf32>
    %25 = vector.multi_reduction <add>, %24, %cst_20 [1] : vector<2x4x1xf32> to vector<2x1xf32>
    %26 = vector.shape_cast %25 : vector<2x1xf32> to vector<2x1x1xf32>
    %cst_21 = arith.constant 7.812500e-03 : f32
    %27 = vector.broadcast %cst_21 : f32 to vector<2x1x1xf32>
    %28 = arith.mulf %21, %27 : vector<2x1x1xf32>
    %cst_22 = arith.constant 7.812500e-03 : f32
    %29 = vector.broadcast %cst_22 : f32 to vector<2x1x1xf32>
    %30 = arith.mulf %26, %29 : vector<2x1x1xf32>
    %31 = arith.mulf %28, %28 : vector<2x1x1xf32>
    %32 = arith.subf %30, %31 : vector<2x1x1xf32>
    %33 = vector.broadcast %28 : vector<2x1x1xf32> to vector<2x4x128xf32>
    %34 = arith.subf %17, %33 : vector<2x4x128xf32>
    %cst_23 = arith.constant 9.99999974E-6 : f32
    %35 = vector.broadcast %cst_23 : f32 to vector<2x1x1xf32>
    %36 = arith.addf %32, %35 : vector<2x1x1xf32>
    %37 = math.rsqrt %36 : vector<2x1x1xf32>
    %38 = vector.broadcast %37 : vector<2x1x1xf32> to vector<2x4x128xf32>
    %39 = arith.mulf %34, %38 : vector<2x4x128xf32>
    %40 = tpu.iota {dimensions = array<i32: 2>} : vector<2x4x128xi32>
    %c32_i32 = arith.constant 32 : i32
    %41 = vector.broadcast %c32_i32 : i32 to vector<2x4x128xi32>
    %42 = arith.cmpi slt, %40, %41 : vector<2x4x128xi32>
    %cst_24 = arith.constant 0.000000e+00 : f32
    %43 = vector.broadcast %cst_24 : f32 to vector<2x4x128xf32>
    %44 = arith.select %42, %39, %43 : vector<2x4x128xi1>, vector<2x4x128xf32>
    %c0_25 = arith.constant 0 : index
    %c0_26 = arith.constant 0 : index
    %c0_27 = arith.constant 0 : index
    %45 = vector.load %arg3[%c0_25, %c0_26, %c0_27] : memref<2x4x128xbf16, #tpu.memory_space<vmem>>, vector<2x4x128xbf16>
    %46 = arith.extf %45 : vector<2x4x128xbf16> to vector<2x4x128xf32>
    %47 = arith.addf %44, %46 : vector<2x4x128xf32>
    %cst_28 = arith.constant 0.000000e+00 : f32
    %48 = vector.broadcast %cst_28 : f32 to vector<2x4x128xf32>
    %49 = arith.maximumf %47, %48 : vector<2x4x128xf32>
    %cst_29 = arith.constant 0.000000e+00 : bf16
    %50 = vector.broadcast %cst_29 : bf16 to vector<2x1x128xbf16>
    %c0_30 = arith.constant 0 : index
    %c0_31 = arith.constant 0 : index
    %c0_32 = arith.constant 0 : index
    %51 = vector.load %arg4[%c0_30, %c0_31, %c0_32] : memref<2x6x128xbf16, #tpu.memory_space<vmem>>, vector<2x1x128xbf16>
    tpu.vector_store %arg4[%c0_30, %c0_31, %c0_32], %50 {strides = array<i32>} : memref<2x6x128xbf16, #tpu.memory_space<vmem>>, vector<2x1x128xbf16>,
    %cst_33 = arith.constant 0.000000e+00 : bf16
    %52 = vector.broadcast %cst_33 : bf16 to vector<2x1x128xbf16>
    %c0_34 = arith.constant 0 : index
    %c5 = arith.constant 5 : index
    %c0_35 = arith.constant 0 : index
    %53 = vector.load %arg4[%c0_34, %c5, %c0_35] : memref<2x6x128xbf16, #tpu.memory_space<vmem>>, vector<2x1x128xbf16>
    tpu.vector_store %arg4[%c0_34, %c5, %c0_35], %52 {strides = array<i32>} : memref<2x6x128xbf16, #tpu.memory_space<vmem>>, vector<2x1x128xbf16>,
    %54 = arith.truncf %49 : vector<2x4x128xf32> to vector<2x4x128xbf16>
    %c0_36 = arith.constant 0 : index
    %c1_37 = arith.constant 1 : index
    %c0_38 = arith.constant 0 : index
    %55 = vector.load %arg4[%c0_36, %c1_37, %c0_38] : memref<2x6x128xbf16, #tpu.memory_space<vmem>>, vector<2x4x128xbf16>
    tpu.vector_store %arg4[%c0_36, %c1_37, %c0_38], %54 {strides = array<i32>} : memref<2x6x128xbf16, #tpu.memory_space<vmem>>, vector<2x4x128xbf16>,
    return
  }
  func.func @transform_0(%arg0: i32) -> (i32, i32, i32) {
    %c0_i32 = arith.constant 0 : i32
    %c0_i32_0 = arith.constant 0 : i32
    %c0_i32_1 = arith.constant 0 : i32
    return %arg0, %c0_i32, %c0_i32_0 : i32, i32, i32
  }
  func.func @transform_1(%arg0: i32) -> (i32, i32, i32) {
    %c0_i32 = arith.constant 0 : i32
    %c0_i32_0 = arith.constant 0 : i32
    %c0_i32_1 = arith.constant 0 : i32
    %c0_i32_2 = arith.constant 0 : i32
    return %c0_i32, %c0_i32_0, %c0_i32_1 : i32, i32, i32
  }
  func.func @transform_2(%arg0: i32) -> (i32, i32, i32) {
    %c0_i32 = arith.constant 0 : i32
    %c0_i32_0 = arith.constant 0 : i32
    %c0_i32_1 = arith.constant 0 : i32
    return %arg0, %c0_i32, %c0_i32_0 : i32, i32, i32
  }
  func.func @transform_3(%arg0: i32) -> (i32, i32, i32) {
    %c0_i32 = arith.constant 0 : i32
    %c0_i32_0 = arith.constant 0 : i32
    %c0_i32_1 = arith.constant 0 : i32
    return %arg0, %c0_i32, %c0_i32_0 : i32, i32, i32
  }
}

module attributes {stable_mosaic.version = 11 : i64} {
  func.func @kernel(%arg0: i32, %arg1: memref<2x3x256xbf16, #tpu.memory_space<vmem>>, %arg2: memref<2x256x128xbf16, #tpu.memory_space<vmem>>, %arg3: memref<2x4x128xbf16, #tpu.memory_space<vmem>>) attributes {dimension_semantics = [#tpu.dimension_semantics<parallel>], iteration_bounds = array<i64: 2>, scalar_prefetch = 0 : i64, scratch_operands = 0 : i64, tpu.core_type = #tpu.core_type<tc>, window_params = [{transform_indices = @transform_0, window_bounds = array<i64: 2, 3, 256>}, {pipeline_mode = #tpu.pipeline_mode<synchronous>, transform_indices = @transform_1, window_bounds = array<i64: 2, 256, 128>}, {transform_indices = @transform_2, window_bounds = array<i64: 2, 4, 128>}]} {
    %c0 = arith.constant 0 : index
    %c0_0 = arith.constant 0 : index
    %c0_1 = arith.constant 0 : index
    %0 = vector.load %arg1[%c0, %c0_0, %c0_1] : memref<2x3x256xbf16, #tpu.memory_space<vmem>>, vector<2x2x256xbf16>
    %1 = vector.shape_cast %0 : vector<2x2x256xbf16> to vector<4x256xbf16>
    %c0_2 = arith.constant 0 : index
    %c0_3 = arith.constant 0 : index
    %c0_4 = arith.constant 0 : index
    %2 = vector.load %arg2[%c0_2, %c0_3, %c0_4] : memref<2x256x128xbf16, #tpu.memory_space<vmem>>, vector<1x256x128xbf16>
    %3 = vector.shape_cast %2 : vector<1x256x128xbf16> to vector<256x128xbf16>
    %cst = arith.constant dense<0.000000e+00> : vector<4x128xf32>
    %4 = tpu.matmul %1, %3, %cst {dimension_numbers = #tpu.dot_dimension_numbers<[1], [0], [0], [1], [0, 0, 1, 1], [], []>} : vector<4x256xbf16>, vector<256x128xbf16>, vector<4x128xf32> -> vector<4x128xf32>
    %c0_5 = arith.constant 0 : index
    %c1 = arith.constant 1 : index
    %c0_6 = arith.constant 0 : index
    %5 = vector.load %arg1[%c0_5, %c1, %c0_6] : memref<2x3x256xbf16, #tpu.memory_space<vmem>>, vector<2x2x256xbf16>
    %6 = vector.shape_cast %5 : vector<2x2x256xbf16> to vector<4x256xbf16>
    %c1_7 = arith.constant 1 : index
    %c0_8 = arith.constant 0 : index
    %c0_9 = arith.constant 0 : index
    %7 = vector.load %arg2[%c1_7, %c0_8, %c0_9] : memref<2x256x128xbf16, #tpu.memory_space<vmem>>, vector<1x256x128xbf16>
    %8 = vector.shape_cast %7 : vector<1x256x128xbf16> to vector<256x128xbf16>
    %cst_10 = arith.constant dense<0.000000e+00> : vector<4x128xf32>
    %9 = tpu.matmul %6, %8, %cst_10 {dimension_numbers = #tpu.dot_dimension_numbers<[1], [0], [0], [1], [0, 0, 1, 1], [], []>} : vector<4x256xbf16>, vector<256x128xbf16>, vector<4x128xf32> -> vector<4x128xf32>
    %10 = arith.addf %4, %9 : vector<4x128xf32>
    %11 = vector.shape_cast %10 : vector<4x128xf32> to vector<2x2x128xf32>
    %cst_11 = arith.constant dense<0.000000e+00> : vector<2x2xf32>
    %12 = vector.multi_reduction <add>, %11, %cst_11 [2] : vector<2x2x128xf32> to vector<2x2xf32>
    %13 = vector.shape_cast %12 : vector<2x2xf32> to vector<2x2x1xf32>
    %cst_12 = arith.constant dense<0.000000e+00> : vector<2x1xf32>
    %14 = vector.multi_reduction <add>, %13, %cst_12 [1] : vector<2x2x1xf32> to vector<2x1xf32>
    %15 = vector.shape_cast %14 : vector<2x1xf32> to vector<2x1x1xf32>
    %16 = arith.mulf %11, %11 : vector<2x2x128xf32>
    %cst_13 = arith.constant dense<0.000000e+00> : vector<2x2xf32>
    %17 = vector.multi_reduction <add>, %16, %cst_13 [2] : vector<2x2x128xf32> to vector<2x2xf32>
    %18 = vector.shape_cast %17 : vector<2x2xf32> to vector<2x2x1xf32>
    %cst_14 = arith.constant dense<0.000000e+00> : vector<2x1xf32>
    %19 = vector.multi_reduction <add>, %18, %cst_14 [1] : vector<2x2x1xf32> to vector<2x1xf32>
    %20 = vector.shape_cast %19 : vector<2x1xf32> to vector<2x1x1xf32>
    %cst_15 = arith.constant 7.812500e-03 : f32
    %21 = vector.broadcast %cst_15 : f32 to vector<2x1x1xf32>
    %22 = arith.mulf %15, %21 : vector<2x1x1xf32>
    %cst_16 = arith.constant 7.812500e-03 : f32
    %23 = vector.broadcast %cst_16 : f32 to vector<2x1x1xf32>
    %24 = arith.mulf %20, %23 : vector<2x1x1xf32>
    %25 = arith.mulf %22, %22 : vector<2x1x1xf32>
    %26 = arith.subf %24, %25 : vector<2x1x1xf32>
    %27 = vector.broadcast %22 : vector<2x1x1xf32> to vector<2x2x128xf32>
    %28 = arith.subf %11, %27 : vector<2x2x128xf32>
    %cst_17 = arith.constant 9.99999974E-6 : f32
    %29 = vector.broadcast %cst_17 : f32 to vector<2x1x1xf32>
    %30 = arith.addf %26, %29 : vector<2x1x1xf32>
    %31 = math.rsqrt %30 : vector<2x1x1xf32>
    %32 = vector.broadcast %31 : vector<2x1x1xf32> to vector<2x2x128xf32>
    %33 = arith.mulf %28, %32 : vector<2x2x128xf32>
    %34 = tpu.iota {dimensions = array<i32: 2>} : vector<2x2x128xi32>
    %c64_i32 = arith.constant 64 : i32
    %35 = vector.broadcast %c64_i32 : i32 to vector<2x2x128xi32>
    %36 = arith.cmpi slt, %34, %35 : vector<2x2x128xi32>
    %cst_18 = arith.constant 0.000000e+00 : f32
    %37 = vector.broadcast %cst_18 : f32 to vector<2x2x128xf32>
    %38 = arith.select %36, %33, %37 : vector<2x2x128xi1>, vector<2x2x128xf32>
    %cst_19 = arith.constant 0.000000e+00 : f32
    %39 = vector.broadcast %cst_19 : f32 to vector<2x2x128xf32>
    %40 = arith.maximumf %38, %39 : vector<2x2x128xf32>
    %cst_20 = arith.constant 0.000000e+00 : bf16
    %41 = vector.broadcast %cst_20 : bf16 to vector<2x1x128xbf16>
    %c0_21 = arith.constant 0 : index
    %c0_22 = arith.constant 0 : index
    %c0_23 = arith.constant 0 : index
    %42 = vector.load %arg3[%c0_21, %c0_22, %c0_23] : memref<2x4x128xbf16, #tpu.memory_space<vmem>>, vector<2x1x128xbf16>
    tpu.vector_store %arg3[%c0_21, %c0_22, %c0_23], %41 {strides = array<i32>} : memref<2x4x128xbf16, #tpu.memory_space<vmem>>, vector<2x1x128xbf16>,
    %cst_24 = arith.constant 0.000000e+00 : bf16
    %43 = vector.broadcast %cst_24 : bf16 to vector<2x1x128xbf16>
    %c0_25 = arith.constant 0 : index
    %c3 = arith.constant 3 : index
    %c0_26 = arith.constant 0 : index
    %44 = vector.load %arg3[%c0_25, %c3, %c0_26] : memref<2x4x128xbf16, #tpu.memory_space<vmem>>, vector<2x1x128xbf16>
    tpu.vector_store %arg3[%c0_25, %c3, %c0_26], %43 {strides = array<i32>} : memref<2x4x128xbf16, #tpu.memory_space<vmem>>, vector<2x1x128xbf16>,
    %45 = arith.truncf %40 : vector<2x2x128xf32> to vector<2x2x128xbf16>
    %c0_27 = arith.constant 0 : index
    %c1_28 = arith.constant 1 : index
    %c0_29 = arith.constant 0 : index
    %46 = vector.load %arg3[%c0_27, %c1_28, %c0_29] : memref<2x4x128xbf16, #tpu.memory_space<vmem>>, vector<2x2x128xbf16>
    tpu.vector_store %arg3[%c0_27, %c1_28, %c0_29], %45 {strides = array<i32>} : memref<2x4x128xbf16, #tpu.memory_space<vmem>>, vector<2x2x128xbf16>,
    return
  }
  func.func @transform_0(%arg0: i32) -> (i32, i32, i32) {
    %c0_i32 = arith.constant 0 : i32
    %c0_i32_0 = arith.constant 0 : i32
    %c0_i32_1 = arith.constant 0 : i32
    return %arg0, %c0_i32, %c0_i32_0 : i32, i32, i32
  }
  func.func @transform_1(%arg0: i32) -> (i32, i32, i32) {
    %c0_i32 = arith.constant 0 : i32
    %c0_i32_0 = arith.constant 0 : i32
    %c0_i32_1 = arith.constant 0 : i32
    %c0_i32_2 = arith.constant 0 : i32
    return %c0_i32, %c0_i32_0, %c0_i32_1 : i32, i32, i32
  }
  func.func @transform_2(%arg0: i32) -> (i32, i32, i32) {
    %c0_i32 = arith.constant 0 : i32
    %c0_i32_0 = arith.constant 0 : i32
    %c0_i32_1 = arith.constant 0 : i32
    return %arg0, %c0_i32, %c0_i32_0 : i32, i32, i32
  }
}

module attributes {stable_mosaic.version = 11 : i64} {
  func.func @kernel(%arg0: i32, %arg1: memref<2x3x256xbf16, #tpu.memory_space<vmem>>, %arg2: memref<1x256x128xbf16, #tpu.memory_space<vmem>>, %arg3: memref<2x2x128xbf16, #tpu.memory_space<vmem>>) attributes {dimension_semantics = [#tpu.dimension_semantics<parallel>], iteration_bounds = array<i64: 2>, scalar_prefetch = 0 : i64, scratch_operands = 0 : i64, tpu.core_type = #tpu.core_type<tc>, window_params = [{transform_indices = @transform_0, window_bounds = array<i64: 2, 3, 256>}, {pipeline_mode = #tpu.pipeline_mode<synchronous>, transform_indices = @transform_1, window_bounds = array<i64: 1, 256, 128>}, {transform_indices = @transform_2, window_bounds = array<i64: 2, 2, 128>}]} {
    %c0 = arith.constant 0 : index
    %c0_0 = arith.constant 0 : index
    %c0_1 = arith.constant 0 : index
    %0 = vector.load %arg1[%c0, %c0_0, %c0_1] : memref<2x3x256xbf16, #tpu.memory_space<vmem>>, vector<2x2x256xbf16>
    %1 = vector.shape_cast %0 : vector<2x2x256xbf16> to vector<4x256xbf16>
    %c0_2 = arith.constant 0 : index
    %c0_3 = arith.constant 0 : index
    %c0_4 = arith.constant 0 : index
    %2 = vector.load %arg2[%c0_2, %c0_3, %c0_4] : memref<1x256x128xbf16, #tpu.memory_space<vmem>>, vector<1x256x128xbf16>
    %3 = vector.shape_cast %2 : vector<1x256x128xbf16> to vector<256x128xbf16>
    %cst = arith.constant dense<0.000000e+00> : vector<4x128xf32>
    %4 = tpu.matmul %1, %3, %cst {dimension_numbers = #tpu.dot_dimension_numbers<[1], [0], [0], [1], [0, 0, 1, 1], [], []>} : vector<4x256xbf16>, vector<256x128xbf16>, vector<4x128xf32> -> vector<4x128xf32>
    %5 = vector.shape_cast %4 : vector<4x128xf32> to vector<2x2x128xf32>
    %cst_5 = arith.constant dense<0.000000e+00> : vector<2x2xf32>
    %6 = vector.multi_reduction <add>, %5, %cst_5 [2] : vector<2x2x128xf32> to vector<2x2xf32>
    %7 = vector.shape_cast %6 : vector<2x2xf32> to vector<2x2x1xf32>
    %cst_6 = arith.constant dense<0.000000e+00> : vector<2x1xf32>
    %8 = vector.multi_reduction <add>, %7, %cst_6 [1] : vector<2x2x1xf32> to vector<2x1xf32>
    %9 = vector.shape_cast %8 : vector<2x1xf32> to vector<2x1x1xf32>
    %10 = arith.mulf %5, %5 : vector<2x2x128xf32>
    %cst_7 = arith.constant dense<0.000000e+00> : vector<2x2xf32>
    %11 = vector.multi_reduction <add>, %10, %cst_7 [2] : vector<2x2x128xf32> to vector<2x2xf32>
    %12 = vector.shape_cast %11 : vector<2x2xf32> to vector<2x2x1xf32>
    %cst_8 = arith.constant dense<0.000000e+00> : vector<2x1xf32>
    %13 = vector.multi_reduction <add>, %12, %cst_8 [1] : vector<2x2x1xf32> to vector<2x1xf32>
    %14 = vector.shape_cast %13 : vector<2x1xf32> to vector<2x1x1xf32>
    %cst_9 = arith.constant 7.812500e-03 : f32
    %15 = vector.broadcast %cst_9 : f32 to vector<2x1x1xf32>
    %16 = arith.mulf %9, %15 : vector<2x1x1xf32>
    %cst_10 = arith.constant 7.812500e-03 : f32
    %17 = vector.broadcast %cst_10 : f32 to vector<2x1x1xf32>
    %18 = arith.mulf %14, %17 : vector<2x1x1xf32>
    %19 = arith.mulf %16, %16 : vector<2x1x1xf32>
    %20 = arith.subf %18, %19 : vector<2x1x1xf32>
    %21 = vector.broadcast %16 : vector<2x1x1xf32> to vector<2x2x128xf32>
    %22 = arith.subf %5, %21 : vector<2x2x128xf32>
    %cst_11 = arith.constant 9.99999974E-6 : f32
    %23 = vector.broadcast %cst_11 : f32 to vector<2x1x1xf32>
    %24 = arith.addf %20, %23 : vector<2x1x1xf32>
    %25 = math.rsqrt %24 : vector<2x1x1xf32>
    %26 = vector.broadcast %25 : vector<2x1x1xf32> to vector<2x2x128xf32>
    %27 = arith.mulf %22, %26 : vector<2x2x128xf32>
    %28 = tpu.iota {dimensions = array<i32: 2>} : vector<2x2x128xi32>
    %c64_i32 = arith.constant 64 : i32
    %29 = vector.broadcast %c64_i32 : i32 to vector<2x2x128xi32>
    %30 = arith.cmpi slt, %28, %29 : vector<2x2x128xi32>
    %cst_12 = arith.constant 0.000000e+00 : f32
    %31 = vector.broadcast %cst_12 : f32 to vector<2x2x128xf32>
    %32 = arith.select %30, %27, %31 : vector<2x2x128xi1>, vector<2x2x128xf32>
    %33 = arith.truncf %32 : vector<2x2x128xf32> to vector<2x2x128xbf16>
    %c0_13 = arith.constant 0 : index
    %c0_14 = arith.constant 0 : index
    %c0_15 = arith.constant 0 : index
    %34 = vector.load %arg3[%c0_13, %c0_14, %c0_15] : memref<2x2x128xbf16, #tpu.memory_space<vmem>>, vector<2x2x128xbf16>
    tpu.vector_store %arg3[%c0_13, %c0_14, %c0_15], %33 {strides = array<i32>} : memref<2x2x128xbf16, #tpu.memory_space<vmem>>, vector<2x2x128xbf16>,
    return
  }
  func.func @transform_0(%arg0: i32) -> (i32, i32, i32) {
    %c0_i32 = arith.constant 0 : i32
    %c0_i32_0 = arith.constant 0 : i32
    %c0_i32_1 = arith.constant 0 : i32
    return %arg0, %c0_i32, %c0_i32_0 : i32, i32, i32
  }
  func.func @transform_1(%arg0: i32) -> (i32, i32, i32) {
    %c0_i32 = arith.constant 0 : i32
    %c0_i32_0 = arith.constant 0 : i32
    %c0_i32_1 = arith.constant 0 : i32
    %c0_i32_2 = arith.constant 0 : i32
    return %c0_i32, %c0_i32_0, %c0_i32_1 : i32, i32, i32
  }
  func.func @transform_2(%arg0: i32) -> (i32, i32, i32) {
    %c0_i32 = arith.constant 0 : i32
    %c0_i32_0 = arith.constant 0 : i32
    %c0_i32_1 = arith.constant 0 : i32
    return %arg0, %c0_i32, %c0_i32_0 : i32, i32, i32
  }
}

module attributes {stable_mosaic.version = 11 : i64} {
  func.func @kernel(%arg0: i32, %arg1: memref<2x4x128xbf16, #tpu.memory_space<vmem>>, %arg2: memref<3x128x128xbf16, #tpu.memory_space<vmem>>, %arg3: memref<2x2x128xbf16, #tpu.memory_space<vmem>>, %arg4: memref<2x1x128xf32, #tpu.memory_space<vmem>>) attributes {dimension_semantics = [#tpu.dimension_semantics<parallel>], iteration_bounds = array<i64: 2>, scalar_prefetch = 0 : i64, scratch_operands = 0 : i64, tpu.core_type = #tpu.core_type<tc>, window_params = [{transform_indices = @transform_0, window_bounds = array<i64: 2, 4, 128>}, {pipeline_mode = #tpu.pipeline_mode<synchronous>, transform_indices = @transform_1, window_bounds = array<i64: 3, 128, 128>}, {transform_indices = @transform_2, window_bounds = array<i64: 2, 2, 128>}, {transform_indices = @transform_3, window_bounds = array<i64: 2, 1, 128>}]} {
    %c0 = arith.constant 0 : index
    %c0_0 = arith.constant 0 : index
    %c0_1 = arith.constant 0 : index
    %0 = vector.load %arg1[%c0, %c0_0, %c0_1] : memref<2x4x128xbf16, #tpu.memory_space<vmem>>, vector<2x2x128xbf16>
    %1 = vector.shape_cast %0 : vector<2x2x128xbf16> to vector<4x128xbf16>
    %c0_2 = arith.constant 0 : index
    %c0_3 = arith.constant 0 : index
    %c0_4 = arith.constant 0 : index
    %2 = vector.load %arg2[%c0_2, %c0_3, %c0_4] : memref<3x128x128xbf16, #tpu.memory_space<vmem>>, vector<1x128x128xbf16>
    %3 = vector.shape_cast %2 : vector<1x128x128xbf16> to vector<128x128xbf16>
    %cst = arith.constant dense<0.000000e+00> : vector<4x128xf32>
    %4 = tpu.matmul %1, %3, %cst {dimension_numbers = #tpu.dot_dimension_numbers<[1], [0], [0], [1], [0, 0, 1, 1], [], []>} : vector<4x128xbf16>, vector<128x128xbf16>, vector<4x128xf32> -> vector<4x128xf32>
    %c0_5 = arith.constant 0 : index
    %c1 = arith.constant 1 : index
    %c0_6 = arith.constant 0 : index
    %5 = vector.load %arg1[%c0_5, %c1, %c0_6] : memref<2x4x128xbf16, #tpu.memory_space<vmem>>, vector<2x2x128xbf16>
    %6 = vector.shape_cast %5 : vector<2x2x128xbf16> to vector<4x128xbf16>
    %c1_7 = arith.constant 1 : index
    %c0_8 = arith.constant 0 : index
    %c0_9 = arith.constant 0 : index
    %7 = vector.load %arg2[%c1_7, %c0_8, %c0_9] : memref<3x128x128xbf16, #tpu.memory_space<vmem>>, vector<1x128x128xbf16>
    %8 = vector.shape_cast %7 : vector<1x128x128xbf16> to vector<128x128xbf16>
    %cst_10 = arith.constant dense<0.000000e+00> : vector<4x128xf32>
    %9 = tpu.matmul %6, %8, %cst_10 {dimension_numbers = #tpu.dot_dimension_numbers<[1], [0], [0], [1], [0, 0, 1, 1], [], []>} : vector<4x128xbf16>, vector<128x128xbf16>, vector<4x128xf32> -> vector<4x128xf32>
    %10 = arith.addf %4, %9 : vector<4x128xf32>
    %c0_11 = arith.constant 0 : index
    %c2 = arith.constant 2 : index
    %c0_12 = arith.constant 0 : index
    %11 = vector.load %arg1[%c0_11, %c2, %c0_12] : memref<2x4x128xbf16, #tpu.memory_space<vmem>>, vector<2x2x128xbf16>
    %12 = vector.shape_cast %11 : vector<2x2x128xbf16> to vector<4x128xbf16>
    %c2_13 = arith.constant 2 : index
    %c0_14 = arith.constant 0 : index
    %c0_15 = arith.constant 0 : index
    %13 = vector.load %arg2[%c2_13, %c0_14, %c0_15] : memref<3x128x128xbf16, #tpu.memory_space<vmem>>, vector<1x128x128xbf16>
    %14 = vector.shape_cast %13 : vector<1x128x128xbf16> to vector<128x128xbf16>
    %cst_16 = arith.constant dense<0.000000e+00> : vector<4x128xf32>
    %15 = tpu.matmul %12, %14, %cst_16 {dimension_numbers = #tpu.dot_dimension_numbers<[1], [0], [0], [1], [0, 0, 1, 1], [], []>} : vector<4x128xbf16>, vector<128x128xbf16>, vector<4x128xf32> -> vector<4x128xf32>
    %16 = arith.addf %10, %15 : vector<4x128xf32>
    %17 = vector.shape_cast %16 : vector<4x128xf32> to vector<2x2x128xf32>
    %cst_17 = arith.constant dense<0.000000e+00> : vector<2x2xf32>
    %18 = vector.multi_reduction <add>, %17, %cst_17 [2] : vector<2x2x128xf32> to vector<2x2xf32>
    %19 = vector.shape_cast %18 : vector<2x2xf32> to vector<2x2x1xf32>
    %cst_18 = arith.constant dense<0.000000e+00> : vector<2x1xf32>
    %20 = vector.multi_reduction <add>, %19, %cst_18 [1] : vector<2x2x1xf32> to vector<2x1xf32>
    %21 = vector.shape_cast %20 : vector<2x1xf32> to vector<2x1x1xf32>
    %22 = arith.mulf %17, %17 : vector<2x2x128xf32>
    %cst_19 = arith.constant dense<0.000000e+00> : vector<2x2xf32>
    %23 = vector.multi_reduction <add>, %22, %cst_19 [2] : vector<2x2x128xf32> to vector<2x2xf32>
    %24 = vector.shape_cast %23 : vector<2x2xf32> to vector<2x2x1xf32>
    %cst_20 = arith.constant dense<0.000000e+00> : vector<2x1xf32>
    %25 = vector.multi_reduction <add>, %24, %cst_20 [1] : vector<2x2x1xf32> to vector<2x1xf32>
    %26 = vector.shape_cast %25 : vector<2x1xf32> to vector<2x1x1xf32>
    %cst_21 = arith.constant 7.812500e-03 : f32
    %27 = vector.broadcast %cst_21 : f32 to vector<2x1x1xf32>
    %28 = arith.mulf %21, %27 : vector<2x1x1xf32>
    %cst_22 = arith.constant 7.812500e-03 : f32
    %29 = vector.broadcast %cst_22 : f32 to vector<2x1x1xf32>
    %30 = arith.mulf %26, %29 : vector<2x1x1xf32>
    %31 = arith.mulf %28, %28 : vector<2x1x1xf32>
    %32 = arith.subf %30, %31 : vector<2x1x1xf32>
    %33 = vector.broadcast %28 : vector<2x1x1xf32> to vector<2x2x128xf32>
    %34 = arith.subf %17, %33 : vector<2x2x128xf32>
    %cst_23 = arith.constant 9.99999974E-6 : f32
    %35 = vector.broadcast %cst_23 : f32 to vector<2x1x1xf32>
    %36 = arith.addf %32, %35 : vector<2x1x1xf32>
    %37 = math.rsqrt %36 : vector<2x1x1xf32>
    %38 = vector.broadcast %37 : vector<2x1x1xf32> to vector<2x2x128xf32>
    %39 = arith.mulf %34, %38 : vector<2x2x128xf32>
    %40 = tpu.iota {dimensions = array<i32: 2>} : vector<2x2x128xi32>
    %c64_i32 = arith.constant 64 : i32
    %41 = vector.broadcast %c64_i32 : i32 to vector<2x2x128xi32>
    %42 = arith.cmpi slt, %40, %41 : vector<2x2x128xi32>
    %cst_24 = arith.constant 0.000000e+00 : f32
    %43 = vector.broadcast %cst_24 : f32 to vector<2x2x128xf32>
    %44 = arith.select %42, %39, %43 : vector<2x2x128xi1>, vector<2x2x128xf32>
    %c0_25 = arith.constant 0 : index
    %c0_26 = arith.constant 0 : index
    %c0_27 = arith.constant 0 : index
    %45 = vector.load %arg3[%c0_25, %c0_26, %c0_27] : memref<2x2x128xbf16, #tpu.memory_space<vmem>>, vector<2x2x128xbf16>
    %46 = arith.extf %45 : vector<2x2x128xbf16> to vector<2x2x128xf32>
    %47 = arith.addf %44, %46 : vector<2x2x128xf32>
    %cst_28 = arith.constant 0.000000e+00 : f32
    %48 = vector.broadcast %cst_28 : f32 to vector<2x2x128xf32>
    %49 = arith.maximumf %47, %48 : vector<2x2x128xf32>
    %cst_29 = arith.constant dense<0.000000e+00> : vector<2x128xf32>
    %50 = vector.multi_reduction <add>, %49, %cst_29 [1] : vector<2x2x128xf32> to vector<2x128xf32>
    %51 = vector.shape_cast %50 : vector<2x128xf32> to vector<2x1x128xf32>
    %cst_30 = arith.constant 5.000000e-01 : f32
    %52 = vector.broadcast %cst_30 : f32 to vector<2x1x128xf32>
    %53 = arith.mulf %51, %52 : vector<2x1x128xf32>
    %c0_31 = arith.constant 0 : index
    %c0_32 = arith.constant 0 : index
    %c0_33 = arith.constant 0 : index
    %54 = vector.load %arg4[%c0_31, %c0_32, %c0_33] : memref<2x1x128xf32, #tpu.memory_space<vmem>>, vector<2x1x128xf32>
    tpu.vector_store %arg4[%c0_31, %c0_32, %c0_33], %53 {strides = array<i32>} : memref<2x1x128xf32, #tpu.memory_space<vmem>>, vector<2x1x128xf32>,
    return
  }
  func.func @transform_0(%arg0: i32) -> (i32, i32, i32) {
    %c0_i32 = arith.constant 0 : i32
    %c0_i32_0 = arith.constant 0 : i32
    %c0_i32_1 = arith.constant 0 : i32
    return %arg0, %c0_i32, %c0_i32_0 : i32, i32, i32
  }
  func.func @transform_1(%arg0: i32) -> (i32, i32, i32) {
    %c0_i32 = arith.constant 0 : i32
    %c0_i32_0 = arith.constant 0 : i32
    %c0_i32_1 = arith.constant 0 : i32
    %c0_i32_2 = arith.constant 0 : i32
    return %c0_i32, %c0_i32_0, %c0_i32_1 : i32, i32, i32
  }
  func.func @transform_2(%arg0: i32) -> (i32, i32, i32) {
    %c0_i32 = arith.constant 0 : i32
    %c0_i32_0 = arith.constant 0 : i32
    %c0_i32_1 = arith.constant 0 : i32
    return %arg0, %c0_i32, %c0_i32_0 : i32, i32, i32
  }
  func.func @transform_3(%arg0: i32) -> (i32, i32, i32) {
    %c0_i32 = arith.constant 0 : i32
    %c0_i32_0 = arith.constant 0 : i32
    %c0_i32_1 = arith.constant 0 : i32
    return %arg0, %c0_i32, %c0_i32_0 : i32, i32, i32
  }
}

</mosaic_0001>

<llo_original>
// kernel: _lambda_.14
$region0: #{_lambda_.14}
  #allocation0 [shape = 'u32[]', space=smem, size = 0x4, offset = 0x4, fixed_abs, tag = 'smem constant byte address 0x4 - core index']
  #allocation1 [shape = 'u32[144,128]{1,0:T(1,128)}', space=vmem, size = 0x12000, scoped, tag = 'internal scratch']
  %s0 = inlined_call_operand.vmem [shape: bf16[4,16,256], index: 0, kind: input, shape index: {}]
  %s1 = inlined_call_operand.vmem [shape: bf16[4,18,128], index: 1, kind: output, shape index: {}]
  %s2 = sld [smem:[#allocation0]]
  $region37: #{_lambda_.14} parent=0
    _
  %s4 = ssub.s32 1, %s2
  %s5 = scalar_select 0, %s4, %s2
  loop: start=0, step=1, limit=4
  $region2: #{_lambda_.14} parent=0 // loop_pre_header
    _
  $region3: #{_lambda_.14} parent=0 // loop_header
    %s7 = sphi 0, %s11
    %p8 = scmp.ge.s32.totalorder %s7, 4
    %s17 = sphi 0, %s19
    %s20 = sphi 0, %s17
    %s21 = sphi 0, %s20
    %s37 = sphi 0, %s21
    %s43 = sphi 0, %s45
    %s46 = sphi 0, %s43
    %s47 = sphi 0, %s46
    %s63 = sphi 0, %s47
  $region4: #{_lambda_.14} parent=0 // loop_header_branch
    %10 = sbr.rel (%p8) target = $region8
  $region5: #{_lambda_.14} parent=0 // loop_body
    %s12 = ssub.s32 %s7, 1
    %s13 = ssub.s32 %s7, 2
    %s14 = sadd.s32 %s7, 1
    %s15 = ssub.s32 %s7, %s14
    %p16 = scmp.eq.s32.totalorder %s15, 0
    %s18 = sadd.s32 %s17, 1
    %s19 = scalar_select %p16, %s17, %s18
    %p22 = pneg %p16
    %p23 = scmp.eq.s32.totalorder %s7, 1
    %p24 = por %p22, %p23
    %p25 = scmp.ne.s32.totalorder %s17, %s20
    %p26 = scmp.eq.s32.totalorder %s7, 0
    %p27 = por %p25, %p26
    %p28 = scmp.ne.s32.totalorder %s17, %s20
    %p29 = scmp.eq.s32.totalorder %s12, 1
    %p30 = por %p28, %p29
    %p31 = scmp.ne.s32.totalorder %s20, %s21
    %p32 = scmp.eq.s32.totalorder %s12, 0
    %p33 = por %p31, %p32
    %p34 = scmp.ne.s32.totalorder %s20, %s21
    %p35 = scmp.eq.s32.totalorder %s13, 1
    %p36 = por %p34, %p35
    %p38 = scmp.ne.s32.totalorder %s21, %s37
    %p39 = scmp.eq.s32.totalorder %s13, 0
    %p40 = por %p38, %p39
    %s41 = ssub.s32 %s7, %s14
    %p42 = scmp.eq.s32.totalorder %s41, 0
    %s44 = sadd.s32 %s43, 1
    %s45 = scalar_select %p42, %s43, %s44
    %p48 = pneg %p42
    %p49 = scmp.eq.s32.totalorder %s7, 1
    %p50 = por %p48, %p49
    %p51 = scmp.ne.s32.totalorder %s43, %s46
    %p52 = scmp.eq.s32.totalorder %s7, 0
    %p53 = por %p51, %p52
    %p54 = scmp.ne.s32.totalorder %s43, %s46
    %p55 = scmp.eq.s32.totalorder %s12, 1
    %p56 = por %p54, %p55
    %p57 = scmp.ne.s32.totalorder %s46, %s47
    %p58 = scmp.eq.s32.totalorder %s12, 0
    %p59 = por %p57, %p58
    %p60 = scmp.ne.s32.totalorder %s46, %s47
    %p61 = scmp.eq.s32.totalorder %s13, 1
    %p62 = por %p60, %p61
    %p64 = scmp.ne.s32.totalorder %s47, %s63
    %p65 = scmp.eq.s32.totalorder %s13, 0
    %p66 = por %p64, %p65
    %p67 = scmp.le.s32.totalorder 1, %s7
    %p68 = scmp.lt.s32.totalorder %s7, 3
    %p69 = pnand %p67, %p68
    %p70 = pneg %p69
    // Predicated region
    $region9: #{_lambda_.14} parent=5 // pred_check
      _
    $region10: #{_lambda_.14} parent=5 // pred_check_branch
      %72 = sbr.rel (%p69) target = $region12
    $region11: #{_lambda_.14} parent=5 // pred_region
      %s73 = ssub.s32 %s7, 1
    $region12: #{_lambda_.14} parent=5 // pred_fallthru
      _
    %p74 = scmp.lt.s32.totalorder %s7, 2
    // Predicated region
    $region13: #{_lambda_.14} parent=5 // pred_check
      %p75 = pneg %p74
    $region14: #{_lambda_.14} parent=5 // pred_check_branch
      %77 = sbr.rel (%p75) target = $region16
    $region15: #{_lambda_.14} parent=5 // pred_region
      // Predicated region
      $region17: #{_lambda_.14} parent=15 // pred_check
        %p78 = pneg %p27
      $region18: #{_lambda_.14} parent=15 // pred_check_branch
        %80 = sbr.rel (%p78) target = $region20
      $region19: #{_lambda_.14} parent=15 // pred_region
        %s81 = smul.u32 2, %s7
        %p82 = scmp.lt.s32.totalorder %s81, 3
        %s83 = scalar_select %p82, %s81, 3
        %s84 = smul.addr %s83, 4
        %s85 = smul.addr %s84, 4
        %s86 = scalar_lea.vmem %s0, %s85
        %s87 = smul.u32 2, %s7
      $region20: #{_lambda_.14} parent=15 // pred_fallthru
        _
    $region16: #{_lambda_.14} parent=5 // pred_fallthru
      _
    %p88 = scmp.le.s32.totalorder 1, %s7
    %p89 = scmp.lt.s32.totalorder %s7, 3
    %p90 = pnand %p88, %p89
    %p91 = pneg %p90
    // Predicated region
    $region21: #{_lambda_.14} parent=5 // pred_check
      _
    $region22: #{_lambda_.14} parent=5 // pred_check_branch
      %93 = sbr.rel (%p90) target = $region24
    $region23: #{_lambda_.14} parent=5 // pred_region
      %s94 = ssub.s32 %s7, 1
      %s95 = smul.u32 2, %s12
      %p96 = scmp.lt.s32.totalorder %s95, 3
      %s97 = scalar_select %p96, %s95, 3
      %s98 = smul.addr %s97, 4
      %s99 = smul.addr %s98, 4
      %s100 = scalar_lea.vmem %s0, %s99
      %p101 = pneg %p33
      %p102 = pneg %p30
      %p103 = pneg %p59
      %p104 = pneg %p56
      %s105 = smul.u32 2, %s12
      %p106 = scmp.lt.s32.totalorder %s105, 3
      %s107 = scalar_select %p106, %s105, 3
      %s108 = smul.addr %s107, 3
      %s109 = smul.addr %s108, 4
      %s110 = scalar_lea.vmem %s1, %s109
      %s111 = smul.u32 2, %s12
      %p112 = scmp.lt.s32.totalorder %s111, 3
      %s113 = scalar_select %p112, %s111, 3
      %s114 = smul.addr %s113, 4
      %s115 = smul.addr %s114, 4
      %s116 = scalar_lea.vmem %s0, %s115
      %s117 = smul.u32 2, %s12
      %s118 = smul.u32 2, %s12
      %p119 = scmp.lt.s32.totalorder %s118, 3
      %s120 = scalar_select %p119, %s118, 3
      %s121 = smul.addr %s120, 3
      %s122 = smul.addr %s121, 4
      %s123 = scalar_lea.vmem %s1, %s122
      %s124 = smul.u32 2, %s12
      %v126 = vld [vmem:[%s116] sm:$0xff]
      %v127 = vld [vmem:[%s116 + $0x8] sm:$0xff]
      %v128 = vld [vmem:[%s116 + $0x10] sm:$0xff]
      %v129 = vld [vmem:[%s116 + $0x18] sm:$0xff]
      %v134 = vrot.slane %v126, 4
      %v135 = vrot.slane %v127, 4
      %v136 = vrot.slane %v128, 4
      %v137 = vrot.slane %v129, 4
      %v142 = vmax.bf16 %v126, %v134
      %v143 = vmax.bf16 %v127, %v135
      %v144 = vmax.bf16 %v128, %v136
      %v145 = vmax.bf16 %v129, %v137
      %vm146 = vcmask 1040384
      %vm147 = vsmask.f32 256
      %vm148 = vmand %vm146, %vm147
      %v149 = vld [vmem:[%s123] sm:$0x1]
      %v150 = vsel %vm148, 0, %v149
      %151 = vst [vmem:[%s123] sm:$0x1] %v150
      %v152 = vld [vmem:[%s123 + $0xc] sm:$0x1]
      %v153 = vsel %vm148, 0, %v152
      %154 = vst [vmem:[%s123 + $0xc] sm:$0x1] %v153
      %vm155 = vsmask.f32 7938
      %vm156 = vmand %vm146, %vm155
      %v157 = vld [vmem:[%s123 + $0x8] sm:$0x1]
      %v158 = vsel %vm156, 0, %v157
      %159 = vst [vmem:[%s123 + $0x8] sm:$0x1] %v158
      %v160 = vld [vmem:[%s123 + $0x14] sm:$0x1]
      %v161 = vsel %vm156, 0, %v160
      %162 = vst [vmem:[%s123 + $0x14] sm:$0x1] %v161
      %v164 = vshll.u32 %v142, 16
      %v167 = vshll.u32 %v144, 16
      %v171 = vld [vmem:[%s123] sm:$0x1]
      %v172 = vsel %vm156, %v164, %v171
      %173 = vst [vmem:[%s123] sm:$0x1] %v172
      %v174 = vld [vmem:[%s123 + $0xc] sm:$0x1]
      %v175 = vsel %vm156, %v167, %v174
      %176 = vst [vmem:[%s123 + $0xc] sm:$0x1] %v175
      %vm177 = vsmask.f32 4368
      %vm178 = vmor %vm147, %vm177
      %v180 = vshrl.u32 %v126, 16
      %v182 = vrot.slane %v180, 7
      %v183 = vshll.u32 %v126, 16
      %v185 = vor.u32 %v182, %v183
      %v186 = vrot.slane %v182, 4
      %v188 = vshrl.u32 %v127, 16
      %v190 = vrot.slane %v188, 7
      %v191 = vshll.u32 %v127, 16
      %v193 = vor.u32 %v190, %v191
      %v194 = vsel %vm178, %v186, %v193
      %v196 = vshrl.u32 %v128, 16
      %v198 = vrot.slane %v196, 7
      %v199 = vshll.u32 %v128, 16
      %v201 = vor.u32 %v198, %v199
      %v202 = vrot.slane %v198, 4
      %v204 = vshrl.u32 %v129, 16
      %v206 = vrot.slane %v204, 7
      %v207 = vshll.u32 %v129, 16
      %v209 = vor.u32 %v206, %v207
      %v210 = vsel %vm178, %v202, %v209
      %v211 = vrot.slane %v185, 4
      %v212 = vrot.slane %v194, 4
      %v213 = vrot.slane %v201, 4
      %v214 = vrot.slane %v210, 4
      %v219 = vmax.bf16 %v142, %v211
      %v220 = vmax.bf16 %v143, %v212
      %v221 = vmax.bf16 %v144, %v213
      %v222 = vmax.bf16 %v145, %v214
      %v224 = vshrl.u32 %v219, 16
      %v226 = vrot.slane %v224, 7
      %v227 = vshll.u32 %v219, 16
      %v229 = vor.u32 %v226, %v227
      %v230 = vrot.slane %v226, 4
      %v232 = vshrl.u32 %v220, 16
      %v234 = vrot.slane %v232, 7
      %v235 = vshll.u32 %v220, 16
      %v237 = vor.u32 %v234, %v235
      %v238 = vsel %vm178, %v230, %v237
      %v239 = vrot.slane %v234, 4
      %v241 = vshrl.u32 %v221, 16
      %v243 = vrot.slane %v241, 7
      %v244 = vshll.u32 %v221, 16
      %v246 = vor.u32 %v243, %v244
      %v247 = vrot.slane %v243, 4
      %v249 = vshrl.u32 %v222, 16
      %v251 = vrot.slane %v249, 7
      %v252 = vshll.u32 %v222, 16
      %v254 = vor.u32 %v251, %v252
      %v255 = vsel %vm178, %v247, %v254
      %v256 = vrot.slane %v251, 4
      %263 = vst [vmem:[%s123] sm:$0xe] %v229
      %264 = vst [vmem:[%s123 + $0x4] sm:$0xf] %v238
      %v265 = vld [vmem:[%s123 + $0x8] sm:$0x1]
      %v266 = vsel %vm148, %v239, %v265
      %267 = vst [vmem:[%s123 + $0x8] sm:$0x1] %v266
      %268 = vst [vmem:[%s123 + $0xc] sm:$0xe] %v246
      %269 = vst [vmem:[%s123 + $0x10] sm:$0xf] %v255
      %v270 = vld [vmem:[%s123 + $0x14] sm:$0x1]
      %v271 = vsel %vm148, %v256, %v270
      %272 = vst [vmem:[%s123 + $0x14] sm:$0x1] %v271
      %s273 = smul.u32 2, %s12
      %p274 = scmp.lt.s32.totalorder %s273, 3
      %s275 = scalar_select %p274, %s273, 3
      %s276 = smul.addr %s275, 3
      %s277 = smul.addr %s276, 4
      %s278 = scalar_lea.vmem %s1, %s277
      // Predicated region
      $region25: #{_lambda_.14} parent=23 // pred_check
        %p279 = pneg %p56
      $region26: #{_lambda_.14} parent=23 // pred_check_branch
        %281 = sbr.rel (%p279) target = $region28
      $region27: #{_lambda_.14} parent=23 // pred_region
        %s282 = smul.u32 2, %s12
      $region28: #{_lambda_.14} parent=23 // pred_fallthru
        _
    $region24: #{_lambda_.14} parent=5 // pred_fallthru
      _
    %p283 = scmp.le.s32.totalorder 2, %s7
    // Predicated region
    $region29: #{_lambda_.14} parent=5 // pred_check
      %p284 = pneg %p283
    $region30: #{_lambda_.14} parent=5 // pred_check_branch
      %286 = sbr.rel (%p284) target = $region32
    $region31: #{_lambda_.14} parent=5 // pred_region
      %s287 = ssub.s32 %s7, 2
      // Predicated region
      $region33: #{_lambda_.14} parent=31 // pred_check
        %p288 = pneg %p62
      $region34: #{_lambda_.14} parent=31 // pred_check_branch
        %290 = sbr.rel (%p288) target = $region36
      $region35: #{_lambda_.14} parent=31 // pred_region
        %s291 = smul.u32 2, %s13
        %p292 = scmp.lt.s32.totalorder %s291, 3
        %s293 = scalar_select %p292, %s291, 3
        %s294 = smul.addr %s293, 3
        %s295 = smul.addr %s294, 4
        %s296 = scalar_lea.vmem %s1, %s295
      $region36: #{_lambda_.14} parent=31 // pred_fallthru
        _
    $region32: #{_lambda_.14} parent=5 // pred_fallthru
      _
  $region6: #{_lambda_.14} parent=0 // loop_footer
    %s11 = sadd.s32 1, %s7
  $region7: #{_lambda_.14} parent=0 // loop_footer_branch
    %6 = sbr.rel target = $region3
  $region8: #{_lambda_.14} parent=0 // loop_exit
    _

// kernel: _lambda_.15
$region0: #{_lambda_.15}
  #allocation0 [shape = 'u32[]', space=smem, size = 0x4, offset = 0x4, fixed_abs, tag = 'smem constant byte address 0x4 - core index']
  #allocation1 [shape = 'u32[144,128]{1,0:T(1,128)}', space=vmem, size = 0x12000, scoped, tag = 'internal scratch']
  %s0 = inlined_call_operand.vmem [shape: bf16[4,18,128], index: 0, kind: input, shape index: {}]
  %s1 = inlined_call_operand.vmem [shape: bf16[3,128,128], index: 1, kind: input, shape index: {}]
  %s2 = inlined_call_operand.vmem [shape: bf16[4,18,128], index: 2, kind: output, shape index: {}]
  %s3 = sld [smem:[#allocation0]]
  $region41: #{_lambda_.15} parent=0
    _
  %s5 = ssub.s32 1, %s3
  %s6 = scalar_select 0, %s5, %s3
  loop: start=0, step=1, limit=4
  $region2: #{_lambda_.15} parent=0 // loop_pre_header
    _
  $region3: #{_lambda_.15} parent=0 // loop_header
    %s8 = sphi 0, %s12
    %p9 = scmp.ge.s32.totalorder %s8, 4
    %s18 = sphi 0, %s20
    %s21 = sphi 0, %s18
    %s22 = sphi 0, %s21
    %s38 = sphi 0, %s22
    %s42 = sphi 0, %s42
    %s44 = sphi 0, %s42
    %s45 = sphi 0, %s44
    %s59 = sphi 0, %s45
    %s65 = sphi 0, %s67
    %s68 = sphi 0, %s65
    %s69 = sphi 0, %s68
    %s85 = sphi 0, %s69
  $region4: #{_lambda_.15} parent=0 // loop_header_branch
    %11 = sbr.rel (%p9) target = $region8
  $region5: #{_lambda_.15} parent=0 // loop_body
    %s13 = ssub.s32 %s8, 1
    %s14 = ssub.s32 %s8, 2
    %s15 = sadd.s32 %s8, 1
    %s16 = ssub.s32 %s8, %s15
    %p17 = scmp.eq.s32.totalorder %s16, 0
    %s19 = sadd.s32 %s18, 1
    %s20 = scalar_select %p17, %s18, %s19
    %p23 = pneg %p17
    %p24 = scmp.eq.s32.totalorder %s8, 1
    %p25 = por %p23, %p24
    %p26 = scmp.ne.s32.totalorder %s18, %s21
    %p27 = scmp.eq.s32.totalorder %s8, 0
    %p28 = por %p26, %p27
    %p29 = scmp.ne.s32.totalorder %s18, %s21
    %p30 = scmp.eq.s32.totalorder %s13, 1
    %p31 = por %p29, %p30
    %p32 = scmp.ne.s32.totalorder %s21, %s22
    %p33 = scmp.eq.s32.totalorder %s13, 0
    %p34 = por %p32, %p33
    %p35 = scmp.ne.s32.totalorder %s21, %s22
    %p36 = scmp.eq.s32.totalorder %s14, 1
    %p37 = por %p35, %p36
    %p39 = scmp.ne.s32.totalorder %s22, %s38
    %p40 = scmp.eq.s32.totalorder %s14, 0
    %p41 = por %p39, %p40
    %s43 = sadd.s32 %s42, 1
    %p46 = scmp.eq.s32.totalorder %s8, 1
    %p47 = scmp.ne.s32.totalorder %s42, %s44
    %p48 = scmp.eq.s32.totalorder %s8, 0
    %p49 = por %p47, %p48
    %p50 = scmp.ne.s32.totalorder %s42, %s44
    %p51 = scmp.eq.s32.totalorder %s13, 1
    %p52 = por %p50, %p51
    %p53 = scmp.ne.s32.totalorder %s44, %s45
    %p54 = scmp.eq.s32.totalorder %s13, 0
    %p55 = por %p53, %p54
    %p56 = scmp.ne.s32.totalorder %s44, %s45
    %p57 = scmp.eq.s32.totalorder %s14, 1
    %p58 = por %p56, %p57
    %p60 = scmp.ne.s32.totalorder %s45, %s59
    %p61 = scmp.eq.s32.totalorder %s14, 0
    %p62 = por %p60, %p61
    %s63 = ssub.s32 %s8, %s15
    %p64 = scmp.eq.s32.totalorder %s63, 0
    %s66 = sadd.s32 %s65, 1
    %s67 = scalar_select %p64, %s65, %s66
    %p70 = pneg %p64
    %p71 = scmp.eq.s32.totalorder %s8, 1
    %p72 = por %p70, %p71
    %p73 = scmp.ne.s32.totalorder %s65, %s68
    %p74 = scmp.eq.s32.totalorder %s8, 0
    %p75 = por %p73, %p74
    %p76 = scmp.ne.s32.totalorder %s65, %s68
    %p77 = scmp.eq.s32.totalorder %s13, 1
    %p78 = por %p76, %p77
    %p79 = scmp.ne.s32.totalorder %s68, %s69
    %p80 = scmp.eq.s32.totalorder %s13, 0
    %p81 = por %p79, %p80
    %p82 = scmp.ne.s32.totalorder %s68, %s69
    %p83 = scmp.eq.s32.totalorder %s14, 1
    %p84 = por %p82, %p83
    %p86 = scmp.ne.s32.totalorder %s69, %s85
    %p87 = scmp.eq.s32.totalorder %s14, 0
    %p88 = por %p86, %p87
    %p89 = scmp.le.s32.totalorder 1, %s8
    %p90 = scmp.lt.s32.totalorder %s8, 3
    %p91 = pnand %p89, %p90
    %p92 = pneg %p91
    // Predicated region
    $region9: #{_lambda_.15} parent=5 // pred_check
      _
    $region10: #{_lambda_.15} parent=5 // pred_check_branch
      %94 = sbr.rel (%p91) target = $region12
    $region11: #{_lambda_.15} parent=5 // pred_region
      %s95 = ssub.s32 %s8, 1
      // Predicated region
      $region13: #{_lambda_.15} parent=11 // pred_check
        %p96 = pneg %p55
      $region14: #{_lambda_.15} parent=11 // pred_check_branch
        %98 = sbr.rel (%p96) target = $region16
      $region15: #{_lambda_.15} parent=11 // pred_region
        _
      $region16: #{_lambda_.15} parent=11 // pred_fallthru
        _
    $region12: #{_lambda_.15} parent=5 // pred_fallthru
      _
    %p99 = scmp.lt.s32.totalorder %s8, 2
    // Predicated region
    $region17: #{_lambda_.15} parent=5 // pred_check
      %p100 = pneg %p99
    $region18: #{_lambda_.15} parent=5 // pred_check_branch
      %102 = sbr.rel (%p100) target = $region20
    $region19: #{_lambda_.15} parent=5 // pred_region
      // Predicated region
      $region21: #{_lambda_.15} parent=19 // pred_check
        %p103 = pneg %p28
      $region22: #{_lambda_.15} parent=19 // pred_check_branch
        %105 = sbr.rel (%p103) target = $region24
      $region23: #{_lambda_.15} parent=19 // pred_region
        %s106 = smul.u32 2, %s8
        %p107 = scmp.lt.s32.totalorder %s106, 3
        %s108 = scalar_select %p107, %s106, 3
        %s109 = smul.addr %s108, 3
        %s110 = smul.addr %s109, 4
        %s111 = scalar_lea.vmem %s0, %s110
        %s112 = smul.u32 2, %s8
      $region24: #{_lambda_.15} parent=19 // pred_fallthru
        _
    $region20: #{_lambda_.15} parent=5 // pred_fallthru
      _
    %p113 = scmp.le.s32.totalorder 1, %s8
    %p114 = scmp.lt.s32.totalorder %s8, 3
    %p115 = pnand %p113, %p114
    %p116 = pneg %p115
    // Predicated region
    $region25: #{_lambda_.15} parent=5 // pred_check
      _
    $region26: #{_lambda_.15} parent=5 // pred_check_branch
      %118 = sbr.rel (%p115) target = $region28
    $region27: #{_lambda_.15} parent=5 // pred_region
      %s119 = ssub.s32 %s8, 1
      %s120 = smul.u32 2, %s13
      %p121 = scmp.lt.s32.totalorder %s120, 3
      %s122 = scalar_select %p121, %s120, 3
      %s123 = smul.addr %s122, 3
      %s124 = smul.addr %s123, 4
      %s125 = scalar_lea.vmem %s0, %s124
      %p126 = pneg %p34
      %p127 = pneg %p31
      %p128 = pneg %p55
      %p129 = pneg %p52
      %p130 = pneg %p81
      %p131 = pneg %p78
      %s132 = smul.u32 2, %s13
      %p133 = scmp.lt.s32.totalorder %s132, 3
      %s134 = scalar_select %p133, %s132, 3
      %s135 = smul.addr %s134, 3
      %s136 = smul.addr %s135, 4
      %s137 = scalar_lea.vmem %s2, %s136
      %s138 = smul.u32 2, %s13
      %p139 = scmp.lt.s32.totalorder %s138, 3
      %s140 = scalar_select %p139, %s138, 3
      %s141 = smul.addr %s140, 3
      %s142 = smul.addr %s141, 4
      %s143 = scalar_lea.vmem %s0, %s142
      %s144 = smul.u32 2, %s13
      %s145 = smul.u32 2, %s13
      %p146 = scmp.lt.s32.totalorder %s145, 3
      %s147 = scalar_select %p146, %s145, 3
      %s148 = smul.addr %s147, 3
      %s149 = smul.addr %s148, 4
      %s150 = scalar_lea.vmem %s2, %s149
      %s151 = smul.u32 2, %s13
      %v153 = vld [vmem:[%s143] sm:$0xf]
      %v154 = vld [vmem:[%s143 + $0x4] sm:$0xf]
      %v155 = vld [vmem:[%s143 + $0xc] sm:$0xf]
      %v156 = vld [vmem:[%s143 + $0x10] sm:$0xf]
      %v157 = vld [vmem:[%s1] sm:$0xf]
      %v158 = vld [vmem:[%s1 + $0x4] sm:$0xf]
      %v159 = vld [vmem:[%s1 + $0x8] sm:$0xf]
      %v160 = vld [vmem:[%s1 + $0xc] sm:$0xf]
      %v161 = vld [vmem:[%s1 + $0x10] sm:$0xf]
      %v162 = vld [vmem:[%s1 + $0x14] sm:$0xf]
      %v163 = vld [vmem:[%s1 + $0x18] sm:$0xf]
      %v164 = vld [vmem:[%s1 + $0x1c] sm:$0xf]
      %v165 = vld [vmem:[%s1 + $0x20] sm:$0xf]
      %v166 = vld [vmem:[%s1 + $0x24] sm:$0xf]
      %v167 = vld [vmem:[%s1 + $0x28] sm:$0xf]
      %v168 = vld [vmem:[%s1 + $0x2c] sm:$0xf]
      %v169 = vld [vmem:[%s1 + $0x30] sm:$0xf]
      %v170 = vld [vmem:[%s1 + $0x34] sm:$0xf]
      %v171 = vld [vmem:[%s1 + $0x38] sm:$0xf]
      %v172 = vld [vmem:[%s1 + $0x3c] sm:$0xf]
      %v173 = vld [vmem:[%s143 + $0x8] sm:$0x1]
      %v174 = vld [vmem:[%s143 + $0x14] sm:$0x1]
      %vm175 = vsmask.f32 3328
      %vm176 = vsmask.f32 7440
      %vm177 = vmor %vm175, %vm176
      %v179 = vshrl.u32 %v153, 16
      %v181 = vrot.slane %v179, 4
      %v182 = vshll.u32 %v153, 16
      %v184 = vrot.slane %v182, 5
      %v185 = vor.u32 %v181, %v184
      %v186 = vrot.slane %v185, 4
      %v188 = vshll.u32 %v154, 16
      %v190 = vrot.slane %v188, 5
      %v191 = vsel %vm177, %v186, %v190
      %v192 = vshrl.u32 %v154, 16
      %v194 = vrot.slane %v192, 4
      %v195 = vor.u32 %v194, %v190
      %v196 = vrot.slane %v195, 4
      %v198 = vshll.u32 %v173, 16
      %v200 = vrot.slane %v198, 5
      %v201 = vsel %vm177, %v196, %v200
      %v203 = vshrl.u32 %v155, 16
      %v205 = vrot.slane %v203, 4
      %v206 = vshll.u32 %v155, 16
      %v208 = vrot.slane %v206, 5
      %v209 = vor.u32 %v205, %v208
      %v210 = vrot.slane %v209, 4
      %v212 = vshll.u32 %v156, 16
      %v214 = vrot.slane %v212, 5
      %v215 = vsel %vm177, %v210, %v214
      %v216 = vshrl.u32 %v156, 16
      %v218 = vrot.slane %v216, 4
      %v219 = vor.u32 %v218, %v214
      %v220 = vrot.slane %v219, 4
      %v222 = vshll.u32 %v174, 16
      %v224 = vrot.slane %v222, 5
      %v225 = vsel %vm177, %v220, %v224
      %s226 = scalar_lea.vmem %s1, 64
      %v227 = vld [vmem:[%s226] sm:$0xf]
      %v228 = vld [vmem:[%s226 + $0x4] sm:$0xf]
      %v229 = vld [vmem:[%s226 + $0x8] sm:$0xf]
      %v230 = vld [vmem:[%s226 + $0xc] sm:$0xf]
      %v231 = vld [vmem:[%s226 + $0x10] sm:$0xf]
      %v232 = vld [vmem:[%s226 + $0x14] sm:$0xf]
      %v233 = vld [vmem:[%s226 + $0x18] sm:$0xf]
      %v234 = vld [vmem:[%s226 + $0x1c] sm:$0xf]
      %v235 = vld [vmem:[%s226 + $0x20] sm:$0xf]
      %v236 = vld [vmem:[%s226 + $0x24] sm:$0xf]
      %v237 = vld [vmem:[%s226 + $0x28] sm:$0xf]
      %v238 = vld [vmem:[%s226 + $0x2c] sm:$0xf]
      %v239 = vld [vmem:[%s226 + $0x30] sm:$0xf]
      %v240 = vld [vmem:[%s226 + $0x34] sm:$0xf]
      %v241 = vld [vmem:[%s226 + $0x38] sm:$0xf]
      %v242 = vld [vmem:[%s226 + $0x3c] sm:$0xf]
      %v243 = vunpack.c.l.b16 %v191
      %v244 = vunpack.c.l.b16 %v201
      %v245 = vunpack.c.l.b16 %v215
      %v246 = vunpack.c.l.b16 %v225
      %v247 = vpack.c.b16 %v244, %v243
      %v248 = vpack.c.b16 %v246, %v245
      %v267 = vunpack.c.l.b16 %v227
      %v268 = vunpack.c.l.b16 %v228
      %v269 = vunpack.c.l.b16 %v229
      %v270 = vunpack.c.l.b16 %v230
      %v271 = vunpack.c.l.b16 %v231
      %v272 = vunpack.c.l.b16 %v232
      %v273 = vunpack.c.l.b16 %v233
      %v274 = vunpack.c.l.b16 %v234
      %v275 = vunpack.c.l.b16 %v235
      %v276 = vunpack.c.l.b16 %v236
      %v277 = vunpack.c.l.b16 %v237
      %v278 = vunpack.c.l.b16 %v238
      %v279 = vunpack.c.l.b16 %v239
      %v280 = vunpack.c.l.b16 %v240
      %v281 = vunpack.c.l.b16 %v241
      %v282 = vunpack.c.l.b16 %v242
      %v283 = vpack.c.b16 %v268, %v267
      %v284 = vpack.c.b16 %v270, %v269
      %v285 = vpack.c.b16 %v272, %v271
      %v286 = vpack.c.b16 %v274, %v273
      %v287 = vpack.c.b16 %v276, %v275
      %v288 = vpack.c.b16 %v278, %v277
      %v289 = vpack.c.b16 %v280, %v279
      %v290 = vpack.c.b16 %v282, %v281
      %299 = vmatprep.subr.bf16.mxu0 0
      %300 = vmatpush1.bf16.msra.mxu0 %v290
      %301 = vmatprep.subr.bf16.mxu0 0
      %302 = vmatpush1.bf16.msra.mxu0 %v289
      %303 = vmatprep.subr.bf16.mxu0 0
      %304 = vmatpush1.bf16.msra.mxu0 %v288
      %305 = vmatprep.subr.bf16.mxu0 0
      %306 = vmatpush1.bf16.msra.mxu0 %v287
      %307 = vmatprep.subr.bf16.mxu0 0
      %308 = vmatpush1.bf16.msra.mxu0 %v286
      %309 = vmatprep.subr.bf16.mxu0 0
      %310 = vmatpush1.bf16.msra.mxu0 %v285
      %311 = vmatprep.subr.bf16.mxu0 0
      %312 = vmatpush1.bf16.msra.mxu0 %v284
      %313 = vmatprep.subr.bf16.mxu0 0
      %314 = vmatpush1.bf16.msra.mxu0 %v283
      %315 = vmatprep.subr.bf16.mxu0 0
      %316 = vmatpush2.bf16.msra.mxu0 0
      %317 = vmatprep.subr.bf16.mxu0 0
      %318 = vmatpush2.bf16.msra.mxu0 0
      %319 = vmatprep.subr.bf16.mxu0 0
      %320 = vmatpush2.bf16.msra.mxu0 0
      %321 = vmatprep.subr.bf16.mxu0 0
      %322 = vmatpush2.bf16.msra.mxu0 0
      %323 = vmatprep.subr.bf16.mxu0 0
      %324 = vmatpush2.bf16.msra.mxu0 0
      %325 = vmatprep.subr.bf16.mxu0 0
      %326 = vmatpush2.bf16.msra.mxu0 0
      %327 = vmatprep.subr.bf16.mxu0 0
      %328 = vmatpush2.bf16.msra.mxu0 0
      %329 = vmatprep.subr.bf16.mxu0 0
      %330 = vmatpush2.bf16.msra.mxu0 0
      %331 = vmatprep.mubr.bf16.mxu0 0
      %332 = vmatmul.mubr.bf16.gmra.mxu0 %v247
      %v333 = vpop.f32.mrf.mxu0
      %v334 = vadd.f32 0.0, %v333
      %v335 = vpop.f32.mrf.mxu0
      %v336 = vpop.f32.mrf.mxu0
      %v337 = vadd.f32 0.0, %v336
      %v338 = vpop.f32.mrf.mxu0
      %339 = vmatprep.mubr.bf16.mxu0 0
      %340 = vmatmul.mubr.bf16.gmra.mxu0 %v248
      %v341 = vpop.f32.mrf.mxu0
      %v342 = vadd.f32 0.0, %v341
      %v343 = vpop.f32.mrf.mxu0
      %v344 = vpop.f32.mrf.mxu0
      %v345 = vadd.f32 0.0, %v344
      %v346 = vpop.f32.mrf.mxu0
      %347 = vdwg.mxu0
      %v352 = vunpack.c.l.b16 %v153
      %v353 = vunpack.c.l.b16 %v154
      %v354 = vunpack.c.l.b16 %v155
      %v355 = vunpack.c.l.b16 %v156
      %v356 = vpack.c.b16 %v353, %v352
      %v357 = vpack.c.b16 %v355, %v354
      %v376 = vunpack.c.l.b16 %v157
      %v377 = vunpack.c.l.b16 %v158
      %v378 = vunpack.c.l.b16 %v159
      %v379 = vunpack.c.l.b16 %v160
      %v380 = vunpack.c.l.b16 %v161
      %v381 = vunpack.c.l.b16 %v162
      %v382 = vunpack.c.l.b16 %v163
      %v383 = vunpack.c.l.b16 %v164
      %v384 = vunpack.c.l.b16 %v165
      %v385 = vunpack.c.l.b16 %v166
      %v386 = vunpack.c.l.b16 %v167
      %v387 = vunpack.c.l.b16 %v168
      %v388 = vunpack.c.l.b16 %v169
      %v389 = vunpack.c.l.b16 %v170
      %v390 = vunpack.c.l.b16 %v171
      %v391 = vunpack.c.l.b16 %v172
      %v392 = vpack.c.b16 %v377, %v376
      %v393 = vpack.c.b16 %v379, %v378
      %v394 = vpack.c.b16 %v381, %v380
      %v395 = vpack.c.b16 %v383, %v382
      %v396 = vpack.c.b16 %v385, %v384
      %v397 = vpack.c.b16 %v387, %v386
      %v398 = vpack.c.b16 %v389, %v388
      %v399 = vpack.c.b16 %v391, %v390
      %408 = vmatprep.subr.bf16.mxu0 0
      %409 = vmatpush1.bf16.msra.mxu0 %v399
      %410 = vmatprep.subr.bf16.mxu0 0
      %411 = vmatpush1.bf16.msra.mxu0 %v398
      %412 = vmatprep.subr.bf16.mxu0 0
      %413 = vmatpush1.bf16.msra.mxu0 %v397
      %414 = vmatprep.subr.bf16.mxu0 0
      %415 = vmatpush1.bf16.msra.mxu0 %v396
      %416 = vmatprep.subr.bf16.mxu0 0
      %417 = vmatpush1.bf16.msra.mxu0 %v395
      %418 = vmatprep.subr.bf16.mxu0 0
      %419 = vmatpush1.bf16.msra.mxu0 %v394
      %420 = vmatprep.subr.bf16.mxu0 0
      %421 = vmatpush1.bf16.msra.mxu0 %v393
      %422 = vmatprep.subr.bf16.mxu0 0
      %423 = vmatpush1.bf16.msra.mxu0 %v392
      %424 = vmatprep.subr.bf16.mxu0 0
      %425 = vmatpush2.bf16.msra.mxu0 0
      %426 = vmatprep.subr.bf16.mxu0 0
      %427 = vmatpush2.bf16.msra.mxu0 0
      %428 = vmatprep.subr.bf16.mxu0 0
      %429 = vmatpush2.bf16.msra.mxu0 0
      %430 = vmatprep.subr.bf16.mxu0 0
      %431 = vmatpush2.bf16.msra.mxu0 0
      %432 = vmatprep.subr.bf16.mxu0 0
      %433 = vmatpush2.bf16.msra.mxu0 0
      %434 = vmatprep.subr.bf16.mxu0 0
      %435 = vmatpush2.bf16.msra.mxu0 0
      %436 = vmatprep.subr.bf16.mxu0 0
      %437 = vmatpush2.bf16.msra.mxu0 0
      %438 = vmatprep.subr.bf16.mxu0 0
      %439 = vmatpush2.bf16.msra.mxu0 0
      %440 = vmatprep.mubr.bf16.mxu0 0
      %441 = vmatmul.mubr.bf16.gmra.mxu0 %v356
      %v442 = vpop.f32.mrf.mxu0
      %v443 = vadd.f32 %v334, %v442
      %v444 = vpop.f32.mrf.mxu0
      %v445 = vpop.f32.mrf.mxu0
      %v446 = vadd.f32 %v337, %v445
      %v447 = vpop.f32.mrf.mxu0
      %448 = vmatprep.mubr.bf16.mxu0 0
      %449 = vmatmul.mubr.bf16.gmra.mxu0 %v357
      %v450 = vpop.f32.mrf.mxu0
      %v451 = vadd.f32 %v342, %v450
      %v452 = vpop.f32.mrf.mxu0
      %v453 = vpop.f32.mrf.mxu0
      %v454 = vadd.f32 %v345, %v453
      %v455 = vpop.f32.mrf.mxu0
      %456 = vdwg.mxu0
      %v457 = vld [vmem:[%s143] sm:$0xe]
      %v458 = vld [vmem:[%s143 + $0xc] sm:$0xe]
      %vm463 = vcmask 1042432
      %vm464 = vcmask 1046532
      %vm465 = vmor %vm463, %vm464
      %v466 = vrot.slane %v457, 5
      %v467 = vrot.slane %v466, 4
      %v468 = vrot.slane %v154, 5
      %v469 = vsel %vm465, %v467, %v468
      %v470 = vrot.slane %v468, 4
      %v471 = vrot.slane %v173, 5
      %v472 = vsel %vm465, %v470, %v471
      %v473 = vrot.slane %v458, 5
      %v474 = vrot.slane %v473, 4
      %v475 = vrot.slane %v156, 5
      %v476 = vsel %vm465, %v474, %v475
      %v477 = vrot.slane %v475, 4
      %v478 = vrot.slane %v174, 5
      %v479 = vsel %vm465, %v477, %v478
      %s480 = scalar_lea.vmem %s1, 128
      %v481 = vld [vmem:[%s480] sm:$0xf]
      %v482 = vld [vmem:[%s480 + $0x4] sm:$0xf]
      %v483 = vld [vmem:[%s480 + $0x8] sm:$0xf]
      %v484 = vld [vmem:[%s480 + $0xc] sm:$0xf]
      %v485 = vld [vmem:[%s480 + $0x10] sm:$0xf]
      %v486 = vld [vmem:[%s480 + $0x14] sm:$0xf]
      %v487 = vld [vmem:[%s480 + $0x18] sm:$0xf]
      %v488 = vld [vmem:[%s480 + $0x1c] sm:$0xf]
      %v489 = vld [vmem:[%s480 + $0x20] sm:$0xf]
      %v490 = vld [vmem:[%s480 + $0x24] sm:$0xf]
      %v491 = vld [vmem:[%s480 + $0x28] sm:$0xf]
      %v492 = vld [vmem:[%s480 + $0x2c] sm:$0xf]
      %v493 = vld [vmem:[%s480 + $0x30] sm:$0xf]
      %v494 = vld [vmem:[%s480 + $0x34] sm:$0xf]
      %v495 = vld [vmem:[%s480 + $0x38] sm:$0xf]
      %v496 = vld [vmem:[%s480 + $0x3c] sm:$0xf]
      %v497 = vunpack.c.l.b16 %v469
      %v498 = vunpack.c.l.b16 %v472
      %v499 = vunpack.c.l.b16 %v476
      %v500 = vunpack.c.l.b16 %v479
      %v501 = vpack.c.b16 %v498, %v497
      %v502 = vpack.c.b16 %v500, %v499
      %v521 = vunpack.c.l.b16 %v481
      %v522 = vunpack.c.l.b16 %v482
      %v523 = vunpack.c.l.b16 %v483
      %v524 = vunpack.c.l.b16 %v484
      %v525 = vunpack.c.l.b16 %v485
      %v526 = vunpack.c.l.b16 %v486
      %v527 = vunpack.c.l.b16 %v487
      %v528 = vunpack.c.l.b16 %v488
      %v529 = vunpack.c.l.b16 %v489
      %v530 = vunpack.c.l.b16 %v490
      %v531 = vunpack.c.l.b16 %v491
      %v532 = vunpack.c.l.b16 %v492
      %v533 = vunpack.c.l.b16 %v493
      %v534 = vunpack.c.l.b16 %v494
      %v535 = vunpack.c.l.b16 %v495
      %v536 = vunpack.c.l.b16 %v496
      %v537 = vpack.c.b16 %v522, %v521
      %v538 = vpack.c.b16 %v524, %v523
      %v539 = vpack.c.b16 %v526, %v525
      %v540 = vpack.c.b16 %v528, %v527
      %v541 = vpack.c.b16 %v530, %v529
      %v542 = vpack.c.b16 %v532, %v531
      %v543 = vpack.c.b16 %v534, %v533
      %v544 = vpack.c.b16 %v536, %v535
      %553 = vmatprep.subr.bf16.mxu0 0
      %554 = vmatpush1.bf16.msra.mxu0 %v544
      %555 = vmatprep.subr.bf16.mxu0 0
      %556 = vmatpush1.bf16.msra.mxu0 %v543
      %557 = vmatprep.subr.bf16.mxu0 0
      %558 = vmatpush1.bf16.msra.mxu0 %v542
      %559 = vmatprep.subr.bf16.mxu0 0
      %560 = vmatpush1.bf16.msra.mxu0 %v541
      %561 = vmatprep.subr.bf16.mxu0 0
      %562 = vmatpush1.bf16.msra.mxu0 %v540
      %563 = vmatprep.subr.bf16.mxu0 0
      %564 = vmatpush1.bf16.msra.mxu0 %v539
      %565 = vmatprep.subr.bf16.mxu0 0
      %566 = vmatpush1.bf16.msra.mxu0 %v538
      %567 = vmatprep.subr.bf16.mxu0 0
      %568 = vmatpush1.bf16.msra.mxu0 %v537
      %569 = vmatprep.subr.bf16.mxu0 0
      %570 = vmatpush2.bf16.msra.mxu0 0
      %571 = vmatprep.subr.bf16.mxu0 0
      %572 = vmatpush2.bf16.msra.mxu0 0
      %573 = vmatprep.subr.bf16.mxu0 0
      %574 = vmatpush2.bf16.msra.mxu0 0
      %575 = vmatprep.subr.bf16.mxu0 0
      %576 = vmatpush2.bf16.msra.mxu0 0
      %577 = vmatprep.subr.bf16.mxu0 0
      %578 = vmatpush2.bf16.msra.mxu0 0
      %579 = vmatprep.subr.bf16.mxu0 0
      %580 = vmatpush2.bf16.msra.mxu0 0
      %581 = vmatprep.subr.bf16.mxu0 0
      %582 = vmatpush2.bf16.msra.mxu0 0
      %583 = vmatprep.subr.bf16.mxu0 0
      %584 = vmatpush2.bf16.msra.mxu0 0
      %585 = vmatprep.mubr.bf16.mxu0 0
      %586 = vmatmul.mubr.bf16.gmra.mxu0 %v501
      %v587 = vpop.f32.mrf.mxu0
      %v588 = vadd.f32 0.0, %v587
      %v589 = vpop.f32.mrf.mxu0
      %v590 = vpop.f32.mrf.mxu0
      %v591 = vadd.f32 0.0, %v590
      %v592 = vpop.f32.mrf.mxu0
      %593 = vmatprep.mubr.bf16.mxu0 0
      %594 = vmatmul.mubr.bf16.gmra.mxu0 %v502
      %v595 = vpop.f32.mrf.mxu0
      %v596 = vadd.f32 0.0, %v595
      %v597 = vpop.f32.mrf.mxu0
      %v598 = vpop.f32.mrf.mxu0
      %v599 = vadd.f32 0.0, %v598
      %v600 = vpop.f32.mrf.mxu0
      %601 = vdwg.mxu0
      %v602 = vadd.f32 %v443, %v588
      %v603 = vadd.f32 %v446, %v591
      %v604 = vadd.f32 %v451, %v596
      %v605 = vadd.f32 %v454, %v599
      %606 = vadd.xlane.f32.xlu0 %v602
      %v607 = vpop.xlane.xlu0 %606
      %608 = vadd.xlane.f32.xlu0 %v603
      %v609 = vpop.xlane.xlu0 %608
      %610 = vadd.xlane.f32.xlu0 %v604
      %v611 = vpop.xlane.xlu0 %610
      %612 = vadd.xlane.f32.xlu0 %v605
      %v613 = vpop.xlane.xlu0 %612
      %v614 = vadd.f32 %v607, %v609
      %v615 = vrot.slane %v614, 4
      %v616 = vadd.f32 %v614, %v615
      %v617 = vrot.slane %v616, 2
      %v618 = vadd.f32 %v616, %v617
      %v619 = vrot.slane %v618, 1
      %v620 = vadd.f32 %v618, %v619
      %v621 = vadd.f32 %v611, %v613
      %v622 = vrot.slane %v621, 4
      %v623 = vadd.f32 %v621, %v622
      %v624 = vrot.slane %v623, 2
      %v625 = vadd.f32 %v623, %v624
      %v626 = vrot.slane %v625, 1
      %v627 = vadd.f32 %v625, %v626
      %v628 = vmul.f32 %v602, %v602
      %v629 = vmul.f32 %v603, %v603
      %v630 = vmul.f32 %v604, %v604
      %v631 = vmul.f32 %v605, %v605
      %632 = vadd.xlane.f32.xlu0 %v628
      %v633 = vpop.xlane.xlu0 %632
      %634 = vadd.xlane.f32.xlu0 %v629
      %v635 = vpop.xlane.xlu0 %634
      %636 = vadd.xlane.f32.xlu0 %v630
      %v637 = vpop.xlane.xlu0 %636
      %638 = vadd.xlane.f32.xlu0 %v631
      %v639 = vpop.xlane.xlu0 %638
      %v640 = vadd.f32 %v633, %v635
      %v641 = vrot.slane %v640, 4
      %v642 = vadd.f32 %v640, %v641
      %v643 = vrot.slane %v642, 2
      %v644 = vadd.f32 %v642, %v643
      %v645 = vrot.slane %v644, 1
      %v646 = vadd.f32 %v644, %v645
      %v647 = vadd.f32 %v637, %v639
      %v648 = vrot.slane %v647, 4
      %v649 = vadd.f32 %v647, %v648
      %v650 = vrot.slane %v649, 2
      %v651 = vadd.f32 %v649, %v650
      %v652 = vrot.slane %v651, 1
      %v653 = vadd.f32 %v651, %v652
      %v654 = vmul.f32 %v620, 0.0078125
      %v655 = vmul.f32 %v627, 0.0078125
      %v656 = vmul.f32 %v646, 0.0078125
      %v657 = vmul.f32 %v653, 0.0078125
      %v658 = vmul.f32 %v654, %v654
      %v659 = vmul.f32 %v655, %v655
      %v660 = vsub.f32 %v656, %v658
      %v661 = vsub.f32 %v657, %v659
      %v662 = vsub.f32 %v602, %v654
      %v663 = vsub.f32 %v603, %v654
      %v664 = vsub.f32 %v604, %v655
      %v665 = vsub.f32 %v605, %v655
      %v666 = vadd.f32 %v660, 1e-05
      %v667 = vadd.f32 %v661, 1e-05
      %v668 = vrsqrt.pop %v666
      %v669 = vrsqrt.pop %v667
      %v670 = vmul.f32 %v662, %v668
      %v671 = vmul.f32 %v663, %v668
      %v672 = vmul.f32 %v664, %v669
      %v673 = vmul.f32 %v665, %v669
      %v674 = vlaneseq
      %v675 = vand.u32 %v674, 127
      %vm676 = vcmp.lt.s32.totalorder %v675, 8
      %v677 = vsel %vm676, %v670, 0.0
      %v678 = vsel %vm676, %v671, 0.0
      %v679 = vsel %vm676, %v672, 0.0
      %v680 = vsel %vm676, %v673, 0.0
      %v681 = vmax.f32 %v677, 0.0
      %v682 = vmax.f32 %v678, 0.0
      %v683 = vmax.f32 %v679, 0.0
      %v684 = vmax.f32 %v680, 0.0
      %vm685 = vcmask 1040384
      %vm686 = vsmask.f32 256
      %vm687 = vmand %vm685, %vm686
      %v688 = vld [vmem:[%s150] sm:$0x1]
      %v689 = vsel %vm687, 0, %v688
      %690 = vst [vmem:[%s150] sm:$0x1] %v689
      %v691 = vld [vmem:[%s150 + $0xc] sm:$0x1]
      %v692 = vsel %vm687, 0, %v691
      %693 = vst [vmem:[%s150 + $0xc] sm:$0x1] %v692
      %vm694 = vsmask.f32 7938
      %vm695 = vmand %vm685, %vm694
      %v696 = vld [vmem:[%s150 + $0x8] sm:$0x1]
      %v697 = vsel %vm695, 0, %v696
      %698 = vst [vmem:[%s150 + $0x8] sm:$0x1] %v697
      %v699 = vld [vmem:[%s150 + $0x14] sm:$0x1]
      %v700 = vsel %vm695, 0, %v699
      %701 = vst [vmem:[%s150 + $0x14] sm:$0x1] %v700
      %v702 = vpack.c.bf16 %v682, %v681
      %v703 = vpack.c.bf16 %v684, %v683
      %v706 = vunpack.c.l.b16 %v702
      %v707 = vunpack.c.h.b16 %v702
      %v708 = vunpack.c.l.b16 %v703
      %v709 = vunpack.c.h.b16 %v703
      %v710 = vpack.c.b16 %v706, %v706
      %v711 = vpack.c.b16 %v707, %v707
      %v712 = vpack.c.b16 %v708, %v708
      %v713 = vpack.c.b16 %v709, %v709
      %vm714 = vsmask.f32 4368
      %vm715 = vmor %vm686, %vm714
      %v717 = vshrl.u32 %v710, 16
      %v719 = vrot.slane %v717, 7
      %v720 = vshll.u32 %v710, 16
      %v722 = vor.u32 %v719, %v720
      %v723 = vrot.slane %v719, 4
      %v725 = vshrl.u32 %v711, 16
      %v727 = vrot.slane %v725, 7
      %v728 = vshll.u32 %v711, 16
      %v730 = vor.u32 %v727, %v728
      %v731 = vsel %vm715, %v723, %v730
      %v732 = vrot.slane %v727, 4
      %v734 = vshrl.u32 %v712, 16
      %v736 = vrot.slane %v734, 7
      %v737 = vshll.u32 %v712, 16
      %v739 = vor.u32 %v736, %v737
      %v740 = vrot.slane %v736, 4
      %v742 = vshrl.u32 %v713, 16
      %v744 = vrot.slane %v742, 7
      %v745 = vshll.u32 %v713, 16
      %v747 = vor.u32 %v744, %v745
      %v748 = vsel %vm715, %v740, %v747
      %v749 = vrot.slane %v744, 4
      %vm756 = vcmask 1043456
      %vm757 = vmand %vm756, %vm694
      %v758 = vld [vmem:[%s150] sm:$0xf]
      %v759 = vsel %vm757, %v722, %v758
      %760 = vst [vmem:[%s150] sm:$0xf] %v759
      %761 = vst [vmem:[%s150 + $0x4] sm:$0xf] %v731
      %v762 = vld [vmem:[%s150 + $0x8] sm:$0x1]
      %v763 = vsel %vm687, %v732, %v762
      %764 = vst [vmem:[%s150 + $0x8] sm:$0x1] %v763
      %v765 = vld [vmem:[%s150 + $0xc] sm:$0xf]
      %v766 = vsel %vm757, %v739, %v765
      %767 = vst [vmem:[%s150 + $0xc] sm:$0xf] %v766
      %768 = vst [vmem:[%s150 + $0x10] sm:$0xf] %v748
      %v769 = vld [vmem:[%s150 + $0x14] sm:$0x1]
      %v770 = vsel %vm687, %v749, %v769
      %771 = vst [vmem:[%s150 + $0x14] sm:$0x1] %v770
      %s772 = smul.u32 2, %s13
      %p773 = scmp.lt.s32.totalorder %s772, 3
      %s774 = scalar_select %p773, %s772, 3
      %s775 = smul.addr %s774, 3
      %s776 = smul.addr %s775, 4
      %s777 = scalar_lea.vmem %s2, %s776
      // Predicated region
      $region29: #{_lambda_.15} parent=27 // pred_check
        %p778 = pneg %p78
      $region30: #{_lambda_.15} parent=27 // pred_check_branch
        %780 = sbr.rel (%p778) target = $region32
      $region31: #{_lambda_.15} parent=27 // pred_region
        %s781 = smul.u32 2, %s13
      $region32: #{_lambda_.15} parent=27 // pred_fallthru
        _
    $region28: #{_lambda_.15} parent=5 // pred_fallthru
      _
    %p782 = scmp.le.s32.totalorder 2, %s8
    // Predicated region
    $region33: #{_lambda_.15} parent=5 // pred_check
      %p783 = pneg %p782
    $region34: #{_lambda_.15} parent=5 // pred_check_branch
      %785 = sbr.rel (%p783) target = $region36
    $region35: #{_lambda_.15} parent=5 // pred_region
      %s786 = ssub.s32 %s8, 2
      // Predicated region
      $region37: #{_lambda_.15} parent=35 // pred_check
        %p787 = pneg %p84
      $region38: #{_lambda_.15} parent=35 // pred_check_branch
        %789 = sbr.rel (%p787) target = $region40
      $region39: #{_lambda_.15} parent=35 // pred_region
        %s790 = smul.u32 2, %s14
        %p791 = scmp.lt.s32.totalorder %s790, 3
        %s792 = scalar_select %p791, %s790, 3
        %s793 = smul.addr %s792, 3
        %s794 = smul.addr %s793, 4
        %s795 = scalar_lea.vmem %s2, %s794
      $region40: #{_lambda_.15} parent=35 // pred_fallthru
        _
    $region36: #{_lambda_.15} parent=5 // pred_fallthru
      _
  $region6: #{_lambda_.15} parent=0 // loop_footer
    %s12 = sadd.s32 1, %s8
  $region7: #{_lambda_.15} parent=0 // loop_footer_branch
    %7 = sbr.rel target = $region3
  $region8: #{_lambda_.15} parent=0 // loop_exit
    _

// kernel: _lambda_.16
$region0: #{_lambda_.16}
  #allocation0 [shape = 'u32[]', space=smem, size = 0x4, offset = 0x4, fixed_abs, tag = 'smem constant byte address 0x4 - core index']
  #allocation1 [shape = 'u32[144,128]{1,0:T(1,128)}', space=vmem, size = 0x12000, scoped, tag = 'internal scratch']
  %s0 = inlined_call_operand.vmem [shape: bf16[4,18,128], index: 0, kind: input, shape index: {}]
  %s1 = inlined_call_operand.vmem [shape: bf16[3,128,128], index: 1, kind: input, shape index: {}]
  %s2 = inlined_call_operand.vmem [shape: bf16[4,18,128], index: 2, kind: input, shape index: {}]
  %s3 = inlined_call_operand.vmem [shape: bf16[4,18,128], index: 3, kind: output, shape index: {}]
  %s4 = sld [smem:[#allocation0]]
  $region45: #{_lambda_.16} parent=0
    _
  %s6 = ssub.s32 1, %s4
  %s7 = scalar_select 0, %s6, %s4
  loop: start=0, step=1, limit=4
  $region2: #{_lambda_.16} parent=0 // loop_pre_header
    _
  $region3: #{_lambda_.16} parent=0 // loop_header
    %s9 = sphi 0, %s13
    %p10 = scmp.ge.s32.totalorder %s9, 4
    %s19 = sphi 0, %s21
    %s22 = sphi 0, %s19
    %s23 = sphi 0, %s22
    %s39 = sphi 0, %s23
    %s43 = sphi 0, %s43
    %s45 = sphi 0, %s43
    %s46 = sphi 0, %s45
    %s60 = sphi 0, %s46
    %s66 = sphi 0, %s68
    %s69 = sphi 0, %s66
    %s70 = sphi 0, %s69
    %s86 = sphi 0, %s70
    %s92 = sphi 0, %s94
    %s95 = sphi 0, %s92
    %s96 = sphi 0, %s95
    %s112 = sphi 0, %s96
  $region4: #{_lambda_.16} parent=0 // loop_header_branch
    %12 = sbr.rel (%p10) target = $region8
  $region5: #{_lambda_.16} parent=0 // loop_body
    %s14 = ssub.s32 %s9, 1
    %s15 = ssub.s32 %s9, 2
    %s16 = sadd.s32 %s9, 1
    %s17 = ssub.s32 %s9, %s16
    %p18 = scmp.eq.s32.totalorder %s17, 0
    %s20 = sadd.s32 %s19, 1
    %s21 = scalar_select %p18, %s19, %s20
    %p24 = pneg %p18
    %p25 = scmp.eq.s32.totalorder %s9, 1
    %p26 = por %p24, %p25
    %p27 = scmp.ne.s32.totalorder %s19, %s22
    %p28 = scmp.eq.s32.totalorder %s9, 0
    %p29 = por %p27, %p28
    %p30 = scmp.ne.s32.totalorder %s19, %s22
    %p31 = scmp.eq.s32.totalorder %s14, 1
    %p32 = por %p30, %p31
    %p33 = scmp.ne.s32.totalorder %s22, %s23
    %p34 = scmp.eq.s32.totalorder %s14, 0
    %p35 = por %p33, %p34
    %p36 = scmp.ne.s32.totalorder %s22, %s23
    %p37 = scmp.eq.s32.totalorder %s15, 1
    %p38 = por %p36, %p37
    %p40 = scmp.ne.s32.totalorder %s23, %s39
    %p41 = scmp.eq.s32.totalorder %s15, 0
    %p42 = por %p40, %p41
    %s44 = sadd.s32 %s43, 1
    %p47 = scmp.eq.s32.totalorder %s9, 1
    %p48 = scmp.ne.s32.totalorder %s43, %s45
    %p49 = scmp.eq.s32.totalorder %s9, 0
    %p50 = por %p48, %p49
    %p51 = scmp.ne.s32.totalorder %s43, %s45
    %p52 = scmp.eq.s32.totalorder %s14, 1
    %p53 = por %p51, %p52
    %p54 = scmp.ne.s32.totalorder %s45, %s46
    %p55 = scmp.eq.s32.totalorder %s14, 0
    %p56 = por %p54, %p55
    %p57 = scmp.ne.s32.totalorder %s45, %s46
    %p58 = scmp.eq.s32.totalorder %s15, 1
    %p59 = por %p57, %p58
    %p61 = scmp.ne.s32.totalorder %s46, %s60
    %p62 = scmp.eq.s32.totalorder %s15, 0
    %p63 = por %p61, %p62
    %s64 = ssub.s32 %s9, %s16
    %p65 = scmp.eq.s32.totalorder %s64, 0
    %s67 = sadd.s32 %s66, 1
    %s68 = scalar_select %p65, %s66, %s67
    %p71 = pneg %p65
    %p72 = scmp.eq.s32.totalorder %s9, 1
    %p73 = por %p71, %p72
    %p74 = scmp.ne.s32.totalorder %s66, %s69
    %p75 = scmp.eq.s32.totalorder %s9, 0
    %p76 = por %p74, %p75
    %p77 = scmp.ne.s32.totalorder %s66, %s69
    %p78 = scmp.eq.s32.totalorder %s14, 1
    %p79 = por %p77, %p78
    %p80 = scmp.ne.s32.totalorder %s69, %s70
    %p81 = scmp.eq.s32.totalorder %s14, 0
    %p82 = por %p80, %p81
    %p83 = scmp.ne.s32.totalorder %s69, %s70
    %p84 = scmp.eq.s32.totalorder %s15, 1
    %p85 = por %p83, %p84
    %p87 = scmp.ne.s32.totalorder %s70, %s86
    %p88 = scmp.eq.s32.totalorder %s15, 0
    %p89 = por %p87, %p88
    %s90 = ssub.s32 %s9, %s16
    %p91 = scmp.eq.s32.totalorder %s90, 0
    %s93 = sadd.s32 %s92, 1
    %s94 = scalar_select %p91, %s92, %s93
    %p97 = pneg %p91
    %p98 = scmp.eq.s32.totalorder %s9, 1
    %p99 = por %p97, %p98
    %p100 = scmp.ne.s32.totalorder %s92, %s95
    %p101 = scmp.eq.s32.totalorder %s9, 0
    %p102 = por %p100, %p101
    %p103 = scmp.ne.s32.totalorder %s92, %s95
    %p104 = scmp.eq.s32.totalorder %s14, 1
    %p105 = por %p103, %p104
    %p106 = scmp.ne.s32.totalorder %s95, %s96
    %p107 = scmp.eq.s32.totalorder %s14, 0
    %p108 = por %p106, %p107
    %p109 = scmp.ne.s32.totalorder %s95, %s96
    %p110 = scmp.eq.s32.totalorder %s15, 1
    %p111 = por %p109, %p110
    %p113 = scmp.ne.s32.totalorder %s96, %s112
    %p114 = scmp.eq.s32.totalorder %s15, 0
    %p115 = por %p113, %p114
    %p116 = scmp.le.s32.totalorder 1, %s9
    %p117 = scmp.lt.s32.totalorder %s9, 3
    %p118 = pnand %p116, %p117
    %p119 = pneg %p118
    // Predicated region
    $region9: #{_lambda_.16} parent=5 // pred_check
      _
    $region10: #{_lambda_.16} parent=5 // pred_check_branch
      %121 = sbr.rel (%p118) target = $region12
    $region11: #{_lambda_.16} parent=5 // pred_region
      %s122 = ssub.s32 %s9, 1
      // Predicated region
      $region13: #{_lambda_.16} parent=11 // pred_check
        %p123 = pneg %p56
      $region14: #{_lambda_.16} parent=11 // pred_check_branch
        %125 = sbr.rel (%p123) target = $region16
      $region15: #{_lambda_.16} parent=11 // pred_region
        _
      $region16: #{_lambda_.16} parent=11 // pred_fallthru
        _
    $region12: #{_lambda_.16} parent=5 // pred_fallthru
      _
    %p126 = scmp.lt.s32.totalorder %s9, 2
    // Predicated region
    $region17: #{_lambda_.16} parent=5 // pred_check
      %p127 = pneg %p126
    $region18: #{_lambda_.16} parent=5 // pred_check_branch
      %129 = sbr.rel (%p127) target = $region20
    $region19: #{_lambda_.16} parent=5 // pred_region
      // Predicated region
      $region21: #{_lambda_.16} parent=19 // pred_check
        %p130 = pneg %p29
      $region22: #{_lambda_.16} parent=19 // pred_check_branch
        %132 = sbr.rel (%p130) target = $region24
      $region23: #{_lambda_.16} parent=19 // pred_region
        %s133 = smul.u32 2, %s9
        %p134 = scmp.lt.s32.totalorder %s133, 3
        %s135 = scalar_select %p134, %s133, 3
        %s136 = smul.addr %s135, 3
        %s137 = smul.addr %s136, 4
        %s138 = scalar_lea.vmem %s0, %s137
        %s139 = smul.u32 2, %s9
      $region24: #{_lambda_.16} parent=19 // pred_fallthru
        _
      // Predicated region
      $region25: #{_lambda_.16} parent=19 // pred_check
        %p140 = pneg %p76
      $region26: #{_lambda_.16} parent=19 // pred_check_branch
        %142 = sbr.rel (%p140) target = $region28
      $region27: #{_lambda_.16} parent=19 // pred_region
        %s143 = smul.u32 2, %s9
        %p144 = scmp.lt.s32.totalorder %s143, 3
        %s145 = scalar_select %p144, %s143, 3
        %s146 = smul.addr %s145, 3
        %s147 = smul.addr %s146, 4
        %s148 = scalar_lea.vmem %s2, %s147
        %s149 = smul.u32 2, %s9
      $region28: #{_lambda_.16} parent=19 // pred_fallthru
        _
    $region20: #{_lambda_.16} parent=5 // pred_fallthru
      _
    %p150 = scmp.le.s32.totalorder 1, %s9
    %p151 = scmp.lt.s32.totalorder %s9, 3
    %p152 = pnand %p150, %p151
    %p153 = pneg %p152
    // Predicated region
    $region29: #{_lambda_.16} parent=5 // pred_check
      _
    $region30: #{_lambda_.16} parent=5 // pred_check_branch
      %155 = sbr.rel (%p152) target = $region32
    $region31: #{_lambda_.16} parent=5 // pred_region
      %s156 = ssub.s32 %s9, 1
      %s157 = smul.u32 2, %s14
      %p158 = scmp.lt.s32.totalorder %s157, 3
      %s159 = scalar_select %p158, %s157, 3
      %s160 = smul.addr %s159, 3
      %s161 = smul.addr %s160, 4
      %s162 = scalar_lea.vmem %s0, %s161
      %p163 = pneg %p35
      %p164 = pneg %p32
      %p165 = pneg %p56
      %p166 = pneg %p53
      %s167 = smul.u32 2, %s14
      %p168 = scmp.lt.s32.totalorder %s167, 3
      %s169 = scalar_select %p168, %s167, 3
      %s170 = smul.addr %s169, 3
      %s171 = smul.addr %s170, 4
      %s172 = scalar_lea.vmem %s2, %s171
      %p173 = pneg %p82
      %p174 = pneg %p79
      %p175 = pneg %p108
      %p176 = pneg %p105
      %s177 = smul.u32 2, %s14
      %p178 = scmp.lt.s32.totalorder %s177, 3
      %s179 = scalar_select %p178, %s177, 3
      %s180 = smul.addr %s179, 3
      %s181 = smul.addr %s180, 4
      %s182 = scalar_lea.vmem %s3, %s181
      %s183 = smul.u32 2, %s14
      %p184 = scmp.lt.s32.totalorder %s183, 3
      %s185 = scalar_select %p184, %s183, 3
      %s186 = smul.addr %s185, 3
      %s187 = smul.addr %s186, 4
      %s188 = scalar_lea.vmem %s0, %s187
      %s189 = smul.u32 2, %s14
      %s190 = smul.u32 2, %s14
      %p191 = scmp.lt.s32.totalorder %s190, 3
      %s192 = scalar_select %p191, %s190, 3
      %s193 = smul.addr %s192, 3
      %s194 = smul.addr %s193, 4
      %s195 = scalar_lea.vmem %s2, %s194
      %s196 = smul.u32 2, %s14
      %s197 = smul.u32 2, %s14
      %p198 = scmp.lt.s32.totalorder %s197, 3
      %s199 = scalar_select %p198, %s197, 3
      %s200 = smul.addr %s199, 3
      %s201 = smul.addr %s200, 4
      %s202 = scalar_lea.vmem %s3, %s201
      %s203 = smul.u32 2, %s14
      %v205 = vld [vmem:[%s188] sm:$0xf]
      %v206 = vld [vmem:[%s188 + $0x4] sm:$0xf]
      %v207 = vld [vmem:[%s188 + $0xc] sm:$0xf]
      %v208 = vld [vmem:[%s188 + $0x10] sm:$0xf]
      %v209 = vld [vmem:[%s1] sm:$0xf]
      %v210 = vld [vmem:[%s1 + $0x4] sm:$0xf]
      %v211 = vld [vmem:[%s1 + $0x8] sm:$0xf]
      %v212 = vld [vmem:[%s1 + $0xc] sm:$0xf]
      %v213 = vld [vmem:[%s1 + $0x10] sm:$0xf]
      %v214 = vld [vmem:[%s1 + $0x14] sm:$0xf]
      %v215 = vld [vmem:[%s1 + $0x18] sm:$0xf]
      %v216 = vld [vmem:[%s1 + $0x1c] sm:$0xf]
      %v217 = vld [vmem:[%s1 + $0x20] sm:$0xf]
      %v218 = vld [vmem:[%s1 + $0x24] sm:$0xf]
      %v219 = vld [vmem:[%s1 + $0x28] sm:$0xf]
      %v220 = vld [vmem:[%s1 + $0x2c] sm:$0xf]
      %v221 = vld [vmem:[%s1 + $0x30] sm:$0xf]
      %v222 = vld [vmem:[%s1 + $0x34] sm:$0xf]
      %v223 = vld [vmem:[%s1 + $0x38] sm:$0xf]
      %v224 = vld [vmem:[%s1 + $0x3c] sm:$0xf]
      %v225 = vld [vmem:[%s188 + $0x8] sm:$0x1]
      %v226 = vld [vmem:[%s188 + $0x14] sm:$0x1]
      %vm227 = vsmask.f32 3328
      %vm228 = vsmask.f32 7440
      %vm229 = vmor %vm227, %vm228
      %v231 = vshrl.u32 %v205, 16
      %v233 = vrot.slane %v231, 4
      %v234 = vshll.u32 %v205, 16
      %v236 = vrot.slane %v234, 5
      %v237 = vor.u32 %v233, %v236
      %v238 = vrot.slane %v237, 4
      %v240 = vshll.u32 %v206, 16
      %v242 = vrot.slane %v240, 5
      %v243 = vsel %vm229, %v238, %v242
      %v244 = vshrl.u32 %v206, 16
      %v246 = vrot.slane %v244, 4
      %v247 = vor.u32 %v246, %v242
      %v248 = vrot.slane %v247, 4
      %v250 = vshll.u32 %v225, 16
      %v252 = vrot.slane %v250, 5
      %v253 = vsel %vm229, %v248, %v252
      %v255 = vshrl.u32 %v207, 16
      %v257 = vrot.slane %v255, 4
      %v258 = vshll.u32 %v207, 16
      %v260 = vrot.slane %v258, 5
      %v261 = vor.u32 %v257, %v260
      %v262 = vrot.slane %v261, 4
      %v264 = vshll.u32 %v208, 16
      %v266 = vrot.slane %v264, 5
      %v267 = vsel %vm229, %v262, %v266
      %v268 = vshrl.u32 %v208, 16
      %v270 = vrot.slane %v268, 4
      %v271 = vor.u32 %v270, %v266
      %v272 = vrot.slane %v271, 4
      %v274 = vshll.u32 %v226, 16
      %v276 = vrot.slane %v274, 5
      %v277 = vsel %vm229, %v272, %v276
      %s278 = scalar_lea.vmem %s1, 64
      %v279 = vld [vmem:[%s278] sm:$0xf]
      %v280 = vld [vmem:[%s278 + $0x4] sm:$0xf]
      %v281 = vld [vmem:[%s278 + $0x8] sm:$0xf]
      %v282 = vld [vmem:[%s278 + $0xc] sm:$0xf]
      %v283 = vld [vmem:[%s278 + $0x10] sm:$0xf]
      %v284 = vld [vmem:[%s278 + $0x14] sm:$0xf]
      %v285 = vld [vmem:[%s278 + $0x18] sm:$0xf]
      %v286 = vld [vmem:[%s278 + $0x1c] sm:$0xf]
      %v287 = vld [vmem:[%s278 + $0x20] sm:$0xf]
      %v288 = vld [vmem:[%s278 + $0x24] sm:$0xf]
      %v289 = vld [vmem:[%s278 + $0x28] sm:$0xf]
      %v290 = vld [vmem:[%s278 + $0x2c] sm:$0xf]
      %v291 = vld [vmem:[%s278 + $0x30] sm:$0xf]
      %v292 = vld [vmem:[%s278 + $0x34] sm:$0xf]
      %v293 = vld [vmem:[%s278 + $0x38] sm:$0xf]
      %v294 = vld [vmem:[%s278 + $0x3c] sm:$0xf]
      %v295 = vunpack.c.l.b16 %v243
      %v296 = vunpack.c.l.b16 %v253
      %v297 = vunpack.c.l.b16 %v267
      %v298 = vunpack.c.l.b16 %v277
      %v299 = vpack.c.b16 %v296, %v295
      %v300 = vpack.c.b16 %v298, %v297
      %v319 = vunpack.c.l.b16 %v279
      %v320 = vunpack.c.l.b16 %v280
      %v321 = vunpack.c.l.b16 %v281
      %v322 = vunpack.c.l.b16 %v282
      %v323 = vunpack.c.l.b16 %v283
      %v324 = vunpack.c.l.b16 %v284
      %v325 = vunpack.c.l.b16 %v285
      %v326 = vunpack.c.l.b16 %v286
      %v327 = vunpack.c.l.b16 %v287
      %v328 = vunpack.c.l.b16 %v288
      %v329 = vunpack.c.l.b16 %v289
      %v330 = vunpack.c.l.b16 %v290
      %v331 = vunpack.c.l.b16 %v291
      %v332 = vunpack.c.l.b16 %v292
      %v333 = vunpack.c.l.b16 %v293
      %v334 = vunpack.c.l.b16 %v294
      %v335 = vpack.c.b16 %v320, %v319
      %v336 = vpack.c.b16 %v322, %v321
      %v337 = vpack.c.b16 %v324, %v323
      %v338 = vpack.c.b16 %v326, %v325
      %v339 = vpack.c.b16 %v328, %v327
      %v340 = vpack.c.b16 %v330, %v329
      %v341 = vpack.c.b16 %v332, %v331
      %v342 = vpack.c.b16 %v334, %v333
      %351 = vmatprep.subr.bf16.mxu0 0
      %352 = vmatpush1.bf16.msra.mxu0 %v342
      %353 = vmatprep.subr.bf16.mxu0 0
      %354 = vmatpush1.bf16.msra.mxu0 %v341
      %355 = vmatprep.subr.bf16.mxu0 0
      %356 = vmatpush1.bf16.msra.mxu0 %v340
      %357 = vmatprep.subr.bf16.mxu0 0
      %358 = vmatpush1.bf16.msra.mxu0 %v339
      %359 = vmatprep.subr.bf16.mxu0 0
      %360 = vmatpush1.bf16.msra.mxu0 %v338
      %361 = vmatprep.subr.bf16.mxu0 0
      %362 = vmatpush1.bf16.msra.mxu0 %v337
      %363 = vmatprep.subr.bf16.mxu0 0
      %364 = vmatpush1.bf16.msra.mxu0 %v336
      %365 = vmatprep.subr.bf16.mxu0 0
      %366 = vmatpush1.bf16.msra.mxu0 %v335
      %367 = vmatprep.subr.bf16.mxu0 0
      %368 = vmatpush2.bf16.msra.mxu0 0
      %369 = vmatprep.subr.bf16.mxu0 0
      %370 = vmatpush2.bf16.msra.mxu0 0
      %371 = vmatprep.subr.bf16.mxu0 0
      %372 = vmatpush2.bf16.msra.mxu0 0
      %373 = vmatprep.subr.bf16.mxu0 0
      %374 = vmatpush2.bf16.msra.mxu0 0
      %375 = vmatprep.subr.bf16.mxu0 0
      %376 = vmatpush2.bf16.msra.mxu0 0
      %377 = vmatprep.subr.bf16.mxu0 0
      %378 = vmatpush2.bf16.msra.mxu0 0
      %379 = vmatprep.subr.bf16.mxu0 0
      %380 = vmatpush2.bf16.msra.mxu0 0
      %381 = vmatprep.subr.bf16.mxu0 0
      %382 = vmatpush2.bf16.msra.mxu0 0
      %383 = vmatprep.mubr.bf16.mxu0 0
      %384 = vmatmul.mubr.bf16.gmra.mxu0 %v299
      %v385 = vpop.f32.mrf.mxu0
      %v386 = vadd.f32 0.0, %v385
      %v387 = vpop.f32.mrf.mxu0
      %v388 = vpop.f32.mrf.mxu0
      %v389 = vadd.f32 0.0, %v388
      %v390 = vpop.f32.mrf.mxu0
      %391 = vmatprep.mubr.bf16.mxu0 0
      %392 = vmatmul.mubr.bf16.gmra.mxu0 %v300
      %v393 = vpop.f32.mrf.mxu0
      %v394 = vadd.f32 0.0, %v393
      %v395 = vpop.f32.mrf.mxu0
      %v396 = vpop.f32.mrf.mxu0
      %v397 = vadd.f32 0.0, %v396
      %v398 = vpop.f32.mrf.mxu0
      %399 = vdwg.mxu0
      %v404 = vunpack.c.l.b16 %v205
      %v405 = vunpack.c.l.b16 %v206
      %v406 = vunpack.c.l.b16 %v207
      %v407 = vunpack.c.l.b16 %v208
      %v408 = vpack.c.b16 %v405, %v404
      %v409 = vpack.c.b16 %v407, %v406
      %v428 = vunpack.c.l.b16 %v209
      %v429 = vunpack.c.l.b16 %v210
      %v430 = vunpack.c.l.b16 %v211
      %v431 = vunpack.c.l.b16 %v212
      %v432 = vunpack.c.l.b16 %v213
      %v433 = vunpack.c.l.b16 %v214
      %v434 = vunpack.c.l.b16 %v215
      %v435 = vunpack.c.l.b16 %v216
      %v436 = vunpack.c.l.b16 %v217
      %v437 = vunpack.c.l.b16 %v218
      %v438 = vunpack.c.l.b16 %v219
      %v439 = vunpack.c.l.b16 %v220
      %v440 = vunpack.c.l.b16 %v221
      %v441 = vunpack.c.l.b16 %v222
      %v442 = vunpack.c.l.b16 %v223
      %v443 = vunpack.c.l.b16 %v224
      %v444 = vpack.c.b16 %v429, %v428
      %v445 = vpack.c.b16 %v431, %v430
      %v446 = vpack.c.b16 %v433, %v432
      %v447 = vpack.c.b16 %v435, %v434
      %v448 = vpack.c.b16 %v437, %v436
      %v449 = vpack.c.b16 %v439, %v438
      %v450 = vpack.c.b16 %v441, %v440
      %v451 = vpack.c.b16 %v443, %v442
      %460 = vmatprep.subr.bf16.mxu0 0
      %461 = vmatpush1.bf16.msra.mxu0 %v451
      %462 = vmatprep.subr.bf16.mxu0 0
      %463 = vmatpush1.bf16.msra.mxu0 %v450
      %464 = vmatprep.subr.bf16.mxu0 0
      %465 = vmatpush1.bf16.msra.mxu0 %v449
      %466 = vmatprep.subr.bf16.mxu0 0
      %467 = vmatpush1.bf16.msra.mxu0 %v448
      %468 = vmatprep.subr.bf16.mxu0 0
      %469 = vmatpush1.bf16.msra.mxu0 %v447
      %470 = vmatprep.subr.bf16.mxu0 0
      %471 = vmatpush1.bf16.msra.mxu0 %v446
      %472 = vmatprep.subr.bf16.mxu0 0
      %473 = vmatpush1.bf16.msra.mxu0 %v445
      %474 = vmatprep.subr.bf16.mxu0 0
      %475 = vmatpush1.bf16.msra.mxu0 %v444
      %476 = vmatprep.subr.bf16.mxu0 0
      %477 = vmatpush2.bf16.msra.mxu0 0
      %478 = vmatprep.subr.bf16.mxu0 0
      %479 = vmatpush2.bf16.msra.mxu0 0
      %480 = vmatprep.subr.bf16.mxu0 0
      %481 = vmatpush2.bf16.msra.mxu0 0
      %482 = vmatprep.subr.bf16.mxu0 0
      %483 = vmatpush2.bf16.msra.mxu0 0
      %484 = vmatprep.subr.bf16.mxu0 0
      %485 = vmatpush2.bf16.msra.mxu0 0
      %486 = vmatprep.subr.bf16.mxu0 0
      %487 = vmatpush2.bf16.msra.mxu0 0
      %488 = vmatprep.subr.bf16.mxu0 0
      %489 = vmatpush2.bf16.msra.mxu0 0
      %490 = vmatprep.subr.bf16.mxu0 0
      %491 = vmatpush2.bf16.msra.mxu0 0
      %492 = vmatprep.mubr.bf16.mxu0 0
      %493 = vmatmul.mubr.bf16.gmra.mxu0 %v408
      %v494 = vpop.f32.mrf.mxu0
      %v495 = vadd.f32 %v386, %v494
      %v496 = vpop.f32.mrf.mxu0
      %v497 = vpop.f32.mrf.mxu0
      %v498 = vadd.f32 %v389, %v497
      %v499 = vpop.f32.mrf.mxu0
      %500 = vmatprep.mubr.bf16.mxu0 0
      %501 = vmatmul.mubr.bf16.gmra.mxu0 %v409
      %v502 = vpop.f32.mrf.mxu0
      %v503 = vadd.f32 %v394, %v502
      %v504 = vpop.f32.mrf.mxu0
      %v505 = vpop.f32.mrf.mxu0
      %v506 = vadd.f32 %v397, %v505
      %v507 = vpop.f32.mrf.mxu0
      %508 = vdwg.mxu0
      %v509 = vld [vmem:[%s188] sm:$0xe]
      %v510 = vld [vmem:[%s188 + $0xc] sm:$0xe]
      %vm515 = vcmask 1042432
      %vm516 = vcmask 1046532
      %vm517 = vmor %vm515, %vm516
      %v518 = vrot.slane %v509, 5
      %v519 = vrot.slane %v518, 4
      %v520 = vrot.slane %v206, 5
      %v521 = vsel %vm517, %v519, %v520
      %v522 = vrot.slane %v520, 4
      %v523 = vrot.slane %v225, 5
      %v524 = vsel %vm517, %v522, %v523
      %v525 = vrot.slane %v510, 5
      %v526 = vrot.slane %v525, 4
      %v527 = vrot.slane %v208, 5
      %v528 = vsel %vm517, %v526, %v527
      %v529 = vrot.slane %v527, 4
      %v530 = vrot.slane %v226, 5
      %v531 = vsel %vm517, %v529, %v530
      %s532 = scalar_lea.vmem %s1, 128
      %v533 = vld [vmem:[%s532] sm:$0xf]
      %v534 = vld [vmem:[%s532 + $0x4] sm:$0xf]
      %v535 = vld [vmem:[%s532 + $0x8] sm:$0xf]
      %v536 = vld [vmem:[%s532 + $0xc] sm:$0xf]
      %v537 = vld [vmem:[%s532 + $0x10] sm:$0xf]
      %v538 = vld [vmem:[%s532 + $0x14] sm:$0xf]
      %v539 = vld [vmem:[%s532 + $0x18] sm:$0xf]
      %v540 = vld [vmem:[%s532 + $0x1c] sm:$0xf]
      %v541 = vld [vmem:[%s532 + $0x20] sm:$0xf]
      %v542 = vld [vmem:[%s532 + $0x24] sm:$0xf]
      %v543 = vld [vmem:[%s532 + $0x28] sm:$0xf]
      %v544 = vld [vmem:[%s532 + $0x2c] sm:$0xf]
      %v545 = vld [vmem:[%s532 + $0x30] sm:$0xf]
      %v546 = vld [vmem:[%s532 + $0x34] sm:$0xf]
      %v547 = vld [vmem:[%s532 + $0x38] sm:$0xf]
      %v548 = vld [vmem:[%s532 + $0x3c] sm:$0xf]
      %v549 = vunpack.c.l.b16 %v521
      %v550 = vunpack.c.l.b16 %v524
      %v551 = vunpack.c.l.b16 %v528
      %v552 = vunpack.c.l.b16 %v531
      %v553 = vpack.c.b16 %v550, %v549
      %v554 = vpack.c.b16 %v552, %v551
      %v573 = vunpack.c.l.b16 %v533
      %v574 = vunpack.c.l.b16 %v534
      %v575 = vunpack.c.l.b16 %v535
      %v576 = vunpack.c.l.b16 %v536
      %v577 = vunpack.c.l.b16 %v537
      %v578 = vunpack.c.l.b16 %v538
      %v579 = vunpack.c.l.b16 %v539
      %v580 = vunpack.c.l.b16 %v540
      %v581 = vunpack.c.l.b16 %v541
      %v582 = vunpack.c.l.b16 %v542
      %v583 = vunpack.c.l.b16 %v543
      %v584 = vunpack.c.l.b16 %v544
      %v585 = vunpack.c.l.b16 %v545
      %v586 = vunpack.c.l.b16 %v546
      %v587 = vunpack.c.l.b16 %v547
      %v588 = vunpack.c.l.b16 %v548
      %v589 = vpack.c.b16 %v574, %v573
      %v590 = vpack.c.b16 %v576, %v575
      %v591 = vpack.c.b16 %v578, %v577
      %v592 = vpack.c.b16 %v580, %v579
      %v593 = vpack.c.b16 %v582, %v581
      %v594 = vpack.c.b16 %v584, %v583
      %v595 = vpack.c.b16 %v586, %v585
      %v596 = vpack.c.b16 %v588, %v587
      %605 = vmatprep.subr.bf16.mxu0 0
      %606 = vmatpush1.bf16.msra.mxu0 %v596
      %607 = vmatprep.subr.bf16.mxu0 0
      %608 = vmatpush1.bf16.msra.mxu0 %v595
      %609 = vmatprep.subr.bf16.mxu0 0
      %610 = vmatpush1.bf16.msra.mxu0 %v594
      %611 = vmatprep.subr.bf16.mxu0 0
      %612 = vmatpush1.bf16.msra.mxu0 %v593
      %613 = vmatprep.subr.bf16.mxu0 0
      %614 = vmatpush1.bf16.msra.mxu0 %v592
      %615 = vmatprep.subr.bf16.mxu0 0
      %616 = vmatpush1.bf16.msra.mxu0 %v591
      %617 = vmatprep.subr.bf16.mxu0 0
      %618 = vmatpush1.bf16.msra.mxu0 %v590
      %619 = vmatprep.subr.bf16.mxu0 0
      %620 = vmatpush1.bf16.msra.mxu0 %v589
      %621 = vmatprep.subr.bf16.mxu0 0
      %622 = vmatpush2.bf16.msra.mxu0 0
      %623 = vmatprep.subr.bf16.mxu0 0
      %624 = vmatpush2.bf16.msra.mxu0 0
      %625 = vmatprep.subr.bf16.mxu0 0
      %626 = vmatpush2.bf16.msra.mxu0 0
      %627 = vmatprep.subr.bf16.mxu0 0
      %628 = vmatpush2.bf16.msra.mxu0 0
      %629 = vmatprep.subr.bf16.mxu0 0
      %630 = vmatpush2.bf16.msra.mxu0 0
      %631 = vmatprep.subr.bf16.mxu0 0
      %632 = vmatpush2.bf16.msra.mxu0 0
      %633 = vmatprep.subr.bf16.mxu0 0
      %634 = vmatpush2.bf16.msra.mxu0 0
      %635 = vmatprep.subr.bf16.mxu0 0
      %636 = vmatpush2.bf16.msra.mxu0 0
      %637 = vmatprep.mubr.bf16.mxu0 0
      %638 = vmatmul.mubr.bf16.gmra.mxu0 %v553
      %v639 = vpop.f32.mrf.mxu0
      %v640 = vadd.f32 0.0, %v639
      %v641 = vpop.f32.mrf.mxu0
      %v642 = vpop.f32.mrf.mxu0
      %v643 = vadd.f32 0.0, %v642
      %v644 = vpop.f32.mrf.mxu0
      %645 = vmatprep.mubr.bf16.mxu0 0
      %646 = vmatmul.mubr.bf16.gmra.mxu0 %v554
      %v647 = vpop.f32.mrf.mxu0
      %v648 = vadd.f32 0.0, %v647
      %v649 = vpop.f32.mrf.mxu0
      %v650 = vpop.f32.mrf.mxu0
      %v651 = vadd.f32 0.0, %v650
      %v652 = vpop.f32.mrf.mxu0
      %653 = vdwg.mxu0
      %v654 = vadd.f32 %v495, %v640
      %v655 = vadd.f32 %v498, %v643
      %v656 = vadd.f32 %v503, %v648
      %v657 = vadd.f32 %v506, %v651
      %658 = vadd.xlane.f32.xlu0 %v654
      %v659 = vpop.xlane.xlu0 %658
      %660 = vadd.xlane.f32.xlu0 %v655
      %v661 = vpop.xlane.xlu0 %660
      %662 = vadd.xlane.f32.xlu0 %v656
      %v663 = vpop.xlane.xlu0 %662
      %664 = vadd.xlane.f32.xlu0 %v657
      %v665 = vpop.xlane.xlu0 %664
      %v666 = vadd.f32 %v659, %v661
      %v667 = vrot.slane %v666, 4
      %v668 = vadd.f32 %v666, %v667
      %v669 = vrot.slane %v668, 2
      %v670 = vadd.f32 %v668, %v669
      %v671 = vrot.slane %v670, 1
      %v672 = vadd.f32 %v670, %v671
      %v673 = vadd.f32 %v663, %v665
      %v674 = vrot.slane %v673, 4
      %v675 = vadd.f32 %v673, %v674
      %v676 = vrot.slane %v675, 2
      %v677 = vadd.f32 %v675, %v676
      %v678 = vrot.slane %v677, 1
      %v679 = vadd.f32 %v677, %v678
      %v680 = vmul.f32 %v654, %v654
      %v681 = vmul.f32 %v655, %v655
      %v682 = vmul.f32 %v656, %v656
      %v683 = vmul.f32 %v657, %v657
      %684 = vadd.xlane.f32.xlu0 %v680
      %v685 = vpop.xlane.xlu0 %684
      %686 = vadd.xlane.f32.xlu0 %v681
      %v687 = vpop.xlane.xlu0 %686
      %688 = vadd.xlane.f32.xlu0 %v682
      %v689 = vpop.xlane.xlu0 %688
      %690 = vadd.xlane.f32.xlu0 %v683
      %v691 = vpop.xlane.xlu0 %690
      %v692 = vadd.f32 %v685, %v687
      %v693 = vrot.slane %v692, 4
      %v694 = vadd.f32 %v692, %v693
      %v695 = vrot.slane %v694, 2
      %v696 = vadd.f32 %v694, %v695
      %v697 = vrot.slane %v696, 1
      %v698 = vadd.f32 %v696, %v697
      %v699 = vadd.f32 %v689, %v691
      %v700 = vrot.slane %v699, 4
      %v701 = vadd.f32 %v699, %v700
      %v702 = vrot.slane %v701, 2
      %v703 = vadd.f32 %v701, %v702
      %v704 = vrot.slane %v703, 1
      %v705 = vadd.f32 %v703, %v704
      %v706 = vmul.f32 %v672, 0.0078125
      %v707 = vmul.f32 %v679, 0.0078125
      %v708 = vmul.f32 %v698, 0.0078125
      %v709 = vmul.f32 %v705, 0.0078125
      %v710 = vmul.f32 %v706, %v706
      %v711 = vmul.f32 %v707, %v707
      %v712 = vsub.f32 %v708, %v710
      %v713 = vsub.f32 %v709, %v711
      %v714 = vsub.f32 %v654, %v706
      %v715 = vsub.f32 %v655, %v706
      %v716 = vsub.f32 %v656, %v707
      %v717 = vsub.f32 %v657, %v707
      %v718 = vadd.f32 %v712, 1e-05
      %v719 = vadd.f32 %v713, 1e-05
      %v720 = vrsqrt.pop %v718
      %v721 = vrsqrt.pop %v719
      %v722 = vmul.f32 %v714, %v720
      %v723 = vmul.f32 %v715, %v720
      %v724 = vmul.f32 %v716, %v721
      %v725 = vmul.f32 %v717, %v721
      %v726 = vlaneseq
      %v727 = vand.u32 %v726, 127
      %vm728 = vcmp.lt.s32.totalorder %v727, 8
      %v729 = vsel %vm728, %v722, 0.0
      %v730 = vsel %vm728, %v723, 0.0
      %v731 = vsel %vm728, %v724, 0.0
      %v732 = vsel %vm728, %v725, 0.0
      %v733 = vld [vmem:[%s195] sm:$0xf]
      %v734 = vld [vmem:[%s195 + $0x4] sm:$0xf]
      %v735 = vld [vmem:[%s195 + $0x8] sm:$0x1]
      %v736 = vld [vmem:[%s195 + $0xc] sm:$0xf]
      %v737 = vld [vmem:[%s195 + $0x10] sm:$0xf]
      %v738 = vld [vmem:[%s195 + $0x14] sm:$0x1]
      %v739 = vunpack.c.l.bf16 %v733
      %v740 = vunpack.c.l.bf16 %v734
      %v741 = vunpack.c.l.bf16 %v735
      %v742 = vunpack.c.l.bf16 %v736
      %v743 = vunpack.c.l.bf16 %v737
      %v744 = vunpack.c.l.bf16 %v738
      %vm751 = vcmask 1046528
      %v752 = vrot.slane %v739, 1
      %v753 = vrot.slane %v740, 1
      %v754 = vsel %vm751, %v752, %v753
      %v755 = vrot.slane %v741, 1
      %v756 = vsel %vm751, %v753, %v755
      %v757 = vrot.slane %v742, 1
      %v758 = vrot.slane %v743, 1
      %v759 = vsel %vm751, %v757, %v758
      %v760 = vrot.slane %v744, 1
      %v761 = vsel %vm751, %v758, %v760
      %v766 = vadd.f32 %v729, %v754
      %v767 = vadd.f32 %v730, %v756
      %v768 = vadd.f32 %v731, %v759
      %v769 = vadd.f32 %v732, %v761
      %v770 = vmax.f32 %v766, 0.0
      %v771 = vmax.f32 %v767, 0.0
      %v772 = vmax.f32 %v768, 0.0
      %v773 = vmax.f32 %v769, 0.0
      %vm774 = vcmask 1040384
      %vm775 = vsmask.f32 256
      %vm776 = vmand %vm774, %vm775
      %v777 = vld [vmem:[%s202] sm:$0x1]
      %v778 = vsel %vm776, 0, %v777
      %779 = vst [vmem:[%s202] sm:$0x1] %v778
      %v780 = vld [vmem:[%s202 + $0xc] sm:$0x1]
      %v781 = vsel %vm776, 0, %v780
      %782 = vst [vmem:[%s202 + $0xc] sm:$0x1] %v781
      %vm783 = vsmask.f32 7938
      %vm784 = vmand %vm774, %vm783
      %v785 = vld [vmem:[%s202 + $0x8] sm:$0x1]
      %v786 = vsel %vm784, 0, %v785
      %787 = vst [vmem:[%s202 + $0x8] sm:$0x1] %v786
      %v788 = vld [vmem:[%s202 + $0x14] sm:$0x1]
      %v789 = vsel %vm784, 0, %v788
      %790 = vst [vmem:[%s202 + $0x14] sm:$0x1] %v789
      %v791 = vpack.c.bf16 %v771, %v770
      %v792 = vpack.c.bf16 %v773, %v772
      %v795 = vunpack.c.l.b16 %v791
      %v796 = vunpack.c.h.b16 %v791
      %v797 = vunpack.c.l.b16 %v792
      %v798 = vunpack.c.h.b16 %v792
      %v799 = vpack.c.b16 %v795, %v795
      %v800 = vpack.c.b16 %v796, %v796
      %v801 = vpack.c.b16 %v797, %v797
      %v802 = vpack.c.b16 %v798, %v798
      %vm803 = vsmask.f32 4368
      %vm804 = vmor %vm775, %vm803
      %v806 = vshrl.u32 %v799, 16
      %v808 = vrot.slane %v806, 7
      %v809 = vshll.u32 %v799, 16
      %v811 = vor.u32 %v808, %v809
      %v812 = vrot.slane %v808, 4
      %v814 = vshrl.u32 %v800, 16
      %v816 = vrot.slane %v814, 7
      %v817 = vshll.u32 %v800, 16
      %v819 = vor.u32 %v816, %v817
      %v820 = vsel %vm804, %v812, %v819
      %v821 = vrot.slane %v816, 4
      %v823 = vshrl.u32 %v801, 16
      %v825 = vrot.slane %v823, 7
      %v826 = vshll.u32 %v801, 16
      %v828 = vor.u32 %v825, %v826
      %v829 = vrot.slane %v825, 4
      %v831 = vshrl.u32 %v802, 16
      %v833 = vrot.slane %v831, 7
      %v834 = vshll.u32 %v802, 16
      %v836 = vor.u32 %v833, %v834
      %v837 = vsel %vm804, %v829, %v836
      %v838 = vrot.slane %v833, 4
      %vm845 = vcmask 1043456
      %vm846 = vmand %vm845, %vm783
      %v847 = vld [vmem:[%s202] sm:$0xf]
      %v848 = vsel %vm846, %v811, %v847
      %849 = vst [vmem:[%s202] sm:$0xf] %v848
      %850 = vst [vmem:[%s202 + $0x4] sm:$0xf] %v820
      %v851 = vld [vmem:[%s202 + $0x8] sm:$0x1]
      %v852 = vsel %vm776, %v821, %v851
      %853 = vst [vmem:[%s202 + $0x8] sm:$0x1] %v852
      %v854 = vld [vmem:[%s202 + $0xc] sm:$0xf]
      %v855 = vsel %vm846, %v828, %v854
      %856 = vst [vmem:[%s202 + $0xc] sm:$0xf] %v855
      %857 = vst [vmem:[%s202 + $0x10] sm:$0xf] %v837
      %v858 = vld [vmem:[%s202 + $0x14] sm:$0x1]
      %v859 = vsel %vm776, %v838, %v858
      %860 = vst [vmem:[%s202 + $0x14] sm:$0x1] %v859
      %s861 = smul.u32 2, %s14
      %p862 = scmp.lt.s32.totalorder %s861, 3
      %s863 = scalar_select %p862, %s861, 3
      %s864 = smul.addr %s863, 3
      %s865 = smul.addr %s864, 4
      %s866 = scalar_lea.vmem %s3, %s865
      // Predicated region
      $region33: #{_lambda_.16} parent=31 // pred_check
        %p867 = pneg %p105
      $region34: #{_lambda_.16} parent=31 // pred_check_branch
        %869 = sbr.rel (%p867) target = $region36
      $region35: #{_lambda_.16} parent=31 // pred_region
        %s870 = smul.u32 2, %s14
      $region36: #{_lambda_.16} parent=31 // pred_fallthru
        _
    $region32: #{_lambda_.16} parent=5 // pred_fallthru
      _
    %p871 = scmp.le.s32.totalorder 2, %s9
    // Predicated region
    $region37: #{_lambda_.16} parent=5 // pred_check
      %p872 = pneg %p871
    $region38: #{_lambda_.16} parent=5 // pred_check_branch
      %874 = sbr.rel (%p872) target = $region40
    $region39: #{_lambda_.16} parent=5 // pred_region
      %s875 = ssub.s32 %s9, 2
      // Predicated region
      $region41: #{_lambda_.16} parent=39 // pred_check
        %p876 = pneg %p111
      $region42: #{_lambda_.16} parent=39 // pred_check_branch
        %878 = sbr.rel (%p876) target = $region44
      $region43: #{_lambda_.16} parent=39 // pred_region
        %s879 = smul.u32 2, %s15
        %p880 = scmp.lt.s32.totalorder %s879, 3
        %s881 = scalar_select %p880, %s879, 3
        %s882 = smul.addr %s881, 3
        %s883 = smul.addr %s882, 4
        %s884 = scalar_lea.vmem %s3, %s883
      $region44: #{_lambda_.16} parent=39 // pred_fallthru
        _
    $region40: #{_lambda_.16} parent=5 // pred_fallthru
      _
  $region6: #{_lambda_.16} parent=0 // loop_footer
    %s13 = sadd.s32 1, %s9
  $region7: #{_lambda_.16} parent=0 // loop_footer_branch
    %8 = sbr.rel target = $region3
  $region8: #{_lambda_.16} parent=0 // loop_exit
    _

// kernel: _lambda_.13
$region0: #{_lambda_.13}
  #allocation0 [shape = 'u32[]', space=smem, size = 0x4, offset = 0x4, fixed_abs, tag = 'smem constant byte address 0x4 - core index']
  #allocation1 [shape = 'u32[144,128]{1,0:T(1,128)}', space=vmem, size = 0x12000, scoped, tag = 'internal scratch']
  %s0 = inlined_call_operand.vmem [shape: bf16[4,35,256], index: 0, kind: input, shape index: {}]
  %s1 = inlined_call_operand.vmem [shape: bf16[4,256,128], index: 1, kind: input, shape index: {}]
  %s2 = inlined_call_operand.vmem [shape: bf16[4,32,128], index: 2, kind: output, shape index: {}]
  %s3 = sld [smem:[#allocation0]]
  $region41: #{_lambda_.13} parent=0
    _
  %s5 = ssub.s32 1, %s3
  %s6 = scalar_select 0, %s5, %s3
  loop: start=0, step=1, limit=4
  $region2: #{_lambda_.13} parent=0 // loop_pre_header
    _
  $region3: #{_lambda_.13} parent=0 // loop_header
    %s8 = sphi 0, %s12
    %p9 = scmp.ge.s32.totalorder %s8, 4
    %s18 = sphi 0, %s20
    %s21 = sphi 0, %s18
    %s22 = sphi 0, %s21
    %s38 = sphi 0, %s22
    %s42 = sphi 0, %s42
    %s44 = sphi 0, %s42
    %s45 = sphi 0, %s44
    %s59 = sphi 0, %s45
    %s65 = sphi 0, %s67
    %s68 = sphi 0, %s65
    %s69 = sphi 0, %s68
    %s85 = sphi 0, %s69
  $region4: #{_lambda_.13} parent=0 // loop_header_branch
    %11 = sbr.rel (%p9) target = $region8
  $region5: #{_lambda_.13} parent=0 // loop_body
    %s13 = ssub.s32 %s8, 1
    %s14 = ssub.s32 %s8, 2
    %s15 = sadd.s32 %s8, 1
    %s16 = ssub.s32 %s8, %s15
    %p17 = scmp.eq.s32.totalorder %s16, 0
    %s19 = sadd.s32 %s18, 1
    %s20 = scalar_select %p17, %s18, %s19
    %p23 = pneg %p17
    %p24 = scmp.eq.s32.totalorder %s8, 1
    %p25 = por %p23, %p24
    %p26 = scmp.ne.s32.totalorder %s18, %s21
    %p27 = scmp.eq.s32.totalorder %s8, 0
    %p28 = por %p26, %p27
    %p29 = scmp.ne.s32.totalorder %s18, %s21
    %p30 = scmp.eq.s32.totalorder %s13, 1
    %p31 = por %p29, %p30
    %p32 = scmp.ne.s32.totalorder %s21, %s22
    %p33 = scmp.eq.s32.totalorder %s13, 0
    %p34 = por %p32, %p33
    %p35 = scmp.ne.s32.totalorder %s21, %s22
    %p36 = scmp.eq.s32.totalorder %s14, 1
    %p37 = por %p35, %p36
    %p39 = scmp.ne.s32.totalorder %s22, %s38
    %p40 = scmp.eq.s32.totalorder %s14, 0
    %p41 = por %p39, %p40
    %s43 = sadd.s32 %s42, 1
    %p46 = scmp.eq.s32.totalorder %s8, 1
    %p47 = scmp.ne.s32.totalorder %s42, %s44
    %p48 = scmp.eq.s32.totalorder %s8, 0
    %p49 = por %p47, %p48
    %p50 = scmp.ne.s32.totalorder %s42, %s44
    %p51 = scmp.eq.s32.totalorder %s13, 1
    %p52 = por %p50, %p51
    %p53 = scmp.ne.s32.totalorder %s44, %s45
    %p54 = scmp.eq.s32.totalorder %s13, 0
    %p55 = por %p53, %p54
    %p56 = scmp.ne.s32.totalorder %s44, %s45
    %p57 = scmp.eq.s32.totalorder %s14, 1
    %p58 = por %p56, %p57
    %p60 = scmp.ne.s32.totalorder %s45, %s59
    %p61 = scmp.eq.s32.totalorder %s14, 0
    %p62 = por %p60, %p61
    %s63 = ssub.s32 %s8, %s15
    %p64 = scmp.eq.s32.totalorder %s63, 0
    %s66 = sadd.s32 %s65, 1
    %s67 = scalar_select %p64, %s65, %s66
    %p70 = pneg %p64
    %p71 = scmp.eq.s32.totalorder %s8, 1
    %p72 = por %p70, %p71
    %p73 = scmp.ne.s32.totalorder %s65, %s68
    %p74 = scmp.eq.s32.totalorder %s8, 0
    %p75 = por %p73, %p74
    %p76 = scmp.ne.s32.totalorder %s65, %s68
    %p77 = scmp.eq.s32.totalorder %s13, 1
    %p78 = por %p76, %p77
    %p79 = scmp.ne.s32.totalorder %s68, %s69
    %p80 = scmp.eq.s32.totalorder %s13, 0
    %p81 = por %p79, %p80
    %p82 = scmp.ne.s32.totalorder %s68, %s69
    %p83 = scmp.eq.s32.totalorder %s14, 1
    %p84 = por %p82, %p83
    %p86 = scmp.ne.s32.totalorder %s69, %s85
    %p87 = scmp.eq.s32.totalorder %s14, 0
    %p88 = por %p86, %p87
    %p89 = scmp.le.s32.totalorder 1, %s8
    %p90 = scmp.lt.s32.totalorder %s8, 3
    %p91 = pnand %p89, %p90
    %p92 = pneg %p91
    // Predicated region
    $region9: #{_lambda_.13} parent=5 // pred_check
      _
    $region10: #{_lambda_.13} parent=5 // pred_check_branch
      %94 = sbr.rel (%p91) target = $region12
    $region11: #{_lambda_.13} parent=5 // pred_region
      %s95 = ssub.s32 %s8, 1
      // Predicated region
      $region13: #{_lambda_.13} parent=11 // pred_check
        %p96 = pneg %p55
      $region14: #{_lambda_.13} parent=11 // pred_check_branch
        %98 = sbr.rel (%p96) target = $region16
      $region15: #{_lambda_.13} parent=11 // pred_region
        _
      $region16: #{_lambda_.13} parent=11 // pred_fallthru
        _
    $region12: #{_lambda_.13} parent=5 // pred_fallthru
      _
    %p99 = scmp.lt.s32.totalorder %s8, 2
    // Predicated region
    $region17: #{_lambda_.13} parent=5 // pred_check
      %p100 = pneg %p99
    $region18: #{_lambda_.13} parent=5 // pred_check_branch
      %102 = sbr.rel (%p100) target = $region20
    $region19: #{_lambda_.13} parent=5 // pred_region
      // Predicated region
      $region21: #{_lambda_.13} parent=19 // pred_check
        %p103 = pneg %p28
      $region22: #{_lambda_.13} parent=19 // pred_check_branch
        %105 = sbr.rel (%p103) target = $region24
      $region23: #{_lambda_.13} parent=19 // pred_region
        %s106 = smul.u32 2, %s8
        %p107 = scmp.lt.s32.totalorder %s106, 3
        %s108 = scalar_select %p107, %s106, 3
        %s109 = smul.addr %s108, 10
        %s110 = smul.addr %s109, 4
        %s111 = scalar_lea.vmem %s0, %s110
        %s112 = smul.u32 2, %s8
      $region24: #{_lambda_.13} parent=19 // pred_fallthru
        _
    $region20: #{_lambda_.13} parent=5 // pred_fallthru
      _
    %p113 = scmp.le.s32.totalorder 1, %s8
    %p114 = scmp.lt.s32.totalorder %s8, 3
    %p115 = pnand %p113, %p114
    %p116 = pneg %p115
    // Predicated region
    $region25: #{_lambda_.13} parent=5 // pred_check
      _
    $region26: #{_lambda_.13} parent=5 // pred_check_branch
      %118 = sbr.rel (%p115) target = $region28
    $region27: #{_lambda_.13} parent=5 // pred_region
      %s119 = ssub.s32 %s8, 1
      %s120 = smul.u32 2, %s13
      %p121 = scmp.lt.s32.totalorder %s120, 3
      %s122 = scalar_select %p121, %s120, 3
      %s123 = smul.addr %s122, 10
      %s124 = smul.addr %s123, 4
      %s125 = scalar_lea.vmem %s0, %s124
      %p126 = pneg %p34
      %p127 = pneg %p31
      %p128 = pneg %p55
      %p129 = pneg %p52
      %p130 = pneg %p81
      %p131 = pneg %p78
      %s132 = smul.u32 2, %s13
      %p133 = scmp.lt.s32.totalorder %s132, 3
      %s134 = scalar_select %p133, %s132, 3
      %s135 = smul.addr %s134, 4
      %s136 = smul.addr %s135, 4
      %s137 = scalar_lea.vmem %s2, %s136
      %s138 = smul.u32 2, %s13
      %p139 = scmp.lt.s32.totalorder %s138, 3
      %s140 = scalar_select %p139, %s138, 3
      %s141 = smul.addr %s140, 10
      %s142 = smul.addr %s141, 4
      %s143 = scalar_lea.vmem %s0, %s142
      %s144 = smul.u32 2, %s13
      %s145 = smul.u32 2, %s13
      %p146 = scmp.lt.s32.totalorder %s145, 3
      %s147 = scalar_select %p146, %s145, 3
      %s148 = smul.addr %s147, 4
      %s149 = smul.addr %s148, 4
      %s150 = scalar_lea.vmem %s2, %s149
      %s151 = smul.u32 2, %s13
      %v153 = vld [vmem:[%s143] sm:$0xff]
      %v154 = vld [vmem:[%s143 + $0x8] sm:$0xff]
      %v155 = vld [vmem:[%s143 + $0x10] sm:$0xff]
      %v156 = vld [vmem:[%s143 + $0x18] sm:$0xff]
      %v157 = vld [vmem:[%s143 + $0x28] sm:$0xff]
      %v158 = vld [vmem:[%s143 + $0x30] sm:$0xff]
      %v159 = vld [vmem:[%s143 + $0x38] sm:$0xff]
      %v160 = vld [vmem:[%s143 + $0x40] sm:$0xff]
      %v161 = vld [vmem:[%s1] sm:$0xf]
      %v162 = vld [vmem:[%s1 + $0x4] sm:$0xf]
      %v163 = vld [vmem:[%s1 + $0x8] sm:$0xf]
      %v164 = vld [vmem:[%s1 + $0xc] sm:$0xf]
      %v165 = vld [vmem:[%s1 + $0x10] sm:$0xf]
      %v166 = vld [vmem:[%s1 + $0x14] sm:$0xf]
      %v167 = vld [vmem:[%s1 + $0x18] sm:$0xf]
      %v168 = vld [vmem:[%s1 + $0x1c] sm:$0xf]
      %v169 = vld [vmem:[%s1 + $0x20] sm:$0xf]
      %v170 = vld [vmem:[%s1 + $0x24] sm:$0xf]
      %v171 = vld [vmem:[%s1 + $0x28] sm:$0xf]
      %v172 = vld [vmem:[%s1 + $0x2c] sm:$0xf]
      %v173 = vld [vmem:[%s1 + $0x30] sm:$0xf]
      %v174 = vld [vmem:[%s1 + $0x34] sm:$0xf]
      %v175 = vld [vmem:[%s1 + $0x38] sm:$0xf]
      %v176 = vld [vmem:[%s1 + $0x3c] sm:$0xf]
      %v177 = vld [vmem:[%s1 + $0x40] sm:$0xf]
      %v178 = vld [vmem:[%s1 + $0x44] sm:$0xf]
      %v179 = vld [vmem:[%s1 + $0x48] sm:$0xf]
      %v180 = vld [vmem:[%s1 + $0x4c] sm:$0xf]
      %v181 = vld [vmem:[%s1 + $0x50] sm:$0xf]
      %v182 = vld [vmem:[%s1 + $0x54] sm:$0xf]
      %v183 = vld [vmem:[%s1 + $0x58] sm:$0xf]
      %v184 = vld [vmem:[%s1 + $0x5c] sm:$0xf]
      %v185 = vld [vmem:[%s1 + $0x60] sm:$0xf]
      %v186 = vld [vmem:[%s1 + $0x64] sm:$0xf]
      %v187 = vld [vmem:[%s1 + $0x68] sm:$0xf]
      %v188 = vld [vmem:[%s1 + $0x6c] sm:$0xf]
      %v189 = vld [vmem:[%s1 + $0x70] sm:$0xf]
      %v190 = vld [vmem:[%s1 + $0x74] sm:$0xf]
      %v191 = vld [vmem:[%s1 + $0x78] sm:$0xf]
      %v192 = vld [vmem:[%s1 + $0x7c] sm:$0xf]
      %v193 = vld [vmem:[%s143 + $0x20] sm:$0x11]
      %v194 = vld [vmem:[%s143 + $0x48] sm:$0x11]
      %vm195 = vsmask.f32 3328
      %vm196 = vsmask.f32 7440
      %vm197 = vmor %vm195, %vm196
      %v199 = vshrl.u32 %v153, 16
      %v201 = vrot.slane %v199, 4
      %v202 = vshll.u32 %v153, 16
      %v204 = vrot.slane %v202, 5
      %v205 = vor.u32 %v201, %v204
      %v206 = vrot.slane %v205, 4
      %v208 = vshll.u32 %v154, 16
      %v210 = vrot.slane %v208, 5
      %v211 = vsel %vm197, %v206, %v210
      %v212 = vshrl.u32 %v154, 16
      %v214 = vrot.slane %v212, 4
      %v215 = vor.u32 %v214, %v210
      %v216 = vrot.slane %v215, 4
      %v218 = vshll.u32 %v155, 16
      %v220 = vrot.slane %v218, 5
      %v221 = vsel %vm197, %v216, %v220
      %v222 = vshrl.u32 %v155, 16
      %v224 = vrot.slane %v222, 4
      %v225 = vor.u32 %v224, %v220
      %v226 = vrot.slane %v225, 4
      %v228 = vshll.u32 %v156, 16
      %v230 = vrot.slane %v228, 5
      %v231 = vsel %vm197, %v226, %v230
      %v232 = vshrl.u32 %v156, 16
      %v234 = vrot.slane %v232, 4
      %v235 = vor.u32 %v234, %v230
      %v236 = vrot.slane %v235, 4
      %v238 = vshll.u32 %v193, 16
      %v240 = vrot.slane %v238, 5
      %v241 = vsel %vm197, %v236, %v240
      %v243 = vshrl.u32 %v157, 16
      %v245 = vrot.slane %v243, 4
      %v246 = vshll.u32 %v157, 16
      %v248 = vrot.slane %v246, 5
      %v249 = vor.u32 %v245, %v248
      %v250 = vrot.slane %v249, 4
      %v252 = vshll.u32 %v158, 16
      %v254 = vrot.slane %v252, 5
      %v255 = vsel %vm197, %v250, %v254
      %v256 = vshrl.u32 %v158, 16
      %v258 = vrot.slane %v256, 4
      %v259 = vor.u32 %v258, %v254
      %v260 = vrot.slane %v259, 4
      %v262 = vshll.u32 %v159, 16
      %v264 = vrot.slane %v262, 5
      %v265 = vsel %vm197, %v260, %v264
      %v266 = vshrl.u32 %v159, 16
      %v268 = vrot.slane %v266, 4
      %v269 = vor.u32 %v268, %v264
      %v270 = vrot.slane %v269, 4
      %v272 = vshll.u32 %v160, 16
      %v274 = vrot.slane %v272, 5
      %v275 = vsel %vm197, %v270, %v274
      %v276 = vshrl.u32 %v160, 16
      %v278 = vrot.slane %v276, 4
      %v279 = vor.u32 %v278, %v274
      %v280 = vrot.slane %v279, 4
      %v282 = vshll.u32 %v194, 16
      %v284 = vrot.slane %v282, 5
      %v285 = vsel %vm197, %v280, %v284
      %s286 = scalar_lea.vmem %s1, 128
      %v287 = vld [vmem:[%s286] sm:$0xf]
      %v288 = vld [vmem:[%s286 + $0x4] sm:$0xf]
      %v289 = vld [vmem:[%s286 + $0x8] sm:$0xf]
      %v290 = vld [vmem:[%s286 + $0xc] sm:$0xf]
      %v291 = vld [vmem:[%s286 + $0x10] sm:$0xf]
      %v292 = vld [vmem:[%s286 + $0x14] sm:$0xf]
      %v293 = vld [vmem:[%s286 + $0x18] sm:$0xf]
      %v294 = vld [vmem:[%s286 + $0x1c] sm:$0xf]
      %v295 = vld [vmem:[%s286 + $0x20] sm:$0xf]
      %v296 = vld [vmem:[%s286 + $0x24] sm:$0xf]
      %v297 = vld [vmem:[%s286 + $0x28] sm:$0xf]
      %v298 = vld [vmem:[%s286 + $0x2c] sm:$0xf]
      %v299 = vld [vmem:[%s286 + $0x30] sm:$0xf]
      %v300 = vld [vmem:[%s286 + $0x34] sm:$0xf]
      %v301 = vld [vmem:[%s286 + $0x38] sm:$0xf]
      %v302 = vld [vmem:[%s286 + $0x3c] sm:$0xf]
      %v303 = vld [vmem:[%s286 + $0x40] sm:$0xf]
      %v304 = vld [vmem:[%s286 + $0x44] sm:$0xf]
      %v305 = vld [vmem:[%s286 + $0x48] sm:$0xf]
      %v306 = vld [vmem:[%s286 + $0x4c] sm:$0xf]
      %v307 = vld [vmem:[%s286 + $0x50] sm:$0xf]
      %v308 = vld [vmem:[%s286 + $0x54] sm:$0xf]
      %v309 = vld [vmem:[%s286 + $0x58] sm:$0xf]
      %v310 = vld [vmem:[%s286 + $0x5c] sm:$0xf]
      %v311 = vld [vmem:[%s286 + $0x60] sm:$0xf]
      %v312 = vld [vmem:[%s286 + $0x64] sm:$0xf]
      %v313 = vld [vmem:[%s286 + $0x68] sm:$0xf]
      %v314 = vld [vmem:[%s286 + $0x6c] sm:$0xf]
      %v315 = vld [vmem:[%s286 + $0x70] sm:$0xf]
      %v316 = vld [vmem:[%s286 + $0x74] sm:$0xf]
      %v317 = vld [vmem:[%s286 + $0x78] sm:$0xf]
      %v318 = vld [vmem:[%s286 + $0x7c] sm:$0xf]
      %v319 = vunpack.c.l.b16 %v211
      %v320 = vunpack.c.h.b16 %v211
      %v321 = vunpack.c.l.b16 %v221
      %v322 = vunpack.c.h.b16 %v221
      %v323 = vunpack.c.l.b16 %v231
      %v324 = vunpack.c.h.b16 %v231
      %v325 = vunpack.c.l.b16 %v241
      %v326 = vunpack.c.h.b16 %v241
      %v327 = vunpack.c.l.b16 %v255
      %v328 = vunpack.c.h.b16 %v255
      %v329 = vunpack.c.l.b16 %v265
      %v330 = vunpack.c.h.b16 %v265
      %v331 = vunpack.c.l.b16 %v275
      %v332 = vunpack.c.h.b16 %v275
      %v333 = vunpack.c.l.b16 %v285
      %v334 = vunpack.c.h.b16 %v285
      %v335 = vpack.c.b16 %v321, %v319
      %v336 = vpack.c.b16 %v322, %v320
      %v337 = vpack.c.b16 %v325, %v323
      %v338 = vpack.c.b16 %v326, %v324
      %v339 = vpack.c.b16 %v329, %v327
      %v340 = vpack.c.b16 %v330, %v328
      %v341 = vpack.c.b16 %v333, %v331
      %v342 = vpack.c.b16 %v334, %v332
      %v383 = vunpack.c.l.b16 %v287
      %v384 = vunpack.c.l.b16 %v288
      %v385 = vunpack.c.l.b16 %v289
      %v386 = vunpack.c.l.b16 %v290
      %v387 = vunpack.c.l.b16 %v291
      %v388 = vunpack.c.l.b16 %v292
      %v389 = vunpack.c.l.b16 %v293
      %v390 = vunpack.c.l.b16 %v294
      %v391 = vunpack.c.l.b16 %v295
      %v392 = vunpack.c.l.b16 %v296
      %v393 = vunpack.c.l.b16 %v297
      %v394 = vunpack.c.l.b16 %v298
      %v395 = vunpack.c.l.b16 %v299
      %v396 = vunpack.c.l.b16 %v300
      %v397 = vunpack.c.l.b16 %v301
      %v398 = vunpack.c.l.b16 %v302
      %v399 = vunpack.c.l.b16 %v303
      %v400 = vunpack.c.l.b16 %v304
      %v401 = vunpack.c.l.b16 %v305
      %v402 = vunpack.c.l.b16 %v306
      %v403 = vunpack.c.l.b16 %v307
      %v404 = vunpack.c.l.b16 %v308
      %v405 = vunpack.c.l.b16 %v309
      %v406 = vunpack.c.l.b16 %v310
      %v407 = vunpack.c.l.b16 %v311
      %v408 = vunpack.c.l.b16 %v312
      %v409 = vunpack.c.l.b16 %v313
      %v410 = vunpack.c.l.b16 %v314
      %v411 = vunpack.c.l.b16 %v315
      %v412 = vunpack.c.l.b16 %v316
      %v413 = vunpack.c.l.b16 %v317
      %v414 = vunpack.c.l.b16 %v318
      %v415 = vpack.c.b16 %v384, %v383
      %v416 = vpack.c.b16 %v386, %v385
      %v417 = vpack.c.b16 %v388, %v387
      %v418 = vpack.c.b16 %v390, %v389
      %v419 = vpack.c.b16 %v392, %v391
      %v420 = vpack.c.b16 %v394, %v393
      %v421 = vpack.c.b16 %v396, %v395
      %v422 = vpack.c.b16 %v398, %v397
      %v423 = vpack.c.b16 %v400, %v399
      %v424 = vpack.c.b16 %v402, %v401
      %v425 = vpack.c.b16 %v404, %v403
      %v426 = vpack.c.b16 %v406, %v405
      %v427 = vpack.c.b16 %v408, %v407
      %v428 = vpack.c.b16 %v410, %v409
      %v429 = vpack.c.b16 %v412, %v411
      %v430 = vpack.c.b16 %v414, %v413
      %447 = vmatprep.subr.bf16.mxu0 0
      %448 = vmatpush1.bf16.msra.mxu0 %v422
      %449 = vmatprep.subr.bf16.mxu0 0
      %450 = vmatpush1.bf16.msra.mxu0 %v421
      %451 = vmatprep.subr.bf16.mxu0 0
      %452 = vmatpush1.bf16.msra.mxu0 %v420
      %453 = vmatprep.subr.bf16.mxu0 0
      %454 = vmatpush1.bf16.msra.mxu0 %v419
      %455 = vmatprep.subr.bf16.mxu0 0
      %456 = vmatpush1.bf16.msra.mxu0 %v418
      %457 = vmatprep.subr.bf16.mxu0 0
      %458 = vmatpush1.bf16.msra.mxu0 %v417
      %459 = vmatprep.subr.bf16.mxu0 0
      %460 = vmatpush1.bf16.msra.mxu0 %v416
      %461 = vmatprep.subr.bf16.mxu0 0
      %462 = vmatpush1.bf16.msra.mxu0 %v415
      %463 = vmatprep.subr.bf16.mxu0 0
      %464 = vmatpush2.bf16.msra.mxu0 %v430
      %465 = vmatprep.subr.bf16.mxu0 0
      %466 = vmatpush2.bf16.msra.mxu0 %v429
      %467 = vmatprep.subr.bf16.mxu0 0
      %468 = vmatpush2.bf16.msra.mxu0 %v428
      %469 = vmatprep.subr.bf16.mxu0 0
      %470 = vmatpush2.bf16.msra.mxu0 %v427
      %471 = vmatprep.subr.bf16.mxu0 0
      %472 = vmatpush2.bf16.msra.mxu0 %v426
      %473 = vmatprep.subr.bf16.mxu0 0
      %474 = vmatpush2.bf16.msra.mxu0 %v425
      %475 = vmatprep.subr.bf16.mxu0 0
      %476 = vmatpush2.bf16.msra.mxu0 %v424
      %477 = vmatprep.subr.bf16.mxu0 0
      %478 = vmatpush2.bf16.msra.mxu0 %v423
      %479 = vmatprep.mubr.bf16.mxu0 %v336
      %480 = vmatmul.mubr.bf16.gmra.mxu0 %v335
      %v481 = vpop.f32.mrf.mxu0
      %v482 = vadd.f32 0.0, %v481
      %v483 = vpop.f32.mrf.mxu0
      %v484 = vpop.f32.mrf.mxu0
      %v485 = vadd.f32 0.0, %v484
      %v486 = vpop.f32.mrf.mxu0
      %487 = vmatprep.mubr.bf16.mxu0 %v338
      %488 = vmatmul.mubr.bf16.gmra.mxu0 %v337
      %v489 = vpop.f32.mrf.mxu0
      %v490 = vadd.f32 0.0, %v489
      %v491 = vpop.f32.mrf.mxu0
      %v492 = vpop.f32.mrf.mxu0
      %v493 = vadd.f32 0.0, %v492
      %v494 = vpop.f32.mrf.mxu0
      %495 = vmatprep.mubr.bf16.mxu0 %v340
      %496 = vmatmul.mubr.bf16.gmra.mxu0 %v339
      %v497 = vpop.f32.mrf.mxu0
      %v498 = vadd.f32 0.0, %v497
      %v499 = vpop.f32.mrf.mxu0
      %v500 = vpop.f32.mrf.mxu0
      %v501 = vadd.f32 0.0, %v500
      %v502 = vpop.f32.mrf.mxu0
      %503 = vmatprep.mubr.bf16.mxu0 %v342
      %504 = vmatmul.mubr.bf16.gmra.mxu0 %v341
      %v505 = vpop.f32.mrf.mxu0
      %v506 = vadd.f32 0.0, %v505
      %v507 = vpop.f32.mrf.mxu0
      %v508 = vpop.f32.mrf.mxu0
      %v509 = vadd.f32 0.0, %v508
      %v510 = vpop.f32.mrf.mxu0
      %511 = vdwg.mxu0
      %v520 = vunpack.c.l.b16 %v153
      %v521 = vunpack.c.h.b16 %v153
      %v522 = vunpack.c.l.b16 %v154
      %v523 = vunpack.c.h.b16 %v154
      %v524 = vunpack.c.l.b16 %v155
      %v525 = vunpack.c.h.b16 %v155
      %v526 = vunpack.c.l.b16 %v156
      %v527 = vunpack.c.h.b16 %v156
      %v528 = vunpack.c.l.b16 %v157
      %v529 = vunpack.c.h.b16 %v157
      %v530 = vunpack.c.l.b16 %v158
      %v531 = vunpack.c.h.b16 %v158
      %v532 = vunpack.c.l.b16 %v159
      %v533 = vunpack.c.h.b16 %v159
      %v534 = vunpack.c.l.b16 %v160
      %v535 = vunpack.c.h.b16 %v160
      %v536 = vpack.c.b16 %v522, %v520
      %v537 = vpack.c.b16 %v523, %v521
      %v538 = vpack.c.b16 %v526, %v524
      %v539 = vpack.c.b16 %v527, %v525
      %v540 = vpack.c.b16 %v530, %v528
      %v541 = vpack.c.b16 %v531, %v529
      %v542 = vpack.c.b16 %v534, %v532
      %v543 = vpack.c.b16 %v535, %v533
      %v584 = vunpack.c.l.b16 %v161
      %v585 = vunpack.c.l.b16 %v162
      %v586 = vunpack.c.l.b16 %v163
      %v587 = vunpack.c.l.b16 %v164
      %v588 = vunpack.c.l.b16 %v165
      %v589 = vunpack.c.l.b16 %v166
      %v590 = vunpack.c.l.b16 %v167
      %v591 = vunpack.c.l.b16 %v168
      %v592 = vunpack.c.l.b16 %v169
      %v593 = vunpack.c.l.b16 %v170
      %v594 = vunpack.c.l.b16 %v171
      %v595 = vunpack.c.l.b16 %v172
      %v596 = vunpack.c.l.b16 %v173
      %v597 = vunpack.c.l.b16 %v174
      %v598 = vunpack.c.l.b16 %v175
      %v599 = vunpack.c.l.b16 %v176
      %v600 = vunpack.c.l.b16 %v177
      %v601 = vunpack.c.l.b16 %v178
      %v602 = vunpack.c.l.b16 %v179
      %v603 = vunpack.c.l.b16 %v180
      %v604 = vunpack.c.l.b16 %v181
      %v605 = vunpack.c.l.b16 %v182
      %v606 = vunpack.c.l.b16 %v183
      %v607 = vunpack.c.l.b16 %v184
      %v608 = vunpack.c.l.b16 %v185
      %v609 = vunpack.c.l.b16 %v186
      %v610 = vunpack.c.l.b16 %v187
      %v611 = vunpack.c.l.b16 %v188
      %v612 = vunpack.c.l.b16 %v189
      %v613 = vunpack.c.l.b16 %v190
      %v614 = vunpack.c.l.b16 %v191
      %v615 = vunpack.c.l.b16 %v192
      %v616 = vpack.c.b16 %v585, %v584
      %v617 = vpack.c.b16 %v587, %v586
      %v618 = vpack.c.b16 %v589, %v588
      %v619 = vpack.c.b16 %v591, %v590
      %v620 = vpack.c.b16 %v593, %v592
      %v621 = vpack.c.b16 %v595, %v594
      %v622 = vpack.c.b16 %v597, %v596
      %v623 = vpack.c.b16 %v599, %v598
      %v624 = vpack.c.b16 %v601, %v600
      %v625 = vpack.c.b16 %v603, %v602
      %v626 = vpack.c.b16 %v605, %v604
      %v627 = vpack.c.b16 %v607, %v606
      %v628 = vpack.c.b16 %v609, %v608
      %v629 = vpack.c.b16 %v611, %v610
      %v630 = vpack.c.b16 %v613, %v612
      %v631 = vpack.c.b16 %v615, %v614
      %648 = vmatprep.subr.bf16.mxu0 0
      %649 = vmatpush1.bf16.msra.mxu0 %v623
      %650 = vmatprep.subr.bf16.mxu0 0
      %651 = vmatpush1.bf16.msra.mxu0 %v622
      %652 = vmatprep.subr.bf16.mxu0 0
      %653 = vmatpush1.bf16.msra.mxu0 %v621
      %654 = vmatprep.subr.bf16.mxu0 0
      %655 = vmatpush1.bf16.msra.mxu0 %v620
      %656 = vmatprep.subr.bf16.mxu0 0
      %657 = vmatpush1.bf16.msra.mxu0 %v619
      %658 = vmatprep.subr.bf16.mxu0 0
      %659 = vmatpush1.bf16.msra.mxu0 %v618
      %660 = vmatprep.subr.bf16.mxu0 0
      %661 = vmatpush1.bf16.msra.mxu0 %v617
      %662 = vmatprep.subr.bf16.mxu0 0
      %663 = vmatpush1.bf16.msra.mxu0 %v616
      %664 = vmatprep.subr.bf16.mxu0 0
      %665 = vmatpush2.bf16.msra.mxu0 %v631
      %666 = vmatprep.subr.bf16.mxu0 0
      %667 = vmatpush2.bf16.msra.mxu0 %v630
      %668 = vmatprep.subr.bf16.mxu0 0
      %669 = vmatpush2.bf16.msra.mxu0 %v629
      %670 = vmatprep.subr.bf16.mxu0 0
      %671 = vmatpush2.bf16.msra.mxu0 %v628
      %672 = vmatprep.subr.bf16.mxu0 0
      %673 = vmatpush2.bf16.msra.mxu0 %v627
      %674 = vmatprep.subr.bf16.mxu0 0
      %675 = vmatpush2.bf16.msra.mxu0 %v626
      %676 = vmatprep.subr.bf16.mxu0 0
      %677 = vmatpush2.bf16.msra.mxu0 %v625
      %678 = vmatprep.subr.bf16.mxu0 0
      %679 = vmatpush2.bf16.msra.mxu0 %v624
      %680 = vmatprep.mubr.bf16.mxu0 %v537
      %681 = vmatmul.mubr.bf16.gmra.mxu0 %v536
      %v682 = vpop.f32.mrf.mxu0
      %v683 = vadd.f32 %v482, %v682
      %v684 = vpop.f32.mrf.mxu0
      %v685 = vpop.f32.mrf.mxu0
      %v686 = vadd.f32 %v485, %v685
      %v687 = vpop.f32.mrf.mxu0
      %688 = vmatprep.mubr.bf16.mxu0 %v539
      %689 = vmatmul.mubr.bf16.gmra.mxu0 %v538
      %v690 = vpop.f32.mrf.mxu0
      %v691 = vadd.f32 %v490, %v690
      %v692 = vpop.f32.mrf.mxu0
      %v693 = vpop.f32.mrf.mxu0
      %v694 = vadd.f32 %v493, %v693
      %v695 = vpop.f32.mrf.mxu0
      %696 = vmatprep.mubr.bf16.mxu0 %v541
      %697 = vmatmul.mubr.bf16.gmra.mxu0 %v540
      %v698 = vpop.f32.mrf.mxu0
      %v699 = vadd.f32 %v498, %v698
      %v700 = vpop.f32.mrf.mxu0
      %v701 = vpop.f32.mrf.mxu0
      %v702 = vadd.f32 %v501, %v701
      %v703 = vpop.f32.mrf.mxu0
      %704 = vmatprep.mubr.bf16.mxu0 %v543
      %705 = vmatmul.mubr.bf16.gmra.mxu0 %v542
      %v706 = vpop.f32.mrf.mxu0
      %v707 = vadd.f32 %v506, %v706
      %v708 = vpop.f32.mrf.mxu0
      %v709 = vpop.f32.mrf.mxu0
      %v710 = vadd.f32 %v509, %v709
      %v711 = vpop.f32.mrf.mxu0
      %712 = vdwg.mxu0
      %v713 = vld [vmem:[%s143] sm:$0xee]
      %v714 = vld [vmem:[%s143 + $0x28] sm:$0xee]
      %vm719 = vcmask 1042432
      %vm720 = vcmask 1046532
      %vm721 = vmor %vm719, %vm720
      %v722 = vrot.slane %v713, 5
      %v723 = vrot.slane %v722, 4
      %v724 = vrot.slane %v154, 5
      %v725 = vsel %vm721, %v723, %v724
      %v726 = vrot.slane %v724, 4
      %v727 = vrot.slane %v155, 5
      %v728 = vsel %vm721, %v726, %v727
      %v729 = vrot.slane %v727, 4
      %v730 = vrot.slane %v156, 5
      %v731 = vsel %vm721, %v729, %v730
      %v732 = vrot.slane %v730, 4
      %v733 = vrot.slane %v193, 5
      %v734 = vsel %vm721, %v732, %v733
      %v735 = vrot.slane %v714, 5
      %v736 = vrot.slane %v735, 4
      %v737 = vrot.slane %v158, 5
      %v738 = vsel %vm721, %v736, %v737
      %v739 = vrot.slane %v737, 4
      %v740 = vrot.slane %v159, 5
      %v741 = vsel %vm721, %v739, %v740
      %v742 = vrot.slane %v740, 4
      %v743 = vrot.slane %v160, 5
      %v744 = vsel %vm721, %v742, %v743
      %v745 = vrot.slane %v743, 4
      %v746 = vrot.slane %v194, 5
      %v747 = vsel %vm721, %v745, %v746
      %s748 = scalar_lea.vmem %s1, 256
      %v749 = vld [vmem:[%s748] sm:$0xf]
      %v750 = vld [vmem:[%s748 + $0x4] sm:$0xf]
      %v751 = vld [vmem:[%s748 + $0x8] sm:$0xf]
      %v752 = vld [vmem:[%s748 + $0xc] sm:$0xf]
      %v753 = vld [vmem:[%s748 + $0x10] sm:$0xf]
      %v754 = vld [vmem:[%s748 + $0x14] sm:$0xf]
      %v755 = vld [vmem:[%s748 + $0x18] sm:$0xf]
      %v756 = vld [vmem:[%s748 + $0x1c] sm:$0xf]
      %v757 = vld [vmem:[%s748 + $0x20] sm:$0xf]
      %v758 = vld [vmem:[%s748 + $0x24] sm:$0xf]
      %v759 = vld [vmem:[%s748 + $0x28] sm:$0xf]
      %v760 = vld [vmem:[%s748 + $0x2c] sm:$0xf]
      %v761 = vld [vmem:[%s748 + $0x30] sm:$0xf]
      %v762 = vld [vmem:[%s748 + $0x34] sm:$0xf]
      %v763 = vld [vmem:[%s748 + $0x38] sm:$0xf]
      %v764 = vld [vmem:[%s748 + $0x3c] sm:$0xf]
      %v765 = vld [vmem:[%s748 + $0x40] sm:$0xf]
      %v766 = vld [vmem:[%s748 + $0x44] sm:$0xf]
      %v767 = vld [vmem:[%s748 + $0x48] sm:$0xf]
      %v768 = vld [vmem:[%s748 + $0x4c] sm:$0xf]
      %v769 = vld [vmem:[%s748 + $0x50] sm:$0xf]
      %v770 = vld [vmem:[%s748 + $0x54] sm:$0xf]
      %v771 = vld [vmem:[%s748 + $0x58] sm:$0xf]
      %v772 = vld [vmem:[%s748 + $0x5c] sm:$0xf]
      %v773 = vld [vmem:[%s748 + $0x60] sm:$0xf]
      %v774 = vld [vmem:[%s748 + $0x64] sm:$0xf]
      %v775 = vld [vmem:[%s748 + $0x68] sm:$0xf]
      %v776 = vld [vmem:[%s748 + $0x6c] sm:$0xf]
      %v777 = vld [vmem:[%s748 + $0x70] sm:$0xf]
      %v778 = vld [vmem:[%s748 + $0x74] sm:$0xf]
      %v779 = vld [vmem:[%s748 + $0x78] sm:$0xf]
      %v780 = vld [vmem:[%s748 + $0x7c] sm:$0xf]
      %v781 = vunpack.c.l.b16 %v725
      %v782 = vunpack.c.h.b16 %v725
      %v783 = vunpack.c.l.b16 %v728
      %v784 = vunpack.c.h.b16 %v728
      %v785 = vunpack.c.l.b16 %v731
      %v786 = vunpack.c.h.b16 %v731
      %v787 = vunpack.c.l.b16 %v734
      %v788 = vunpack.c.h.b16 %v734
      %v789 = vunpack.c.l.b16 %v738
      %v790 = vunpack.c.h.b16 %v738
      %v791 = vunpack.c.l.b16 %v741
      %v792 = vunpack.c.h.b16 %v741
      %v793 = vunpack.c.l.b16 %v744
      %v794 = vunpack.c.h.b16 %v744
      %v795 = vunpack.c.l.b16 %v747
      %v796 = vunpack.c.h.b16 %v747
      %v797 = vpack.c.b16 %v783, %v781
      %v798 = vpack.c.b16 %v784, %v782
      %v799 = vpack.c.b16 %v787, %v785
      %v800 = vpack.c.b16 %v788, %v786
      %v801 = vpack.c.b16 %v791, %v789
      %v802 = vpack.c.b16 %v792, %v790
      %v803 = vpack.c.b16 %v795, %v793
      %v804 = vpack.c.b16 %v796, %v794
      %v845 = vunpack.c.l.b16 %v749
      %v846 = vunpack.c.l.b16 %v750
      %v847 = vunpack.c.l.b16 %v751
      %v848 = vunpack.c.l.b16 %v752
      %v849 = vunpack.c.l.b16 %v753
      %v850 = vunpack.c.l.b16 %v754
      %v851 = vunpack.c.l.b16 %v755
      %v852 = vunpack.c.l.b16 %v756
      %v853 = vunpack.c.l.b16 %v757
      %v854 = vunpack.c.l.b16 %v758
      %v855 = vunpack.c.l.b16 %v759
      %v856 = vunpack.c.l.b16 %v760
      %v857 = vunpack.c.l.b16 %v761
      %v858 = vunpack.c.l.b16 %v762
      %v859 = vunpack.c.l.b16 %v763
      %v860 = vunpack.c.l.b16 %v764
      %v861 = vunpack.c.l.b16 %v765
      %v862 = vunpack.c.l.b16 %v766
      %v863 = vunpack.c.l.b16 %v767
      %v864 = vunpack.c.l.b16 %v768
      %v865 = vunpack.c.l.b16 %v769
      %v866 = vunpack.c.l.b16 %v770
      %v867 = vunpack.c.l.b16 %v771
      %v868 = vunpack.c.l.b16 %v772
      %v869 = vunpack.c.l.b16 %v773
      %v870 = vunpack.c.l.b16 %v774
      %v871 = vunpack.c.l.b16 %v775
      %v872 = vunpack.c.l.b16 %v776
      %v873 = vunpack.c.l.b16 %v777
      %v874 = vunpack.c.l.b16 %v778
      %v875 = vunpack.c.l.b16 %v779
      %v876 = vunpack.c.l.b16 %v780
      %v877 = vpack.c.b16 %v846, %v845
      %v878 = vpack.c.b16 %v848, %v847
      %v879 = vpack.c.b16 %v850, %v849
      %v880 = vpack.c.b16 %v852, %v851
      %v881 = vpack.c.b16 %v854, %v853
      %v882 = vpack.c.b16 %v856, %v855
      %v883 = vpack.c.b16 %v858, %v857
      %v884 = vpack.c.b16 %v860, %v859
      %v885 = vpack.c.b16 %v862, %v861
      %v886 = vpack.c.b16 %v864, %v863
      %v887 = vpack.c.b16 %v866, %v865
      %v888 = vpack.c.b16 %v868, %v867
      %v889 = vpack.c.b16 %v870, %v869
      %v890 = vpack.c.b16 %v872, %v871
      %v891 = vpack.c.b16 %v874, %v873
      %v892 = vpack.c.b16 %v876, %v875
      %909 = vmatprep.subr.bf16.mxu0 0
      %910 = vmatpush1.bf16.msra.mxu0 %v884
      %911 = vmatprep.subr.bf16.mxu0 0
      %912 = vmatpush1.bf16.msra.mxu0 %v883
      %913 = vmatprep.subr.bf16.mxu0 0
      %914 = vmatpush1.bf16.msra.mxu0 %v882
      %915 = vmatprep.subr.bf16.mxu0 0
      %916 = vmatpush1.bf16.msra.mxu0 %v881
      %917 = vmatprep.subr.bf16.mxu0 0
      %918 = vmatpush1.bf16.msra.mxu0 %v880
      %919 = vmatprep.subr.bf16.mxu0 0
      %920 = vmatpush1.bf16.msra.mxu0 %v879
      %921 = vmatprep.subr.bf16.mxu0 0
      %922 = vmatpush1.bf16.msra.mxu0 %v878
      %923 = vmatprep.subr.bf16.mxu0 0
      %924 = vmatpush1.bf16.msra.mxu0 %v877
      %925 = vmatprep.subr.bf16.mxu0 0
      %926 = vmatpush2.bf16.msra.mxu0 %v892
      %927 = vmatprep.subr.bf16.mxu0 0
      %928 = vmatpush2.bf16.msra.mxu0 %v891
      %929 = vmatprep.subr.bf16.mxu0 0
      %930 = vmatpush2.bf16.msra.mxu0 %v890
      %931 = vmatprep.subr.bf16.mxu0 0
      %932 = vmatpush2.bf16.msra.mxu0 %v889
      %933 = vmatprep.subr.bf16.mxu0 0
      %934 = vmatpush2.bf16.msra.mxu0 %v888
      %935 = vmatprep.subr.bf16.mxu0 0
      %936 = vmatpush2.bf16.msra.mxu0 %v887
      %937 = vmatprep.subr.bf16.mxu0 0
      %938 = vmatpush2.bf16.msra.mxu0 %v886
      %939 = vmatprep.subr.bf16.mxu0 0
      %940 = vmatpush2.bf16.msra.mxu0 %v885
      %941 = vmatprep.mubr.bf16.mxu0 %v798
      %942 = vmatmul.mubr.bf16.gmra.mxu0 %v797
      %v943 = vpop.f32.mrf.mxu0
      %v944 = vadd.f32 0.0, %v943
      %v945 = vpop.f32.mrf.mxu0
      %v946 = vpop.f32.mrf.mxu0
      %v947 = vadd.f32 0.0, %v946
      %v948 = vpop.f32.mrf.mxu0
      %949 = vmatprep.mubr.bf16.mxu0 %v800
      %950 = vmatmul.mubr.bf16.gmra.mxu0 %v799
      %v951 = vpop.f32.mrf.mxu0
      %v952 = vadd.f32 0.0, %v951
      %v953 = vpop.f32.mrf.mxu0
      %v954 = vpop.f32.mrf.mxu0
      %v955 = vadd.f32 0.0, %v954
      %v956 = vpop.f32.mrf.mxu0
      %957 = vmatprep.mubr.bf16.mxu0 %v802
      %958 = vmatmul.mubr.bf16.gmra.mxu0 %v801
      %v959 = vpop.f32.mrf.mxu0
      %v960 = vadd.f32 0.0, %v959
      %v961 = vpop.f32.mrf.mxu0
      %v962 = vpop.f32.mrf.mxu0
      %v963 = vadd.f32 0.0, %v962
      %v964 = vpop.f32.mrf.mxu0
      %965 = vmatprep.mubr.bf16.mxu0 %v804
      %966 = vmatmul.mubr.bf16.gmra.mxu0 %v803
      %v967 = vpop.f32.mrf.mxu0
      %v968 = vadd.f32 0.0, %v967
      %v969 = vpop.f32.mrf.mxu0
      %v970 = vpop.f32.mrf.mxu0
      %v971 = vadd.f32 0.0, %v970
      %v972 = vpop.f32.mrf.mxu0
      %973 = vdwg.mxu0
      %v974 = vadd.f32 %v683, %v944
      %v975 = vadd.f32 %v686, %v947
      %v976 = vadd.f32 %v691, %v952
      %v977 = vadd.f32 %v694, %v955
      %v978 = vadd.f32 %v699, %v960
      %v979 = vadd.f32 %v702, %v963
      %v980 = vadd.f32 %v707, %v968
      %v981 = vadd.f32 %v710, %v971
      %v982 = vld [vmem:[%s143 + $0x20] sm:$0x33]
      %v983 = vld [vmem:[%s143 + $0x48] sm:$0x33]
      %vm984 = vsmask.f32 2304
      %vm985 = vsmask.f32 6416
      %vm986 = vmor %vm984, %vm985
      %v988 = vshrl.u32 %v713, 16
      %v990 = vrot.slane %v988, 5
      %v991 = vshll.u32 %v713, 16
      %v993 = vrot.slane %v991, 6
      %v994 = vor.u32 %v990, %v993
      %v995 = vrot.slane %v994, 4
      %v996 = vrot.slane %v212, 5
      %v997 = vrot.slane %v208, 6
      %v998 = vor.u32 %v996, %v997
      %v999 = vsel %vm986, %v995, %v998
      %v1000 = vrot.slane %v998, 4
      %v1001 = vrot.slane %v222, 5
      %v1002 = vrot.slane %v218, 6
      %v1003 = vor.u32 %v1001, %v1002
      %v1004 = vsel %vm986, %v1000, %v1003
      %v1005 = vrot.slane %v1003, 4
      %v1006 = vrot.slane %v232, 5
      %v1007 = vrot.slane %v228, 6
      %v1008 = vor.u32 %v1006, %v1007
      %v1009 = vsel %vm986, %v1005, %v1008
      %v1010 = vrot.slane %v1008, 4
      %v1012 = vshrl.u32 %v982, 16
      %v1014 = vrot.slane %v1012, 5
      %v1015 = vshll.u32 %v982, 16
      %v1017 = vrot.slane %v1015, 6
      %v1018 = vor.u32 %v1014, %v1017
      %v1019 = vsel %vm986, %v1010, %v1018
      %v1021 = vshrl.u32 %v714, 16
      %v1023 = vrot.slane %v1021, 5
      %v1024 = vshll.u32 %v714, 16
      %v1026 = vrot.slane %v1024, 6
      %v1027 = vor.u32 %v1023, %v1026
      %v1028 = vrot.slane %v1027, 4
      %v1029 = vrot.slane %v256, 5
      %v1030 = vrot.slane %v252, 6
      %v1031 = vor.u32 %v1029, %v1030
      %v1032 = vsel %vm986, %v1028, %v1031
      %v1033 = vrot.slane %v1031, 4
      %v1034 = vrot.slane %v266, 5
      %v1035 = vrot.slane %v262, 6
      %v1036 = vor.u32 %v1034, %v1035
      %v1037 = vsel %vm986, %v1033, %v1036
      %v1038 = vrot.slane %v1036, 4
      %v1039 = vrot.slane %v276, 5
      %v1040 = vrot.slane %v272, 6
      %v1041 = vor.u32 %v1039, %v1040
      %v1042 = vsel %vm986, %v1038, %v1041
      %v1043 = vrot.slane %v1041, 4
      %v1045 = vshrl.u32 %v983, 16
      %v1047 = vrot.slane %v1045, 5
      %v1048 = vshll.u32 %v983, 16
      %v1050 = vrot.slane %v1048, 6
      %v1051 = vor.u32 %v1047, %v1050
      %v1052 = vsel %vm986, %v1043, %v1051
      %s1053 = scalar_lea.vmem %s1, 384
      %v1054 = vld [vmem:[%s1053] sm:$0xf]
      %v1055 = vld [vmem:[%s1053 + $0x4] sm:$0xf]
      %v1056 = vld [vmem:[%s1053 + $0x8] sm:$0xf]
      %v1057 = vld [vmem:[%s1053 + $0xc] sm:$0xf]
      %v1058 = vld [vmem:[%s1053 + $0x10] sm:$0xf]
      %v1059 = vld [vmem:[%s1053 + $0x14] sm:$0xf]
      %v1060 = vld [vmem:[%s1053 + $0x18] sm:$0xf]
      %v1061 = vld [vmem:[%s1053 + $0x1c] sm:$0xf]
      %v1062 = vld [vmem:[%s1053 + $0x20] sm:$0xf]
      %v1063 = vld [vmem:[%s1053 + $0x24] sm:$0xf]
      %v1064 = vld [vmem:[%s1053 + $0x28] sm:$0xf]
      %v1065 = vld [vmem:[%s1053 + $0x2c] sm:$0xf]
      %v1066 = vld [vmem:[%s1053 + $0x30] sm:$0xf]
      %v1067 = vld [vmem:[%s1053 + $0x34] sm:$0xf]
      %v1068 = vld [vmem:[%s1053 + $0x38] sm:$0xf]
      %v1069 = vld [vmem:[%s1053 + $0x3c] sm:$0xf]
      %v1070 = vld [vmem:[%s1053 + $0x40] sm:$0xf]
      %v1071 = vld [vmem:[%s1053 + $0x44] sm:$0xf]
      %v1072 = vld [vmem:[%s1053 + $0x48] sm:$0xf]
      %v1073 = vld [vmem:[%s1053 + $0x4c] sm:$0xf]
      %v1074 = vld [vmem:[%s1053 + $0x50] sm:$0xf]
      %v1075 = vld [vmem:[%s1053 + $0x54] sm:$0xf]
      %v1076 = vld [vmem:[%s1053 + $0x58] sm:$0xf]
      %v1077 = vld [vmem:[%s1053 + $0x5c] sm:$0xf]
      %v1078 = vld [vmem:[%s1053 + $0x60] sm:$0xf]
      %v1079 = vld [vmem:[%s1053 + $0x64] sm:$0xf]
      %v1080 = vld [vmem:[%s1053 + $0x68] sm:$0xf]
      %v1081 = vld [vmem:[%s1053 + $0x6c] sm:$0xf]
      %v1082 = vld [vmem:[%s1053 + $0x70] sm:$0xf]
      %v1083 = vld [vmem:[%s1053 + $0x74] sm:$0xf]
      %v1084 = vld [vmem:[%s1053 + $0x78] sm:$0xf]
      %v1085 = vld [vmem:[%s1053 + $0x7c] sm:$0xf]
      %v1086 = vunpack.c.l.b16 %v999
      %v1087 = vunpack.c.h.b16 %v999
      %v1088 = vunpack.c.l.b16 %v1004
      %v1089 = vunpack.c.h.b16 %v1004
      %v1090 = vunpack.c.l.b16 %v1009
      %v1091 = vunpack.c.h.b16 %v1009
      %v1092 = vunpack.c.l.b16 %v1019
      %v1093 = vunpack.c.h.b16 %v1019
      %v1094 = vunpack.c.l.b16 %v1032
      %v1095 = vunpack.c.h.b16 %v1032
      %v1096 = vunpack.c.l.b16 %v1037
      %v1097 = vunpack.c.h.b16 %v1037
      %v1098 = vunpack.c.l.b16 %v1042
      %v1099 = vunpack.c.h.b16 %v1042
      %v1100 = vunpack.c.l.b16 %v1052
      %v1101 = vunpack.c.h.b16 %v1052
      %v1102 = vpack.c.b16 %v1088, %v1086
      %v1103 = vpack.c.b16 %v1089, %v1087
      %v1104 = vpack.c.b16 %v1092, %v1090
      %v1105 = vpack.c.b16 %v1093, %v1091
      %v1106 = vpack.c.b16 %v1096, %v1094
      %v1107 = vpack.c.b16 %v1097, %v1095
      %v1108 = vpack.c.b16 %v1100, %v1098
      %v1109 = vpack.c.b16 %v1101, %v1099
      %v1150 = vunpack.c.l.b16 %v1054
      %v1151 = vunpack.c.l.b16 %v1055
      %v1152 = vunpack.c.l.b16 %v1056
      %v1153 = vunpack.c.l.b16 %v1057
      %v1154 = vunpack.c.l.b16 %v1058
      %v1155 = vunpack.c.l.b16 %v1059
      %v1156 = vunpack.c.l.b16 %v1060
      %v1157 = vunpack.c.l.b16 %v1061
      %v1158 = vunpack.c.l.b16 %v1062
      %v1159 = vunpack.c.l.b16 %v1063
      %v1160 = vunpack.c.l.b16 %v1064
      %v1161 = vunpack.c.l.b16 %v1065
      %v1162 = vunpack.c.l.b16 %v1066
      %v1163 = vunpack.c.l.b16 %v1067
      %v1164 = vunpack.c.l.b16 %v1068
      %v1165 = vunpack.c.l.b16 %v1069
      %v1166 = vunpack.c.l.b16 %v1070
      %v1167 = vunpack.c.l.b16 %v1071
      %v1168 = vunpack.c.l.b16 %v1072
      %v1169 = vunpack.c.l.b16 %v1073
      %v1170 = vunpack.c.l.b16 %v1074
      %v1171 = vunpack.c.l.b16 %v1075
      %v1172 = vunpack.c.l.b16 %v1076
      %v1173 = vunpack.c.l.b16 %v1077
      %v1174 = vunpack.c.l.b16 %v1078
      %v1175 = vunpack.c.l.b16 %v1079
      %v1176 = vunpack.c.l.b16 %v1080
      %v1177 = vunpack.c.l.b16 %v1081
      %v1178 = vunpack.c.l.b16 %v1082
      %v1179 = vunpack.c.l.b16 %v1083
      %v1180 = vunpack.c.l.b16 %v1084
      %v1181 = vunpack.c.l.b16 %v1085
      %v1182 = vpack.c.b16 %v1151, %v1150
      %v1183 = vpack.c.b16 %v1153, %v1152
      %v1184 = vpack.c.b16 %v1155, %v1154
      %v1185 = vpack.c.b16 %v1157, %v1156
      %v1186 = vpack.c.b16 %v1159, %v1158
      %v1187 = vpack.c.b16 %v1161, %v1160
      %v1188 = vpack.c.b16 %v1163, %v1162
      %v1189 = vpack.c.b16 %v1165, %v1164
      %v1190 = vpack.c.b16 %v1167, %v1166
      %v1191 = vpack.c.b16 %v1169, %v1168
      %v1192 = vpack.c.b16 %v1171, %v1170
      %v1193 = vpack.c.b16 %v1173, %v1172
      %v1194 = vpack.c.b16 %v1175, %v1174
      %v1195 = vpack.c.b16 %v1177, %v1176
      %v1196 = vpack.c.b16 %v1179, %v1178
      %v1197 = vpack.c.b16 %v1181, %v1180
      %1214 = vmatprep.subr.bf16.mxu0 0
      %1215 = vmatpush1.bf16.msra.mxu0 %v1189
      %1216 = vmatprep.subr.bf16.mxu0 0
      %1217 = vmatpush1.bf16.msra.mxu0 %v1188
      %1218 = vmatprep.subr.bf16.mxu0 0
      %1219 = vmatpush1.bf16.msra.mxu0 %v1187
      %1220 = vmatprep.subr.bf16.mxu0 0
      %1221 = vmatpush1.bf16.msra.mxu0 %v1186
      %1222 = vmatprep.subr.bf16.mxu0 0
      %1223 = vmatpush1.bf16.msra.mxu0 %v1185
      %1224 = vmatprep.subr.bf16.mxu0 0
      %1225 = vmatpush1.bf16.msra.mxu0 %v1184
      %1226 = vmatprep.subr.bf16.mxu0 0
      %1227 = vmatpush1.bf16.msra.mxu0 %v1183
      %1228 = vmatprep.subr.bf16.mxu0 0
      %1229 = vmatpush1.bf16.msra.mxu0 %v1182
      %1230 = vmatprep.subr.bf16.mxu0 0
      %1231 = vmatpush2.bf16.msra.mxu0 %v1197
      %1232 = vmatprep.subr.bf16.mxu0 0
      %1233 = vmatpush2.bf16.msra.mxu0 %v1196
      %1234 = vmatprep.subr.bf16.mxu0 0
      %1235 = vmatpush2.bf16.msra.mxu0 %v1195
      %1236 = vmatprep.subr.bf16.mxu0 0
      %1237 = vmatpush2.bf16.msra.mxu0 %v1194
      %1238 = vmatprep.subr.bf16.mxu0 0
      %1239 = vmatpush2.bf16.msra.mxu0 %v1193
      %1240 = vmatprep.subr.bf16.mxu0 0
      %1241 = vmatpush2.bf16.msra.mxu0 %v1192
      %1242 = vmatprep.subr.bf16.mxu0 0
      %1243 = vmatpush2.bf16.msra.mxu0 %v1191
      %1244 = vmatprep.subr.bf16.mxu0 0
      %1245 = vmatpush2.bf16.msra.mxu0 %v1190
      %1246 = vmatprep.mubr.bf16.mxu0 %v1103
      %1247 = vmatmul.mubr.bf16.gmra.mxu0 %v1102
      %v1248 = vpop.f32.mrf.mxu0
      %v1249 = vadd.f32 0.0, %v1248
      %v1250 = vpop.f32.mrf.mxu0
      %v1251 = vpop.f32.mrf.mxu0
      %v1252 = vadd.f32 0.0, %v1251
      %v1253 = vpop.f32.mrf.mxu0
      %1254 = vmatprep.mubr.bf16.mxu0 %v1105
      %1255 = vmatmul.mubr.bf16.gmra.mxu0 %v1104
      %v1256 = vpop.f32.mrf.mxu0
      %v1257 = vadd.f32 0.0, %v1256
      %v1258 = vpop.f32.mrf.mxu0
      %v1259 = vpop.f32.mrf.mxu0
      %v1260 = vadd.f32 0.0, %v1259
      %v1261 = vpop.f32.mrf.mxu0
      %1262 = vmatprep.mubr.bf16.mxu0 %v1107
      %1263 = vmatmul.mubr.bf16.gmra.mxu0 %v1106
      %v1264 = vpop.f32.mrf.mxu0
      %v1265 = vadd.f32 0.0, %v1264
      %v1266 = vpop.f32.mrf.mxu0
      %v1267 = vpop.f32.mrf.mxu0
      %v1268 = vadd.f32 0.0, %v1267
      %v1269 = vpop.f32.mrf.mxu0
      %1270 = vmatprep.mubr.bf16.mxu0 %v1109
      %1271 = vmatmul.mubr.bf16.gmra.mxu0 %v1108
      %v1272 = vpop.f32.mrf.mxu0
      %v1273 = vadd.f32 0.0, %v1272
      %v1274 = vpop.f32.mrf.mxu0
      %v1275 = vpop.f32.mrf.mxu0
      %v1276 = vadd.f32 0.0, %v1275
      %v1277 = vpop.f32.mrf.mxu0
      %1278 = vdwg.mxu0
      %v1279 = vadd.f32 %v974, %v1249
      %v1280 = vadd.f32 %v975, %v1252
      %v1281 = vadd.f32 %v976, %v1257
      %v1282 = vadd.f32 %v977, %v1260
      %v1283 = vadd.f32 %v978, %v1265
      %v1284 = vadd.f32 %v979, %v1268
      %v1285 = vadd.f32 %v980, %v1273
      %v1286 = vadd.f32 %v981, %v1276
      %1287 = vadd.xlane.f32.xlu0 %v1279
      %v1288 = vpop.xlane.xlu0 %1287
      %1289 = vadd.xlane.f32.xlu0 %v1280
      %v1290 = vpop.xlane.xlu0 %1289
      %1291 = vadd.xlane.f32.xlu0 %v1281
      %v1292 = vpop.xlane.xlu0 %1291
      %1293 = vadd.xlane.f32.xlu0 %v1282
      %v1294 = vpop.xlane.xlu0 %1293
      %1295 = vadd.xlane.f32.xlu0 %v1283
      %v1296 = vpop.xlane.xlu0 %1295
      %1297 = vadd.xlane.f32.xlu0 %v1284
      %v1298 = vpop.xlane.xlu0 %1297
      %1299 = vadd.xlane.f32.xlu0 %v1285
      %v1300 = vpop.xlane.xlu0 %1299
      %1301 = vadd.xlane.f32.xlu0 %v1286
      %v1302 = vpop.xlane.xlu0 %1301
      %v1303 = vadd.f32 %v1288, %v1290
      %v1304 = vadd.f32 %v1303, %v1292
      %v1305 = vadd.f32 %v1304, %v1294
      %v1306 = vrot.slane %v1305, 4
      %v1307 = vadd.f32 %v1305, %v1306
      %v1308 = vrot.slane %v1307, 2
      %v1309 = vadd.f32 %v1307, %v1308
      %v1310 = vrot.slane %v1309, 1
      %v1311 = vadd.f32 %v1309, %v1310
      %v1312 = vadd.f32 %v1296, %v1298
      %v1313 = vadd.f32 %v1312, %v1300
      %v1314 = vadd.f32 %v1313, %v1302
      %v1315 = vrot.slane %v1314, 4
      %v1316 = vadd.f32 %v1314, %v1315
      %v1317 = vrot.slane %v1316, 2
      %v1318 = vadd.f32 %v1316, %v1317
      %v1319 = vrot.slane %v1318, 1
      %v1320 = vadd.f32 %v1318, %v1319
      %v1321 = vmul.f32 %v1279, %v1279
      %v1322 = vmul.f32 %v1280, %v1280
      %v1323 = vmul.f32 %v1281, %v1281
      %v1324 = vmul.f32 %v1282, %v1282
      %v1325 = vmul.f32 %v1283, %v1283
      %v1326 = vmul.f32 %v1284, %v1284
      %v1327 = vmul.f32 %v1285, %v1285
      %v1328 = vmul.f32 %v1286, %v1286
      %1329 = vadd.xlane.f32.xlu0 %v1321
      %v1330 = vpop.xlane.xlu0 %1329
      %1331 = vadd.xlane.f32.xlu0 %v1322
      %v1332 = vpop.xlane.xlu0 %1331
      %1333 = vadd.xlane.f32.xlu0 %v1323
      %v1334 = vpop.xlane.xlu0 %1333
      %1335 = vadd.xlane.f32.xlu0 %v1324
      %v1336 = vpop.xlane.xlu0 %1335
      %1337 = vadd.xlane.f32.xlu0 %v1325
      %v1338 = vpop.xlane.xlu0 %1337
      %1339 = vadd.xlane.f32.xlu0 %v1326
      %v1340 = vpop.xlane.xlu0 %1339
      %1341 = vadd.xlane.f32.xlu0 %v1327
      %v1342 = vpop.xlane.xlu0 %1341
      %1343 = vadd.xlane.f32.xlu0 %v1328
      %v1344 = vpop.xlane.xlu0 %1343
      %v1345 = vadd.f32 %v1330, %v1332
      %v1346 = vadd.f32 %v1345, %v1334
      %v1347 = vadd.f32 %v1346, %v1336
      %v1348 = vrot.slane %v1347, 4
      %v1349 = vadd.f32 %v1347, %v1348
      %v1350 = vrot.slane %v1349, 2
      %v1351 = vadd.f32 %v1349, %v1350
      %v1352 = vrot.slane %v1351, 1
      %v1353 = vadd.f32 %v1351, %v1352
      %v1354 = vadd.f32 %v1338, %v1340
      %v1355 = vadd.f32 %v1354, %v1342
      %v1356 = vadd.f32 %v1355, %v1344
      %v1357 = vrot.slane %v1356, 4
      %v1358 = vadd.f32 %v1356, %v1357
      %v1359 = vrot.slane %v1358, 2
      %v1360 = vadd.f32 %v1358, %v1359
      %v1361 = vrot.slane %v1360, 1
      %v1362 = vadd.f32 %v1360, %v1361
      %v1363 = vmul.f32 %v1311, 0.00390625
      %v1364 = vmul.f32 %v1320, 0.00390625
      %v1365 = vmul.f32 %v1353, 0.00390625
      %v1366 = vmul.f32 %v1362, 0.00390625
      %v1367 = vmul.f32 %v1363, %v1363
      %v1368 = vmul.f32 %v1364, %v1364
      %v1369 = vsub.f32 %v1365, %v1367
      %v1370 = vsub.f32 %v1366, %v1368
      %v1371 = vsub.f32 %v1279, %v1363
      %v1372 = vsub.f32 %v1280, %v1363
      %v1373 = vsub.f32 %v1281, %v1363
      %v1374 = vsub.f32 %v1282, %v1363
      %v1375 = vsub.f32 %v1283, %v1364
      %v1376 = vsub.f32 %v1284, %v1364
      %v1377 = vsub.f32 %v1285, %v1364
      %v1378 = vsub.f32 %v1286, %v1364
      %v1379 = vadd.f32 %v1369, 1e-05
      %v1380 = vadd.f32 %v1370, 1e-05
      %v1381 = vrsqrt.pop %v1379
      %v1382 = vrsqrt.pop %v1380
      %v1383 = vmul.f32 %v1371, %v1381
      %v1384 = vmul.f32 %v1372, %v1381
      %v1385 = vmul.f32 %v1373, %v1381
      %v1386 = vmul.f32 %v1374, %v1381
      %v1387 = vmul.f32 %v1375, %v1382
      %v1388 = vmul.f32 %v1376, %v1382
      %v1389 = vmul.f32 %v1377, %v1382
      %v1390 = vmul.f32 %v1378, %v1382
      %v1391 = vlaneseq
      %v1392 = vand.u32 %v1391, 127
      %vm1393 = vcmp.lt.s32.totalorder %v1392, 8
      %v1394 = vsel %vm1393, %v1383, 0.0
      %v1395 = vsel %vm1393, %v1384, 0.0
      %v1396 = vsel %vm1393, %v1385, 0.0
      %v1397 = vsel %vm1393, %v1386, 0.0
      %v1398 = vsel %vm1393, %v1387, 0.0
      %v1399 = vsel %vm1393, %v1388, 0.0
      %v1400 = vsel %vm1393, %v1389, 0.0
      %v1401 = vsel %vm1393, %v1390, 0.0
      %v1402 = vmax.f32 %v1394, 0.0
      %v1403 = vmax.f32 %v1395, 0.0
      %v1404 = vmax.f32 %v1396, 0.0
      %v1405 = vmax.f32 %v1397, 0.0
      %v1406 = vmax.f32 %v1398, 0.0
      %v1407 = vmax.f32 %v1399, 0.0
      %v1408 = vmax.f32 %v1400, 0.0
      %v1409 = vmax.f32 %v1401, 0.0
      %v1410 = vpack.c.bf16 %v1403, %v1402
      %v1411 = vpack.c.bf16 %v1405, %v1404
      %v1412 = vpack.c.bf16 %v1407, %v1406
      %v1413 = vpack.c.bf16 %v1409, %v1408
      %v1418 = vunpack.c.l.b16 %v1410
      %v1419 = vunpack.c.h.b16 %v1410
      %v1420 = vunpack.c.l.b16 %v1411
      %v1421 = vunpack.c.h.b16 %v1411
      %v1422 = vunpack.c.l.b16 %v1412
      %v1423 = vunpack.c.h.b16 %v1412
      %v1424 = vunpack.c.l.b16 %v1413
      %v1425 = vunpack.c.h.b16 %v1413
      %v1426 = vpack.c.b16 %v1418, %v1418
      %v1427 = vpack.c.b16 %v1419, %v1419
      %v1428 = vpack.c.b16 %v1420, %v1420
      %v1429 = vpack.c.b16 %v1421, %v1421
      %v1430 = vpack.c.b16 %v1422, %v1422
      %v1431 = vpack.c.b16 %v1423, %v1423
      %v1432 = vpack.c.b16 %v1424, %v1424
      %v1433 = vpack.c.b16 %v1425, %v1425
      %1442 = vst [vmem:[%s150] sm:$0xf] %v1426
      %1443 = vst [vmem:[%s150 + $0x4] sm:$0xf] %v1427
      %1444 = vst [vmem:[%s150 + $0x8] sm:$0xf] %v1428
      %1445 = vst [vmem:[%s150 + $0xc] sm:$0xf] %v1429
      %1446 = vst [vmem:[%s150 + $0x10] sm:$0xf] %v1430
      %1447 = vst [vmem:[%s150 + $0x14] sm:$0xf] %v1431
      %1448 = vst [vmem:[%s150 + $0x18] sm:$0xf] %v1432
      %1449 = vst [vmem:[%s150 + $0x1c] sm:$0xf] %v1433
      %s1450 = smul.u32 2, %s13
      %p1451 = scmp.lt.s32.totalorder %s1450, 3
      %s1452 = scalar_select %p1451, %s1450, 3
      %s1453 = smul.addr %s1452, 4
      %s1454 = smul.addr %s1453, 4
      %s1455 = scalar_lea.vmem %s2, %s1454
      // Predicated region
      $region29: #{_lambda_.13} parent=27 // pred_check
        %p1456 = pneg %p78
      $region30: #{_lambda_.13} parent=27 // pred_check_branch
        %1458 = sbr.rel (%p1456) target = $region32
      $region31: #{_lambda_.13} parent=27 // pred_region
        %s1459 = smul.u32 2, %s13
      $region32: #{_lambda_.13} parent=27 // pred_fallthru
        _
    $region28: #{_lambda_.13} parent=5 // pred_fallthru
      _
    %p1460 = scmp.le.s32.totalorder 2, %s8
    // Predicated region
    $region33: #{_lambda_.13} parent=5 // pred_check
      %p1461 = pneg %p1460
    $region34: #{_lambda_.13} parent=5 // pred_check_branch
      %1463 = sbr.rel (%p1461) target = $region36
    $region35: #{_lambda_.13} parent=5 // pred_region
      %s1464 = ssub.s32 %s8, 2
      // Predicated region
      $region37: #{_lambda_.13} parent=35 // pred_check
        %p1465 = pneg %p84
      $region38: #{_lambda_.13} parent=35 // pred_check_branch
        %1467 = sbr.rel (%p1465) target = $region40
      $region39: #{_lambda_.13} parent=35 // pred_region
        %s1468 = smul.u32 2, %s14
        %p1469 = scmp.lt.s32.totalorder %s1468, 3
        %s1470 = scalar_select %p1469, %s1468, 3
        %s1471 = smul.addr %s1470, 4
        %s1472 = smul.addr %s1471, 4
        %s1473 = scalar_lea.vmem %s2, %s1472
      $region40: #{_lambda_.13} parent=35 // pred_fallthru
        _
    $region36: #{_lambda_.13} parent=5 // pred_fallthru
      _
  $region6: #{_lambda_.13} parent=0 // loop_footer
    %s12 = sadd.s32 1, %s8
  $region7: #{_lambda_.13} parent=0 // loop_footer_branch
    %7 = sbr.rel target = $region3
  $region8: #{_lambda_.13} parent=0 // loop_exit
    _

// kernel: _lambda_.18
$region0: #{_lambda_.18}
  #allocation0 [shape = 'u32[]', space=smem, size = 0x4, offset = 0x4, fixed_abs, tag = 'smem constant byte address 0x4 - core index']
  #allocation1 [shape = 'u32[144,128]{1,0:T(1,128)}', space=vmem, size = 0x12000, scoped, tag = 'internal scratch']
  %s0 = inlined_call_operand.vmem [shape: bf16[4,9,256], index: 0, kind: input, shape index: {}]
  %s1 = inlined_call_operand.vmem [shape: bf16[1,256,128], index: 1, kind: input, shape index: {}]
  %s2 = inlined_call_operand.vmem [shape: bf16[4,8,128], index: 2, kind: output, shape index: {}]
  %s3 = sld [smem:[#allocation0]]
  $region41: #{_lambda_.18} parent=0
    _
  %s5 = ssub.s32 1, %s3
  %s6 = scalar_select 0, %s5, %s3
  loop: start=0, step=1, limit=4
  $region2: #{_lambda_.18} parent=0 // loop_pre_header
    _
  $region3: #{_lambda_.18} parent=0 // loop_header
    %s8 = sphi 0, %s12
    %p9 = scmp.ge.s32.totalorder %s8, 4
    %s18 = sphi 0, %s20
    %s21 = sphi 0, %s18
    %s22 = sphi 0, %s21
    %s38 = sphi 0, %s22
    %s42 = sphi 0, %s42
    %s44 = sphi 0, %s42
    %s45 = sphi 0, %s44
    %s59 = sphi 0, %s45
    %s65 = sphi 0, %s67
    %s68 = sphi 0, %s65
    %s69 = sphi 0, %s68
    %s85 = sphi 0, %s69
  $region4: #{_lambda_.18} parent=0 // loop_header_branch
    %11 = sbr.rel (%p9) target = $region8
  $region5: #{_lambda_.18} parent=0 // loop_body
    %s13 = ssub.s32 %s8, 1
    %s14 = ssub.s32 %s8, 2
    %s15 = sadd.s32 %s8, 1
    %s16 = ssub.s32 %s8, %s15
    %p17 = scmp.eq.s32.totalorder %s16, 0
    %s19 = sadd.s32 %s18, 1
    %s20 = scalar_select %p17, %s18, %s19
    %p23 = pneg %p17
    %p24 = scmp.eq.s32.totalorder %s8, 1
    %p25 = por %p23, %p24
    %p26 = scmp.ne.s32.totalorder %s18, %s21
    %p27 = scmp.eq.s32.totalorder %s8, 0
    %p28 = por %p26, %p27
    %p29 = scmp.ne.s32.totalorder %s18, %s21
    %p30 = scmp.eq.s32.totalorder %s13, 1
    %p31 = por %p29, %p30
    %p32 = scmp.ne.s32.totalorder %s21, %s22
    %p33 = scmp.eq.s32.totalorder %s13, 0
    %p34 = por %p32, %p33
    %p35 = scmp.ne.s32.totalorder %s21, %s22
    %p36 = scmp.eq.s32.totalorder %s14, 1
    %p37 = por %p35, %p36
    %p39 = scmp.ne.s32.totalorder %s22, %s38
    %p40 = scmp.eq.s32.totalorder %s14, 0
    %p41 = por %p39, %p40
    %s43 = sadd.s32 %s42, 1
    %p46 = scmp.eq.s32.totalorder %s8, 1
    %p47 = scmp.ne.s32.totalorder %s42, %s44
    %p48 = scmp.eq.s32.totalorder %s8, 0
    %p49 = por %p47, %p48
    %p50 = scmp.ne.s32.totalorder %s42, %s44
    %p51 = scmp.eq.s32.totalorder %s13, 1
    %p52 = por %p50, %p51
    %p53 = scmp.ne.s32.totalorder %s44, %s45
    %p54 = scmp.eq.s32.totalorder %s13, 0
    %p55 = por %p53, %p54
    %p56 = scmp.ne.s32.totalorder %s44, %s45
    %p57 = scmp.eq.s32.totalorder %s14, 1
    %p58 = por %p56, %p57
    %p60 = scmp.ne.s32.totalorder %s45, %s59
    %p61 = scmp.eq.s32.totalorder %s14, 0
    %p62 = por %p60, %p61
    %s63 = ssub.s32 %s8, %s15
    %p64 = scmp.eq.s32.totalorder %s63, 0
    %s66 = sadd.s32 %s65, 1
    %s67 = scalar_select %p64, %s65, %s66
    %p70 = pneg %p64
    %p71 = scmp.eq.s32.totalorder %s8, 1
    %p72 = por %p70, %p71
    %p73 = scmp.ne.s32.totalorder %s65, %s68
    %p74 = scmp.eq.s32.totalorder %s8, 0
    %p75 = por %p73, %p74
    %p76 = scmp.ne.s32.totalorder %s65, %s68
    %p77 = scmp.eq.s32.totalorder %s13, 1
    %p78 = por %p76, %p77
    %p79 = scmp.ne.s32.totalorder %s68, %s69
    %p80 = scmp.eq.s32.totalorder %s13, 0
    %p81 = por %p79, %p80
    %p82 = scmp.ne.s32.totalorder %s68, %s69
    %p83 = scmp.eq.s32.totalorder %s14, 1
    %p84 = por %p82, %p83
    %p86 = scmp.ne.s32.totalorder %s69, %s85
    %p87 = scmp.eq.s32.totalorder %s14, 0
    %p88 = por %p86, %p87
    %p89 = scmp.le.s32.totalorder 1, %s8
    %p90 = scmp.lt.s32.totalorder %s8, 3
    %p91 = pnand %p89, %p90
    %p92 = pneg %p91
    // Predicated region
    $region9: #{_lambda_.18} parent=5 // pred_check
      _
    $region10: #{_lambda_.18} parent=5 // pred_check_branch
      %94 = sbr.rel (%p91) target = $region12
    $region11: #{_lambda_.18} parent=5 // pred_region
      %s95 = ssub.s32 %s8, 1
      // Predicated region
      $region13: #{_lambda_.18} parent=11 // pred_check
        %p96 = pneg %p55
      $region14: #{_lambda_.18} parent=11 // pred_check_branch
        %98 = sbr.rel (%p96) target = $region16
      $region15: #{_lambda_.18} parent=11 // pred_region
        _
      $region16: #{_lambda_.18} parent=11 // pred_fallthru
        _
    $region12: #{_lambda_.18} parent=5 // pred_fallthru
      _
    %p99 = scmp.lt.s32.totalorder %s8, 2
    // Predicated region
    $region17: #{_lambda_.18} parent=5 // pred_check
      %p100 = pneg %p99
    $region18: #{_lambda_.18} parent=5 // pred_check_branch
      %102 = sbr.rel (%p100) target = $region20
    $region19: #{_lambda_.18} parent=5 // pred_region
      // Predicated region
      $region21: #{_lambda_.18} parent=19 // pred_check
        %p103 = pneg %p28
      $region22: #{_lambda_.18} parent=19 // pred_check_branch
        %105 = sbr.rel (%p103) target = $region24
      $region23: #{_lambda_.18} parent=19 // pred_region
        %s106 = smul.u32 2, %s8
        %p107 = scmp.lt.s32.totalorder %s106, 3
        %s108 = scalar_select %p107, %s106, 3
        %s109 = smul.addr %s108, 4
        %s110 = smul.addr %s109, 4
        %s111 = scalar_lea.vmem %s0, %s110
        %s112 = smul.u32 2, %s8
      $region24: #{_lambda_.18} parent=19 // pred_fallthru
        _
    $region20: #{_lambda_.18} parent=5 // pred_fallthru
      _
    %p113 = scmp.le.s32.totalorder 1, %s8
    %p114 = scmp.lt.s32.totalorder %s8, 3
    %p115 = pnand %p113, %p114
    %p116 = pneg %p115
    // Predicated region
    $region25: #{_lambda_.18} parent=5 // pred_check
      _
    $region26: #{_lambda_.18} parent=5 // pred_check_branch
      %118 = sbr.rel (%p115) target = $region28
    $region27: #{_lambda_.18} parent=5 // pred_region
      %s119 = ssub.s32 %s8, 1
      %s120 = smul.u32 2, %s13
      %p121 = scmp.lt.s32.totalorder %s120, 3
      %s122 = scalar_select %p121, %s120, 3
      %s123 = smul.addr %s122, 4
      %s124 = smul.addr %s123, 4
      %s125 = scalar_lea.vmem %s0, %s124
      %p126 = pneg %p34
      %p127 = pneg %p31
      %p128 = pneg %p55
      %p129 = pneg %p52
      %p130 = pneg %p81
      %p131 = pneg %p78
      %s132 = smul.u32 2, %s13
      %p133 = scmp.lt.s32.totalorder %s132, 3
      %s134 = scalar_select %p133, %s132, 3
      %s135 = smul.addr %s134, 4
      %s136 = scalar_lea.vmem %s2, %s135
      %s137 = smul.u32 2, %s13
      %p138 = scmp.lt.s32.totalorder %s137, 3
      %s139 = scalar_select %p138, %s137, 3
      %s140 = smul.addr %s139, 4
      %s141 = smul.addr %s140, 4
      %s142 = scalar_lea.vmem %s0, %s141
      %s143 = smul.u32 2, %s13
      %s144 = smul.u32 2, %s13
      %p145 = scmp.lt.s32.totalorder %s144, 3
      %s146 = scalar_select %p145, %s144, 3
      %s147 = smul.addr %s146, 4
      %s148 = scalar_lea.vmem %s2, %s147
      %s149 = smul.u32 2, %s13
      %v151 = vld [vmem:[%s142] sm:$0xff]
      %v152 = vld [vmem:[%s142 + $0x10] sm:$0xff]
      %v153 = vld [vmem:[%s1] sm:$0xf]
      %v154 = vld [vmem:[%s1 + $0x4] sm:$0xf]
      %v155 = vld [vmem:[%s1 + $0x8] sm:$0xf]
      %v156 = vld [vmem:[%s1 + $0xc] sm:$0xf]
      %v157 = vld [vmem:[%s1 + $0x10] sm:$0xf]
      %v158 = vld [vmem:[%s1 + $0x14] sm:$0xf]
      %v159 = vld [vmem:[%s1 + $0x18] sm:$0xf]
      %v160 = vld [vmem:[%s1 + $0x1c] sm:$0xf]
      %v161 = vld [vmem:[%s1 + $0x20] sm:$0xf]
      %v162 = vld [vmem:[%s1 + $0x24] sm:$0xf]
      %v163 = vld [vmem:[%s1 + $0x28] sm:$0xf]
      %v164 = vld [vmem:[%s1 + $0x2c] sm:$0xf]
      %v165 = vld [vmem:[%s1 + $0x30] sm:$0xf]
      %v166 = vld [vmem:[%s1 + $0x34] sm:$0xf]
      %v167 = vld [vmem:[%s1 + $0x38] sm:$0xf]
      %v168 = vld [vmem:[%s1 + $0x3c] sm:$0xf]
      %v169 = vld [vmem:[%s1 + $0x40] sm:$0xf]
      %v170 = vld [vmem:[%s1 + $0x44] sm:$0xf]
      %v171 = vld [vmem:[%s1 + $0x48] sm:$0xf]
      %v172 = vld [vmem:[%s1 + $0x4c] sm:$0xf]
      %v173 = vld [vmem:[%s1 + $0x50] sm:$0xf]
      %v174 = vld [vmem:[%s1 + $0x54] sm:$0xf]
      %v175 = vld [vmem:[%s1 + $0x58] sm:$0xf]
      %v176 = vld [vmem:[%s1 + $0x5c] sm:$0xf]
      %v177 = vld [vmem:[%s1 + $0x60] sm:$0xf]
      %v178 = vld [vmem:[%s1 + $0x64] sm:$0xf]
      %v179 = vld [vmem:[%s1 + $0x68] sm:$0xf]
      %v180 = vld [vmem:[%s1 + $0x6c] sm:$0xf]
      %v181 = vld [vmem:[%s1 + $0x70] sm:$0xf]
      %v182 = vld [vmem:[%s1 + $0x74] sm:$0xf]
      %v183 = vld [vmem:[%s1 + $0x78] sm:$0xf]
      %v184 = vld [vmem:[%s1 + $0x7c] sm:$0xf]
      %v187 = vunpack.c.l.b16 %v151
      %v188 = vunpack.c.h.b16 %v151
      %v189 = vunpack.c.l.b16 %v152
      %v190 = vunpack.c.h.b16 %v152
      %v191 = vpack.c.b16 %v189, %v187
      %v192 = vpack.c.b16 %v190, %v188
      %v227 = vunpack.c.l.b16 %v153
      %v228 = vunpack.c.l.b16 %v154
      %v229 = vunpack.c.l.b16 %v155
      %v230 = vunpack.c.l.b16 %v156
      %v231 = vunpack.c.l.b16 %v157
      %v232 = vunpack.c.l.b16 %v158
      %v233 = vunpack.c.l.b16 %v159
      %v234 = vunpack.c.l.b16 %v160
      %v235 = vunpack.c.l.b16 %v161
      %v236 = vunpack.c.l.b16 %v162
      %v237 = vunpack.c.l.b16 %v163
      %v238 = vunpack.c.l.b16 %v164
      %v239 = vunpack.c.l.b16 %v165
      %v240 = vunpack.c.l.b16 %v166
      %v241 = vunpack.c.l.b16 %v167
      %v242 = vunpack.c.l.b16 %v168
      %v243 = vunpack.c.l.b16 %v169
      %v244 = vunpack.c.l.b16 %v170
      %v245 = vunpack.c.l.b16 %v171
      %v246 = vunpack.c.l.b16 %v172
      %v247 = vunpack.c.l.b16 %v173
      %v248 = vunpack.c.l.b16 %v174
      %v249 = vunpack.c.l.b16 %v175
      %v250 = vunpack.c.l.b16 %v176
      %v251 = vunpack.c.l.b16 %v177
      %v252 = vunpack.c.l.b16 %v178
      %v253 = vunpack.c.l.b16 %v179
      %v254 = vunpack.c.l.b16 %v180
      %v255 = vunpack.c.l.b16 %v181
      %v256 = vunpack.c.l.b16 %v182
      %v257 = vunpack.c.l.b16 %v183
      %v258 = vunpack.c.l.b16 %v184
      %v259 = vpack.c.b16 %v228, %v227
      %v260 = vpack.c.b16 %v230, %v229
      %v261 = vpack.c.b16 %v232, %v231
      %v262 = vpack.c.b16 %v234, %v233
      %v263 = vpack.c.b16 %v236, %v235
      %v264 = vpack.c.b16 %v238, %v237
      %v265 = vpack.c.b16 %v240, %v239
      %v266 = vpack.c.b16 %v242, %v241
      %v267 = vpack.c.b16 %v244, %v243
      %v268 = vpack.c.b16 %v246, %v245
      %v269 = vpack.c.b16 %v248, %v247
      %v270 = vpack.c.b16 %v250, %v249
      %v271 = vpack.c.b16 %v252, %v251
      %v272 = vpack.c.b16 %v254, %v253
      %v273 = vpack.c.b16 %v256, %v255
      %v274 = vpack.c.b16 %v258, %v257
      %291 = vmatprep.subr.bf16.mxu0 0
      %292 = vmatpush1.bf16.msra.mxu0 %v266
      %293 = vmatprep.subr.bf16.mxu0 0
      %294 = vmatpush1.bf16.msra.mxu0 %v265
      %295 = vmatprep.subr.bf16.mxu0 0
      %296 = vmatpush1.bf16.msra.mxu0 %v264
      %297 = vmatprep.subr.bf16.mxu0 0
      %298 = vmatpush1.bf16.msra.mxu0 %v263
      %299 = vmatprep.subr.bf16.mxu0 0
      %300 = vmatpush1.bf16.msra.mxu0 %v262
      %301 = vmatprep.subr.bf16.mxu0 0
      %302 = vmatpush1.bf16.msra.mxu0 %v261
      %303 = vmatprep.subr.bf16.mxu0 0
      %304 = vmatpush1.bf16.msra.mxu0 %v260
      %305 = vmatprep.subr.bf16.mxu0 0
      %306 = vmatpush1.bf16.msra.mxu0 %v259
      %307 = vmatprep.subr.bf16.mxu0 0
      %308 = vmatpush2.bf16.msra.mxu0 %v274
      %309 = vmatprep.subr.bf16.mxu0 0
      %310 = vmatpush2.bf16.msra.mxu0 %v273
      %311 = vmatprep.subr.bf16.mxu0 0
      %312 = vmatpush2.bf16.msra.mxu0 %v272
      %313 = vmatprep.subr.bf16.mxu0 0
      %314 = vmatpush2.bf16.msra.mxu0 %v271
      %315 = vmatprep.subr.bf16.mxu0 0
      %316 = vmatpush2.bf16.msra.mxu0 %v270
      %317 = vmatprep.subr.bf16.mxu0 0
      %318 = vmatpush2.bf16.msra.mxu0 %v269
      %319 = vmatprep.subr.bf16.mxu0 0
      %320 = vmatpush2.bf16.msra.mxu0 %v268
      %321 = vmatprep.subr.bf16.mxu0 0
      %322 = vmatpush2.bf16.msra.mxu0 %v267
      %323 = vmatprep.mubr.bf16.mxu0 %v192
      %324 = vmatmul.mubr.bf16.gmra.mxu0 %v191
      %v325 = vpop.f32.mrf.mxu0
      %v326 = vadd.f32 0.0, %v325
      %v327 = vpop.f32.mrf.mxu0
      %v328 = vpop.f32.mrf.mxu0
      %v329 = vadd.f32 0.0, %v328
      %v330 = vpop.f32.mrf.mxu0
      %331 = vdwg.mxu0
      %332 = vadd.xlane.f32.xlu0 %v326
      %v333 = vpop.xlane.xlu0 %332
      %334 = vadd.xlane.f32.xlu0 %v329
      %v335 = vpop.xlane.xlu0 %334
      %v336 = vrot.slane %v333, 4
      %v337 = vadd.f32 %v333, %v336
      %v338 = vrot.slane %v337, 2
      %v339 = vadd.f32 %v337, %v338
      %v340 = vrot.slane %v339, 1
      %v341 = vadd.f32 %v339, %v340
      %v342 = vrot.slane %v335, 4
      %v343 = vadd.f32 %v335, %v342
      %v344 = vrot.slane %v343, 2
      %v345 = vadd.f32 %v343, %v344
      %v346 = vrot.slane %v345, 1
      %v347 = vadd.f32 %v345, %v346
      %v348 = vmul.f32 %v326, %v326
      %v349 = vmul.f32 %v329, %v329
      %350 = vadd.xlane.f32.xlu0 %v348
      %v351 = vpop.xlane.xlu0 %350
      %352 = vadd.xlane.f32.xlu0 %v349
      %v353 = vpop.xlane.xlu0 %352
      %v354 = vrot.slane %v351, 4
      %v355 = vadd.f32 %v351, %v354
      %v356 = vrot.slane %v355, 2
      %v357 = vadd.f32 %v355, %v356
      %v358 = vrot.slane %v357, 1
      %v359 = vadd.f32 %v357, %v358
      %v360 = vrot.slane %v353, 4
      %v361 = vadd.f32 %v353, %v360
      %v362 = vrot.slane %v361, 2
      %v363 = vadd.f32 %v361, %v362
      %v364 = vrot.slane %v363, 1
      %v365 = vadd.f32 %v363, %v364
      %v366 = vmul.f32 %v341, 0.0078125
      %v367 = vmul.f32 %v347, 0.0078125
      %v368 = vmul.f32 %v359, 0.0078125
      %v369 = vmul.f32 %v365, 0.0078125
      %v370 = vmul.f32 %v366, %v366
      %v371 = vmul.f32 %v367, %v367
      %v372 = vsub.f32 %v368, %v370
      %v373 = vsub.f32 %v369, %v371
      %v374 = vsub.f32 %v326, %v366
      %v375 = vsub.f32 %v329, %v367
      %v376 = vadd.f32 %v372, 1e-05
      %v377 = vadd.f32 %v373, 1e-05
      %v378 = vrsqrt.pop %v376
      %v379 = vrsqrt.pop %v377
      %v380 = vmul.f32 %v374, %v378
      %v381 = vmul.f32 %v375, %v379
      %v382 = vlaneseq
      %v383 = vand.u32 %v382, 127
      %vm384 = vcmp.lt.s32.totalorder %v383, 16
      %v385 = vsel %vm384, %v380, 0.0
      %v386 = vsel %vm384, %v381, 0.0
      %v387 = vpack.c.bf16 %v385, %v385
      %v388 = vpack.c.bf16 %v386, %v386
      %389 = vst [vmem:[%s148] sm:$0xf] %v387
      %390 = vst [vmem:[%s148 + $0x4] sm:$0xf] %v388
      %s391 = smul.u32 2, %s13
      %p392 = scmp.lt.s32.totalorder %s391, 3
      %s393 = scalar_select %p392, %s391, 3
      %s394 = smul.addr %s393, 4
      %s395 = scalar_lea.vmem %s2, %s394
      // Predicated region
      $region29: #{_lambda_.18} parent=27 // pred_check
        %p396 = pneg %p78
      $region30: #{_lambda_.18} parent=27 // pred_check_branch
        %398 = sbr.rel (%p396) target = $region32
      $region31: #{_lambda_.18} parent=27 // pred_region
        %s399 = smul.u32 2, %s13
      $region32: #{_lambda_.18} parent=27 // pred_fallthru
        _
    $region28: #{_lambda_.18} parent=5 // pred_fallthru
      _
    %p400 = scmp.le.s32.totalorder 2, %s8
    // Predicated region
    $region33: #{_lambda_.18} parent=5 // pred_check
      %p401 = pneg %p400
    $region34: #{_lambda_.18} parent=5 // pred_check_branch
      %403 = sbr.rel (%p401) target = $region36
    $region35: #{_lambda_.18} parent=5 // pred_region
      %s404 = ssub.s32 %s8, 2
      // Predicated region
      $region37: #{_lambda_.18} parent=35 // pred_check
        %p405 = pneg %p84
      $region38: #{_lambda_.18} parent=35 // pred_check_branch
        %407 = sbr.rel (%p405) target = $region40
      $region39: #{_lambda_.18} parent=35 // pred_region
        %s408 = smul.u32 2, %s14
        %p409 = scmp.lt.s32.totalorder %s408, 3
        %s410 = scalar_select %p409, %s408, 3
        %s411 = smul.addr %s410, 4
        %s412 = scalar_lea.vmem %s2, %s411
      $region40: #{_lambda_.18} parent=35 // pred_fallthru
        _
    $region36: #{_lambda_.18} parent=5 // pred_fallthru
      _
  $region6: #{_lambda_.18} parent=0 // loop_footer
    %s12 = sadd.s32 1, %s8
  $region7: #{_lambda_.18} parent=0 // loop_footer_branch
    %7 = sbr.rel target = $region3
  $region8: #{_lambda_.18} parent=0 // loop_exit
    _

// kernel: _lambda_.19
$region0: #{_lambda_.19}
  #allocation0 [shape = 'u32[]', space=smem, size = 0x4, offset = 0x4, fixed_abs, tag = 'smem constant byte address 0x4 - core index']
  #allocation1 [shape = 'u32[144,128]{1,0:T(1,128)}', space=vmem, size = 0x12000, scoped, tag = 'internal scratch']
  %s0 = inlined_call_operand.vmem [shape: bf16[4,10,128], index: 0, kind: input, shape index: {}]
  %s1 = inlined_call_operand.vmem [shape: bf16[3,128,128], index: 1, kind: input, shape index: {}]
  %s2 = inlined_call_operand.vmem [shape: bf16[4,8,128], index: 2, kind: input, shape index: {}]
  %s3 = inlined_call_operand.vmem [shape: bf16[4,10,128], index: 3, kind: output, shape index: {}]
  %s4 = sld [smem:[#allocation0]]
  $region45: #{_lambda_.19} parent=0
    _
  %s6 = ssub.s32 1, %s4
  %s7 = scalar_select 0, %s6, %s4
  loop: start=0, step=1, limit=4
  $region2: #{_lambda_.19} parent=0 // loop_pre_header
    _
  $region3: #{_lambda_.19} parent=0 // loop_header
    %s9 = sphi 0, %s13
    %p10 = scmp.ge.s32.totalorder %s9, 4
    %s19 = sphi 0, %s21
    %s22 = sphi 0, %s19
    %s23 = sphi 0, %s22
    %s39 = sphi 0, %s23
    %s43 = sphi 0, %s43
    %s45 = sphi 0, %s43
    %s46 = sphi 0, %s45
    %s60 = sphi 0, %s46
    %s66 = sphi 0, %s68
    %s69 = sphi 0, %s66
    %s70 = sphi 0, %s69
    %s86 = sphi 0, %s70
    %s92 = sphi 0, %s94
    %s95 = sphi 0, %s92
    %s96 = sphi 0, %s95
    %s112 = sphi 0, %s96
  $region4: #{_lambda_.19} parent=0 // loop_header_branch
    %12 = sbr.rel (%p10) target = $region8
  $region5: #{_lambda_.19} parent=0 // loop_body
    %s14 = ssub.s32 %s9, 1
    %s15 = ssub.s32 %s9, 2
    %s16 = sadd.s32 %s9, 1
    %s17 = ssub.s32 %s9, %s16
    %p18 = scmp.eq.s32.totalorder %s17, 0
    %s20 = sadd.s32 %s19, 1
    %s21 = scalar_select %p18, %s19, %s20
    %p24 = pneg %p18
    %p25 = scmp.eq.s32.totalorder %s9, 1
    %p26 = por %p24, %p25
    %p27 = scmp.ne.s32.totalorder %s19, %s22
    %p28 = scmp.eq.s32.totalorder %s9, 0
    %p29 = por %p27, %p28
    %p30 = scmp.ne.s32.totalorder %s19, %s22
    %p31 = scmp.eq.s32.totalorder %s14, 1
    %p32 = por %p30, %p31
    %p33 = scmp.ne.s32.totalorder %s22, %s23
    %p34 = scmp.eq.s32.totalorder %s14, 0
    %p35 = por %p33, %p34
    %p36 = scmp.ne.s32.totalorder %s22, %s23
    %p37 = scmp.eq.s32.totalorder %s15, 1
    %p38 = por %p36, %p37
    %p40 = scmp.ne.s32.totalorder %s23, %s39
    %p41 = scmp.eq.s32.totalorder %s15, 0
    %p42 = por %p40, %p41
    %s44 = sadd.s32 %s43, 1
    %p47 = scmp.eq.s32.totalorder %s9, 1
    %p48 = scmp.ne.s32.totalorder %s43, %s45
    %p49 = scmp.eq.s32.totalorder %s9, 0
    %p50 = por %p48, %p49
    %p51 = scmp.ne.s32.totalorder %s43, %s45
    %p52 = scmp.eq.s32.totalorder %s14, 1
    %p53 = por %p51, %p52
    %p54 = scmp.ne.s32.totalorder %s45, %s46
    %p55 = scmp.eq.s32.totalorder %s14, 0
    %p56 = por %p54, %p55
    %p57 = scmp.ne.s32.totalorder %s45, %s46
    %p58 = scmp.eq.s32.totalorder %s15, 1
    %p59 = por %p57, %p58
    %p61 = scmp.ne.s32.totalorder %s46, %s60
    %p62 = scmp.eq.s32.totalorder %s15, 0
    %p63 = por %p61, %p62
    %s64 = ssub.s32 %s9, %s16
    %p65 = scmp.eq.s32.totalorder %s64, 0
    %s67 = sadd.s32 %s66, 1
    %s68 = scalar_select %p65, %s66, %s67
    %p71 = pneg %p65
    %p72 = scmp.eq.s32.totalorder %s9, 1
    %p73 = por %p71, %p72
    %p74 = scmp.ne.s32.totalorder %s66, %s69
    %p75 = scmp.eq.s32.totalorder %s9, 0
    %p76 = por %p74, %p75
    %p77 = scmp.ne.s32.totalorder %s66, %s69
    %p78 = scmp.eq.s32.totalorder %s14, 1
    %p79 = por %p77, %p78
    %p80 = scmp.ne.s32.totalorder %s69, %s70
    %p81 = scmp.eq.s32.totalorder %s14, 0
    %p82 = por %p80, %p81
    %p83 = scmp.ne.s32.totalorder %s69, %s70
    %p84 = scmp.eq.s32.totalorder %s15, 1
    %p85 = por %p83, %p84
    %p87 = scmp.ne.s32.totalorder %s70, %s86
    %p88 = scmp.eq.s32.totalorder %s15, 0
    %p89 = por %p87, %p88
    %s90 = ssub.s32 %s9, %s16
    %p91 = scmp.eq.s32.totalorder %s90, 0
    %s93 = sadd.s32 %s92, 1
    %s94 = scalar_select %p91, %s92, %s93
    %p97 = pneg %p91
    %p98 = scmp.eq.s32.totalorder %s9, 1
    %p99 = por %p97, %p98
    %p100 = scmp.ne.s32.totalorder %s92, %s95
    %p101 = scmp.eq.s32.totalorder %s9, 0
    %p102 = por %p100, %p101
    %p103 = scmp.ne.s32.totalorder %s92, %s95
    %p104 = scmp.eq.s32.totalorder %s14, 1
    %p105 = por %p103, %p104
    %p106 = scmp.ne.s32.totalorder %s95, %s96
    %p107 = scmp.eq.s32.totalorder %s14, 0
    %p108 = por %p106, %p107
    %p109 = scmp.ne.s32.totalorder %s95, %s96
    %p110 = scmp.eq.s32.totalorder %s15, 1
    %p111 = por %p109, %p110
    %p113 = scmp.ne.s32.totalorder %s96, %s112
    %p114 = scmp.eq.s32.totalorder %s15, 0
    %p115 = por %p113, %p114
    %p116 = scmp.le.s32.totalorder 1, %s9
    %p117 = scmp.lt.s32.totalorder %s9, 3
    %p118 = pnand %p116, %p117
    %p119 = pneg %p118
    // Predicated region
    $region9: #{_lambda_.19} parent=5 // pred_check
      _
    $region10: #{_lambda_.19} parent=5 // pred_check_branch
      %121 = sbr.rel (%p118) target = $region12
    $region11: #{_lambda_.19} parent=5 // pred_region
      %s122 = ssub.s32 %s9, 1
      // Predicated region
      $region13: #{_lambda_.19} parent=11 // pred_check
        %p123 = pneg %p56
      $region14: #{_lambda_.19} parent=11 // pred_check_branch
        %125 = sbr.rel (%p123) target = $region16
      $region15: #{_lambda_.19} parent=11 // pred_region
        _
      $region16: #{_lambda_.19} parent=11 // pred_fallthru
        _
    $region12: #{_lambda_.19} parent=5 // pred_fallthru
      _
    %p126 = scmp.lt.s32.totalorder %s9, 2
    // Predicated region
    $region17: #{_lambda_.19} parent=5 // pred_check
      %p127 = pneg %p126
    $region18: #{_lambda_.19} parent=5 // pred_check_branch
      %129 = sbr.rel (%p127) target = $region20
    $region19: #{_lambda_.19} parent=5 // pred_region
      // Predicated region
      $region21: #{_lambda_.19} parent=19 // pred_check
        %p130 = pneg %p29
      $region22: #{_lambda_.19} parent=19 // pred_check_branch
        %132 = sbr.rel (%p130) target = $region24
      $region23: #{_lambda_.19} parent=19 // pred_region
        %s133 = smul.u32 2, %s9
        %p134 = scmp.lt.s32.totalorder %s133, 3
        %s135 = scalar_select %p134, %s133, 3
        %s136 = smul.addr %s135, 2
        %s137 = smul.addr %s136, 4
        %s138 = scalar_lea.vmem %s0, %s137
        %s139 = smul.u32 2, %s9
      $region24: #{_lambda_.19} parent=19 // pred_fallthru
        _
      // Predicated region
      $region25: #{_lambda_.19} parent=19 // pred_check
        %p140 = pneg %p76
      $region26: #{_lambda_.19} parent=19 // pred_check_branch
        %142 = sbr.rel (%p140) target = $region28
      $region27: #{_lambda_.19} parent=19 // pred_region
        %s143 = smul.u32 2, %s9
        %p144 = scmp.lt.s32.totalorder %s143, 3
        %s145 = scalar_select %p144, %s143, 3
        %s146 = smul.addr %s145, 4
        %s147 = scalar_lea.vmem %s2, %s146
        %s148 = smul.u32 2, %s9
      $region28: #{_lambda_.19} parent=19 // pred_fallthru
        _
    $region20: #{_lambda_.19} parent=5 // pred_fallthru
      _
    %p149 = scmp.le.s32.totalorder 1, %s9
    %p150 = scmp.lt.s32.totalorder %s9, 3
    %p151 = pnand %p149, %p150
    %p152 = pneg %p151
    // Predicated region
    $region29: #{_lambda_.19} parent=5 // pred_check
      _
    $region30: #{_lambda_.19} parent=5 // pred_check_branch
      %154 = sbr.rel (%p151) target = $region32
    $region31: #{_lambda_.19} parent=5 // pred_region
      %s155 = ssub.s32 %s9, 1
      %s156 = smul.u32 2, %s14
      %p157 = scmp.lt.s32.totalorder %s156, 3
      %s158 = scalar_select %p157, %s156, 3
      %s159 = smul.addr %s158, 2
      %s160 = smul.addr %s159, 4
      %s161 = scalar_lea.vmem %s0, %s160
      %p162 = pneg %p35
      %p163 = pneg %p32
      %p164 = pneg %p56
      %p165 = pneg %p53
      %s166 = smul.u32 2, %s14
      %p167 = scmp.lt.s32.totalorder %s166, 3
      %s168 = scalar_select %p167, %s166, 3
      %s169 = smul.addr %s168, 4
      %s170 = scalar_lea.vmem %s2, %s169
      %p171 = pneg %p82
      %p172 = pneg %p79
      %p173 = pneg %p108
      %p174 = pneg %p105
      %s175 = smul.u32 2, %s14
      %p176 = scmp.lt.s32.totalorder %s175, 3
      %s177 = scalar_select %p176, %s175, 3
      %s178 = smul.addr %s177, 2
      %s179 = smul.addr %s178, 4
      %s180 = scalar_lea.vmem %s3, %s179
      %s181 = smul.u32 2, %s14
      %p182 = scmp.lt.s32.totalorder %s181, 3
      %s183 = scalar_select %p182, %s181, 3
      %s184 = smul.addr %s183, 2
      %s185 = smul.addr %s184, 4
      %s186 = scalar_lea.vmem %s0, %s185
      %s187 = smul.u32 2, %s14
      %s188 = smul.u32 2, %s14
      %p189 = scmp.lt.s32.totalorder %s188, 3
      %s190 = scalar_select %p189, %s188, 3
      %s191 = smul.addr %s190, 4
      %s192 = scalar_lea.vmem %s2, %s191
      %s193 = smul.u32 2, %s14
      %s194 = smul.u32 2, %s14
      %p195 = scmp.lt.s32.totalorder %s194, 3
      %s196 = scalar_select %p195, %s194, 3
      %s197 = smul.addr %s196, 2
      %s198 = smul.addr %s197, 4
      %s199 = scalar_lea.vmem %s3, %s198
      %s200 = smul.u32 2, %s14
      %v202 = vld [vmem:[%s186] sm:$0xf]
      %v203 = vld [vmem:[%s186 + $0x8] sm:$0xf]
      %v204 = vld [vmem:[%s1] sm:$0xf]
      %v205 = vld [vmem:[%s1 + $0x4] sm:$0xf]
      %v206 = vld [vmem:[%s1 + $0x8] sm:$0xf]
      %v207 = vld [vmem:[%s1 + $0xc] sm:$0xf]
      %v208 = vld [vmem:[%s1 + $0x10] sm:$0xf]
      %v209 = vld [vmem:[%s1 + $0x14] sm:$0xf]
      %v210 = vld [vmem:[%s1 + $0x18] sm:$0xf]
      %v211 = vld [vmem:[%s1 + $0x1c] sm:$0xf]
      %v212 = vld [vmem:[%s1 + $0x20] sm:$0xf]
      %v213 = vld [vmem:[%s1 + $0x24] sm:$0xf]
      %v214 = vld [vmem:[%s1 + $0x28] sm:$0xf]
      %v215 = vld [vmem:[%s1 + $0x2c] sm:$0xf]
      %v216 = vld [vmem:[%s1 + $0x30] sm:$0xf]
      %v217 = vld [vmem:[%s1 + $0x34] sm:$0xf]
      %v218 = vld [vmem:[%s1 + $0x38] sm:$0xf]
      %v219 = vld [vmem:[%s1 + $0x3c] sm:$0xf]
      %v220 = vld [vmem:[%s186 + $0x4] sm:$0x1]
      %v221 = vld [vmem:[%s186 + $0xc] sm:$0x1]
      %vm222 = vsmask.f32 3328
      %vm223 = vsmask.f32 7440
      %vm224 = vmor %vm222, %vm223
      %v226 = vshrl.u32 %v202, 16
      %v228 = vrot.slane %v226, 4
      %v229 = vshll.u32 %v202, 16
      %v231 = vrot.slane %v229, 5
      %v232 = vor.u32 %v228, %v231
      %v233 = vrot.slane %v232, 4
      %v235 = vshll.u32 %v220, 16
      %v237 = vrot.slane %v235, 5
      %v238 = vsel %vm224, %v233, %v237
      %v240 = vshrl.u32 %v203, 16
      %v242 = vrot.slane %v240, 4
      %v243 = vshll.u32 %v203, 16
      %v245 = vrot.slane %v243, 5
      %v246 = vor.u32 %v242, %v245
      %v247 = vrot.slane %v246, 4
      %v249 = vshll.u32 %v221, 16
      %v251 = vrot.slane %v249, 5
      %v252 = vsel %vm224, %v247, %v251
      %s253 = scalar_lea.vmem %s1, 64
      %v254 = vld [vmem:[%s253] sm:$0xf]
      %v255 = vld [vmem:[%s253 + $0x4] sm:$0xf]
      %v256 = vld [vmem:[%s253 + $0x8] sm:$0xf]
      %v257 = vld [vmem:[%s253 + $0xc] sm:$0xf]
      %v258 = vld [vmem:[%s253 + $0x10] sm:$0xf]
      %v259 = vld [vmem:[%s253 + $0x14] sm:$0xf]
      %v260 = vld [vmem:[%s253 + $0x18] sm:$0xf]
      %v261 = vld [vmem:[%s253 + $0x1c] sm:$0xf]
      %v262 = vld [vmem:[%s253 + $0x20] sm:$0xf]
      %v263 = vld [vmem:[%s253 + $0x24] sm:$0xf]
      %v264 = vld [vmem:[%s253 + $0x28] sm:$0xf]
      %v265 = vld [vmem:[%s253 + $0x2c] sm:$0xf]
      %v266 = vld [vmem:[%s253 + $0x30] sm:$0xf]
      %v267 = vld [vmem:[%s253 + $0x34] sm:$0xf]
      %v268 = vld [vmem:[%s253 + $0x38] sm:$0xf]
      %v269 = vld [vmem:[%s253 + $0x3c] sm:$0xf]
      %v270 = vunpack.c.l.b16 %v238
      %v271 = vunpack.c.l.b16 %v252
      %v272 = vpack.c.b16 %v271, %v270
      %v290 = vunpack.c.l.b16 %v254
      %v291 = vunpack.c.l.b16 %v255
      %v292 = vunpack.c.l.b16 %v256
      %v293 = vunpack.c.l.b16 %v257
      %v294 = vunpack.c.l.b16 %v258
      %v295 = vunpack.c.l.b16 %v259
      %v296 = vunpack.c.l.b16 %v260
      %v297 = vunpack.c.l.b16 %v261
      %v298 = vunpack.c.l.b16 %v262
      %v299 = vunpack.c.l.b16 %v263
      %v300 = vunpack.c.l.b16 %v264
      %v301 = vunpack.c.l.b16 %v265
      %v302 = vunpack.c.l.b16 %v266
      %v303 = vunpack.c.l.b16 %v267
      %v304 = vunpack.c.l.b16 %v268
      %v305 = vunpack.c.l.b16 %v269
      %v306 = vpack.c.b16 %v291, %v290
      %v307 = vpack.c.b16 %v293, %v292
      %v308 = vpack.c.b16 %v295, %v294
      %v309 = vpack.c.b16 %v297, %v296
      %v310 = vpack.c.b16 %v299, %v298
      %v311 = vpack.c.b16 %v301, %v300
      %v312 = vpack.c.b16 %v303, %v302
      %v313 = vpack.c.b16 %v305, %v304
      %322 = vmatprep.subr.bf16.mxu0 0
      %323 = vmatpush1.bf16.msra.mxu0 %v313
      %324 = vmatprep.subr.bf16.mxu0 0
      %325 = vmatpush1.bf16.msra.mxu0 %v312
      %326 = vmatprep.subr.bf16.mxu0 0
      %327 = vmatpush1.bf16.msra.mxu0 %v311
      %328 = vmatprep.subr.bf16.mxu0 0
      %329 = vmatpush1.bf16.msra.mxu0 %v310
      %330 = vmatprep.subr.bf16.mxu0 0
      %331 = vmatpush1.bf16.msra.mxu0 %v309
      %332 = vmatprep.subr.bf16.mxu0 0
      %333 = vmatpush1.bf16.msra.mxu0 %v308
      %334 = vmatprep.subr.bf16.mxu0 0
      %335 = vmatpush1.bf16.msra.mxu0 %v307
      %336 = vmatprep.subr.bf16.mxu0 0
      %337 = vmatpush1.bf16.msra.mxu0 %v306
      %338 = vmatprep.subr.bf16.mxu0 0
      %339 = vmatpush2.bf16.msra.mxu0 0
      %340 = vmatprep.subr.bf16.mxu0 0
      %341 = vmatpush2.bf16.msra.mxu0 0
      %342 = vmatprep.subr.bf16.mxu0 0
      %343 = vmatpush2.bf16.msra.mxu0 0
      %344 = vmatprep.subr.bf16.mxu0 0
      %345 = vmatpush2.bf16.msra.mxu0 0
      %346 = vmatprep.subr.bf16.mxu0 0
      %347 = vmatpush2.bf16.msra.mxu0 0
      %348 = vmatprep.subr.bf16.mxu0 0
      %349 = vmatpush2.bf16.msra.mxu0 0
      %350 = vmatprep.subr.bf16.mxu0 0
      %351 = vmatpush2.bf16.msra.mxu0 0
      %352 = vmatprep.subr.bf16.mxu0 0
      %353 = vmatpush2.bf16.msra.mxu0 0
      %354 = vmatprep.mubr.bf16.mxu0 0
      %355 = vmatmul.mubr.bf16.gmra.mxu0 %v272
      %v356 = vpop.f32.mrf.mxu0
      %v357 = vadd.f32 0.0, %v356
      %v358 = vpop.f32.mrf.mxu0
      %v359 = vpop.f32.mrf.mxu0
      %v360 = vadd.f32 0.0, %v359
      %v361 = vpop.f32.mrf.mxu0
      %362 = vdwg.mxu0
      %v365 = vunpack.c.l.b16 %v202
      %v366 = vunpack.c.l.b16 %v203
      %v367 = vpack.c.b16 %v366, %v365
      %v385 = vunpack.c.l.b16 %v204
      %v386 = vunpack.c.l.b16 %v205
      %v387 = vunpack.c.l.b16 %v206
      %v388 = vunpack.c.l.b16 %v207
      %v389 = vunpack.c.l.b16 %v208
      %v390 = vunpack.c.l.b16 %v209
      %v391 = vunpack.c.l.b16 %v210
      %v392 = vunpack.c.l.b16 %v211
      %v393 = vunpack.c.l.b16 %v212
      %v394 = vunpack.c.l.b16 %v213
      %v395 = vunpack.c.l.b16 %v214
      %v396 = vunpack.c.l.b16 %v215
      %v397 = vunpack.c.l.b16 %v216
      %v398 = vunpack.c.l.b16 %v217
      %v399 = vunpack.c.l.b16 %v218
      %v400 = vunpack.c.l.b16 %v219
      %v401 = vpack.c.b16 %v386, %v385
      %v402 = vpack.c.b16 %v388, %v387
      %v403 = vpack.c.b16 %v390, %v389
      %v404 = vpack.c.b16 %v392, %v391
      %v405 = vpack.c.b16 %v394, %v393
      %v406 = vpack.c.b16 %v396, %v395
      %v407 = vpack.c.b16 %v398, %v397
      %v408 = vpack.c.b16 %v400, %v399
      %417 = vmatprep.subr.bf16.mxu0 0
      %418 = vmatpush1.bf16.msra.mxu0 %v408
      %419 = vmatprep.subr.bf16.mxu0 0
      %420 = vmatpush1.bf16.msra.mxu0 %v407
      %421 = vmatprep.subr.bf16.mxu0 0
      %422 = vmatpush1.bf16.msra.mxu0 %v406
      %423 = vmatprep.subr.bf16.mxu0 0
      %424 = vmatpush1.bf16.msra.mxu0 %v405
      %425 = vmatprep.subr.bf16.mxu0 0
      %426 = vmatpush1.bf16.msra.mxu0 %v404
      %427 = vmatprep.subr.bf16.mxu0 0
      %428 = vmatpush1.bf16.msra.mxu0 %v403
      %429 = vmatprep.subr.bf16.mxu0 0
      %430 = vmatpush1.bf16.msra.mxu0 %v402
      %431 = vmatprep.subr.bf16.mxu0 0
      %432 = vmatpush1.bf16.msra.mxu0 %v401
      %433 = vmatprep.subr.bf16.mxu0 0
      %434 = vmatpush2.bf16.msra.mxu0 0
      %435 = vmatprep.subr.bf16.mxu0 0
      %436 = vmatpush2.bf16.msra.mxu0 0
      %437 = vmatprep.subr.bf16.mxu0 0
      %438 = vmatpush2.bf16.msra.mxu0 0
      %439 = vmatprep.subr.bf16.mxu0 0
      %440 = vmatpush2.bf16.msra.mxu0 0
      %441 = vmatprep.subr.bf16.mxu0 0
      %442 = vmatpush2.bf16.msra.mxu0 0
      %443 = vmatprep.subr.bf16.mxu0 0
      %444 = vmatpush2.bf16.msra.mxu0 0
      %445 = vmatprep.subr.bf16.mxu0 0
      %446 = vmatpush2.bf16.msra.mxu0 0
      %447 = vmatprep.subr.bf16.mxu0 0
      %448 = vmatpush2.bf16.msra.mxu0 0
      %449 = vmatprep.mubr.bf16.mxu0 0
      %450 = vmatmul.mubr.bf16.gmra.mxu0 %v367
      %v451 = vpop.f32.mrf.mxu0
      %v452 = vadd.f32 %v357, %v451
      %v453 = vpop.f32.mrf.mxu0
      %v454 = vpop.f32.mrf.mxu0
      %v455 = vadd.f32 %v360, %v454
      %v456 = vpop.f32.mrf.mxu0
      %457 = vdwg.mxu0
      %v458 = vld [vmem:[%s186] sm:$0xe]
      %v459 = vld [vmem:[%s186 + $0x8] sm:$0xe]
      %vm464 = vcmask 1042432
      %vm465 = vcmask 1046532
      %vm466 = vmor %vm464, %vm465
      %v467 = vrot.slane %v458, 5
      %v468 = vrot.slane %v467, 4
      %v469 = vrot.slane %v220, 5
      %v470 = vsel %vm466, %v468, %v469
      %v471 = vrot.slane %v459, 5
      %v472 = vrot.slane %v471, 4
      %v473 = vrot.slane %v221, 5
      %v474 = vsel %vm466, %v472, %v473
      %s475 = scalar_lea.vmem %s1, 128
      %v476 = vld [vmem:[%s475] sm:$0xf]
      %v477 = vld [vmem:[%s475 + $0x4] sm:$0xf]
      %v478 = vld [vmem:[%s475 + $0x8] sm:$0xf]
      %v479 = vld [vmem:[%s475 + $0xc] sm:$0xf]
      %v480 = vld [vmem:[%s475 + $0x10] sm:$0xf]
      %v481 = vld [vmem:[%s475 + $0x14] sm:$0xf]
      %v482 = vld [vmem:[%s475 + $0x18] sm:$0xf]
      %v483 = vld [vmem:[%s475 + $0x1c] sm:$0xf]
      %v484 = vld [vmem:[%s475 + $0x20] sm:$0xf]
      %v485 = vld [vmem:[%s475 + $0x24] sm:$0xf]
      %v486 = vld [vmem:[%s475 + $0x28] sm:$0xf]
      %v487 = vld [vmem:[%s475 + $0x2c] sm:$0xf]
      %v488 = vld [vmem:[%s475 + $0x30] sm:$0xf]
      %v489 = vld [vmem:[%s475 + $0x34] sm:$0xf]
      %v490 = vld [vmem:[%s475 + $0x38] sm:$0xf]
      %v491 = vld [vmem:[%s475 + $0x3c] sm:$0xf]
      %v492 = vunpack.c.l.b16 %v470
      %v493 = vunpack.c.l.b16 %v474
      %v494 = vpack.c.b16 %v493, %v492
      %v512 = vunpack.c.l.b16 %v476
      %v513 = vunpack.c.l.b16 %v477
      %v514 = vunpack.c.l.b16 %v478
      %v515 = vunpack.c.l.b16 %v479
      %v516 = vunpack.c.l.b16 %v480
      %v517 = vunpack.c.l.b16 %v481
      %v518 = vunpack.c.l.b16 %v482
      %v519 = vunpack.c.l.b16 %v483
      %v520 = vunpack.c.l.b16 %v484
      %v521 = vunpack.c.l.b16 %v485
      %v522 = vunpack.c.l.b16 %v486
      %v523 = vunpack.c.l.b16 %v487
      %v524 = vunpack.c.l.b16 %v488
      %v525 = vunpack.c.l.b16 %v489
      %v526 = vunpack.c.l.b16 %v490
      %v527 = vunpack.c.l.b16 %v491
      %v528 = vpack.c.b16 %v513, %v512
      %v529 = vpack.c.b16 %v515, %v514
      %v530 = vpack.c.b16 %v517, %v516
      %v531 = vpack.c.b16 %v519, %v518
      %v532 = vpack.c.b16 %v521, %v520
      %v533 = vpack.c.b16 %v523, %v522
      %v534 = vpack.c.b16 %v525, %v524
      %v535 = vpack.c.b16 %v527, %v526
      %544 = vmatprep.subr.bf16.mxu0 0
      %545 = vmatpush1.bf16.msra.mxu0 %v535
      %546 = vmatprep.subr.bf16.mxu0 0
      %547 = vmatpush1.bf16.msra.mxu0 %v534
      %548 = vmatprep.subr.bf16.mxu0 0
      %549 = vmatpush1.bf16.msra.mxu0 %v533
      %550 = vmatprep.subr.bf16.mxu0 0
      %551 = vmatpush1.bf16.msra.mxu0 %v532
      %552 = vmatprep.subr.bf16.mxu0 0
      %553 = vmatpush1.bf16.msra.mxu0 %v531
      %554 = vmatprep.subr.bf16.mxu0 0
      %555 = vmatpush1.bf16.msra.mxu0 %v530
      %556 = vmatprep.subr.bf16.mxu0 0
      %557 = vmatpush1.bf16.msra.mxu0 %v529
      %558 = vmatprep.subr.bf16.mxu0 0
      %559 = vmatpush1.bf16.msra.mxu0 %v528
      %560 = vmatprep.subr.bf16.mxu0 0
      %561 = vmatpush2.bf16.msra.mxu0 0
      %562 = vmatprep.subr.bf16.mxu0 0
      %563 = vmatpush2.bf16.msra.mxu0 0
      %564 = vmatprep.subr.bf16.mxu0 0
      %565 = vmatpush2.bf16.msra.mxu0 0
      %566 = vmatprep.subr.bf16.mxu0 0
      %567 = vmatpush2.bf16.msra.mxu0 0
      %568 = vmatprep.subr.bf16.mxu0 0
      %569 = vmatpush2.bf16.msra.mxu0 0
      %570 = vmatprep.subr.bf16.mxu0 0
      %571 = vmatpush2.bf16.msra.mxu0 0
      %572 = vmatprep.subr.bf16.mxu0 0
      %573 = vmatpush2.bf16.msra.mxu0 0
      %574 = vmatprep.subr.bf16.mxu0 0
      %575 = vmatpush2.bf16.msra.mxu0 0
      %576 = vmatprep.mubr.bf16.mxu0 0
      %577 = vmatmul.mubr.bf16.gmra.mxu0 %v494
      %v578 = vpop.f32.mrf.mxu0
      %v579 = vadd.f32 0.0, %v578
      %v580 = vpop.f32.mrf.mxu0
      %v581 = vpop.f32.mrf.mxu0
      %v582 = vadd.f32 0.0, %v581
      %v583 = vpop.f32.mrf.mxu0
      %584 = vdwg.mxu0
      %v585 = vadd.f32 %v452, %v579
      %v586 = vadd.f32 %v455, %v582
      %587 = vadd.xlane.f32.xlu0 %v585
      %v588 = vpop.xlane.xlu0 %587
      %589 = vadd.xlane.f32.xlu0 %v586
      %v590 = vpop.xlane.xlu0 %589
      %v591 = vrot.slane %v588, 4
      %v592 = vadd.f32 %v588, %v591
      %v593 = vrot.slane %v592, 2
      %v594 = vadd.f32 %v592, %v593
      %v595 = vrot.slane %v594, 1
      %v596 = vadd.f32 %v594, %v595
      %v597 = vrot.slane %v590, 4
      %v598 = vadd.f32 %v590, %v597
      %v599 = vrot.slane %v598, 2
      %v600 = vadd.f32 %v598, %v599
      %v601 = vrot.slane %v600, 1
      %v602 = vadd.f32 %v600, %v601
      %v603 = vmul.f32 %v585, %v585
      %v604 = vmul.f32 %v586, %v586
      %605 = vadd.xlane.f32.xlu0 %v603
      %v606 = vpop.xlane.xlu0 %605
      %607 = vadd.xlane.f32.xlu0 %v604
      %v608 = vpop.xlane.xlu0 %607
      %v609 = vrot.slane %v606, 4
      %v610 = vadd.f32 %v606, %v609
      %v611 = vrot.slane %v610, 2
      %v612 = vadd.f32 %v610, %v611
      %v613 = vrot.slane %v612, 1
      %v614 = vadd.f32 %v612, %v613
      %v615 = vrot.slane %v608, 4
      %v616 = vadd.f32 %v608, %v615
      %v617 = vrot.slane %v616, 2
      %v618 = vadd.f32 %v616, %v617
      %v619 = vrot.slane %v618, 1
      %v620 = vadd.f32 %v618, %v619
      %v621 = vmul.f32 %v596, 0.0078125
      %v622 = vmul.f32 %v602, 0.0078125
      %v623 = vmul.f32 %v614, 0.0078125
      %v624 = vmul.f32 %v620, 0.0078125
      %v625 = vmul.f32 %v621, %v621
      %v626 = vmul.f32 %v622, %v622
      %v627 = vsub.f32 %v623, %v625
      %v628 = vsub.f32 %v624, %v626
      %v629 = vsub.f32 %v585, %v621
      %v630 = vsub.f32 %v586, %v622
      %v631 = vadd.f32 %v627, 1e-05
      %v632 = vadd.f32 %v628, 1e-05
      %v633 = vrsqrt.pop %v631
      %v634 = vrsqrt.pop %v632
      %v635 = vmul.f32 %v629, %v633
      %v636 = vmul.f32 %v630, %v634
      %v637 = vlaneseq
      %v638 = vand.u32 %v637, 127
      %vm639 = vcmp.lt.s32.totalorder %v638, 16
      %v640 = vsel %vm639, %v635, 0.0
      %v641 = vsel %vm639, %v636, 0.0
      %v642 = vld [vmem:[%s192] sm:$0xf]
      %v643 = vld [vmem:[%s192 + $0x4] sm:$0xf]
      %v644 = vunpack.c.l.bf16 %v642
      %v645 = vunpack.c.l.bf16 %v643
      %v646 = vadd.f32 %v640, %v644
      %v647 = vadd.f32 %v641, %v645
      %v648 = vmax.f32 %v646, 0.0
      %v649 = vmax.f32 %v647, 0.0
      %vm650 = vcmask 1040384
      %vm651 = vsmask.f32 256
      %vm652 = vmand %vm650, %vm651
      %v653 = vld [vmem:[%s199] sm:$0x1]
      %v654 = vsel %vm652, 0, %v653
      %655 = vst [vmem:[%s199] sm:$0x1] %v654
      %v656 = vld [vmem:[%s199 + $0x8] sm:$0x1]
      %v657 = vsel %vm652, 0, %v656
      %658 = vst [vmem:[%s199 + $0x8] sm:$0x1] %v657
      %vm659 = vsmask.f32 7938
      %vm660 = vmand %vm650, %vm659
      %v661 = vld [vmem:[%s199 + $0x4] sm:$0x1]
      %v662 = vsel %vm660, 0, %v661
      %663 = vst [vmem:[%s199 + $0x4] sm:$0x1] %v662
      %v664 = vld [vmem:[%s199 + $0xc] sm:$0x1]
      %v665 = vsel %vm660, 0, %v664
      %666 = vst [vmem:[%s199 + $0xc] sm:$0x1] %v665
      %v667 = vpack.c.bf16 %v648, %v648
      %v668 = vpack.c.bf16 %v649, %v649
      %v671 = vunpack.c.l.b16 %v667
      %v672 = vunpack.c.l.b16 %v668
      %v673 = vpack.c.b16 %v671, %v671
      %v674 = vpack.c.b16 %v672, %v672
      %v676 = vshrl.u32 %v673, 16
      %v678 = vrot.slane %v676, 7
      %v679 = vshll.u32 %v673, 16
      %v681 = vor.u32 %v678, %v679
      %v682 = vrot.slane %v678, 4
      %v684 = vshrl.u32 %v674, 16
      %v686 = vrot.slane %v684, 7
      %v687 = vshll.u32 %v674, 16
      %v689 = vor.u32 %v686, %v687
      %v690 = vrot.slane %v686, 4
      %vm695 = vcmask 1043456
      %vm696 = vmand %vm695, %vm659
      %v697 = vld [vmem:[%s199] sm:$0xf]
      %v698 = vsel %vm696, %v681, %v697
      %699 = vst [vmem:[%s199] sm:$0xf] %v698
      %v700 = vld [vmem:[%s199 + $0x4] sm:$0x1]
      %v701 = vsel %vm652, %v682, %v700
      %702 = vst [vmem:[%s199 + $0x4] sm:$0x1] %v701
      %v703 = vld [vmem:[%s199 + $0x8] sm:$0xf]
      %v704 = vsel %vm696, %v689, %v703
      %705 = vst [vmem:[%s199 + $0x8] sm:$0xf] %v704
      %v706 = vld [vmem:[%s199 + $0xc] sm:$0x1]
      %v707 = vsel %vm652, %v690, %v706
      %708 = vst [vmem:[%s199 + $0xc] sm:$0x1] %v707
      %s709 = smul.u32 2, %s14
      %p710 = scmp.lt.s32.totalorder %s709, 3
      %s711 = scalar_select %p710, %s709, 3
      %s712 = smul.addr %s711, 2
      %s713 = smul.addr %s712, 4
      %s714 = scalar_lea.vmem %s3, %s713
      // Predicated region
      $region33: #{_lambda_.19} parent=31 // pred_check
        %p715 = pneg %p105
      $region34: #{_lambda_.19} parent=31 // pred_check_branch
        %717 = sbr.rel (%p715) target = $region36
      $region35: #{_lambda_.19} parent=31 // pred_region
        %s718 = smul.u32 2, %s14
      $region36: #{_lambda_.19} parent=31 // pred_fallthru
        _
    $region32: #{_lambda_.19} parent=5 // pred_fallthru
      _
    %p719 = scmp.le.s32.totalorder 2, %s9
    // Predicated region
    $region37: #{_lambda_.19} parent=5 // pred_check
      %p720 = pneg %p719
    $region38: #{_lambda_.19} parent=5 // pred_check_branch
      %722 = sbr.rel (%p720) target = $region40
    $region39: #{_lambda_.19} parent=5 // pred_region
      %s723 = ssub.s32 %s9, 2
      // Predicated region
      $region41: #{_lambda_.19} parent=39 // pred_check
        %p724 = pneg %p111
      $region42: #{_lambda_.19} parent=39 // pred_check_branch
        %726 = sbr.rel (%p724) target = $region44
      $region43: #{_lambda_.19} parent=39 // pred_region
        %s727 = smul.u32 2, %s15
        %p728 = scmp.lt.s32.totalorder %s727, 3
        %s729 = scalar_select %p728, %s727, 3
        %s730 = smul.addr %s729, 2
        %s731 = smul.addr %s730, 4
        %s732 = scalar_lea.vmem %s3, %s731
      $region44: #{_lambda_.19} parent=39 // pred_fallthru
        _
    $region40: #{_lambda_.19} parent=5 // pred_fallthru
      _
  $region6: #{_lambda_.19} parent=0 // loop_footer
    %s13 = sadd.s32 1, %s9
  $region7: #{_lambda_.19} parent=0 // loop_footer_branch
    %8 = sbr.rel target = $region3
  $region8: #{_lambda_.19} parent=0 // loop_exit
    _

// kernel: _lambda_.21
$region0: #{_lambda_.21}
  #allocation0 [shape = 'u32[]', space=smem, size = 0x4, offset = 0x4, fixed_abs, tag = 'smem constant byte address 0x4 - core index']
  #allocation1 [shape = 'u32[144,128]{1,0:T(1,128)}', space=vmem, size = 0x12000, scoped, tag = 'internal scratch']
  %s0 = inlined_call_operand.vmem [shape: bf16[4,5,256], index: 0, kind: input, shape index: {}]
  %s1 = inlined_call_operand.vmem [shape: bf16[1,256,128], index: 1, kind: input, shape index: {}]
  %s2 = inlined_call_operand.vmem [shape: bf16[4,4,128], index: 2, kind: output, shape index: {}]
  %s3 = sld [smem:[#allocation0]]
  $region41: #{_lambda_.21} parent=0
    _
  %s5 = ssub.s32 1, %s3
  %s6 = scalar_select 0, %s5, %s3
  loop: start=0, step=1, limit=4
  $region2: #{_lambda_.21} parent=0 // loop_pre_header
    _
  $region3: #{_lambda_.21} parent=0 // loop_header
    %s8 = sphi 0, %s12
    %p9 = scmp.ge.s32.totalorder %s8, 4
    %s18 = sphi 0, %s20
    %s21 = sphi 0, %s18
    %s22 = sphi 0, %s21
    %s38 = sphi 0, %s22
    %s42 = sphi 0, %s42
    %s44 = sphi 0, %s42
    %s45 = sphi 0, %s44
    %s59 = sphi 0, %s45
    %s65 = sphi 0, %s67
    %s68 = sphi 0, %s65
    %s69 = sphi 0, %s68
    %s85 = sphi 0, %s69
  $region4: #{_lambda_.21} parent=0 // loop_header_branch
    %11 = sbr.rel (%p9) target = $region8
  $region5: #{_lambda_.21} parent=0 // loop_body
    %s13 = ssub.s32 %s8, 1
    %s14 = ssub.s32 %s8, 2
    %s15 = sadd.s32 %s8, 1
    %s16 = ssub.s32 %s8, %s15
    %p17 = scmp.eq.s32.totalorder %s16, 0
    %s19 = sadd.s32 %s18, 1
    %s20 = scalar_select %p17, %s18, %s19
    %p23 = pneg %p17
    %p24 = scmp.eq.s32.totalorder %s8, 1
    %p25 = por %p23, %p24
    %p26 = scmp.ne.s32.totalorder %s18, %s21
    %p27 = scmp.eq.s32.totalorder %s8, 0
    %p28 = por %p26, %p27
    %p29 = scmp.ne.s32.totalorder %s18, %s21
    %p30 = scmp.eq.s32.totalorder %s13, 1
    %p31 = por %p29, %p30
    %p32 = scmp.ne.s32.totalorder %s21, %s22
    %p33 = scmp.eq.s32.totalorder %s13, 0
    %p34 = por %p32, %p33
    %p35 = scmp.ne.s32.totalorder %s21, %s22
    %p36 = scmp.eq.s32.totalorder %s14, 1
    %p37 = por %p35, %p36
    %p39 = scmp.ne.s32.totalorder %s22, %s38
    %p40 = scmp.eq.s32.totalorder %s14, 0
    %p41 = por %p39, %p40
    %s43 = sadd.s32 %s42, 1
    %p46 = scmp.eq.s32.totalorder %s8, 1
    %p47 = scmp.ne.s32.totalorder %s42, %s44
    %p48 = scmp.eq.s32.totalorder %s8, 0
    %p49 = por %p47, %p48
    %p50 = scmp.ne.s32.totalorder %s42, %s44
    %p51 = scmp.eq.s32.totalorder %s13, 1
    %p52 = por %p50, %p51
    %p53 = scmp.ne.s32.totalorder %s44, %s45
    %p54 = scmp.eq.s32.totalorder %s13, 0
    %p55 = por %p53, %p54
    %p56 = scmp.ne.s32.totalorder %s44, %s45
    %p57 = scmp.eq.s32.totalorder %s14, 1
    %p58 = por %p56, %p57
    %p60 = scmp.ne.s32.totalorder %s45, %s59
    %p61 = scmp.eq.s32.totalorder %s14, 0
    %p62 = por %p60, %p61
    %s63 = ssub.s32 %s8, %s15
    %p64 = scmp.eq.s32.totalorder %s63, 0
    %s66 = sadd.s32 %s65, 1
    %s67 = scalar_select %p64, %s65, %s66
    %p70 = pneg %p64
    %p71 = scmp.eq.s32.totalorder %s8, 1
    %p72 = por %p70, %p71
    %p73 = scmp.ne.s32.totalorder %s65, %s68
    %p74 = scmp.eq.s32.totalorder %s8, 0
    %p75 = por %p73, %p74
    %p76 = scmp.ne.s32.totalorder %s65, %s68
    %p77 = scmp.eq.s32.totalorder %s13, 1
    %p78 = por %p76, %p77
    %p79 = scmp.ne.s32.totalorder %s68, %s69
    %p80 = scmp.eq.s32.totalorder %s13, 0
    %p81 = por %p79, %p80
    %p82 = scmp.ne.s32.totalorder %s68, %s69
    %p83 = scmp.eq.s32.totalorder %s14, 1
    %p84 = por %p82, %p83
    %p86 = scmp.ne.s32.totalorder %s69, %s85
    %p87 = scmp.eq.s32.totalorder %s14, 0
    %p88 = por %p86, %p87
    %p89 = scmp.le.s32.totalorder 1, %s8
    %p90 = scmp.lt.s32.totalorder %s8, 3
    %p91 = pnand %p89, %p90
    %p92 = pneg %p91
    // Predicated region
    $region9: #{_lambda_.21} parent=5 // pred_check
      _
    $region10: #{_lambda_.21} parent=5 // pred_check_branch
      %94 = sbr.rel (%p91) target = $region12
    $region11: #{_lambda_.21} parent=5 // pred_region
      %s95 = ssub.s32 %s8, 1
      // Predicated region
      $region13: #{_lambda_.21} parent=11 // pred_check
        %p96 = pneg %p55
      $region14: #{_lambda_.21} parent=11 // pred_check_branch
        %98 = sbr.rel (%p96) target = $region16
      $region15: #{_lambda_.21} parent=11 // pred_region
        _
      $region16: #{_lambda_.21} parent=11 // pred_fallthru
        _
    $region12: #{_lambda_.21} parent=5 // pred_fallthru
      _
    %p99 = scmp.lt.s32.totalorder %s8, 2
    // Predicated region
    $region17: #{_lambda_.21} parent=5 // pred_check
      %p100 = pneg %p99
    $region18: #{_lambda_.21} parent=5 // pred_check_branch
      %102 = sbr.rel (%p100) target = $region20
    $region19: #{_lambda_.21} parent=5 // pred_region
      // Predicated region
      $region21: #{_lambda_.21} parent=19 // pred_check
        %p103 = pneg %p28
      $region22: #{_lambda_.21} parent=19 // pred_check_branch
        %105 = sbr.rel (%p103) target = $region24
      $region23: #{_lambda_.21} parent=19 // pred_region
        %s106 = smul.u32 2, %s8
        %p107 = scmp.lt.s32.totalorder %s106, 3
        %s108 = scalar_select %p107, %s106, 3
        %s109 = smul.addr %s108, 2
        %s110 = smul.addr %s109, 4
        %s111 = scalar_lea.vmem %s0, %s110
        %s112 = smul.u32 2, %s8
      $region24: #{_lambda_.21} parent=19 // pred_fallthru
        _
    $region20: #{_lambda_.21} parent=5 // pred_fallthru
      _
    %p113 = scmp.le.s32.totalorder 1, %s8
    %p114 = scmp.lt.s32.totalorder %s8, 3
    %p115 = pnand %p113, %p114
    %p116 = pneg %p115
    // Predicated region
    $region25: #{_lambda_.21} parent=5 // pred_check
      _
    $region26: #{_lambda_.21} parent=5 // pred_check_branch
      %118 = sbr.rel (%p115) target = $region28
    $region27: #{_lambda_.21} parent=5 // pred_region
      %s119 = ssub.s32 %s8, 1
      %s120 = smul.u32 2, %s13
      %p121 = scmp.lt.s32.totalorder %s120, 3
      %s122 = scalar_select %p121, %s120, 3
      %s123 = smul.addr %s122, 2
      %s124 = smul.addr %s123, 4
      %s125 = scalar_lea.vmem %s0, %s124
      %p126 = pneg %p34
      %p127 = pneg %p31
      %p128 = pneg %p55
      %p129 = pneg %p52
      %p130 = pneg %p81
      %p131 = pneg %p78
      %s132 = smul.u32 2, %s13
      %p133 = scmp.lt.s32.totalorder %s132, 3
      %s134 = scalar_select %p133, %s132, 3
      %s135 = smul.addr %s134, 2
      %s136 = scalar_lea.vmem %s2, %s135
      %s137 = smul.u32 2, %s13
      %p138 = scmp.lt.s32.totalorder %s137, 3
      %s139 = scalar_select %p138, %s137, 3
      %s140 = smul.addr %s139, 2
      %s141 = smul.addr %s140, 4
      %s142 = scalar_lea.vmem %s0, %s141
      %s143 = smul.u32 2, %s13
      %s144 = smul.u32 2, %s13
      %p145 = scmp.lt.s32.totalorder %s144, 3
      %s146 = scalar_select %p145, %s144, 3
      %s147 = smul.addr %s146, 2
      %s148 = scalar_lea.vmem %s2, %s147
      %s149 = smul.u32 2, %s13
      %v151 = vld [vmem:[%s142] sm:$0x33]
      %v152 = vld [vmem:[%s142 + $0x8] sm:$0x33]
      %v156 = vunpack.c.l.s4 1983009808
      %v157 = vunpack.c.0.s8 %v156
      %v158 = vlaneseq
      %v159 = vshrl.u32 %v158, 7
      %v160 = vsub.s32 %v157, %v159
      %v161 = vrot.slane %v151, %v160
      %v163 = vunpack.c.l.s4 1983009808
      %v164 = vunpack.c.0.s8 %v163
      %v165 = vlaneseq
      %v166 = vshrl.u32 %v165, 7
      %v167 = vsub.s32 %v164, %v166
      %v168 = vrot.slane %v152, %v167
      %v169 = vld [vmem:[%s1] sm:$0xf]
      %v170 = vld [vmem:[%s1 + $0x4] sm:$0xf]
      %v171 = vld [vmem:[%s1 + $0x8] sm:$0xf]
      %v172 = vld [vmem:[%s1 + $0xc] sm:$0xf]
      %v173 = vld [vmem:[%s1 + $0x10] sm:$0xf]
      %v174 = vld [vmem:[%s1 + $0x14] sm:$0xf]
      %v175 = vld [vmem:[%s1 + $0x18] sm:$0xf]
      %v176 = vld [vmem:[%s1 + $0x1c] sm:$0xf]
      %v177 = vld [vmem:[%s1 + $0x20] sm:$0xf]
      %v178 = vld [vmem:[%s1 + $0x24] sm:$0xf]
      %v179 = vld [vmem:[%s1 + $0x28] sm:$0xf]
      %v180 = vld [vmem:[%s1 + $0x2c] sm:$0xf]
      %v181 = vld [vmem:[%s1 + $0x30] sm:$0xf]
      %v182 = vld [vmem:[%s1 + $0x34] sm:$0xf]
      %v183 = vld [vmem:[%s1 + $0x38] sm:$0xf]
      %v184 = vld [vmem:[%s1 + $0x3c] sm:$0xf]
      %v185 = vld [vmem:[%s1 + $0x40] sm:$0xf]
      %v186 = vld [vmem:[%s1 + $0x44] sm:$0xf]
      %v187 = vld [vmem:[%s1 + $0x48] sm:$0xf]
      %v188 = vld [vmem:[%s1 + $0x4c] sm:$0xf]
      %v189 = vld [vmem:[%s1 + $0x50] sm:$0xf]
      %v190 = vld [vmem:[%s1 + $0x54] sm:$0xf]
      %v191 = vld [vmem:[%s1 + $0x58] sm:$0xf]
      %v192 = vld [vmem:[%s1 + $0x5c] sm:$0xf]
      %v193 = vld [vmem:[%s1 + $0x60] sm:$0xf]
      %v194 = vld [vmem:[%s1 + $0x64] sm:$0xf]
      %v195 = vld [vmem:[%s1 + $0x68] sm:$0xf]
      %v196 = vld [vmem:[%s1 + $0x6c] sm:$0xf]
      %v197 = vld [vmem:[%s1 + $0x70] sm:$0xf]
      %v198 = vld [vmem:[%s1 + $0x74] sm:$0xf]
      %v199 = vld [vmem:[%s1 + $0x78] sm:$0xf]
      %v200 = vld [vmem:[%s1 + $0x7c] sm:$0xf]
      %v201 = vcombine.low %v161, %v168
      %v203 = vunpack.c.l.s4 1983009808
      %v204 = vunpack.c.0.s8 %v203
      %v205 = vlaneseq
      %v206 = vshrl.u32 %v205, 7
      %v207 = vsub.s32 %v204, %v206
      %v208 = vrot.slane %v201, %v207
      %v209 = vcombine.high %v208, %v208
      %v244 = vunpack.c.l.b16 %v169
      %v245 = vunpack.c.l.b16 %v170
      %v246 = vunpack.c.l.b16 %v171
      %v247 = vunpack.c.l.b16 %v172
      %v248 = vunpack.c.l.b16 %v173
      %v249 = vunpack.c.l.b16 %v174
      %v250 = vunpack.c.l.b16 %v175
      %v251 = vunpack.c.l.b16 %v176
      %v252 = vunpack.c.l.b16 %v177
      %v253 = vunpack.c.l.b16 %v178
      %v254 = vunpack.c.l.b16 %v179
      %v255 = vunpack.c.l.b16 %v180
      %v256 = vunpack.c.l.b16 %v181
      %v257 = vunpack.c.l.b16 %v182
      %v258 = vunpack.c.l.b16 %v183
      %v259 = vunpack.c.l.b16 %v184
      %v260 = vunpack.c.l.b16 %v185
      %v261 = vunpack.c.l.b16 %v186
      %v262 = vunpack.c.l.b16 %v187
      %v263 = vunpack.c.l.b16 %v188
      %v264 = vunpack.c.l.b16 %v189
      %v265 = vunpack.c.l.b16 %v190
      %v266 = vunpack.c.l.b16 %v191
      %v267 = vunpack.c.l.b16 %v192
      %v268 = vunpack.c.l.b16 %v193
      %v269 = vunpack.c.l.b16 %v194
      %v270 = vunpack.c.l.b16 %v195
      %v271 = vunpack.c.l.b16 %v196
      %v272 = vunpack.c.l.b16 %v197
      %v273 = vunpack.c.l.b16 %v198
      %v274 = vunpack.c.l.b16 %v199
      %v275 = vunpack.c.l.b16 %v200
      %v276 = vpack.c.b16 %v245, %v244
      %v277 = vpack.c.b16 %v247, %v246
      %v278 = vpack.c.b16 %v249, %v248
      %v279 = vpack.c.b16 %v251, %v250
      %v280 = vpack.c.b16 %v253, %v252
      %v281 = vpack.c.b16 %v255, %v254
      %v282 = vpack.c.b16 %v257, %v256
      %v283 = vpack.c.b16 %v259, %v258
      %v284 = vpack.c.b16 %v261, %v260
      %v285 = vpack.c.b16 %v263, %v262
      %v286 = vpack.c.b16 %v265, %v264
      %v287 = vpack.c.b16 %v267, %v266
      %v288 = vpack.c.b16 %v269, %v268
      %v289 = vpack.c.b16 %v271, %v270
      %v290 = vpack.c.b16 %v273, %v272
      %v291 = vpack.c.b16 %v275, %v274
      %308 = vmatprep.subr.bf16.mxu0 0
      %309 = vmatpush1.bf16.msra.mxu0 %v283
      %310 = vmatprep.subr.bf16.mxu0 0
      %311 = vmatpush1.bf16.msra.mxu0 %v282
      %312 = vmatprep.subr.bf16.mxu0 0
      %313 = vmatpush1.bf16.msra.mxu0 %v281
      %314 = vmatprep.subr.bf16.mxu0 0
      %315 = vmatpush1.bf16.msra.mxu0 %v280
      %316 = vmatprep.subr.bf16.mxu0 0
      %317 = vmatpush1.bf16.msra.mxu0 %v279
      %318 = vmatprep.subr.bf16.mxu0 0
      %319 = vmatpush1.bf16.msra.mxu0 %v278
      %320 = vmatprep.subr.bf16.mxu0 0
      %321 = vmatpush1.bf16.msra.mxu0 %v277
      %322 = vmatprep.subr.bf16.mxu0 0
      %323 = vmatpush1.bf16.msra.mxu0 %v276
      %324 = vmatprep.subr.bf16.mxu0 0
      %325 = vmatpush2.bf16.msra.mxu0 %v291
      %326 = vmatprep.subr.bf16.mxu0 0
      %327 = vmatpush2.bf16.msra.mxu0 %v290
      %328 = vmatprep.subr.bf16.mxu0 0
      %329 = vmatpush2.bf16.msra.mxu0 %v289
      %330 = vmatprep.subr.bf16.mxu0 0
      %331 = vmatpush2.bf16.msra.mxu0 %v288
      %332 = vmatprep.subr.bf16.mxu0 0
      %333 = vmatpush2.bf16.msra.mxu0 %v287
      %334 = vmatprep.subr.bf16.mxu0 0
      %335 = vmatpush2.bf16.msra.mxu0 %v286
      %336 = vmatprep.subr.bf16.mxu0 0
      %337 = vmatpush2.bf16.msra.mxu0 %v285
      %338 = vmatprep.subr.bf16.mxu0 0
      %339 = vmatpush2.bf16.msra.mxu0 %v284
      %340 = vmatprep.mubr.bf16.mxu0 %v209
      %341 = vmatmul.mubr.bf16.gmra.mxu0 %v208
      %v342 = vpop.f32.mrf.mxu0
      %v343 = vadd.f32 0.0, %v342
      %v344 = vpop.f32.mrf.mxu0
      %v345 = vpop.f32.mrf.mxu0
      %v346 = vpop.f32.mrf.mxu0
      %347 = vdwg.mxu0
      %v349 = vcombine.high %v343, %v343
      %vm351 = vcmask 1043456
      %v352 = vsel %vm351, %v343, 0.0
      %353 = vadd.xlane.f32.xlu0 %v352
      %v354 = vpop.xlane.xlu0 %353
      %v355 = vsel %vm351, %v349, 0.0
      %356 = vadd.xlane.f32.xlu0 %v355
      %v357 = vpop.xlane.xlu0 %356
      %v358 = vsel %vm351, %v354, 0.0
      %v359 = vrot.slane %v358, 4
      %v360 = vadd.f32 %v358, %v359
      %v361 = vrot.slane %v360, 2
      %v362 = vadd.f32 %v360, %v361
      %v363 = vrot.slane %v362, 1
      %v364 = vadd.f32 %v362, %v363
      %v365 = vsel %vm351, %v357, 0.0
      %v366 = vrot.slane %v365, 4
      %v367 = vadd.f32 %v365, %v366
      %v368 = vrot.slane %v367, 2
      %v369 = vadd.f32 %v367, %v368
      %v370 = vrot.slane %v369, 1
      %v371 = vadd.f32 %v369, %v370
      %v372 = vmul.f32 %v343, %v343
      %v373 = vmul.f32 %v349, %v349
      %v374 = vsel %vm351, %v372, 0.0
      %375 = vadd.xlane.f32.xlu0 %v374
      %v376 = vpop.xlane.xlu0 %375
      %v377 = vsel %vm351, %v373, 0.0
      %378 = vadd.xlane.f32.xlu0 %v377
      %v379 = vpop.xlane.xlu0 %378
      %v380 = vsel %vm351, %v376, 0.0
      %v381 = vrot.slane %v380, 4
      %v382 = vadd.f32 %v380, %v381
      %v383 = vrot.slane %v382, 2
      %v384 = vadd.f32 %v382, %v383
      %v385 = vrot.slane %v384, 1
      %v386 = vadd.f32 %v384, %v385
      %v387 = vsel %vm351, %v379, 0.0
      %v388 = vrot.slane %v387, 4
      %v389 = vadd.f32 %v387, %v388
      %v390 = vrot.slane %v389, 2
      %v391 = vadd.f32 %v389, %v390
      %v392 = vrot.slane %v391, 1
      %v393 = vadd.f32 %v391, %v392
      %v394 = vmul.f32 %v364, 0.0078125
      %v395 = vmul.f32 %v371, 0.0078125
      %v396 = vmul.f32 %v386, 0.0078125
      %v397 = vmul.f32 %v393, 0.0078125
      %v398 = vmul.f32 %v394, %v394
      %v399 = vmul.f32 %v395, %v395
      %v400 = vsub.f32 %v396, %v398
      %v401 = vsub.f32 %v397, %v399
      %v402 = vsub.f32 %v343, %v394
      %v403 = vsub.f32 %v349, %v395
      %v404 = vadd.f32 %v400, 1e-05
      %v405 = vadd.f32 %v401, 1e-05
      %v406 = vrsqrt.pop %v404
      %v407 = vrsqrt.pop %v405
      %v408 = vmul.f32 %v402, %v406
      %v409 = vmul.f32 %v403, %v407
      %v410 = vlaneseq
      %v411 = vand.u32 %v410, 127
      %vm412 = vcmp.lt.s32.totalorder %v411, 32
      %v413 = vsel %vm412, %v408, 0.0
      %v414 = vsel %vm412, %v409, 0.0
      %v415 = vpack.c.bf16 %v413, %v413
      %v416 = vpack.c.bf16 %v414, %v414
      %417 = vst [vmem:[%s148] sm:$0x3] %v415
      %418 = vst [vmem:[%s148 + $0x2] sm:$0x3] %v416
      %s419 = smul.u32 2, %s13
      %p420 = scmp.lt.s32.totalorder %s419, 3
      %s421 = scalar_select %p420, %s419, 3
      %s422 = smul.addr %s421, 2
      %s423 = scalar_lea.vmem %s2, %s422
      // Predicated region
      $region29: #{_lambda_.21} parent=27 // pred_check
        %p424 = pneg %p78
      $region30: #{_lambda_.21} parent=27 // pred_check_branch
        %426 = sbr.rel (%p424) target = $region32
      $region31: #{_lambda_.21} parent=27 // pred_region
        %s427 = smul.u32 2, %s13
      $region32: #{_lambda_.21} parent=27 // pred_fallthru
        _
    $region28: #{_lambda_.21} parent=5 // pred_fallthru
      _
    %p428 = scmp.le.s32.totalorder 2, %s8
    // Predicated region
    $region33: #{_lambda_.21} parent=5 // pred_check
      %p429 = pneg %p428
    $region34: #{_lambda_.21} parent=5 // pred_check_branch
      %431 = sbr.rel (%p429) target = $region36
    $region35: #{_lambda_.21} parent=5 // pred_region
      %s432 = ssub.s32 %s8, 2
      // Predicated region
      $region37: #{_lambda_.21} parent=35 // pred_check
        %p433 = pneg %p84
      $region38: #{_lambda_.21} parent=35 // pred_check_branch
        %435 = sbr.rel (%p433) target = $region40
      $region39: #{_lambda_.21} parent=35 // pred_region
        %s436 = smul.u32 2, %s14
        %p437 = scmp.lt.s32.totalorder %s436, 3
        %s438 = scalar_select %p437, %s436, 3
        %s439 = smul.addr %s438, 2
        %s440 = scalar_lea.vmem %s2, %s439
      $region40: #{_lambda_.21} parent=35 // pred_fallthru
        _
    $region36: #{_lambda_.21} parent=5 // pred_fallthru
      _
  $region6: #{_lambda_.21} parent=0 // loop_footer
    %s12 = sadd.s32 1, %s8
  $region7: #{_lambda_.21} parent=0 // loop_footer_branch
    %7 = sbr.rel target = $region3
  $region8: #{_lambda_.21} parent=0 // loop_exit
    _

// kernel: _lambda_.17
$region0: #{_lambda_.17}
  #allocation0 [shape = 'u32[]', space=smem, size = 0x4, offset = 0x4, fixed_abs, tag = 'smem constant byte address 0x4 - core index']
  #allocation1 [shape = 'u32[144,128]{1,0:T(1,128)}', space=vmem, size = 0x12000, scoped, tag = 'internal scratch']
  %s0 = inlined_call_operand.vmem [shape: bf16[4,9,256], index: 0, kind: input, shape index: {}]
  %s1 = inlined_call_operand.vmem [shape: bf16[2,256,128], index: 1, kind: input, shape index: {}]
  %s2 = inlined_call_operand.vmem [shape: bf16[4,10,128], index: 2, kind: output, shape index: {}]
  %s3 = sld [smem:[#allocation0]]
  $region41: #{_lambda_.17} parent=0
    _
  %s5 = ssub.s32 1, %s3
  %s6 = scalar_select 0, %s5, %s3
  loop: start=0, step=1, limit=4
  $region2: #{_lambda_.17} parent=0 // loop_pre_header
    _
  $region3: #{_lambda_.17} parent=0 // loop_header
    %s8 = sphi 0, %s12
    %p9 = scmp.ge.s32.totalorder %s8, 4
    %s18 = sphi 0, %s20
    %s21 = sphi 0, %s18
    %s22 = sphi 0, %s21
    %s38 = sphi 0, %s22
    %s42 = sphi 0, %s42
    %s44 = sphi 0, %s42
    %s45 = sphi 0, %s44
    %s59 = sphi 0, %s45
    %s65 = sphi 0, %s67
    %s68 = sphi 0, %s65
    %s69 = sphi 0, %s68
    %s85 = sphi 0, %s69
  $region4: #{_lambda_.17} parent=0 // loop_header_branch
    %11 = sbr.rel (%p9) target = $region8
  $region5: #{_lambda_.17} parent=0 // loop_body
    %s13 = ssub.s32 %s8, 1
    %s14 = ssub.s32 %s8, 2
    %s15 = sadd.s32 %s8, 1
    %s16 = ssub.s32 %s8, %s15
    %p17 = scmp.eq.s32.totalorder %s16, 0
    %s19 = sadd.s32 %s18, 1
    %s20 = scalar_select %p17, %s18, %s19
    %p23 = pneg %p17
    %p24 = scmp.eq.s32.totalorder %s8, 1
    %p25 = por %p23, %p24
    %p26 = scmp.ne.s32.totalorder %s18, %s21
    %p27 = scmp.eq.s32.totalorder %s8, 0
    %p28 = por %p26, %p27
    %p29 = scmp.ne.s32.totalorder %s18, %s21
    %p30 = scmp.eq.s32.totalorder %s13, 1
    %p31 = por %p29, %p30
    %p32 = scmp.ne.s32.totalorder %s21, %s22
    %p33 = scmp.eq.s32.totalorder %s13, 0
    %p34 = por %p32, %p33
    %p35 = scmp.ne.s32.totalorder %s21, %s22
    %p36 = scmp.eq.s32.totalorder %s14, 1
    %p37 = por %p35, %p36
    %p39 = scmp.ne.s32.totalorder %s22, %s38
    %p40 = scmp.eq.s32.totalorder %s14, 0
    %p41 = por %p39, %p40
    %s43 = sadd.s32 %s42, 1
    %p46 = scmp.eq.s32.totalorder %s8, 1
    %p47 = scmp.ne.s32.totalorder %s42, %s44
    %p48 = scmp.eq.s32.totalorder %s8, 0
    %p49 = por %p47, %p48
    %p50 = scmp.ne.s32.totalorder %s42, %s44
    %p51 = scmp.eq.s32.totalorder %s13, 1
    %p52 = por %p50, %p51
    %p53 = scmp.ne.s32.totalorder %s44, %s45
    %p54 = scmp.eq.s32.totalorder %s13, 0
    %p55 = por %p53, %p54
    %p56 = scmp.ne.s32.totalorder %s44, %s45
    %p57 = scmp.eq.s32.totalorder %s14, 1
    %p58 = por %p56, %p57
    %p60 = scmp.ne.s32.totalorder %s45, %s59
    %p61 = scmp.eq.s32.totalorder %s14, 0
    %p62 = por %p60, %p61
    %s63 = ssub.s32 %s8, %s15
    %p64 = scmp.eq.s32.totalorder %s63, 0
    %s66 = sadd.s32 %s65, 1
    %s67 = scalar_select %p64, %s65, %s66
    %p70 = pneg %p64
    %p71 = scmp.eq.s32.totalorder %s8, 1
    %p72 = por %p70, %p71
    %p73 = scmp.ne.s32.totalorder %s65, %s68
    %p74 = scmp.eq.s32.totalorder %s8, 0
    %p75 = por %p73, %p74
    %p76 = scmp.ne.s32.totalorder %s65, %s68
    %p77 = scmp.eq.s32.totalorder %s13, 1
    %p78 = por %p76, %p77
    %p79 = scmp.ne.s32.totalorder %s68, %s69
    %p80 = scmp.eq.s32.totalorder %s13, 0
    %p81 = por %p79, %p80
    %p82 = scmp.ne.s32.totalorder %s68, %s69
    %p83 = scmp.eq.s32.totalorder %s14, 1
    %p84 = por %p82, %p83
    %p86 = scmp.ne.s32.totalorder %s69, %s85
    %p87 = scmp.eq.s32.totalorder %s14, 0
    %p88 = por %p86, %p87
    %p89 = scmp.le.s32.totalorder 1, %s8
    %p90 = scmp.lt.s32.totalorder %s8, 3
    %p91 = pnand %p89, %p90
    %p92 = pneg %p91
    // Predicated region
    $region9: #{_lambda_.17} parent=5 // pred_check
      _
    $region10: #{_lambda_.17} parent=5 // pred_check_branch
      %94 = sbr.rel (%p91) target = $region12
    $region11: #{_lambda_.17} parent=5 // pred_region
      %s95 = ssub.s32 %s8, 1
      // Predicated region
      $region13: #{_lambda_.17} parent=11 // pred_check
        %p96 = pneg %p55
      $region14: #{_lambda_.17} parent=11 // pred_check_branch
        %98 = sbr.rel (%p96) target = $region16
      $region15: #{_lambda_.17} parent=11 // pred_region
        _
      $region16: #{_lambda_.17} parent=11 // pred_fallthru
        _
    $region12: #{_lambda_.17} parent=5 // pred_fallthru
      _
    %p99 = scmp.lt.s32.totalorder %s8, 2
    // Predicated region
    $region17: #{_lambda_.17} parent=5 // pred_check
      %p100 = pneg %p99
    $region18: #{_lambda_.17} parent=5 // pred_check_branch
      %102 = sbr.rel (%p100) target = $region20
    $region19: #{_lambda_.17} parent=5 // pred_region
      // Predicated region
      $region21: #{_lambda_.17} parent=19 // pred_check
        %p103 = pneg %p28
      $region22: #{_lambda_.17} parent=19 // pred_check_branch
        %105 = sbr.rel (%p103) target = $region24
      $region23: #{_lambda_.17} parent=19 // pred_region
        %s106 = smul.u32 2, %s8
        %p107 = scmp.lt.s32.totalorder %s106, 3
        %s108 = scalar_select %p107, %s106, 3
        %s109 = smul.addr %s108, 4
        %s110 = smul.addr %s109, 4
        %s111 = scalar_lea.vmem %s0, %s110
        %s112 = smul.u32 2, %s8
      $region24: #{_lambda_.17} parent=19 // pred_fallthru
        _
    $region20: #{_lambda_.17} parent=5 // pred_fallthru
      _
    %p113 = scmp.le.s32.totalorder 1, %s8
    %p114 = scmp.lt.s32.totalorder %s8, 3
    %p115 = pnand %p113, %p114
    %p116 = pneg %p115
    // Predicated region
    $region25: #{_lambda_.17} parent=5 // pred_check
      _
    $region26: #{_lambda_.17} parent=5 // pred_check_branch
      %118 = sbr.rel (%p115) target = $region28
    $region27: #{_lambda_.17} parent=5 // pred_region
      %s119 = ssub.s32 %s8, 1
      %s120 = smul.u32 2, %s13
      %p121 = scmp.lt.s32.totalorder %s120, 3
      %s122 = scalar_select %p121, %s120, 3
      %s123 = smul.addr %s122, 4
      %s124 = smul.addr %s123, 4
      %s125 = scalar_lea.vmem %s0, %s124
      %p126 = pneg %p34
      %p127 = pneg %p31
      %p128 = pneg %p55
      %p129 = pneg %p52
      %p130 = pneg %p81
      %p131 = pneg %p78
      %s132 = smul.u32 2, %s13
      %p133 = scmp.lt.s32.totalorder %s132, 3
      %s134 = scalar_select %p133, %s132, 3
      %s135 = smul.addr %s134, 2
      %s136 = smul.addr %s135, 4
      %s137 = scalar_lea.vmem %s2, %s136
      %s138 = smul.u32 2, %s13
      %p139 = scmp.lt.s32.totalorder %s138, 3
      %s140 = scalar_select %p139, %s138, 3
      %s141 = smul.addr %s140, 4
      %s142 = smul.addr %s141, 4
      %s143 = scalar_lea.vmem %s0, %s142
      %s144 = smul.u32 2, %s13
      %s145 = smul.u32 2, %s13
      %p146 = scmp.lt.s32.totalorder %s145, 3
      %s147 = scalar_select %p146, %s145, 3
      %s148 = smul.addr %s147, 2
      %s149 = smul.addr %s148, 4
      %s150 = scalar_lea.vmem %s2, %s149
      %s151 = smul.u32 2, %s13
      %v153 = vld [vmem:[%s143] sm:$0xff]
      %v154 = vld [vmem:[%s143 + $0x10] sm:$0xff]
      %v155 = vld [vmem:[%s1] sm:$0xf]
      %v156 = vld [vmem:[%s1 + $0x4] sm:$0xf]
      %v157 = vld [vmem:[%s1 + $0x8] sm:$0xf]
      %v158 = vld [vmem:[%s1 + $0xc] sm:$0xf]
      %v159 = vld [vmem:[%s1 + $0x10] sm:$0xf]
      %v160 = vld [vmem:[%s1 + $0x14] sm:$0xf]
      %v161 = vld [vmem:[%s1 + $0x18] sm:$0xf]
      %v162 = vld [vmem:[%s1 + $0x1c] sm:$0xf]
      %v163 = vld [vmem:[%s1 + $0x20] sm:$0xf]
      %v164 = vld [vmem:[%s1 + $0x24] sm:$0xf]
      %v165 = vld [vmem:[%s1 + $0x28] sm:$0xf]
      %v166 = vld [vmem:[%s1 + $0x2c] sm:$0xf]
      %v167 = vld [vmem:[%s1 + $0x30] sm:$0xf]
      %v168 = vld [vmem:[%s1 + $0x34] sm:$0xf]
      %v169 = vld [vmem:[%s1 + $0x38] sm:$0xf]
      %v170 = vld [vmem:[%s1 + $0x3c] sm:$0xf]
      %v171 = vld [vmem:[%s1 + $0x40] sm:$0xf]
      %v172 = vld [vmem:[%s1 + $0x44] sm:$0xf]
      %v173 = vld [vmem:[%s1 + $0x48] sm:$0xf]
      %v174 = vld [vmem:[%s1 + $0x4c] sm:$0xf]
      %v175 = vld [vmem:[%s1 + $0x50] sm:$0xf]
      %v176 = vld [vmem:[%s1 + $0x54] sm:$0xf]
      %v177 = vld [vmem:[%s1 + $0x58] sm:$0xf]
      %v178 = vld [vmem:[%s1 + $0x5c] sm:$0xf]
      %v179 = vld [vmem:[%s1 + $0x60] sm:$0xf]
      %v180 = vld [vmem:[%s1 + $0x64] sm:$0xf]
      %v181 = vld [vmem:[%s1 + $0x68] sm:$0xf]
      %v182 = vld [vmem:[%s1 + $0x6c] sm:$0xf]
      %v183 = vld [vmem:[%s1 + $0x70] sm:$0xf]
      %v184 = vld [vmem:[%s1 + $0x74] sm:$0xf]
      %v185 = vld [vmem:[%s1 + $0x78] sm:$0xf]
      %v186 = vld [vmem:[%s1 + $0x7c] sm:$0xf]
      %v187 = vld [vmem:[%s143 + $0x8] sm:$0x11]
      %v188 = vld [vmem:[%s143 + $0x18] sm:$0x11]
      %vm189 = vsmask.f32 3328
      %vm190 = vsmask.f32 7440
      %vm191 = vmor %vm189, %vm190
      %v193 = vshrl.u32 %v153, 16
      %v195 = vrot.slane %v193, 4
      %v196 = vshll.u32 %v153, 16
      %v198 = vrot.slane %v196, 5
      %v199 = vor.u32 %v195, %v198
      %v200 = vrot.slane %v199, 4
      %v202 = vshll.u32 %v187, 16
      %v204 = vrot.slane %v202, 5
      %v205 = vsel %vm191, %v200, %v204
      %v207 = vshrl.u32 %v154, 16
      %v209 = vrot.slane %v207, 4
      %v210 = vshll.u32 %v154, 16
      %v212 = vrot.slane %v210, 5
      %v213 = vor.u32 %v209, %v212
      %v214 = vrot.slane %v213, 4
      %v216 = vshll.u32 %v188, 16
      %v218 = vrot.slane %v216, 5
      %v219 = vsel %vm191, %v214, %v218
      %s220 = scalar_lea.vmem %s1, 128
      %v221 = vld [vmem:[%s220] sm:$0xf]
      %v222 = vld [vmem:[%s220 + $0x4] sm:$0xf]
      %v223 = vld [vmem:[%s220 + $0x8] sm:$0xf]
      %v224 = vld [vmem:[%s220 + $0xc] sm:$0xf]
      %v225 = vld [vmem:[%s220 + $0x10] sm:$0xf]
      %v226 = vld [vmem:[%s220 + $0x14] sm:$0xf]
      %v227 = vld [vmem:[%s220 + $0x18] sm:$0xf]
      %v228 = vld [vmem:[%s220 + $0x1c] sm:$0xf]
      %v229 = vld [vmem:[%s220 + $0x20] sm:$0xf]
      %v230 = vld [vmem:[%s220 + $0x24] sm:$0xf]
      %v231 = vld [vmem:[%s220 + $0x28] sm:$0xf]
      %v232 = vld [vmem:[%s220 + $0x2c] sm:$0xf]
      %v233 = vld [vmem:[%s220 + $0x30] sm:$0xf]
      %v234 = vld [vmem:[%s220 + $0x34] sm:$0xf]
      %v235 = vld [vmem:[%s220 + $0x38] sm:$0xf]
      %v236 = vld [vmem:[%s220 + $0x3c] sm:$0xf]
      %v237 = vld [vmem:[%s220 + $0x40] sm:$0xf]
      %v238 = vld [vmem:[%s220 + $0x44] sm:$0xf]
      %v239 = vld [vmem:[%s220 + $0x48] sm:$0xf]
      %v240 = vld [vmem:[%s220 + $0x4c] sm:$0xf]
      %v241 = vld [vmem:[%s220 + $0x50] sm:$0xf]
      %v242 = vld [vmem:[%s220 + $0x54] sm:$0xf]
      %v243 = vld [vmem:[%s220 + $0x58] sm:$0xf]
      %v244 = vld [vmem:[%s220 + $0x5c] sm:$0xf]
      %v245 = vld [vmem:[%s220 + $0x60] sm:$0xf]
      %v246 = vld [vmem:[%s220 + $0x64] sm:$0xf]
      %v247 = vld [vmem:[%s220 + $0x68] sm:$0xf]
      %v248 = vld [vmem:[%s220 + $0x6c] sm:$0xf]
      %v249 = vld [vmem:[%s220 + $0x70] sm:$0xf]
      %v250 = vld [vmem:[%s220 + $0x74] sm:$0xf]
      %v251 = vld [vmem:[%s220 + $0x78] sm:$0xf]
      %v252 = vld [vmem:[%s220 + $0x7c] sm:$0xf]
      %v253 = vunpack.c.l.b16 %v205
      %v254 = vunpack.c.h.b16 %v205
      %v255 = vunpack.c.l.b16 %v219
      %v256 = vunpack.c.h.b16 %v219
      %v257 = vpack.c.b16 %v255, %v253
      %v258 = vpack.c.b16 %v256, %v254
      %v293 = vunpack.c.l.b16 %v221
      %v294 = vunpack.c.l.b16 %v222
      %v295 = vunpack.c.l.b16 %v223
      %v296 = vunpack.c.l.b16 %v224
      %v297 = vunpack.c.l.b16 %v225
      %v298 = vunpack.c.l.b16 %v226
      %v299 = vunpack.c.l.b16 %v227
      %v300 = vunpack.c.l.b16 %v228
      %v301 = vunpack.c.l.b16 %v229
      %v302 = vunpack.c.l.b16 %v230
      %v303 = vunpack.c.l.b16 %v231
      %v304 = vunpack.c.l.b16 %v232
      %v305 = vunpack.c.l.b16 %v233
      %v306 = vunpack.c.l.b16 %v234
      %v307 = vunpack.c.l.b16 %v235
      %v308 = vunpack.c.l.b16 %v236
      %v309 = vunpack.c.l.b16 %v237
      %v310 = vunpack.c.l.b16 %v238
      %v311 = vunpack.c.l.b16 %v239
      %v312 = vunpack.c.l.b16 %v240
      %v313 = vunpack.c.l.b16 %v241
      %v314 = vunpack.c.l.b16 %v242
      %v315 = vunpack.c.l.b16 %v243
      %v316 = vunpack.c.l.b16 %v244
      %v317 = vunpack.c.l.b16 %v245
      %v318 = vunpack.c.l.b16 %v246
      %v319 = vunpack.c.l.b16 %v247
      %v320 = vunpack.c.l.b16 %v248
      %v321 = vunpack.c.l.b16 %v249
      %v322 = vunpack.c.l.b16 %v250
      %v323 = vunpack.c.l.b16 %v251
      %v324 = vunpack.c.l.b16 %v252
      %v325 = vpack.c.b16 %v294, %v293
      %v326 = vpack.c.b16 %v296, %v295
      %v327 = vpack.c.b16 %v298, %v297
      %v328 = vpack.c.b16 %v300, %v299
      %v329 = vpack.c.b16 %v302, %v301
      %v330 = vpack.c.b16 %v304, %v303
      %v331 = vpack.c.b16 %v306, %v305
      %v332 = vpack.c.b16 %v308, %v307
      %v333 = vpack.c.b16 %v310, %v309
      %v334 = vpack.c.b16 %v312, %v311
      %v335 = vpack.c.b16 %v314, %v313
      %v336 = vpack.c.b16 %v316, %v315
      %v337 = vpack.c.b16 %v318, %v317
      %v338 = vpack.c.b16 %v320, %v319
      %v339 = vpack.c.b16 %v322, %v321
      %v340 = vpack.c.b16 %v324, %v323
      %357 = vmatprep.subr.bf16.mxu0 0
      %358 = vmatpush1.bf16.msra.mxu0 %v332
      %359 = vmatprep.subr.bf16.mxu0 0
      %360 = vmatpush1.bf16.msra.mxu0 %v331
      %361 = vmatprep.subr.bf16.mxu0 0
      %362 = vmatpush1.bf16.msra.mxu0 %v330
      %363 = vmatprep.subr.bf16.mxu0 0
      %364 = vmatpush1.bf16.msra.mxu0 %v329
      %365 = vmatprep.subr.bf16.mxu0 0
      %366 = vmatpush1.bf16.msra.mxu0 %v328
      %367 = vmatprep.subr.bf16.mxu0 0
      %368 = vmatpush1.bf16.msra.mxu0 %v327
      %369 = vmatprep.subr.bf16.mxu0 0
      %370 = vmatpush1.bf16.msra.mxu0 %v326
      %371 = vmatprep.subr.bf16.mxu0 0
      %372 = vmatpush1.bf16.msra.mxu0 %v325
      %373 = vmatprep.subr.bf16.mxu0 0
      %374 = vmatpush2.bf16.msra.mxu0 %v340
      %375 = vmatprep.subr.bf16.mxu0 0
      %376 = vmatpush2.bf16.msra.mxu0 %v339
      %377 = vmatprep.subr.bf16.mxu0 0
      %378 = vmatpush2.bf16.msra.mxu0 %v338
      %379 = vmatprep.subr.bf16.mxu0 0
      %380 = vmatpush2.bf16.msra.mxu0 %v337
      %381 = vmatprep.subr.bf16.mxu0 0
      %382 = vmatpush2.bf16.msra.mxu0 %v336
      %383 = vmatprep.subr.bf16.mxu0 0
      %384 = vmatpush2.bf16.msra.mxu0 %v335
      %385 = vmatprep.subr.bf16.mxu0 0
      %386 = vmatpush2.bf16.msra.mxu0 %v334
      %387 = vmatprep.subr.bf16.mxu0 0
      %388 = vmatpush2.bf16.msra.mxu0 %v333
      %389 = vmatprep.mubr.bf16.mxu0 %v258
      %390 = vmatmul.mubr.bf16.gmra.mxu0 %v257
      %v391 = vpop.f32.mrf.mxu0
      %v392 = vadd.f32 0.0, %v391
      %v393 = vpop.f32.mrf.mxu0
      %v394 = vpop.f32.mrf.mxu0
      %v395 = vadd.f32 0.0, %v394
      %v396 = vpop.f32.mrf.mxu0
      %397 = vdwg.mxu0
      %v400 = vunpack.c.l.b16 %v153
      %v401 = vunpack.c.h.b16 %v153
      %v402 = vunpack.c.l.b16 %v154
      %v403 = vunpack.c.h.b16 %v154
      %v404 = vpack.c.b16 %v402, %v400
      %v405 = vpack.c.b16 %v403, %v401
      %v440 = vunpack.c.l.b16 %v155
      %v441 = vunpack.c.l.b16 %v156
      %v442 = vunpack.c.l.b16 %v157
      %v443 = vunpack.c.l.b16 %v158
      %v444 = vunpack.c.l.b16 %v159
      %v445 = vunpack.c.l.b16 %v160
      %v446 = vunpack.c.l.b16 %v161
      %v447 = vunpack.c.l.b16 %v162
      %v448 = vunpack.c.l.b16 %v163
      %v449 = vunpack.c.l.b16 %v164
      %v450 = vunpack.c.l.b16 %v165
      %v451 = vunpack.c.l.b16 %v166
      %v452 = vunpack.c.l.b16 %v167
      %v453 = vunpack.c.l.b16 %v168
      %v454 = vunpack.c.l.b16 %v169
      %v455 = vunpack.c.l.b16 %v170
      %v456 = vunpack.c.l.b16 %v171
      %v457 = vunpack.c.l.b16 %v172
      %v458 = vunpack.c.l.b16 %v173
      %v459 = vunpack.c.l.b16 %v174
      %v460 = vunpack.c.l.b16 %v175
      %v461 = vunpack.c.l.b16 %v176
      %v462 = vunpack.c.l.b16 %v177
      %v463 = vunpack.c.l.b16 %v178
      %v464 = vunpack.c.l.b16 %v179
      %v465 = vunpack.c.l.b16 %v180
      %v466 = vunpack.c.l.b16 %v181
      %v467 = vunpack.c.l.b16 %v182
      %v468 = vunpack.c.l.b16 %v183
      %v469 = vunpack.c.l.b16 %v184
      %v470 = vunpack.c.l.b16 %v185
      %v471 = vunpack.c.l.b16 %v186
      %v472 = vpack.c.b16 %v441, %v440
      %v473 = vpack.c.b16 %v443, %v442
      %v474 = vpack.c.b16 %v445, %v444
      %v475 = vpack.c.b16 %v447, %v446
      %v476 = vpack.c.b16 %v449, %v448
      %v477 = vpack.c.b16 %v451, %v450
      %v478 = vpack.c.b16 %v453, %v452
      %v479 = vpack.c.b16 %v455, %v454
      %v480 = vpack.c.b16 %v457, %v456
      %v481 = vpack.c.b16 %v459, %v458
      %v482 = vpack.c.b16 %v461, %v460
      %v483 = vpack.c.b16 %v463, %v462
      %v484 = vpack.c.b16 %v465, %v464
      %v485 = vpack.c.b16 %v467, %v466
      %v486 = vpack.c.b16 %v469, %v468
      %v487 = vpack.c.b16 %v471, %v470
      %504 = vmatprep.subr.bf16.mxu0 0
      %505 = vmatpush1.bf16.msra.mxu0 %v479
      %506 = vmatprep.subr.bf16.mxu0 0
      %507 = vmatpush1.bf16.msra.mxu0 %v478
      %508 = vmatprep.subr.bf16.mxu0 0
      %509 = vmatpush1.bf16.msra.mxu0 %v477
      %510 = vmatprep.subr.bf16.mxu0 0
      %511 = vmatpush1.bf16.msra.mxu0 %v476
      %512 = vmatprep.subr.bf16.mxu0 0
      %513 = vmatpush1.bf16.msra.mxu0 %v475
      %514 = vmatprep.subr.bf16.mxu0 0
      %515 = vmatpush1.bf16.msra.mxu0 %v474
      %516 = vmatprep.subr.bf16.mxu0 0
      %517 = vmatpush1.bf16.msra.mxu0 %v473
      %518 = vmatprep.subr.bf16.mxu0 0
      %519 = vmatpush1.bf16.msra.mxu0 %v472
      %520 = vmatprep.subr.bf16.mxu0 0
      %521 = vmatpush2.bf16.msra.mxu0 %v487
      %522 = vmatprep.subr.bf16.mxu0 0
      %523 = vmatpush2.bf16.msra.mxu0 %v486
      %524 = vmatprep.subr.bf16.mxu0 0
      %525 = vmatpush2.bf16.msra.mxu0 %v485
      %526 = vmatprep.subr.bf16.mxu0 0
      %527 = vmatpush2.bf16.msra.mxu0 %v484
      %528 = vmatprep.subr.bf16.mxu0 0
      %529 = vmatpush2.bf16.msra.mxu0 %v483
      %530 = vmatprep.subr.bf16.mxu0 0
      %531 = vmatpush2.bf16.msra.mxu0 %v482
      %532 = vmatprep.subr.bf16.mxu0 0
      %533 = vmatpush2.bf16.msra.mxu0 %v481
      %534 = vmatprep.subr.bf16.mxu0 0
      %535 = vmatpush2.bf16.msra.mxu0 %v480
      %536 = vmatprep.mubr.bf16.mxu0 %v405
      %537 = vmatmul.mubr.bf16.gmra.mxu0 %v404
      %v538 = vpop.f32.mrf.mxu0
      %v539 = vadd.f32 %v392, %v538
      %v540 = vpop.f32.mrf.mxu0
      %v541 = vpop.f32.mrf.mxu0
      %v542 = vadd.f32 %v395, %v541
      %v543 = vpop.f32.mrf.mxu0
      %544 = vdwg.mxu0
      %545 = vadd.xlane.f32.xlu0 %v539
      %v546 = vpop.xlane.xlu0 %545
      %547 = vadd.xlane.f32.xlu0 %v542
      %v548 = vpop.xlane.xlu0 %547
      %v549 = vrot.slane %v546, 4
      %v550 = vadd.f32 %v546, %v549
      %v551 = vrot.slane %v550, 2
      %v552 = vadd.f32 %v550, %v551
      %v553 = vrot.slane %v552, 1
      %v554 = vadd.f32 %v552, %v553
      %v555 = vrot.slane %v548, 4
      %v556 = vadd.f32 %v548, %v555
      %v557 = vrot.slane %v556, 2
      %v558 = vadd.f32 %v556, %v557
      %v559 = vrot.slane %v558, 1
      %v560 = vadd.f32 %v558, %v559
      %v561 = vmul.f32 %v539, %v539
      %v562 = vmul.f32 %v542, %v542
      %563 = vadd.xlane.f32.xlu0 %v561
      %v564 = vpop.xlane.xlu0 %563
      %565 = vadd.xlane.f32.xlu0 %v562
      %v566 = vpop.xlane.xlu0 %565
      %v567 = vrot.slane %v564, 4
      %v568 = vadd.f32 %v564, %v567
      %v569 = vrot.slane %v568, 2
      %v570 = vadd.f32 %v568, %v569
      %v571 = vrot.slane %v570, 1
      %v572 = vadd.f32 %v570, %v571
      %v573 = vrot.slane %v566, 4
      %v574 = vadd.f32 %v566, %v573
      %v575 = vrot.slane %v574, 2
      %v576 = vadd.f32 %v574, %v575
      %v577 = vrot.slane %v576, 1
      %v578 = vadd.f32 %v576, %v577
      %v579 = vmul.f32 %v554, 0.0078125
      %v580 = vmul.f32 %v560, 0.0078125
      %v581 = vmul.f32 %v572, 0.0078125
      %v582 = vmul.f32 %v578, 0.0078125
      %v583 = vmul.f32 %v579, %v579
      %v584 = vmul.f32 %v580, %v580
      %v585 = vsub.f32 %v581, %v583
      %v586 = vsub.f32 %v582, %v584
      %v587 = vsub.f32 %v539, %v579
      %v588 = vsub.f32 %v542, %v580
      %v589 = vadd.f32 %v585, 1e-05
      %v590 = vadd.f32 %v586, 1e-05
      %v591 = vrsqrt.pop %v589
      %v592 = vrsqrt.pop %v590
      %v593 = vmul.f32 %v587, %v591
      %v594 = vmul.f32 %v588, %v592
      %v595 = vlaneseq
      %v596 = vand.u32 %v595, 127
      %vm597 = vcmp.lt.s32.totalorder %v596, 16
      %v598 = vsel %vm597, %v593, 0.0
      %v599 = vsel %vm597, %v594, 0.0
      %v600 = vmax.f32 %v598, 0.0
      %v601 = vmax.f32 %v599, 0.0
      %vm602 = vcmask 1040384
      %vm603 = vsmask.f32 256
      %vm604 = vmand %vm602, %vm603
      %v605 = vld [vmem:[%s150] sm:$0x1]
      %v606 = vsel %vm604, 0, %v605
      %607 = vst [vmem:[%s150] sm:$0x1] %v606
      %v608 = vld [vmem:[%s150 + $0x8] sm:$0x1]
      %v609 = vsel %vm604, 0, %v608
      %610 = vst [vmem:[%s150 + $0x8] sm:$0x1] %v609
      %vm611 = vsmask.f32 7938
      %vm612 = vmand %vm602, %vm611
      %v613 = vld [vmem:[%s150 + $0x4] sm:$0x1]
      %v614 = vsel %vm612, 0, %v613
      %615 = vst [vmem:[%s150 + $0x4] sm:$0x1] %v614
      %v616 = vld [vmem:[%s150 + $0xc] sm:$0x1]
      %v617 = vsel %vm612, 0, %v616
      %618 = vst [vmem:[%s150 + $0xc] sm:$0x1] %v617
      %v619 = vpack.c.bf16 %v600, %v600
      %v620 = vpack.c.bf16 %v601, %v601
      %v623 = vunpack.c.l.b16 %v619
      %v624 = vunpack.c.l.b16 %v620
      %v625 = vpack.c.b16 %v623, %v623
      %v626 = vpack.c.b16 %v624, %v624
      %v628 = vshrl.u32 %v625, 16
      %v630 = vrot.slane %v628, 7
      %v631 = vshll.u32 %v625, 16
      %v633 = vor.u32 %v630, %v631
      %v634 = vrot.slane %v630, 4
      %v636 = vshrl.u32 %v626, 16
      %v638 = vrot.slane %v636, 7
      %v639 = vshll.u32 %v626, 16
      %v641 = vor.u32 %v638, %v639
      %v642 = vrot.slane %v638, 4
      %vm647 = vcmask 1043456
      %vm648 = vmand %vm647, %vm611
      %v649 = vld [vmem:[%s150] sm:$0xf]
      %v650 = vsel %vm648, %v633, %v649
      %651 = vst [vmem:[%s150] sm:$0xf] %v650
      %v652 = vld [vmem:[%s150 + $0x4] sm:$0x1]
      %v653 = vsel %vm604, %v634, %v652
      %654 = vst [vmem:[%s150 + $0x4] sm:$0x1] %v653
      %v655 = vld [vmem:[%s150 + $0x8] sm:$0xf]
      %v656 = vsel %vm648, %v641, %v655
      %657 = vst [vmem:[%s150 + $0x8] sm:$0xf] %v656
      %v658 = vld [vmem:[%s150 + $0xc] sm:$0x1]
      %v659 = vsel %vm604, %v642, %v658
      %660 = vst [vmem:[%s150 + $0xc] sm:$0x1] %v659
      %s661 = smul.u32 2, %s13
      %p662 = scmp.lt.s32.totalorder %s661, 3
      %s663 = scalar_select %p662, %s661, 3
      %s664 = smul.addr %s663, 2
      %s665 = smul.addr %s664, 4
      %s666 = scalar_lea.vmem %s2, %s665
      // Predicated region
      $region29: #{_lambda_.17} parent=27 // pred_check
        %p667 = pneg %p78
      $region30: #{_lambda_.17} parent=27 // pred_check_branch
        %669 = sbr.rel (%p667) target = $region32
      $region31: #{_lambda_.17} parent=27 // pred_region
        %s670 = smul.u32 2, %s13
      $region32: #{_lambda_.17} parent=27 // pred_fallthru
        _
    $region28: #{_lambda_.17} parent=5 // pred_fallthru
      _
    %p671 = scmp.le.s32.totalorder 2, %s8
    // Predicated region
    $region33: #{_lambda_.17} parent=5 // pred_check
      %p672 = pneg %p671
    $region34: #{_lambda_.17} parent=5 // pred_check_branch
      %674 = sbr.rel (%p672) target = $region36
    $region35: #{_lambda_.17} parent=5 // pred_region
      %s675 = ssub.s32 %s8, 2
      // Predicated region
      $region37: #{_lambda_.17} parent=35 // pred_check
        %p676 = pneg %p84
      $region38: #{_lambda_.17} parent=35 // pred_check_branch
        %678 = sbr.rel (%p676) target = $region40
      $region39: #{_lambda_.17} parent=35 // pred_region
        %s679 = smul.u32 2, %s14
        %p680 = scmp.lt.s32.totalorder %s679, 3
        %s681 = scalar_select %p680, %s679, 3
        %s682 = smul.addr %s681, 2
        %s683 = smul.addr %s682, 4
        %s684 = scalar_lea.vmem %s2, %s683
      $region40: #{_lambda_.17} parent=35 // pred_fallthru
        _
    $region36: #{_lambda_.17} parent=5 // pred_fallthru
      _
  $region6: #{_lambda_.17} parent=0 // loop_footer
    %s12 = sadd.s32 1, %s8
  $region7: #{_lambda_.17} parent=0 // loop_footer_branch
    %7 = sbr.rel target = $region3
  $region8: #{_lambda_.17} parent=0 // loop_exit
    _

// kernel: _lambda_.20
$region0: #{_lambda_.20}
  #allocation0 [shape = 'u32[]', space=smem, size = 0x4, offset = 0x4, fixed_abs, tag = 'smem constant byte address 0x4 - core index']
  #allocation1 [shape = 'u32[144,128]{1,0:T(1,128)}', space=vmem, size = 0x12000, scoped, tag = 'internal scratch']
  %s0 = inlined_call_operand.vmem [shape: bf16[4,5,256], index: 0, kind: input, shape index: {}]
  %s1 = inlined_call_operand.vmem [shape: bf16[2,256,128], index: 1, kind: input, shape index: {}]
  %s2 = inlined_call_operand.vmem [shape: bf16[4,6,128], index: 2, kind: output, shape index: {}]
  %s3 = sld [smem:[#allocation0]]
  $region41: #{_lambda_.20} parent=0
    _
  %s5 = ssub.s32 1, %s3
  %s6 = scalar_select 0, %s5, %s3
  loop: start=0, step=1, limit=4
  $region2: #{_lambda_.20} parent=0 // loop_pre_header
    _
  $region3: #{_lambda_.20} parent=0 // loop_header
    %s8 = sphi 0, %s12
    %p9 = scmp.ge.s32.totalorder %s8, 4
    %s18 = sphi 0, %s20
    %s21 = sphi 0, %s18
    %s22 = sphi 0, %s21
    %s38 = sphi 0, %s22
    %s42 = sphi 0, %s42
    %s44 = sphi 0, %s42
    %s45 = sphi 0, %s44
    %s59 = sphi 0, %s45
    %s65 = sphi 0, %s67
    %s68 = sphi 0, %s65
    %s69 = sphi 0, %s68
    %s85 = sphi 0, %s69
  $region4: #{_lambda_.20} parent=0 // loop_header_branch
    %11 = sbr.rel (%p9) target = $region8
  $region5: #{_lambda_.20} parent=0 // loop_body
    %s13 = ssub.s32 %s8, 1
    %s14 = ssub.s32 %s8, 2
    %s15 = sadd.s32 %s8, 1
    %s16 = ssub.s32 %s8, %s15
    %p17 = scmp.eq.s32.totalorder %s16, 0
    %s19 = sadd.s32 %s18, 1
    %s20 = scalar_select %p17, %s18, %s19
    %p23 = pneg %p17
    %p24 = scmp.eq.s32.totalorder %s8, 1
    %p25 = por %p23, %p24
    %p26 = scmp.ne.s32.totalorder %s18, %s21
    %p27 = scmp.eq.s32.totalorder %s8, 0
    %p28 = por %p26, %p27
    %p29 = scmp.ne.s32.totalorder %s18, %s21
    %p30 = scmp.eq.s32.totalorder %s13, 1
    %p31 = por %p29, %p30
    %p32 = scmp.ne.s32.totalorder %s21, %s22
    %p33 = scmp.eq.s32.totalorder %s13, 0
    %p34 = por %p32, %p33
    %p35 = scmp.ne.s32.totalorder %s21, %s22
    %p36 = scmp.eq.s32.totalorder %s14, 1
    %p37 = por %p35, %p36
    %p39 = scmp.ne.s32.totalorder %s22, %s38
    %p40 = scmp.eq.s32.totalorder %s14, 0
    %p41 = por %p39, %p40
    %s43 = sadd.s32 %s42, 1
    %p46 = scmp.eq.s32.totalorder %s8, 1
    %p47 = scmp.ne.s32.totalorder %s42, %s44
    %p48 = scmp.eq.s32.totalorder %s8, 0
    %p49 = por %p47, %p48
    %p50 = scmp.ne.s32.totalorder %s42, %s44
    %p51 = scmp.eq.s32.totalorder %s13, 1
    %p52 = por %p50, %p51
    %p53 = scmp.ne.s32.totalorder %s44, %s45
    %p54 = scmp.eq.s32.totalorder %s13, 0
    %p55 = por %p53, %p54
    %p56 = scmp.ne.s32.totalorder %s44, %s45
    %p57 = scmp.eq.s32.totalorder %s14, 1
    %p58 = por %p56, %p57
    %p60 = scmp.ne.s32.totalorder %s45, %s59
    %p61 = scmp.eq.s32.totalorder %s14, 0
    %p62 = por %p60, %p61
    %s63 = ssub.s32 %s8, %s15
    %p64 = scmp.eq.s32.totalorder %s63, 0
    %s66 = sadd.s32 %s65, 1
    %s67 = scalar_select %p64, %s65, %s66
    %p70 = pneg %p64
    %p71 = scmp.eq.s32.totalorder %s8, 1
    %p72 = por %p70, %p71
    %p73 = scmp.ne.s32.totalorder %s65, %s68
    %p74 = scmp.eq.s32.totalorder %s8, 0
    %p75 = por %p73, %p74
    %p76 = scmp.ne.s32.totalorder %s65, %s68
    %p77 = scmp.eq.s32.totalorder %s13, 1
    %p78 = por %p76, %p77
    %p79 = scmp.ne.s32.totalorder %s68, %s69
    %p80 = scmp.eq.s32.totalorder %s13, 0
    %p81 = por %p79, %p80
    %p82 = scmp.ne.s32.totalorder %s68, %s69
    %p83 = scmp.eq.s32.totalorder %s14, 1
    %p84 = por %p82, %p83
    %p86 = scmp.ne.s32.totalorder %s69, %s85
    %p87 = scmp.eq.s32.totalorder %s14, 0
    %p88 = por %p86, %p87
    %p89 = scmp.le.s32.totalorder 1, %s8
    %p90 = scmp.lt.s32.totalorder %s8, 3
    %p91 = pnand %p89, %p90
    %p92 = pneg %p91
    // Predicated region
    $region9: #{_lambda_.20} parent=5 // pred_check
      _
    $region10: #{_lambda_.20} parent=5 // pred_check_branch
      %94 = sbr.rel (%p91) target = $region12
    $region11: #{_lambda_.20} parent=5 // pred_region
      %s95 = ssub.s32 %s8, 1
      // Predicated region
      $region13: #{_lambda_.20} parent=11 // pred_check
        %p96 = pneg %p55
      $region14: #{_lambda_.20} parent=11 // pred_check_branch
        %98 = sbr.rel (%p96) target = $region16
      $region15: #{_lambda_.20} parent=11 // pred_region
        _
      $region16: #{_lambda_.20} parent=11 // pred_fallthru
        _
    $region12: #{_lambda_.20} parent=5 // pred_fallthru
      _
    %p99 = scmp.lt.s32.totalorder %s8, 2
    // Predicated region
    $region17: #{_lambda_.20} parent=5 // pred_check
      %p100 = pneg %p99
    $region18: #{_lambda_.20} parent=5 // pred_check_branch
      %102 = sbr.rel (%p100) target = $region20
    $region19: #{_lambda_.20} parent=5 // pred_region
      // Predicated region
      $region21: #{_lambda_.20} parent=19 // pred_check
        %p103 = pneg %p28
      $region22: #{_lambda_.20} parent=19 // pred_check_branch
        %105 = sbr.rel (%p103) target = $region24
      $region23: #{_lambda_.20} parent=19 // pred_region
        %s106 = smul.u32 2, %s8
        %p107 = scmp.lt.s32.totalorder %s106, 3
        %s108 = scalar_select %p107, %s106, 3
        %s109 = smul.addr %s108, 2
        %s110 = smul.addr %s109, 4
        %s111 = scalar_lea.vmem %s0, %s110
        %s112 = smul.u32 2, %s8
      $region24: #{_lambda_.20} parent=19 // pred_fallthru
        _
    $region20: #{_lambda_.20} parent=5 // pred_fallthru
      _
    %p113 = scmp.le.s32.totalorder 1, %s8
    %p114 = scmp.lt.s32.totalorder %s8, 3
    %p115 = pnand %p113, %p114
    %p116 = pneg %p115
    // Predicated region
    $region25: #{_lambda_.20} parent=5 // pred_check
      _
    $region26: #{_lambda_.20} parent=5 // pred_check_branch
      %118 = sbr.rel (%p115) target = $region28
    $region27: #{_lambda_.20} parent=5 // pred_region
      %s119 = ssub.s32 %s8, 1
      %s120 = smul.u32 2, %s13
      %p121 = scmp.lt.s32.totalorder %s120, 3
      %s122 = scalar_select %p121, %s120, 3
      %s123 = smul.addr %s122, 2
      %s124 = smul.addr %s123, 4
      %s125 = scalar_lea.vmem %s0, %s124
      %p126 = pneg %p34
      %p127 = pneg %p31
      %p128 = pneg %p55
      %p129 = pneg %p52
      %p130 = pneg %p81
      %p131 = pneg %p78
      %s132 = smul.u32 2, %s13
      %p133 = scmp.lt.s32.totalorder %s132, 3
      %s134 = scalar_select %p133, %s132, 3
      %s135 = smul.addr %s134, 4
      %s136 = scalar_lea.vmem %s2, %s135
      %s137 = smul.u32 2, %s13
      %p138 = scmp.lt.s32.totalorder %s137, 3
      %s139 = scalar_select %p138, %s137, 3
      %s140 = smul.addr %s139, 2
      %s141 = smul.addr %s140, 4
      %s142 = scalar_lea.vmem %s0, %s141
      %s143 = smul.u32 2, %s13
      %s144 = smul.u32 2, %s13
      %p145 = scmp.lt.s32.totalorder %s144, 3
      %s146 = scalar_select %p145, %s144, 3
      %s147 = smul.addr %s146, 4
      %s148 = scalar_lea.vmem %s2, %s147
      %s149 = smul.u32 2, %s13
      %v151 = vld [vmem:[%s142] sm:$0x33]
      %v152 = vld [vmem:[%s142 + $0x8] sm:$0x33]
      %v156 = vunpack.c.l.s4 1983009808
      %v157 = vunpack.c.0.s8 %v156
      %v158 = vlaneseq
      %v159 = vshrl.u32 %v158, 7
      %v160 = vsub.s32 %v157, %v159
      %v161 = vrot.slane %v151, %v160
      %v163 = vunpack.c.l.s4 1983009808
      %v164 = vunpack.c.0.s8 %v163
      %v165 = vlaneseq
      %v166 = vshrl.u32 %v165, 7
      %v167 = vsub.s32 %v164, %v166
      %v168 = vrot.slane %v152, %v167
      %v169 = vld [vmem:[%s1] sm:$0xf]
      %v170 = vld [vmem:[%s1 + $0x4] sm:$0xf]
      %v171 = vld [vmem:[%s1 + $0x8] sm:$0xf]
      %v172 = vld [vmem:[%s1 + $0xc] sm:$0xf]
      %v173 = vld [vmem:[%s1 + $0x10] sm:$0xf]
      %v174 = vld [vmem:[%s1 + $0x14] sm:$0xf]
      %v175 = vld [vmem:[%s1 + $0x18] sm:$0xf]
      %v176 = vld [vmem:[%s1 + $0x1c] sm:$0xf]
      %v177 = vld [vmem:[%s1 + $0x20] sm:$0xf]
      %v178 = vld [vmem:[%s1 + $0x24] sm:$0xf]
      %v179 = vld [vmem:[%s1 + $0x28] sm:$0xf]
      %v180 = vld [vmem:[%s1 + $0x2c] sm:$0xf]
      %v181 = vld [vmem:[%s1 + $0x30] sm:$0xf]
      %v182 = vld [vmem:[%s1 + $0x34] sm:$0xf]
      %v183 = vld [vmem:[%s1 + $0x38] sm:$0xf]
      %v184 = vld [vmem:[%s1 + $0x3c] sm:$0xf]
      %v185 = vld [vmem:[%s1 + $0x40] sm:$0xf]
      %v186 = vld [vmem:[%s1 + $0x44] sm:$0xf]
      %v187 = vld [vmem:[%s1 + $0x48] sm:$0xf]
      %v188 = vld [vmem:[%s1 + $0x4c] sm:$0xf]
      %v189 = vld [vmem:[%s1 + $0x50] sm:$0xf]
      %v190 = vld [vmem:[%s1 + $0x54] sm:$0xf]
      %v191 = vld [vmem:[%s1 + $0x58] sm:$0xf]
      %v192 = vld [vmem:[%s1 + $0x5c] sm:$0xf]
      %v193 = vld [vmem:[%s1 + $0x60] sm:$0xf]
      %v194 = vld [vmem:[%s1 + $0x64] sm:$0xf]
      %v195 = vld [vmem:[%s1 + $0x68] sm:$0xf]
      %v196 = vld [vmem:[%s1 + $0x6c] sm:$0xf]
      %v197 = vld [vmem:[%s1 + $0x70] sm:$0xf]
      %v198 = vld [vmem:[%s1 + $0x74] sm:$0xf]
      %v199 = vld [vmem:[%s1 + $0x78] sm:$0xf]
      %v200 = vld [vmem:[%s1 + $0x7c] sm:$0xf]
      %v201 = vld [vmem:[%s142] sm:$0x77]
      %v202 = vld [vmem:[%s142 + $0x8] sm:$0x77]
      %v206 = vunpack.c.l.s4 1983009808
      %v207 = vunpack.c.0.s8 %v206
      %v208 = vlaneseq
      %v209 = vshrl.u32 %v208, 7
      %v210 = vsub.s32 %v207, %v209
      %v211 = vrot.slane %v201, %v210
      %v212 = vcombine.high %v211, %v211
      %v214 = vunpack.c.l.s4 1983009808
      %v215 = vunpack.c.0.s8 %v214
      %v216 = vlaneseq
      %v217 = vshrl.u32 %v216, 7
      %v218 = vsub.s32 %v215, %v217
      %v219 = vrot.slane %v202, %v218
      %v220 = vcombine.high %v219, %v219
      %vm221 = vsmask.f32 1280
      %vm222 = vsmask.f32 3336
      %vm223 = vmor %vm221, %vm222
      %vm224 = vsmask.f32 5392
      %vm225 = vmor %vm223, %vm224
      %vm226 = vsmask.f32 7448
      %vm227 = vmor %vm225, %vm226
      %v229 = vshrl.u32 %v211, 16
      %v231 = vrot.slane %v229, 6
      %v232 = vshll.u32 %v211, 16
      %v234 = vrot.slane %v232, 7
      %v235 = vor.u32 %v231, %v234
      %v236 = vrot.slane %v235, 2
      %v238 = vshll.u32 %v212, 16
      %v240 = vrot.slane %v238, 7
      %v241 = vsel %vm227, %v236, %v240
      %v243 = vshrl.u32 %v219, 16
      %v245 = vrot.slane %v243, 6
      %v246 = vshll.u32 %v219, 16
      %v248 = vrot.slane %v246, 7
      %v249 = vor.u32 %v245, %v248
      %v250 = vrot.slane %v249, 2
      %v252 = vshll.u32 %v220, 16
      %v254 = vrot.slane %v252, 7
      %v255 = vsel %vm227, %v250, %v254
      %s256 = scalar_lea.vmem %s1, 128
      %v257 = vld [vmem:[%s256] sm:$0xf]
      %v258 = vld [vmem:[%s256 + $0x4] sm:$0xf]
      %v259 = vld [vmem:[%s256 + $0x8] sm:$0xf]
      %v260 = vld [vmem:[%s256 + $0xc] sm:$0xf]
      %v261 = vld [vmem:[%s256 + $0x10] sm:$0xf]
      %v262 = vld [vmem:[%s256 + $0x14] sm:$0xf]
      %v263 = vld [vmem:[%s256 + $0x18] sm:$0xf]
      %v264 = vld [vmem:[%s256 + $0x1c] sm:$0xf]
      %v265 = vld [vmem:[%s256 + $0x20] sm:$0xf]
      %v266 = vld [vmem:[%s256 + $0x24] sm:$0xf]
      %v267 = vld [vmem:[%s256 + $0x28] sm:$0xf]
      %v268 = vld [vmem:[%s256 + $0x2c] sm:$0xf]
      %v269 = vld [vmem:[%s256 + $0x30] sm:$0xf]
      %v270 = vld [vmem:[%s256 + $0x34] sm:$0xf]
      %v271 = vld [vmem:[%s256 + $0x38] sm:$0xf]
      %v272 = vld [vmem:[%s256 + $0x3c] sm:$0xf]
      %v273 = vld [vmem:[%s256 + $0x40] sm:$0xf]
      %v274 = vld [vmem:[%s256 + $0x44] sm:$0xf]
      %v275 = vld [vmem:[%s256 + $0x48] sm:$0xf]
      %v276 = vld [vmem:[%s256 + $0x4c] sm:$0xf]
      %v277 = vld [vmem:[%s256 + $0x50] sm:$0xf]
      %v278 = vld [vmem:[%s256 + $0x54] sm:$0xf]
      %v279 = vld [vmem:[%s256 + $0x58] sm:$0xf]
      %v280 = vld [vmem:[%s256 + $0x5c] sm:$0xf]
      %v281 = vld [vmem:[%s256 + $0x60] sm:$0xf]
      %v282 = vld [vmem:[%s256 + $0x64] sm:$0xf]
      %v283 = vld [vmem:[%s256 + $0x68] sm:$0xf]
      %v284 = vld [vmem:[%s256 + $0x6c] sm:$0xf]
      %v285 = vld [vmem:[%s256 + $0x70] sm:$0xf]
      %v286 = vld [vmem:[%s256 + $0x74] sm:$0xf]
      %v287 = vld [vmem:[%s256 + $0x78] sm:$0xf]
      %v288 = vld [vmem:[%s256 + $0x7c] sm:$0xf]
      %v289 = vcombine.low %v241, %v255
      %v291 = vunpack.c.l.s4 1983009808
      %v292 = vunpack.c.0.s8 %v291
      %v293 = vlaneseq
      %v294 = vshrl.u32 %v293, 7
      %v295 = vsub.s32 %v292, %v294
      %v296 = vrot.slane %v289, %v295
      %v297 = vcombine.high %v296, %v296
      %v332 = vunpack.c.l.b16 %v257
      %v333 = vunpack.c.l.b16 %v258
      %v334 = vunpack.c.l.b16 %v259
      %v335 = vunpack.c.l.b16 %v260
      %v336 = vunpack.c.l.b16 %v261
      %v337 = vunpack.c.l.b16 %v262
      %v338 = vunpack.c.l.b16 %v263
      %v339 = vunpack.c.l.b16 %v264
      %v340 = vunpack.c.l.b16 %v265
      %v341 = vunpack.c.l.b16 %v266
      %v342 = vunpack.c.l.b16 %v267
      %v343 = vunpack.c.l.b16 %v268
      %v344 = vunpack.c.l.b16 %v269
      %v345 = vunpack.c.l.b16 %v270
      %v346 = vunpack.c.l.b16 %v271
      %v347 = vunpack.c.l.b16 %v272
      %v348 = vunpack.c.l.b16 %v273
      %v349 = vunpack.c.l.b16 %v274
      %v350 = vunpack.c.l.b16 %v275
      %v351 = vunpack.c.l.b16 %v276
      %v352 = vunpack.c.l.b16 %v277
      %v353 = vunpack.c.l.b16 %v278
      %v354 = vunpack.c.l.b16 %v279
      %v355 = vunpack.c.l.b16 %v280
      %v356 = vunpack.c.l.b16 %v281
      %v357 = vunpack.c.l.b16 %v282
      %v358 = vunpack.c.l.b16 %v283
      %v359 = vunpack.c.l.b16 %v284
      %v360 = vunpack.c.l.b16 %v285
      %v361 = vunpack.c.l.b16 %v286
      %v362 = vunpack.c.l.b16 %v287
      %v363 = vunpack.c.l.b16 %v288
      %v364 = vpack.c.b16 %v333, %v332
      %v365 = vpack.c.b16 %v335, %v334
      %v366 = vpack.c.b16 %v337, %v336
      %v367 = vpack.c.b16 %v339, %v338
      %v368 = vpack.c.b16 %v341, %v340
      %v369 = vpack.c.b16 %v343, %v342
      %v370 = vpack.c.b16 %v345, %v344
      %v371 = vpack.c.b16 %v347, %v346
      %v372 = vpack.c.b16 %v349, %v348
      %v373 = vpack.c.b16 %v351, %v350
      %v374 = vpack.c.b16 %v353, %v352
      %v375 = vpack.c.b16 %v355, %v354
      %v376 = vpack.c.b16 %v357, %v356
      %v377 = vpack.c.b16 %v359, %v358
      %v378 = vpack.c.b16 %v361, %v360
      %v379 = vpack.c.b16 %v363, %v362
      %396 = vmatprep.subr.bf16.mxu0 0
      %397 = vmatpush1.bf16.msra.mxu0 %v371
      %398 = vmatprep.subr.bf16.mxu0 0
      %399 = vmatpush1.bf16.msra.mxu0 %v370
      %400 = vmatprep.subr.bf16.mxu0 0
      %401 = vmatpush1.bf16.msra.mxu0 %v369
      %402 = vmatprep.subr.bf16.mxu0 0
      %403 = vmatpush1.bf16.msra.mxu0 %v368
      %404 = vmatprep.subr.bf16.mxu0 0
      %405 = vmatpush1.bf16.msra.mxu0 %v367
      %406 = vmatprep.subr.bf16.mxu0 0
      %407 = vmatpush1.bf16.msra.mxu0 %v366
      %408 = vmatprep.subr.bf16.mxu0 0
      %409 = vmatpush1.bf16.msra.mxu0 %v365
      %410 = vmatprep.subr.bf16.mxu0 0
      %411 = vmatpush1.bf16.msra.mxu0 %v364
      %412 = vmatprep.subr.bf16.mxu0 0
      %413 = vmatpush2.bf16.msra.mxu0 %v379
      %414 = vmatprep.subr.bf16.mxu0 0
      %415 = vmatpush2.bf16.msra.mxu0 %v378
      %416 = vmatprep.subr.bf16.mxu0 0
      %417 = vmatpush2.bf16.msra.mxu0 %v377
      %418 = vmatprep.subr.bf16.mxu0 0
      %419 = vmatpush2.bf16.msra.mxu0 %v376
      %420 = vmatprep.subr.bf16.mxu0 0
      %421 = vmatpush2.bf16.msra.mxu0 %v375
      %422 = vmatprep.subr.bf16.mxu0 0
      %423 = vmatpush2.bf16.msra.mxu0 %v374
      %424 = vmatprep.subr.bf16.mxu0 0
      %425 = vmatpush2.bf16.msra.mxu0 %v373
      %426 = vmatprep.subr.bf16.mxu0 0
      %427 = vmatpush2.bf16.msra.mxu0 %v372
      %428 = vmatprep.mubr.bf16.mxu0 %v297
      %429 = vmatmul.mubr.bf16.gmra.mxu0 %v296
      %v430 = vpop.f32.mrf.mxu0
      %v431 = vadd.f32 0.0, %v430
      %v432 = vpop.f32.mrf.mxu0
      %v433 = vpop.f32.mrf.mxu0
      %v434 = vpop.f32.mrf.mxu0
      %435 = vdwg.mxu0
      %v436 = vcombine.low %v161, %v168
      %v438 = vunpack.c.l.s4 1983009808
      %v439 = vunpack.c.0.s8 %v438
      %v440 = vlaneseq
      %v441 = vshrl.u32 %v440, 7
      %v442 = vsub.s32 %v439, %v441
      %v443 = vrot.slane %v436, %v442
      %v444 = vcombine.high %v443, %v443
      %v479 = vunpack.c.l.b16 %v169
      %v480 = vunpack.c.l.b16 %v170
      %v481 = vunpack.c.l.b16 %v171
      %v482 = vunpack.c.l.b16 %v172
      %v483 = vunpack.c.l.b16 %v173
      %v484 = vunpack.c.l.b16 %v174
      %v485 = vunpack.c.l.b16 %v175
      %v486 = vunpack.c.l.b16 %v176
      %v487 = vunpack.c.l.b16 %v177
      %v488 = vunpack.c.l.b16 %v178
      %v489 = vunpack.c.l.b16 %v179
      %v490 = vunpack.c.l.b16 %v180
      %v491 = vunpack.c.l.b16 %v181
      %v492 = vunpack.c.l.b16 %v182
      %v493 = vunpack.c.l.b16 %v183
      %v494 = vunpack.c.l.b16 %v184
      %v495 = vunpack.c.l.b16 %v185
      %v496 = vunpack.c.l.b16 %v186
      %v497 = vunpack.c.l.b16 %v187
      %v498 = vunpack.c.l.b16 %v188
      %v499 = vunpack.c.l.b16 %v189
      %v500 = vunpack.c.l.b16 %v190
      %v501 = vunpack.c.l.b16 %v191
      %v502 = vunpack.c.l.b16 %v192
      %v503 = vunpack.c.l.b16 %v193
      %v504 = vunpack.c.l.b16 %v194
      %v505 = vunpack.c.l.b16 %v195
      %v506 = vunpack.c.l.b16 %v196
      %v507 = vunpack.c.l.b16 %v197
      %v508 = vunpack.c.l.b16 %v198
      %v509 = vunpack.c.l.b16 %v199
      %v510 = vunpack.c.l.b16 %v200
      %v511 = vpack.c.b16 %v480, %v479
      %v512 = vpack.c.b16 %v482, %v481
      %v513 = vpack.c.b16 %v484, %v483
      %v514 = vpack.c.b16 %v486, %v485
      %v515 = vpack.c.b16 %v488, %v487
      %v516 = vpack.c.b16 %v490, %v489
      %v517 = vpack.c.b16 %v492, %v491
      %v518 = vpack.c.b16 %v494, %v493
      %v519 = vpack.c.b16 %v496, %v495
      %v520 = vpack.c.b16 %v498, %v497
      %v521 = vpack.c.b16 %v500, %v499
      %v522 = vpack.c.b16 %v502, %v501
      %v523 = vpack.c.b16 %v504, %v503
      %v524 = vpack.c.b16 %v506, %v505
      %v525 = vpack.c.b16 %v508, %v507
      %v526 = vpack.c.b16 %v510, %v509
      %543 = vmatprep.subr.bf16.mxu0 0
      %544 = vmatpush1.bf16.msra.mxu0 %v518
      %545 = vmatprep.subr.bf16.mxu0 0
      %546 = vmatpush1.bf16.msra.mxu0 %v517
      %547 = vmatprep.subr.bf16.mxu0 0
      %548 = vmatpush1.bf16.msra.mxu0 %v516
      %549 = vmatprep.subr.bf16.mxu0 0
      %550 = vmatpush1.bf16.msra.mxu0 %v515
      %551 = vmatprep.subr.bf16.mxu0 0
      %552 = vmatpush1.bf16.msra.mxu0 %v514
      %553 = vmatprep.subr.bf16.mxu0 0
      %554 = vmatpush1.bf16.msra.mxu0 %v513
      %555 = vmatprep.subr.bf16.mxu0 0
      %556 = vmatpush1.bf16.msra.mxu0 %v512
      %557 = vmatprep.subr.bf16.mxu0 0
      %558 = vmatpush1.bf16.msra.mxu0 %v511
      %559 = vmatprep.subr.bf16.mxu0 0
      %560 = vmatpush2.bf16.msra.mxu0 %v526
      %561 = vmatprep.subr.bf16.mxu0 0
      %562 = vmatpush2.bf16.msra.mxu0 %v525
      %563 = vmatprep.subr.bf16.mxu0 0
      %564 = vmatpush2.bf16.msra.mxu0 %v524
      %565 = vmatprep.subr.bf16.mxu0 0
      %566 = vmatpush2.bf16.msra.mxu0 %v523
      %567 = vmatprep.subr.bf16.mxu0 0
      %568 = vmatpush2.bf16.msra.mxu0 %v522
      %569 = vmatprep.subr.bf16.mxu0 0
      %570 = vmatpush2.bf16.msra.mxu0 %v521
      %571 = vmatprep.subr.bf16.mxu0 0
      %572 = vmatpush2.bf16.msra.mxu0 %v520
      %573 = vmatprep.subr.bf16.mxu0 0
      %574 = vmatpush2.bf16.msra.mxu0 %v519
      %575 = vmatprep.mubr.bf16.mxu0 %v444
      %576 = vmatmul.mubr.bf16.gmra.mxu0 %v443
      %v577 = vpop.f32.mrf.mxu0
      %v578 = vadd.f32 %v431, %v577
      %v579 = vpop.f32.mrf.mxu0
      %v580 = vpop.f32.mrf.mxu0
      %v581 = vpop.f32.mrf.mxu0
      %582 = vdwg.mxu0
      %v584 = vcombine.high %v578, %v578
      %vm586 = vcmask 1043456
      %v587 = vsel %vm586, %v578, 0.0
      %588 = vadd.xlane.f32.xlu0 %v587
      %v589 = vpop.xlane.xlu0 %588
      %v590 = vsel %vm586, %v584, 0.0
      %591 = vadd.xlane.f32.xlu0 %v590
      %v592 = vpop.xlane.xlu0 %591
      %v593 = vsel %vm586, %v589, 0.0
      %v594 = vrot.slane %v593, 4
      %v595 = vadd.f32 %v593, %v594
      %v596 = vrot.slane %v595, 2
      %v597 = vadd.f32 %v595, %v596
      %v598 = vrot.slane %v597, 1
      %v599 = vadd.f32 %v597, %v598
      %v600 = vsel %vm586, %v592, 0.0
      %v601 = vrot.slane %v600, 4
      %v602 = vadd.f32 %v600, %v601
      %v603 = vrot.slane %v602, 2
      %v604 = vadd.f32 %v602, %v603
      %v605 = vrot.slane %v604, 1
      %v606 = vadd.f32 %v604, %v605
      %v607 = vmul.f32 %v578, %v578
      %v608 = vmul.f32 %v584, %v584
      %v609 = vsel %vm586, %v607, 0.0
      %610 = vadd.xlane.f32.xlu0 %v609
      %v611 = vpop.xlane.xlu0 %610
      %v612 = vsel %vm586, %v608, 0.0
      %613 = vadd.xlane.f32.xlu0 %v612
      %v614 = vpop.xlane.xlu0 %613
      %v615 = vsel %vm586, %v611, 0.0
      %v616 = vrot.slane %v615, 4
      %v617 = vadd.f32 %v615, %v616
      %v618 = vrot.slane %v617, 2
      %v619 = vadd.f32 %v617, %v618
      %v620 = vrot.slane %v619, 1
      %v621 = vadd.f32 %v619, %v620
      %v622 = vsel %vm586, %v614, 0.0
      %v623 = vrot.slane %v622, 4
      %v624 = vadd.f32 %v622, %v623
      %v625 = vrot.slane %v624, 2
      %v626 = vadd.f32 %v624, %v625
      %v627 = vrot.slane %v626, 1
      %v628 = vadd.f32 %v626, %v627
      %v629 = vmul.f32 %v599, 0.0078125
      %v630 = vmul.f32 %v606, 0.0078125
      %v631 = vmul.f32 %v621, 0.0078125
      %v632 = vmul.f32 %v628, 0.0078125
      %v633 = vmul.f32 %v629, %v629
      %v634 = vmul.f32 %v630, %v630
      %v635 = vsub.f32 %v631, %v633
      %v636 = vsub.f32 %v632, %v634
      %v637 = vsub.f32 %v578, %v629
      %v638 = vsub.f32 %v584, %v630
      %v639 = vadd.f32 %v635, 1e-05
      %v640 = vadd.f32 %v636, 1e-05
      %v641 = vrsqrt.pop %v639
      %v642 = vrsqrt.pop %v640
      %v643 = vmul.f32 %v637, %v641
      %v644 = vmul.f32 %v638, %v642
      %v645 = vlaneseq
      %v646 = vand.u32 %v645, 127
      %vm647 = vcmp.lt.s32.totalorder %v646, 32
      %v648 = vsel %vm647, %v643, 0.0
      %v649 = vsel %vm647, %v644, 0.0
      %v650 = vmax.f32 %v648, 0.0
      %v651 = vmax.f32 %v649, 0.0
      %vm652 = vcmask 1040384
      %vm653 = vsmask.f32 256
      %vm654 = vmand %vm652, %vm653
      %v655 = vld [vmem:[%s148] sm:$0x1]
      %v656 = vsel %vm654, 0, %v655
      %657 = vst [vmem:[%s148] sm:$0x1] %v656
      %v658 = vld [vmem:[%s148 + $0x4] sm:$0x1]
      %v659 = vsel %vm654, 0, %v658
      %660 = vst [vmem:[%s148 + $0x4] sm:$0x1] %v659
      %vm661 = vcmask 1042434
      %vm662 = vsmask.f32 7946
      %vm663 = vmand %vm661, %vm662
      %v664 = vld [vmem:[%s148] sm:$0x4]
      %v665 = vsel %vm663, 0, %v664
      %666 = vst [vmem:[%s148] sm:$0x4] %v665
      %v667 = vld [vmem:[%s148 + $0x4] sm:$0x4]
      %v668 = vsel %vm663, 0, %v667
      %669 = vst [vmem:[%s148 + $0x4] sm:$0x4] %v668
      %v670 = vpack.c.bf16 %v650, %v650
      %v671 = vpack.c.bf16 %v651, %v651
      %v674 = vunpack.c.l.b16 %v670
      %v675 = vunpack.c.l.b16 %v671
      %v676 = vpack.c.b16 %v674, %v674
      %v677 = vpack.c.b16 %v675, %v675
      %v679 = vshrl.u32 %v676, 16
      %v681 = vrot.slane %v679, 7
      %v682 = vshll.u32 %v676, 16
      %v684 = vor.u32 %v681, %v682
      %v686 = vshrl.u32 %v677, 16
      %v688 = vrot.slane %v686, 7
      %v689 = vshll.u32 %v677, 16
      %v691 = vor.u32 %v688, %v689
      %vm694 = vcmask 1042432
      %vm695 = vsmask.f32 2306
      %vm696 = vmand %vm694, %vm695
      %v697 = vld [vmem:[%s148] sm:$0x7]
      %v698 = vsel %vm696, %v684, %v697
      %699 = vst [vmem:[%s148] sm:$0x7] %v698
      %v700 = vld [vmem:[%s148 + $0x4] sm:$0x7]
      %v701 = vsel %vm696, %v691, %v700
      %702 = vst [vmem:[%s148 + $0x4] sm:$0x7] %v701
      %s703 = smul.u32 2, %s13
      %p704 = scmp.lt.s32.totalorder %s703, 3
      %s705 = scalar_select %p704, %s703, 3
      %s706 = smul.addr %s705, 4
      %s707 = scalar_lea.vmem %s2, %s706
      // Predicated region
      $region29: #{_lambda_.20} parent=27 // pred_check
        %p708 = pneg %p78
      $region30: #{_lambda_.20} parent=27 // pred_check_branch
        %710 = sbr.rel (%p708) target = $region32
      $region31: #{_lambda_.20} parent=27 // pred_region
        %s711 = smul.u32 2, %s13
      $region32: #{_lambda_.20} parent=27 // pred_fallthru
        _
    $region28: #{_lambda_.20} parent=5 // pred_fallthru
      _
    %p712 = scmp.le.s32.totalorder 2, %s8
    // Predicated region
    $region33: #{_lambda_.20} parent=5 // pred_check
      %p713 = pneg %p712
    $region34: #{_lambda_.20} parent=5 // pred_check_branch
      %715 = sbr.rel (%p713) target = $region36
    $region35: #{_lambda_.20} parent=5 // pred_region
      %s716 = ssub.s32 %s8, 2
      // Predicated region
      $region37: #{_lambda_.20} parent=35 // pred_check
        %p717 = pneg %p84
      $region38: #{_lambda_.20} parent=35 // pred_check_branch
        %719 = sbr.rel (%p717) target = $region40
      $region39: #{_lambda_.20} parent=35 // pred_region
        %s720 = smul.u32 2, %s14
        %p721 = scmp.lt.s32.totalorder %s720, 3
        %s722 = scalar_select %p721, %s720, 3
        %s723 = smul.addr %s722, 4
        %s724 = scalar_lea.vmem %s2, %s723
      $region40: #{_lambda_.20} parent=35 // pred_fallthru
        _
    $region36: #{_lambda_.20} parent=5 // pred_fallthru
      _
  $region6: #{_lambda_.20} parent=0 // loop_footer
    %s12 = sadd.s32 1, %s8
  $region7: #{_lambda_.20} parent=0 // loop_footer_branch
    %7 = sbr.rel target = $region3
  $region8: #{_lambda_.20} parent=0 // loop_exit
    _

// kernel: _lambda_.24
$region0: #{_lambda_.24}
  #allocation0 [shape = 'u32[]', space=smem, size = 0x4, offset = 0x4, fixed_abs, tag = 'smem constant byte address 0x4 - core index']
  #allocation1 [shape = 'u32[144,128]{1,0:T(1,128)}', space=vmem, size = 0x12000, scoped, tag = 'internal scratch']
  %s0 = inlined_call_operand.vmem [shape: bf16[4,3,256], index: 0, kind: input, shape index: {}]
  %s1 = inlined_call_operand.vmem [shape: bf16[1,256,128], index: 1, kind: input, shape index: {}]
  %s2 = inlined_call_operand.vmem [shape: bf16[4,2,128], index: 2, kind: output, shape index: {}]
  %s3 = sld [smem:[#allocation0]]
  $region41: #{_lambda_.24} parent=0
    _
  %s5 = ssub.s32 1, %s3
  %s6 = scalar_select 0, %s5, %s3
  loop: start=0, step=1, limit=4
  $region2: #{_lambda_.24} parent=0 // loop_pre_header
    _
  $region3: #{_lambda_.24} parent=0 // loop_header
    %s8 = sphi 0, %s12
    %p9 = scmp.ge.s32.totalorder %s8, 4
    %s18 = sphi 0, %s20
    %s21 = sphi 0, %s18
    %s22 = sphi 0, %s21
    %s38 = sphi 0, %s22
    %s42 = sphi 0, %s42
    %s44 = sphi 0, %s42
    %s45 = sphi 0, %s44
    %s59 = sphi 0, %s45
    %s65 = sphi 0, %s67
    %s68 = sphi 0, %s65
    %s69 = sphi 0, %s68
    %s85 = sphi 0, %s69
  $region4: #{_lambda_.24} parent=0 // loop_header_branch
    %11 = sbr.rel (%p9) target = $region8
  $region5: #{_lambda_.24} parent=0 // loop_body
    %s13 = ssub.s32 %s8, 1
    %s14 = ssub.s32 %s8, 2
    %s15 = sadd.s32 %s8, 1
    %s16 = ssub.s32 %s8, %s15
    %p17 = scmp.eq.s32.totalorder %s16, 0
    %s19 = sadd.s32 %s18, 1
    %s20 = scalar_select %p17, %s18, %s19
    %p23 = pneg %p17
    %p24 = scmp.eq.s32.totalorder %s8, 1
    %p25 = por %p23, %p24
    %p26 = scmp.ne.s32.totalorder %s18, %s21
    %p27 = scmp.eq.s32.totalorder %s8, 0
    %p28 = por %p26, %p27
    %p29 = scmp.ne.s32.totalorder %s18, %s21
    %p30 = scmp.eq.s32.totalorder %s13, 1
    %p31 = por %p29, %p30
    %p32 = scmp.ne.s32.totalorder %s21, %s22
    %p33 = scmp.eq.s32.totalorder %s13, 0
    %p34 = por %p32, %p33
    %p35 = scmp.ne.s32.totalorder %s21, %s22
    %p36 = scmp.eq.s32.totalorder %s14, 1
    %p37 = por %p35, %p36
    %p39 = scmp.ne.s32.totalorder %s22, %s38
    %p40 = scmp.eq.s32.totalorder %s14, 0
    %p41 = por %p39, %p40
    %s43 = sadd.s32 %s42, 1
    %p46 = scmp.eq.s32.totalorder %s8, 1
    %p47 = scmp.ne.s32.totalorder %s42, %s44
    %p48 = scmp.eq.s32.totalorder %s8, 0
    %p49 = por %p47, %p48
    %p50 = scmp.ne.s32.totalorder %s42, %s44
    %p51 = scmp.eq.s32.totalorder %s13, 1
    %p52 = por %p50, %p51
    %p53 = scmp.ne.s32.totalorder %s44, %s45
    %p54 = scmp.eq.s32.totalorder %s13, 0
    %p55 = por %p53, %p54
    %p56 = scmp.ne.s32.totalorder %s44, %s45
    %p57 = scmp.eq.s32.totalorder %s14, 1
    %p58 = por %p56, %p57
    %p60 = scmp.ne.s32.totalorder %s45, %s59
    %p61 = scmp.eq.s32.totalorder %s14, 0
    %p62 = por %p60, %p61
    %s63 = ssub.s32 %s8, %s15
    %p64 = scmp.eq.s32.totalorder %s63, 0
    %s66 = sadd.s32 %s65, 1
    %s67 = scalar_select %p64, %s65, %s66
    %p70 = pneg %p64
    %p71 = scmp.eq.s32.totalorder %s8, 1
    %p72 = por %p70, %p71
    %p73 = scmp.ne.s32.totalorder %s65, %s68
    %p74 = scmp.eq.s32.totalorder %s8, 0
    %p75 = por %p73, %p74
    %p76 = scmp.ne.s32.totalorder %s65, %s68
    %p77 = scmp.eq.s32.totalorder %s13, 1
    %p78 = por %p76, %p77
    %p79 = scmp.ne.s32.totalorder %s68, %s69
    %p80 = scmp.eq.s32.totalorder %s13, 0
    %p81 = por %p79, %p80
    %p82 = scmp.ne.s32.totalorder %s68, %s69
    %p83 = scmp.eq.s32.totalorder %s14, 1
    %p84 = por %p82, %p83
    %p86 = scmp.ne.s32.totalorder %s69, %s85
    %p87 = scmp.eq.s32.totalorder %s14, 0
    %p88 = por %p86, %p87
    %p89 = scmp.le.s32.totalorder 1, %s8
    %p90 = scmp.lt.s32.totalorder %s8, 3
    %p91 = pnand %p89, %p90
    %p92 = pneg %p91
    // Predicated region
    $region9: #{_lambda_.24} parent=5 // pred_check
      _
    $region10: #{_lambda_.24} parent=5 // pred_check_branch
      %94 = sbr.rel (%p91) target = $region12
    $region11: #{_lambda_.24} parent=5 // pred_region
      %s95 = ssub.s32 %s8, 1
      // Predicated region
      $region13: #{_lambda_.24} parent=11 // pred_check
        %p96 = pneg %p55
      $region14: #{_lambda_.24} parent=11 // pred_check_branch
        %98 = sbr.rel (%p96) target = $region16
      $region15: #{_lambda_.24} parent=11 // pred_region
        _
      $region16: #{_lambda_.24} parent=11 // pred_fallthru
        _
    $region12: #{_lambda_.24} parent=5 // pred_fallthru
      _
    %p99 = scmp.lt.s32.totalorder %s8, 2
    // Predicated region
    $region17: #{_lambda_.24} parent=5 // pred_check
      %p100 = pneg %p99
    $region18: #{_lambda_.24} parent=5 // pred_check_branch
      %102 = sbr.rel (%p100) target = $region20
    $region19: #{_lambda_.24} parent=5 // pred_region
      // Predicated region
      $region21: #{_lambda_.24} parent=19 // pred_check
        %p103 = pneg %p28
      $region22: #{_lambda_.24} parent=19 // pred_check_branch
        %105 = sbr.rel (%p103) target = $region24
      $region23: #{_lambda_.24} parent=19 // pred_region
        %s106 = smul.u32 2, %s8
        %p107 = scmp.lt.s32.totalorder %s106, 3
        %s108 = scalar_select %p107, %s106, 3
        %s109 = smul.addr %s108, 2
        %s110 = smul.addr %s109, 2
        %s111 = scalar_lea.vmem %s0, %s110
        %s112 = smul.u32 2, %s8
      $region24: #{_lambda_.24} parent=19 // pred_fallthru
        _
    $region20: #{_lambda_.24} parent=5 // pred_fallthru
      _
    %p113 = scmp.le.s32.totalorder 1, %s8
    %p114 = scmp.lt.s32.totalorder %s8, 3
    %p115 = pnand %p113, %p114
    %p116 = pneg %p115
    // Predicated region
    $region25: #{_lambda_.24} parent=5 // pred_check
      _
    $region26: #{_lambda_.24} parent=5 // pred_check_branch
      %118 = sbr.rel (%p115) target = $region28
    $region27: #{_lambda_.24} parent=5 // pred_region
      %s119 = ssub.s32 %s8, 1
      %s120 = smul.u32 2, %s13
      %p121 = scmp.lt.s32.totalorder %s120, 3
      %s122 = scalar_select %p121, %s120, 3
      %s123 = smul.addr %s122, 2
      %s124 = smul.addr %s123, 2
      %s125 = scalar_lea.vmem %s0, %s124
      %p126 = pneg %p34
      %p127 = pneg %p31
      %p128 = pneg %p55
      %p129 = pneg %p52
      %p130 = pneg %p81
      %p131 = pneg %p78
      %s132 = smul.u32 2, %s13
      %p133 = scmp.lt.s32.totalorder %s132, 3
      %s134 = scalar_select %p133, %s132, 3
      %s135 = scalar_lea.vmem %s2, %s134
      %s136 = smul.u32 2, %s13
      %p137 = scmp.lt.s32.totalorder %s136, 3
      %s138 = scalar_select %p137, %s136, 3
      %s139 = smul.addr %s138, 2
      %s140 = smul.addr %s139, 2
      %s141 = scalar_lea.vmem %s0, %s140
      %s142 = smul.u32 2, %s13
      %s143 = smul.u32 2, %s13
      %p144 = scmp.lt.s32.totalorder %s143, 3
      %s145 = scalar_select %p144, %s143, 3
      %s146 = scalar_lea.vmem %s2, %s145
      %s147 = smul.u32 2, %s13
      %v149 = vld [vmem:[%s141] sm:$0x5]
      %v150 = vld [vmem:[%s141 + $0x4] sm:$0x5]
      %v154 = vunpack.c.l.s4 1966171168
      %v155 = vunpack.c.0.s8 %v154
      %v156 = vlaneseq
      %v157 = vshrl.u32 %v156, 7
      %v158 = vsub.s32 %v155, %v157
      %v159 = vrot.slane %v149, %v158
      %v161 = vunpack.c.l.s4 1966171168
      %v162 = vunpack.c.0.s8 %v161
      %v163 = vlaneseq
      %v164 = vshrl.u32 %v163, 7
      %v165 = vsub.s32 %v162, %v164
      %v166 = vrot.slane %v150, %v165
      %v167 = vld [vmem:[%s1] sm:$0xf]
      %v168 = vld [vmem:[%s1 + $0x4] sm:$0xf]
      %v169 = vld [vmem:[%s1 + $0x8] sm:$0xf]
      %v170 = vld [vmem:[%s1 + $0xc] sm:$0xf]
      %v171 = vld [vmem:[%s1 + $0x10] sm:$0xf]
      %v172 = vld [vmem:[%s1 + $0x14] sm:$0xf]
      %v173 = vld [vmem:[%s1 + $0x18] sm:$0xf]
      %v174 = vld [vmem:[%s1 + $0x1c] sm:$0xf]
      %v175 = vld [vmem:[%s1 + $0x20] sm:$0xf]
      %v176 = vld [vmem:[%s1 + $0x24] sm:$0xf]
      %v177 = vld [vmem:[%s1 + $0x28] sm:$0xf]
      %v178 = vld [vmem:[%s1 + $0x2c] sm:$0xf]
      %v179 = vld [vmem:[%s1 + $0x30] sm:$0xf]
      %v180 = vld [vmem:[%s1 + $0x34] sm:$0xf]
      %v181 = vld [vmem:[%s1 + $0x38] sm:$0xf]
      %v182 = vld [vmem:[%s1 + $0x3c] sm:$0xf]
      %v183 = vld [vmem:[%s1 + $0x40] sm:$0xf]
      %v184 = vld [vmem:[%s1 + $0x44] sm:$0xf]
      %v185 = vld [vmem:[%s1 + $0x48] sm:$0xf]
      %v186 = vld [vmem:[%s1 + $0x4c] sm:$0xf]
      %v187 = vld [vmem:[%s1 + $0x50] sm:$0xf]
      %v188 = vld [vmem:[%s1 + $0x54] sm:$0xf]
      %v189 = vld [vmem:[%s1 + $0x58] sm:$0xf]
      %v190 = vld [vmem:[%s1 + $0x5c] sm:$0xf]
      %v191 = vld [vmem:[%s1 + $0x60] sm:$0xf]
      %v192 = vld [vmem:[%s1 + $0x64] sm:$0xf]
      %v193 = vld [vmem:[%s1 + $0x68] sm:$0xf]
      %v194 = vld [vmem:[%s1 + $0x6c] sm:$0xf]
      %v195 = vld [vmem:[%s1 + $0x70] sm:$0xf]
      %v196 = vld [vmem:[%s1 + $0x74] sm:$0xf]
      %v197 = vld [vmem:[%s1 + $0x78] sm:$0xf]
      %v198 = vld [vmem:[%s1 + $0x7c] sm:$0xf]
      %v199 = vcombine.low %v159, %v166
      %v201 = vunpack.c.l.s4 1966171168
      %v202 = vunpack.c.0.s8 %v201
      %v203 = vlaneseq
      %v204 = vshrl.u32 %v203, 7
      %v205 = vsub.s32 %v202, %v204
      %v206 = vrot.slane %v199, %v205
      %v207 = vcombine.high %v206, %v206
      %v209 = vunpack.c.l.s4 1966171168
      %v210 = vunpack.c.0.s8 %v209
      %v211 = vlaneseq
      %v212 = vshrl.u32 %v211, 7
      %v213 = vsub.s32 %v210, %v212
      %v214 = vrot.slane %v206, %v213
      %v216 = vunpack.c.l.s4 1966171168
      %v217 = vunpack.c.0.s8 %v216
      %v218 = vlaneseq
      %v219 = vshrl.u32 %v218, 7
      %v220 = vsub.s32 %v217, %v219
      %v221 = vrot.slane %v207, %v220
      %v256 = vunpack.c.l.b16 %v167
      %v257 = vunpack.c.l.b16 %v168
      %v258 = vunpack.c.l.b16 %v169
      %v259 = vunpack.c.l.b16 %v170
      %v260 = vunpack.c.l.b16 %v171
      %v261 = vunpack.c.l.b16 %v172
      %v262 = vunpack.c.l.b16 %v173
      %v263 = vunpack.c.l.b16 %v174
      %v264 = vunpack.c.l.b16 %v175
      %v265 = vunpack.c.l.b16 %v176
      %v266 = vunpack.c.l.b16 %v177
      %v267 = vunpack.c.l.b16 %v178
      %v268 = vunpack.c.l.b16 %v179
      %v269 = vunpack.c.l.b16 %v180
      %v270 = vunpack.c.l.b16 %v181
      %v271 = vunpack.c.l.b16 %v182
      %v272 = vunpack.c.l.b16 %v183
      %v273 = vunpack.c.l.b16 %v184
      %v274 = vunpack.c.l.b16 %v185
      %v275 = vunpack.c.l.b16 %v186
      %v276 = vunpack.c.l.b16 %v187
      %v277 = vunpack.c.l.b16 %v188
      %v278 = vunpack.c.l.b16 %v189
      %v279 = vunpack.c.l.b16 %v190
      %v280 = vunpack.c.l.b16 %v191
      %v281 = vunpack.c.l.b16 %v192
      %v282 = vunpack.c.l.b16 %v193
      %v283 = vunpack.c.l.b16 %v194
      %v284 = vunpack.c.l.b16 %v195
      %v285 = vunpack.c.l.b16 %v196
      %v286 = vunpack.c.l.b16 %v197
      %v287 = vunpack.c.l.b16 %v198
      %v288 = vpack.c.b16 %v257, %v256
      %v289 = vpack.c.b16 %v259, %v258
      %v290 = vpack.c.b16 %v261, %v260
      %v291 = vpack.c.b16 %v263, %v262
      %v292 = vpack.c.b16 %v265, %v264
      %v293 = vpack.c.b16 %v267, %v266
      %v294 = vpack.c.b16 %v269, %v268
      %v295 = vpack.c.b16 %v271, %v270
      %v296 = vpack.c.b16 %v273, %v272
      %v297 = vpack.c.b16 %v275, %v274
      %v298 = vpack.c.b16 %v277, %v276
      %v299 = vpack.c.b16 %v279, %v278
      %v300 = vpack.c.b16 %v281, %v280
      %v301 = vpack.c.b16 %v283, %v282
      %v302 = vpack.c.b16 %v285, %v284
      %v303 = vpack.c.b16 %v287, %v286
      %320 = vmatprep.subr.bf16.mxu0 0
      %321 = vmatpush1.bf16.msra.mxu0 %v295
      %322 = vmatprep.subr.bf16.mxu0 0
      %323 = vmatpush1.bf16.msra.mxu0 %v294
      %324 = vmatprep.subr.bf16.mxu0 0
      %325 = vmatpush1.bf16.msra.mxu0 %v293
      %326 = vmatprep.subr.bf16.mxu0 0
      %327 = vmatpush1.bf16.msra.mxu0 %v292
      %328 = vmatprep.subr.bf16.mxu0 0
      %329 = vmatpush1.bf16.msra.mxu0 %v291
      %330 = vmatprep.subr.bf16.mxu0 0
      %331 = vmatpush1.bf16.msra.mxu0 %v290
      %332 = vmatprep.subr.bf16.mxu0 0
      %333 = vmatpush1.bf16.msra.mxu0 %v289
      %334 = vmatprep.subr.bf16.mxu0 0
      %335 = vmatpush1.bf16.msra.mxu0 %v288
      %336 = vmatprep.subr.bf16.mxu0 0
      %337 = vmatpush2.bf16.msra.mxu0 %v303
      %338 = vmatprep.subr.bf16.mxu0 0
      %339 = vmatpush2.bf16.msra.mxu0 %v302
      %340 = vmatprep.subr.bf16.mxu0 0
      %341 = vmatpush2.bf16.msra.mxu0 %v301
      %342 = vmatprep.subr.bf16.mxu0 0
      %343 = vmatpush2.bf16.msra.mxu0 %v300
      %344 = vmatprep.subr.bf16.mxu0 0
      %345 = vmatpush2.bf16.msra.mxu0 %v299
      %346 = vmatprep.subr.bf16.mxu0 0
      %347 = vmatpush2.bf16.msra.mxu0 %v298
      %348 = vmatprep.subr.bf16.mxu0 0
      %349 = vmatpush2.bf16.msra.mxu0 %v297
      %350 = vmatprep.subr.bf16.mxu0 0
      %351 = vmatpush2.bf16.msra.mxu0 %v296
      %352 = vmatprep.mubr.bf16.mxu0 %v221
      %353 = vmatmul.mubr.bf16.gmra.mxu0 %v214
      %v354 = vpop.f32.mrf.mxu0
      %v355 = vadd.f32 0.0, %v354
      %v356 = vpop.f32.mrf.mxu0
      %v357 = vpop.f32.mrf.mxu0
      %v358 = vpop.f32.mrf.mxu0
      %359 = vdwg.mxu0
      %v362 = vunpack.c.l.s4 1983009808
      %v363 = vunpack.c.0.s8 %v362
      %v364 = vlaneseq
      %v365 = vshrl.u32 %v364, 7
      %v366 = vsub.s32 %v363, %v365
      %v367 = vrot.slane %v355, %v366
      %v368 = vcombine.high %v367, %v367
      %vm371 = vcmask 1041408
      %v372 = vsel %vm371, %v367, 0.0
      %373 = vadd.xlane.f32.xlu0 %v372
      %v374 = vpop.xlane.xlu0 %373
      %v375 = vsel %vm371, %v368, 0.0
      %376 = vadd.xlane.f32.xlu0 %v375
      %v377 = vpop.xlane.xlu0 %376
      %v378 = vsel %vm371, %v374, 0.0
      %v379 = vrot.slane %v378, 4
      %v380 = vadd.f32 %v378, %v379
      %v381 = vrot.slane %v380, 2
      %v382 = vadd.f32 %v380, %v381
      %v383 = vrot.slane %v382, 1
      %v384 = vadd.f32 %v382, %v383
      %v385 = vsel %vm371, %v377, 0.0
      %v386 = vrot.slane %v385, 4
      %v387 = vadd.f32 %v385, %v386
      %v388 = vrot.slane %v387, 2
      %v389 = vadd.f32 %v387, %v388
      %v390 = vrot.slane %v389, 1
      %v391 = vadd.f32 %v389, %v390
      %v392 = vmul.f32 %v367, %v367
      %v393 = vmul.f32 %v368, %v368
      %v394 = vsel %vm371, %v392, 0.0
      %395 = vadd.xlane.f32.xlu0 %v394
      %v396 = vpop.xlane.xlu0 %395
      %v397 = vsel %vm371, %v393, 0.0
      %398 = vadd.xlane.f32.xlu0 %v397
      %v399 = vpop.xlane.xlu0 %398
      %v400 = vsel %vm371, %v396, 0.0
      %v401 = vrot.slane %v400, 4
      %v402 = vadd.f32 %v400, %v401
      %v403 = vrot.slane %v402, 2
      %v404 = vadd.f32 %v402, %v403
      %v405 = vrot.slane %v404, 1
      %v406 = vadd.f32 %v404, %v405
      %v407 = vsel %vm371, %v399, 0.0
      %v408 = vrot.slane %v407, 4
      %v409 = vadd.f32 %v407, %v408
      %v410 = vrot.slane %v409, 2
      %v411 = vadd.f32 %v409, %v410
      %v412 = vrot.slane %v411, 1
      %v413 = vadd.f32 %v411, %v412
      %v414 = vmul.f32 %v384, 0.0078125
      %v415 = vmul.f32 %v391, 0.0078125
      %v416 = vmul.f32 %v406, 0.0078125
      %v417 = vmul.f32 %v413, 0.0078125
      %v418 = vmul.f32 %v414, %v414
      %v419 = vmul.f32 %v415, %v415
      %v420 = vsub.f32 %v416, %v418
      %v421 = vsub.f32 %v417, %v419
      %v422 = vsub.f32 %v367, %v414
      %v423 = vsub.f32 %v368, %v415
      %v424 = vadd.f32 %v420, 1e-05
      %v425 = vadd.f32 %v421, 1e-05
      %v426 = vrsqrt.pop %v424
      %v427 = vrsqrt.pop %v425
      %v428 = vmul.f32 %v422, %v426
      %v429 = vmul.f32 %v423, %v427
      %v430 = vlaneseq
      %v431 = vand.u32 %v430, 127
      %vm432 = vcmp.lt.s32.totalorder %v431, 64
      %v433 = vsel %vm432, %v428, 0.0
      %v434 = vsel %vm432, %v429, 0.0
      %v435 = vpack.c.bf16 %v433, %v433
      %v436 = vpack.c.bf16 %v434, %v434
      %437 = vst [vmem:[%s146] sm:$0x1] %v435
      %438 = vst [vmem:[%s146 + $0x1] sm:$0x1] %v436
      %s439 = smul.u32 2, %s13
      %p440 = scmp.lt.s32.totalorder %s439, 3
      %s441 = scalar_select %p440, %s439, 3
      %s442 = scalar_lea.vmem %s2, %s441
      // Predicated region
      $region29: #{_lambda_.24} parent=27 // pred_check
        %p443 = pneg %p78
      $region30: #{_lambda_.24} parent=27 // pred_check_branch
        %445 = sbr.rel (%p443) target = $region32
      $region31: #{_lambda_.24} parent=27 // pred_region
        %s446 = smul.u32 2, %s13
      $region32: #{_lambda_.24} parent=27 // pred_fallthru
        _
    $region28: #{_lambda_.24} parent=5 // pred_fallthru
      _
    %p447 = scmp.le.s32.totalorder 2, %s8
    // Predicated region
    $region33: #{_lambda_.24} parent=5 // pred_check
      %p448 = pneg %p447
    $region34: #{_lambda_.24} parent=5 // pred_check_branch
      %450 = sbr.rel (%p448) target = $region36
    $region35: #{_lambda_.24} parent=5 // pred_region
      %s451 = ssub.s32 %s8, 2
      // Predicated region
      $region37: #{_lambda_.24} parent=35 // pred_check
        %p452 = pneg %p84
      $region38: #{_lambda_.24} parent=35 // pred_check_branch
        %454 = sbr.rel (%p452) target = $region40
      $region39: #{_lambda_.24} parent=35 // pred_region
        %s455 = smul.u32 2, %s14
        %p456 = scmp.lt.s32.totalorder %s455, 3
        %s457 = scalar_select %p456, %s455, 3
        %s458 = scalar_lea.vmem %s2, %s457
      $region40: #{_lambda_.24} parent=35 // pred_fallthru
        _
    $region36: #{_lambda_.24} parent=5 // pred_fallthru
      _
  $region6: #{_lambda_.24} parent=0 // loop_footer
    %s12 = sadd.s32 1, %s8
  $region7: #{_lambda_.24} parent=0 // loop_footer_branch
    %7 = sbr.rel target = $region3
  $region8: #{_lambda_.24} parent=0 // loop_exit
    _

// kernel: _lambda_.22
$region0: #{_lambda_.22}
  #allocation0 [shape = 'u32[]', space=smem, size = 0x4, offset = 0x4, fixed_abs, tag = 'smem constant byte address 0x4 - core index']
  #allocation1 [shape = 'u32[144,128]{1,0:T(1,128)}', space=vmem, size = 0x12000, scoped, tag = 'internal scratch']
  %s0 = inlined_call_operand.vmem [shape: bf16[4,6,128], index: 0, kind: input, shape index: {}]
  %s1 = inlined_call_operand.vmem [shape: bf16[3,128,128], index: 1, kind: input, shape index: {}]
  %s2 = inlined_call_operand.vmem [shape: bf16[4,4,128], index: 2, kind: input, shape index: {}]
  %s3 = inlined_call_operand.vmem [shape: bf16[4,6,128], index: 3, kind: output, shape index: {}]
  %s4 = sld [smem:[#allocation0]]
  $region45: #{_lambda_.22} parent=0
    _
  %s6 = ssub.s32 1, %s4
  %s7 = scalar_select 0, %s6, %s4
  loop: start=0, step=1, limit=4
  $region2: #{_lambda_.22} parent=0 // loop_pre_header
    _
  $region3: #{_lambda_.22} parent=0 // loop_header
    %s9 = sphi 0, %s13
    %p10 = scmp.ge.s32.totalorder %s9, 4
    %s19 = sphi 0, %s21
    %s22 = sphi 0, %s19
    %s23 = sphi 0, %s22
    %s39 = sphi 0, %s23
    %s43 = sphi 0, %s43
    %s45 = sphi 0, %s43
    %s46 = sphi 0, %s45
    %s60 = sphi 0, %s46
    %s66 = sphi 0, %s68
    %s69 = sphi 0, %s66
    %s70 = sphi 0, %s69
    %s86 = sphi 0, %s70
    %s92 = sphi 0, %s94
    %s95 = sphi 0, %s92
    %s96 = sphi 0, %s95
    %s112 = sphi 0, %s96
  $region4: #{_lambda_.22} parent=0 // loop_header_branch
    %12 = sbr.rel (%p10) target = $region8
  $region5: #{_lambda_.22} parent=0 // loop_body
    %s14 = ssub.s32 %s9, 1
    %s15 = ssub.s32 %s9, 2
    %s16 = sadd.s32 %s9, 1
    %s17 = ssub.s32 %s9, %s16
    %p18 = scmp.eq.s32.totalorder %s17, 0
    %s20 = sadd.s32 %s19, 1
    %s21 = scalar_select %p18, %s19, %s20
    %p24 = pneg %p18
    %p25 = scmp.eq.s32.totalorder %s9, 1
    %p26 = por %p24, %p25
    %p27 = scmp.ne.s32.totalorder %s19, %s22
    %p28 = scmp.eq.s32.totalorder %s9, 0
    %p29 = por %p27, %p28
    %p30 = scmp.ne.s32.totalorder %s19, %s22
    %p31 = scmp.eq.s32.totalorder %s14, 1
    %p32 = por %p30, %p31
    %p33 = scmp.ne.s32.totalorder %s22, %s23
    %p34 = scmp.eq.s32.totalorder %s14, 0
    %p35 = por %p33, %p34
    %p36 = scmp.ne.s32.totalorder %s22, %s23
    %p37 = scmp.eq.s32.totalorder %s15, 1
    %p38 = por %p36, %p37
    %p40 = scmp.ne.s32.totalorder %s23, %s39
    %p41 = scmp.eq.s32.totalorder %s15, 0
    %p42 = por %p40, %p41
    %s44 = sadd.s32 %s43, 1
    %p47 = scmp.eq.s32.totalorder %s9, 1
    %p48 = scmp.ne.s32.totalorder %s43, %s45
    %p49 = scmp.eq.s32.totalorder %s9, 0
    %p50 = por %p48, %p49
    %p51 = scmp.ne.s32.totalorder %s43, %s45
    %p52 = scmp.eq.s32.totalorder %s14, 1
    %p53 = por %p51, %p52
    %p54 = scmp.ne.s32.totalorder %s45, %s46
    %p55 = scmp.eq.s32.totalorder %s14, 0
    %p56 = por %p54, %p55
    %p57 = scmp.ne.s32.totalorder %s45, %s46
    %p58 = scmp.eq.s32.totalorder %s15, 1
    %p59 = por %p57, %p58
    %p61 = scmp.ne.s32.totalorder %s46, %s60
    %p62 = scmp.eq.s32.totalorder %s15, 0
    %p63 = por %p61, %p62
    %s64 = ssub.s32 %s9, %s16
    %p65 = scmp.eq.s32.totalorder %s64, 0
    %s67 = sadd.s32 %s66, 1
    %s68 = scalar_select %p65, %s66, %s67
    %p71 = pneg %p65
    %p72 = scmp.eq.s32.totalorder %s9, 1
    %p73 = por %p71, %p72
    %p74 = scmp.ne.s32.totalorder %s66, %s69
    %p75 = scmp.eq.s32.totalorder %s9, 0
    %p76 = por %p74, %p75
    %p77 = scmp.ne.s32.totalorder %s66, %s69
    %p78 = scmp.eq.s32.totalorder %s14, 1
    %p79 = por %p77, %p78
    %p80 = scmp.ne.s32.totalorder %s69, %s70
    %p81 = scmp.eq.s32.totalorder %s14, 0
    %p82 = por %p80, %p81
    %p83 = scmp.ne.s32.totalorder %s69, %s70
    %p84 = scmp.eq.s32.totalorder %s15, 1
    %p85 = por %p83, %p84
    %p87 = scmp.ne.s32.totalorder %s70, %s86
    %p88 = scmp.eq.s32.totalorder %s15, 0
    %p89 = por %p87, %p88
    %s90 = ssub.s32 %s9, %s16
    %p91 = scmp.eq.s32.totalorder %s90, 0
    %s93 = sadd.s32 %s92, 1
    %s94 = scalar_select %p91, %s92, %s93
    %p97 = pneg %p91
    %p98 = scmp.eq.s32.totalorder %s9, 1
    %p99 = por %p97, %p98
    %p100 = scmp.ne.s32.totalorder %s92, %s95
    %p101 = scmp.eq.s32.totalorder %s9, 0
    %p102 = por %p100, %p101
    %p103 = scmp.ne.s32.totalorder %s92, %s95
    %p104 = scmp.eq.s32.totalorder %s14, 1
    %p105 = por %p103, %p104
    %p106 = scmp.ne.s32.totalorder %s95, %s96
    %p107 = scmp.eq.s32.totalorder %s14, 0
    %p108 = por %p106, %p107
    %p109 = scmp.ne.s32.totalorder %s95, %s96
    %p110 = scmp.eq.s32.totalorder %s15, 1
    %p111 = por %p109, %p110
    %p113 = scmp.ne.s32.totalorder %s96, %s112
    %p114 = scmp.eq.s32.totalorder %s15, 0
    %p115 = por %p113, %p114
    %p116 = scmp.le.s32.totalorder 1, %s9
    %p117 = scmp.lt.s32.totalorder %s9, 3
    %p118 = pnand %p116, %p117
    %p119 = pneg %p118
    // Predicated region
    $region9: #{_lambda_.22} parent=5 // pred_check
      _
    $region10: #{_lambda_.22} parent=5 // pred_check_branch
      %121 = sbr.rel (%p118) target = $region12
    $region11: #{_lambda_.22} parent=5 // pred_region
      %s122 = ssub.s32 %s9, 1
      // Predicated region
      $region13: #{_lambda_.22} parent=11 // pred_check
        %p123 = pneg %p56
      $region14: #{_lambda_.22} parent=11 // pred_check_branch
        %125 = sbr.rel (%p123) target = $region16
      $region15: #{_lambda_.22} parent=11 // pred_region
        _
      $region16: #{_lambda_.22} parent=11 // pred_fallthru
        _
    $region12: #{_lambda_.22} parent=5 // pred_fallthru
      _
    %p126 = scmp.lt.s32.totalorder %s9, 2
    // Predicated region
    $region17: #{_lambda_.22} parent=5 // pred_check
      %p127 = pneg %p126
    $region18: #{_lambda_.22} parent=5 // pred_check_branch
      %129 = sbr.rel (%p127) target = $region20
    $region19: #{_lambda_.22} parent=5 // pred_region
      // Predicated region
      $region21: #{_lambda_.22} parent=19 // pred_check
        %p130 = pneg %p29
      $region22: #{_lambda_.22} parent=19 // pred_check_branch
        %132 = sbr.rel (%p130) target = $region24
      $region23: #{_lambda_.22} parent=19 // pred_region
        %s133 = smul.u32 2, %s9
        %p134 = scmp.lt.s32.totalorder %s133, 3
        %s135 = scalar_select %p134, %s133, 3
        %s136 = smul.addr %s135, 4
        %s137 = scalar_lea.vmem %s0, %s136
        %s138 = smul.u32 2, %s9
      $region24: #{_lambda_.22} parent=19 // pred_fallthru
        _
      // Predicated region
      $region25: #{_lambda_.22} parent=19 // pred_check
        %p139 = pneg %p76
      $region26: #{_lambda_.22} parent=19 // pred_check_branch
        %141 = sbr.rel (%p139) target = $region28
      $region27: #{_lambda_.22} parent=19 // pred_region
        %s142 = smul.u32 2, %s9
        %p143 = scmp.lt.s32.totalorder %s142, 3
        %s144 = scalar_select %p143, %s142, 3
        %s145 = smul.addr %s144, 2
        %s146 = scalar_lea.vmem %s2, %s145
        %s147 = smul.u32 2, %s9
      $region28: #{_lambda_.22} parent=19 // pred_fallthru
        _
    $region20: #{_lambda_.22} parent=5 // pred_fallthru
      _
    %p148 = scmp.le.s32.totalorder 1, %s9
    %p149 = scmp.lt.s32.totalorder %s9, 3
    %p150 = pnand %p148, %p149
    %p151 = pneg %p150
    // Predicated region
    $region29: #{_lambda_.22} parent=5 // pred_check
      _
    $region30: #{_lambda_.22} parent=5 // pred_check_branch
      %153 = sbr.rel (%p150) target = $region32
    $region31: #{_lambda_.22} parent=5 // pred_region
      %s154 = ssub.s32 %s9, 1
      %s155 = smul.u32 2, %s14
      %p156 = scmp.lt.s32.totalorder %s155, 3
      %s157 = scalar_select %p156, %s155, 3
      %s158 = smul.addr %s157, 4
      %s159 = scalar_lea.vmem %s0, %s158
      %p160 = pneg %p35
      %p161 = pneg %p32
      %p162 = pneg %p56
      %p163 = pneg %p53
      %s164 = smul.u32 2, %s14
      %p165 = scmp.lt.s32.totalorder %s164, 3
      %s166 = scalar_select %p165, %s164, 3
      %s167 = smul.addr %s166, 2
      %s168 = scalar_lea.vmem %s2, %s167
      %p169 = pneg %p82
      %p170 = pneg %p79
      %p171 = pneg %p108
      %p172 = pneg %p105
      %s173 = smul.u32 2, %s14
      %p174 = scmp.lt.s32.totalorder %s173, 3
      %s175 = scalar_select %p174, %s173, 3
      %s176 = smul.addr %s175, 4
      %s177 = scalar_lea.vmem %s3, %s176
      %s178 = smul.u32 2, %s14
      %p179 = scmp.lt.s32.totalorder %s178, 3
      %s180 = scalar_select %p179, %s178, 3
      %s181 = smul.addr %s180, 4
      %s182 = scalar_lea.vmem %s0, %s181
      %s183 = smul.u32 2, %s14
      %s184 = smul.u32 2, %s14
      %p185 = scmp.lt.s32.totalorder %s184, 3
      %s186 = scalar_select %p185, %s184, 3
      %s187 = smul.addr %s186, 2
      %s188 = scalar_lea.vmem %s2, %s187
      %s189 = smul.u32 2, %s14
      %s190 = smul.u32 2, %s14
      %p191 = scmp.lt.s32.totalorder %s190, 3
      %s192 = scalar_select %p191, %s190, 3
      %s193 = smul.addr %s192, 4
      %s194 = scalar_lea.vmem %s3, %s193
      %s195 = smul.u32 2, %s14
      %v197 = vld [vmem:[%s182] sm:$0x3]
      %v198 = vld [vmem:[%s182 + $0x4] sm:$0x3]
      %v199 = vld [vmem:[%s1] sm:$0xf]
      %v200 = vld [vmem:[%s1 + $0x4] sm:$0xf]
      %v201 = vld [vmem:[%s1 + $0x8] sm:$0xf]
      %v202 = vld [vmem:[%s1 + $0xc] sm:$0xf]
      %v203 = vld [vmem:[%s1 + $0x10] sm:$0xf]
      %v204 = vld [vmem:[%s1 + $0x14] sm:$0xf]
      %v205 = vld [vmem:[%s1 + $0x18] sm:$0xf]
      %v206 = vld [vmem:[%s1 + $0x1c] sm:$0xf]
      %v207 = vld [vmem:[%s1 + $0x20] sm:$0xf]
      %v208 = vld [vmem:[%s1 + $0x24] sm:$0xf]
      %v209 = vld [vmem:[%s1 + $0x28] sm:$0xf]
      %v210 = vld [vmem:[%s1 + $0x2c] sm:$0xf]
      %v211 = vld [vmem:[%s1 + $0x30] sm:$0xf]
      %v212 = vld [vmem:[%s1 + $0x34] sm:$0xf]
      %v213 = vld [vmem:[%s1 + $0x38] sm:$0xf]
      %v214 = vld [vmem:[%s1 + $0x3c] sm:$0xf]
      %v215 = vld [vmem:[%s182] sm:$0x7]
      %v216 = vld [vmem:[%s182 + $0x4] sm:$0x7]
      %v220 = vunpack.c.l.s4 1983009808
      %v221 = vunpack.c.0.s8 %v220
      %v222 = vlaneseq
      %v223 = vshrl.u32 %v222, 7
      %v224 = vsub.s32 %v221, %v223
      %v225 = vrot.slane %v215, %v224
      %v226 = vcombine.high %v225, %v225
      %v228 = vunpack.c.l.s4 1983009808
      %v229 = vunpack.c.0.s8 %v228
      %v230 = vlaneseq
      %v231 = vshrl.u32 %v230, 7
      %v232 = vsub.s32 %v229, %v231
      %v233 = vrot.slane %v216, %v232
      %v234 = vcombine.high %v233, %v233
      %vm235 = vsmask.f32 1280
      %vm236 = vsmask.f32 3336
      %vm237 = vmor %vm235, %vm236
      %vm238 = vsmask.f32 5392
      %vm239 = vmor %vm237, %vm238
      %vm240 = vsmask.f32 7448
      %vm241 = vmor %vm239, %vm240
      %v243 = vshrl.u32 %v225, 16
      %v245 = vrot.slane %v243, 6
      %v246 = vshll.u32 %v225, 16
      %v248 = vrot.slane %v246, 7
      %v249 = vor.u32 %v245, %v248
      %v250 = vrot.slane %v249, 2
      %v252 = vshll.u32 %v226, 16
      %v254 = vrot.slane %v252, 7
      %v255 = vsel %vm241, %v250, %v254
      %v257 = vshrl.u32 %v233, 16
      %v259 = vrot.slane %v257, 6
      %v260 = vshll.u32 %v233, 16
      %v262 = vrot.slane %v260, 7
      %v263 = vor.u32 %v259, %v262
      %v264 = vrot.slane %v263, 2
      %v266 = vshll.u32 %v234, 16
      %v268 = vrot.slane %v266, 7
      %v269 = vsel %vm241, %v264, %v268
      %s270 = scalar_lea.vmem %s1, 64
      %v271 = vld [vmem:[%s270] sm:$0xf]
      %v272 = vld [vmem:[%s270 + $0x4] sm:$0xf]
      %v273 = vld [vmem:[%s270 + $0x8] sm:$0xf]
      %v274 = vld [vmem:[%s270 + $0xc] sm:$0xf]
      %v275 = vld [vmem:[%s270 + $0x10] sm:$0xf]
      %v276 = vld [vmem:[%s270 + $0x14] sm:$0xf]
      %v277 = vld [vmem:[%s270 + $0x18] sm:$0xf]
      %v278 = vld [vmem:[%s270 + $0x1c] sm:$0xf]
      %v279 = vld [vmem:[%s270 + $0x20] sm:$0xf]
      %v280 = vld [vmem:[%s270 + $0x24] sm:$0xf]
      %v281 = vld [vmem:[%s270 + $0x28] sm:$0xf]
      %v282 = vld [vmem:[%s270 + $0x2c] sm:$0xf]
      %v283 = vld [vmem:[%s270 + $0x30] sm:$0xf]
      %v284 = vld [vmem:[%s270 + $0x34] sm:$0xf]
      %v285 = vld [vmem:[%s270 + $0x38] sm:$0xf]
      %v286 = vld [vmem:[%s270 + $0x3c] sm:$0xf]
      %v287 = vcombine.low %v255, %v269
      %v289 = vunpack.c.l.s4 1983009808
      %v290 = vunpack.c.0.s8 %v289
      %v291 = vlaneseq
      %v292 = vshrl.u32 %v291, 7
      %v293 = vsub.s32 %v290, %v292
      %v294 = vrot.slane %v287, %v293
      %v312 = vunpack.c.l.b16 %v271
      %v313 = vunpack.c.l.b16 %v272
      %v314 = vunpack.c.l.b16 %v273
      %v315 = vunpack.c.l.b16 %v274
      %v316 = vunpack.c.l.b16 %v275
      %v317 = vunpack.c.l.b16 %v276
      %v318 = vunpack.c.l.b16 %v277
      %v319 = vunpack.c.l.b16 %v278
      %v320 = vunpack.c.l.b16 %v279
      %v321 = vunpack.c.l.b16 %v280
      %v322 = vunpack.c.l.b16 %v281
      %v323 = vunpack.c.l.b16 %v282
      %v324 = vunpack.c.l.b16 %v283
      %v325 = vunpack.c.l.b16 %v284
      %v326 = vunpack.c.l.b16 %v285
      %v327 = vunpack.c.l.b16 %v286
      %v328 = vpack.c.b16 %v313, %v312
      %v329 = vpack.c.b16 %v315, %v314
      %v330 = vpack.c.b16 %v317, %v316
      %v331 = vpack.c.b16 %v319, %v318
      %v332 = vpack.c.b16 %v321, %v320
      %v333 = vpack.c.b16 %v323, %v322
      %v334 = vpack.c.b16 %v325, %v324
      %v335 = vpack.c.b16 %v327, %v326
      %344 = vmatprep.subr.bf16.mxu0 0
      %345 = vmatpush1.bf16.msra.mxu0 %v335
      %346 = vmatprep.subr.bf16.mxu0 0
      %347 = vmatpush1.bf16.msra.mxu0 %v334
      %348 = vmatprep.subr.bf16.mxu0 0
      %349 = vmatpush1.bf16.msra.mxu0 %v333
      %350 = vmatprep.subr.bf16.mxu0 0
      %351 = vmatpush1.bf16.msra.mxu0 %v332
      %352 = vmatprep.subr.bf16.mxu0 0
      %353 = vmatpush1.bf16.msra.mxu0 %v331
      %354 = vmatprep.subr.bf16.mxu0 0
      %355 = vmatpush1.bf16.msra.mxu0 %v330
      %356 = vmatprep.subr.bf16.mxu0 0
      %357 = vmatpush1.bf16.msra.mxu0 %v329
      %358 = vmatprep.subr.bf16.mxu0 0
      %359 = vmatpush1.bf16.msra.mxu0 %v328
      %360 = vmatprep.subr.bf16.mxu0 0
      %361 = vmatpush2.bf16.msra.mxu0 0
      %362 = vmatprep.subr.bf16.mxu0 0
      %363 = vmatpush2.bf16.msra.mxu0 0
      %364 = vmatprep.subr.bf16.mxu0 0
      %365 = vmatpush2.bf16.msra.mxu0 0
      %366 = vmatprep.subr.bf16.mxu0 0
      %367 = vmatpush2.bf16.msra.mxu0 0
      %368 = vmatprep.subr.bf16.mxu0 0
      %369 = vmatpush2.bf16.msra.mxu0 0
      %370 = vmatprep.subr.bf16.mxu0 0
      %371 = vmatpush2.bf16.msra.mxu0 0
      %372 = vmatprep.subr.bf16.mxu0 0
      %373 = vmatpush2.bf16.msra.mxu0 0
      %374 = vmatprep.subr.bf16.mxu0 0
      %375 = vmatpush2.bf16.msra.mxu0 0
      %376 = vmatprep.mubr.bf16.mxu0 0
      %377 = vmatmul.mubr.bf16.gmra.mxu0 %v294
      %v378 = vpop.f32.mrf.mxu0
      %v379 = vadd.f32 0.0, %v378
      %v380 = vpop.f32.mrf.mxu0
      %v381 = vpop.f32.mrf.mxu0
      %v382 = vpop.f32.mrf.mxu0
      %383 = vdwg.mxu0
      %v386 = vcombine.low %v197, %v198
      %v388 = vunpack.c.l.s4 1983009808
      %v389 = vunpack.c.0.s8 %v388
      %v390 = vlaneseq
      %v391 = vshrl.u32 %v390, 7
      %v392 = vsub.s32 %v389, %v391
      %v393 = vrot.slane %v386, %v392
      %v411 = vunpack.c.l.b16 %v199
      %v412 = vunpack.c.l.b16 %v200
      %v413 = vunpack.c.l.b16 %v201
      %v414 = vunpack.c.l.b16 %v202
      %v415 = vunpack.c.l.b16 %v203
      %v416 = vunpack.c.l.b16 %v204
      %v417 = vunpack.c.l.b16 %v205
      %v418 = vunpack.c.l.b16 %v206
      %v419 = vunpack.c.l.b16 %v207
      %v420 = vunpack.c.l.b16 %v208
      %v421 = vunpack.c.l.b16 %v209
      %v422 = vunpack.c.l.b16 %v210
      %v423 = vunpack.c.l.b16 %v211
      %v424 = vunpack.c.l.b16 %v212
      %v425 = vunpack.c.l.b16 %v213
      %v426 = vunpack.c.l.b16 %v214
      %v427 = vpack.c.b16 %v412, %v411
      %v428 = vpack.c.b16 %v414, %v413
      %v429 = vpack.c.b16 %v416, %v415
      %v430 = vpack.c.b16 %v418, %v417
      %v431 = vpack.c.b16 %v420, %v419
      %v432 = vpack.c.b16 %v422, %v421
      %v433 = vpack.c.b16 %v424, %v423
      %v434 = vpack.c.b16 %v426, %v425
      %443 = vmatprep.subr.bf16.mxu0 0
      %444 = vmatpush1.bf16.msra.mxu0 %v434
      %445 = vmatprep.subr.bf16.mxu0 0
      %446 = vmatpush1.bf16.msra.mxu0 %v433
      %447 = vmatprep.subr.bf16.mxu0 0
      %448 = vmatpush1.bf16.msra.mxu0 %v432
      %449 = vmatprep.subr.bf16.mxu0 0
      %450 = vmatpush1.bf16.msra.mxu0 %v431
      %451 = vmatprep.subr.bf16.mxu0 0
      %452 = vmatpush1.bf16.msra.mxu0 %v430
      %453 = vmatprep.subr.bf16.mxu0 0
      %454 = vmatpush1.bf16.msra.mxu0 %v429
      %455 = vmatprep.subr.bf16.mxu0 0
      %456 = vmatpush1.bf16.msra.mxu0 %v428
      %457 = vmatprep.subr.bf16.mxu0 0
      %458 = vmatpush1.bf16.msra.mxu0 %v427
      %459 = vmatprep.subr.bf16.mxu0 0
      %460 = vmatpush2.bf16.msra.mxu0 0
      %461 = vmatprep.subr.bf16.mxu0 0
      %462 = vmatpush2.bf16.msra.mxu0 0
      %463 = vmatprep.subr.bf16.mxu0 0
      %464 = vmatpush2.bf16.msra.mxu0 0
      %465 = vmatprep.subr.bf16.mxu0 0
      %466 = vmatpush2.bf16.msra.mxu0 0
      %467 = vmatprep.subr.bf16.mxu0 0
      %468 = vmatpush2.bf16.msra.mxu0 0
      %469 = vmatprep.subr.bf16.mxu0 0
      %470 = vmatpush2.bf16.msra.mxu0 0
      %471 = vmatprep.subr.bf16.mxu0 0
      %472 = vmatpush2.bf16.msra.mxu0 0
      %473 = vmatprep.subr.bf16.mxu0 0
      %474 = vmatpush2.bf16.msra.mxu0 0
      %475 = vmatprep.mubr.bf16.mxu0 0
      %476 = vmatmul.mubr.bf16.gmra.mxu0 %v393
      %v477 = vpop.f32.mrf.mxu0
      %v478 = vadd.f32 %v379, %v477
      %v479 = vpop.f32.mrf.mxu0
      %v480 = vpop.f32.mrf.mxu0
      %v481 = vpop.f32.mrf.mxu0
      %482 = vdwg.mxu0
      %v483 = vld [vmem:[%s182] sm:$0x6]
      %v484 = vld [vmem:[%s182 + $0x4] sm:$0x6]
      %v488 = vunpack.c.l.s4 1983009808
      %v489 = vunpack.c.0.s8 %v488
      %v490 = vlaneseq
      %v491 = vshrl.u32 %v490, 7
      %v492 = vsub.s32 %v489, %v491
      %v493 = vrot.slane %v483, %v492
      %v494 = vcombine.high %v493, %v493
      %v496 = vunpack.c.l.s4 1983009808
      %v497 = vunpack.c.0.s8 %v496
      %v498 = vlaneseq
      %v499 = vshrl.u32 %v498, 7
      %v500 = vsub.s32 %v497, %v499
      %v501 = vrot.slane %v484, %v500
      %v502 = vcombine.high %v501, %v501
      %vm503 = vcmask 1040384
      %vm504 = vcmask 1042434
      %vm505 = vmor %vm503, %vm504
      %vm506 = vcmask 1044484
      %vm507 = vmor %vm505, %vm506
      %vm508 = vcmask 1046534
      %vm509 = vmor %vm507, %vm508
      %v510 = vrot.slane %v493, 7
      %v511 = vrot.slane %v510, 2
      %v512 = vrot.slane %v494, 7
      %v513 = vsel %vm509, %v511, %v512
      %v514 = vrot.slane %v501, 7
      %v515 = vrot.slane %v514, 2
      %v516 = vrot.slane %v502, 7
      %v517 = vsel %vm509, %v515, %v516
      %s518 = scalar_lea.vmem %s1, 128
      %v519 = vld [vmem:[%s518] sm:$0xf]
      %v520 = vld [vmem:[%s518 + $0x4] sm:$0xf]
      %v521 = vld [vmem:[%s518 + $0x8] sm:$0xf]
      %v522 = vld [vmem:[%s518 + $0xc] sm:$0xf]
      %v523 = vld [vmem:[%s518 + $0x10] sm:$0xf]
      %v524 = vld [vmem:[%s518 + $0x14] sm:$0xf]
      %v525 = vld [vmem:[%s518 + $0x18] sm:$0xf]
      %v526 = vld [vmem:[%s518 + $0x1c] sm:$0xf]
      %v527 = vld [vmem:[%s518 + $0x20] sm:$0xf]
      %v528 = vld [vmem:[%s518 + $0x24] sm:$0xf]
      %v529 = vld [vmem:[%s518 + $0x28] sm:$0xf]
      %v530 = vld [vmem:[%s518 + $0x2c] sm:$0xf]
      %v531 = vld [vmem:[%s518 + $0x30] sm:$0xf]
      %v532 = vld [vmem:[%s518 + $0x34] sm:$0xf]
      %v533 = vld [vmem:[%s518 + $0x38] sm:$0xf]
      %v534 = vld [vmem:[%s518 + $0x3c] sm:$0xf]
      %v535 = vcombine.low %v513, %v517
      %v537 = vunpack.c.l.s4 1983009808
      %v538 = vunpack.c.0.s8 %v537
      %v539 = vlaneseq
      %v540 = vshrl.u32 %v539, 7
      %v541 = vsub.s32 %v538, %v540
      %v542 = vrot.slane %v535, %v541
      %v560 = vunpack.c.l.b16 %v519
      %v561 = vunpack.c.l.b16 %v520
      %v562 = vunpack.c.l.b16 %v521
      %v563 = vunpack.c.l.b16 %v522
      %v564 = vunpack.c.l.b16 %v523
      %v565 = vunpack.c.l.b16 %v524
      %v566 = vunpack.c.l.b16 %v525
      %v567 = vunpack.c.l.b16 %v526
      %v568 = vunpack.c.l.b16 %v527
      %v569 = vunpack.c.l.b16 %v528
      %v570 = vunpack.c.l.b16 %v529
      %v571 = vunpack.c.l.b16 %v530
      %v572 = vunpack.c.l.b16 %v531
      %v573 = vunpack.c.l.b16 %v532
      %v574 = vunpack.c.l.b16 %v533
      %v575 = vunpack.c.l.b16 %v534
      %v576 = vpack.c.b16 %v561, %v560
      %v577 = vpack.c.b16 %v563, %v562
      %v578 = vpack.c.b16 %v565, %v564
      %v579 = vpack.c.b16 %v567, %v566
      %v580 = vpack.c.b16 %v569, %v568
      %v581 = vpack.c.b16 %v571, %v570
      %v582 = vpack.c.b16 %v573, %v572
      %v583 = vpack.c.b16 %v575, %v574
      %592 = vmatprep.subr.bf16.mxu0 0
      %593 = vmatpush1.bf16.msra.mxu0 %v583
      %594 = vmatprep.subr.bf16.mxu0 0
      %595 = vmatpush1.bf16.msra.mxu0 %v582
      %596 = vmatprep.subr.bf16.mxu0 0
      %597 = vmatpush1.bf16.msra.mxu0 %v581
      %598 = vmatprep.subr.bf16.mxu0 0
      %599 = vmatpush1.bf16.msra.mxu0 %v580
      %600 = vmatprep.subr.bf16.mxu0 0
      %601 = vmatpush1.bf16.msra.mxu0 %v579
      %602 = vmatprep.subr.bf16.mxu0 0
      %603 = vmatpush1.bf16.msra.mxu0 %v578
      %604 = vmatprep.subr.bf16.mxu0 0
      %605 = vmatpush1.bf16.msra.mxu0 %v577
      %606 = vmatprep.subr.bf16.mxu0 0
      %607 = vmatpush1.bf16.msra.mxu0 %v576
      %608 = vmatprep.subr.bf16.mxu0 0
      %609 = vmatpush2.bf16.msra.mxu0 0
      %610 = vmatprep.subr.bf16.mxu0 0
      %611 = vmatpush2.bf16.msra.mxu0 0
      %612 = vmatprep.subr.bf16.mxu0 0
      %613 = vmatpush2.bf16.msra.mxu0 0
      %614 = vmatprep.subr.bf16.mxu0 0
      %615 = vmatpush2.bf16.msra.mxu0 0
      %616 = vmatprep.subr.bf16.mxu0 0
      %617 = vmatpush2.bf16.msra.mxu0 0
      %618 = vmatprep.subr.bf16.mxu0 0
      %619 = vmatpush2.bf16.msra.mxu0 0
      %620 = vmatprep.subr.bf16.mxu0 0
      %621 = vmatpush2.bf16.msra.mxu0 0
      %622 = vmatprep.subr.bf16.mxu0 0
      %623 = vmatpush2.bf16.msra.mxu0 0
      %624 = vmatprep.mubr.bf16.mxu0 0
      %625 = vmatmul.mubr.bf16.gmra.mxu0 %v542
      %v626 = vpop.f32.mrf.mxu0
      %v627 = vadd.f32 0.0, %v626
      %v628 = vpop.f32.mrf.mxu0
      %v629 = vpop.f32.mrf.mxu0
      %v630 = vpop.f32.mrf.mxu0
      %631 = vdwg.mxu0
      %v632 = vadd.f32 %v478, %v627
      %v634 = vcombine.high %v632, %v632
      %vm636 = vcmask 1043456
      %v637 = vsel %vm636, %v632, 0.0
      %638 = vadd.xlane.f32.xlu0 %v637
      %v639 = vpop.xlane.xlu0 %638
      %v640 = vsel %vm636, %v634, 0.0
      %641 = vadd.xlane.f32.xlu0 %v640
      %v642 = vpop.xlane.xlu0 %641
      %v643 = vsel %vm636, %v639, 0.0
      %v644 = vrot.slane %v643, 4
      %v645 = vadd.f32 %v643, %v644
      %v646 = vrot.slane %v645, 2
      %v647 = vadd.f32 %v645, %v646
      %v648 = vrot.slane %v647, 1
      %v649 = vadd.f32 %v647, %v648
      %v650 = vsel %vm636, %v642, 0.0
      %v651 = vrot.slane %v650, 4
      %v652 = vadd.f32 %v650, %v651
      %v653 = vrot.slane %v652, 2
      %v654 = vadd.f32 %v652, %v653
      %v655 = vrot.slane %v654, 1
      %v656 = vadd.f32 %v654, %v655
      %v657 = vmul.f32 %v632, %v632
      %v658 = vmul.f32 %v634, %v634
      %v659 = vsel %vm636, %v657, 0.0
      %660 = vadd.xlane.f32.xlu0 %v659
      %v661 = vpop.xlane.xlu0 %660
      %v662 = vsel %vm636, %v658, 0.0
      %663 = vadd.xlane.f32.xlu0 %v662
      %v664 = vpop.xlane.xlu0 %663
      %v665 = vsel %vm636, %v661, 0.0
      %v666 = vrot.slane %v665, 4
      %v667 = vadd.f32 %v665, %v666
      %v668 = vrot.slane %v667, 2
      %v669 = vadd.f32 %v667, %v668
      %v670 = vrot.slane %v669, 1
      %v671 = vadd.f32 %v669, %v670
      %v672 = vsel %vm636, %v664, 0.0
      %v673 = vrot.slane %v672, 4
      %v674 = vadd.f32 %v672, %v673
      %v675 = vrot.slane %v674, 2
      %v676 = vadd.f32 %v674, %v675
      %v677 = vrot.slane %v676, 1
      %v678 = vadd.f32 %v676, %v677
      %v679 = vmul.f32 %v649, 0.0078125
      %v680 = vmul.f32 %v656, 0.0078125
      %v681 = vmul.f32 %v671, 0.0078125
      %v682 = vmul.f32 %v678, 0.0078125
      %v683 = vmul.f32 %v679, %v679
      %v684 = vmul.f32 %v680, %v680
      %v685 = vsub.f32 %v681, %v683
      %v686 = vsub.f32 %v682, %v684
      %v687 = vsub.f32 %v632, %v679
      %v688 = vsub.f32 %v634, %v680
      %v689 = vadd.f32 %v685, 1e-05
      %v690 = vadd.f32 %v686, 1e-05
      %v691 = vrsqrt.pop %v689
      %v692 = vrsqrt.pop %v690
      %v693 = vmul.f32 %v687, %v691
      %v694 = vmul.f32 %v688, %v692
      %v695 = vlaneseq
      %v696 = vand.u32 %v695, 127
      %vm697 = vcmp.lt.s32.totalorder %v696, 32
      %v698 = vsel %vm697, %v693, 0.0
      %v699 = vsel %vm697, %v694, 0.0
      %v700 = vld [vmem:[%s188] sm:$0x3]
      %v701 = vld [vmem:[%s188 + $0x2] sm:$0x3]
      %v702 = vunpack.c.l.bf16 %v700
      %v703 = vunpack.c.l.bf16 %v701
      %v704 = vadd.f32 %v698, %v702
      %v705 = vadd.f32 %v699, %v703
      %v706 = vmax.f32 %v704, 0.0
      %v707 = vmax.f32 %v705, 0.0
      %vm708 = vsmask.f32 256
      %vm709 = vmand %vm503, %vm708
      %v710 = vld [vmem:[%s194] sm:$0x1]
      %v711 = vsel %vm709, 0, %v710
      %712 = vst [vmem:[%s194] sm:$0x1] %v711
      %v713 = vld [vmem:[%s194 + $0x4] sm:$0x1]
      %v714 = vsel %vm709, 0, %v713
      %715 = vst [vmem:[%s194 + $0x4] sm:$0x1] %v714
      %vm716 = vsmask.f32 7946
      %vm717 = vmand %vm504, %vm716
      %v718 = vld [vmem:[%s194] sm:$0x4]
      %v719 = vsel %vm717, 0, %v718
      %720 = vst [vmem:[%s194] sm:$0x4] %v719
      %v721 = vld [vmem:[%s194 + $0x4] sm:$0x4]
      %v722 = vsel %vm717, 0, %v721
      %723 = vst [vmem:[%s194 + $0x4] sm:$0x4] %v722
      %v724 = vpack.c.bf16 %v706, %v706
      %v725 = vpack.c.bf16 %v707, %v707
      %v728 = vunpack.c.l.b16 %v724
      %v729 = vunpack.c.l.b16 %v725
      %v730 = vpack.c.b16 %v728, %v728
      %v731 = vpack.c.b16 %v729, %v729
      %v733 = vshrl.u32 %v730, 16
      %v735 = vrot.slane %v733, 7
      %v736 = vshll.u32 %v730, 16
      %v738 = vor.u32 %v735, %v736
      %v740 = vshrl.u32 %v731, 16
      %v742 = vrot.slane %v740, 7
      %v743 = vshll.u32 %v731, 16
      %v745 = vor.u32 %v742, %v743
      %vm748 = vcmask 1042432
      %vm749 = vsmask.f32 2306
      %vm750 = vmand %vm748, %vm749
      %v751 = vld [vmem:[%s194] sm:$0x7]
      %v752 = vsel %vm750, %v738, %v751
      %753 = vst [vmem:[%s194] sm:$0x7] %v752
      %v754 = vld [vmem:[%s194 + $0x4] sm:$0x7]
      %v755 = vsel %vm750, %v745, %v754
      %756 = vst [vmem:[%s194 + $0x4] sm:$0x7] %v755
      %s757 = smul.u32 2, %s14
      %p758 = scmp.lt.s32.totalorder %s757, 3
      %s759 = scalar_select %p758, %s757, 3
      %s760 = smul.addr %s759, 4
      %s761 = scalar_lea.vmem %s3, %s760
      // Predicated region
      $region33: #{_lambda_.22} parent=31 // pred_check
        %p762 = pneg %p105
      $region34: #{_lambda_.22} parent=31 // pred_check_branch
        %764 = sbr.rel (%p762) target = $region36
      $region35: #{_lambda_.22} parent=31 // pred_region
        %s765 = smul.u32 2, %s14
      $region36: #{_lambda_.22} parent=31 // pred_fallthru
        _
    $region32: #{_lambda_.22} parent=5 // pred_fallthru
      _
    %p766 = scmp.le.s32.totalorder 2, %s9
    // Predicated region
    $region37: #{_lambda_.22} parent=5 // pred_check
      %p767 = pneg %p766
    $region38: #{_lambda_.22} parent=5 // pred_check_branch
      %769 = sbr.rel (%p767) target = $region40
    $region39: #{_lambda_.22} parent=5 // pred_region
      %s770 = ssub.s32 %s9, 2
      // Predicated region
      $region41: #{_lambda_.22} parent=39 // pred_check
        %p771 = pneg %p111
      $region42: #{_lambda_.22} parent=39 // pred_check_branch
        %773 = sbr.rel (%p771) target = $region44
      $region43: #{_lambda_.22} parent=39 // pred_region
        %s774 = smul.u32 2, %s15
        %p775 = scmp.lt.s32.totalorder %s774, 3
        %s776 = scalar_select %p775, %s774, 3
        %s777 = smul.addr %s776, 4
        %s778 = scalar_lea.vmem %s3, %s777
      $region44: #{_lambda_.22} parent=39 // pred_fallthru
        _
    $region40: #{_lambda_.22} parent=5 // pred_fallthru
      _
  $region6: #{_lambda_.22} parent=0 // loop_footer
    %s13 = sadd.s32 1, %s9
  $region7: #{_lambda_.22} parent=0 // loop_footer_branch
    %8 = sbr.rel target = $region3
  $region8: #{_lambda_.22} parent=0 // loop_exit
    _

// kernel: _lambda_.25
$region0: #{_lambda_.25}
  #allocation0 [shape = 'u32[]', space=smem, size = 0x4, offset = 0x4, fixed_abs, tag = 'smem constant byte address 0x4 - core index']
  #allocation1 [shape = 'u32[144,128]{1,0:T(1,128)}', space=vmem, size = 0x12000, scoped, tag = 'internal scratch']
  %s0 = inlined_call_operand.vmem [shape: bf16[4,4,128], index: 0, kind: input, shape index: {}]
  %s1 = inlined_call_operand.vmem [shape: bf16[3,128,128], index: 1, kind: input, shape index: {}]
  %s2 = inlined_call_operand.vmem [shape: bf16[4,2,128], index: 2, kind: input, shape index: {}]
  %s3 = inlined_call_operand.vmem [shape: f32[4,1,128], index: 3, kind: output, shape index: {}]
  %s4 = sld [smem:[#allocation0]]
  $region45: #{_lambda_.25} parent=0
    _
  %s6 = ssub.s32 1, %s4
  %s7 = scalar_select 0, %s6, %s4
  loop: start=0, step=1, limit=4
  $region2: #{_lambda_.25} parent=0 // loop_pre_header
    _
  $region3: #{_lambda_.25} parent=0 // loop_header
    %s9 = sphi 0, %s13
    %p10 = scmp.ge.s32.totalorder %s9, 4
    %s19 = sphi 0, %s21
    %s22 = sphi 0, %s19
    %s23 = sphi 0, %s22
    %s39 = sphi 0, %s23
    %s43 = sphi 0, %s43
    %s45 = sphi 0, %s43
    %s46 = sphi 0, %s45
    %s60 = sphi 0, %s46
    %s66 = sphi 0, %s68
    %s69 = sphi 0, %s66
    %s70 = sphi 0, %s69
    %s86 = sphi 0, %s70
    %s92 = sphi 0, %s94
    %s95 = sphi 0, %s92
    %s96 = sphi 0, %s95
    %s112 = sphi 0, %s96
  $region4: #{_lambda_.25} parent=0 // loop_header_branch
    %12 = sbr.rel (%p10) target = $region8
  $region5: #{_lambda_.25} parent=0 // loop_body
    %s14 = ssub.s32 %s9, 1
    %s15 = ssub.s32 %s9, 2
    %s16 = sadd.s32 %s9, 1
    %s17 = ssub.s32 %s9, %s16
    %p18 = scmp.eq.s32.totalorder %s17, 0
    %s20 = sadd.s32 %s19, 1
    %s21 = scalar_select %p18, %s19, %s20
    %p24 = pneg %p18
    %p25 = scmp.eq.s32.totalorder %s9, 1
    %p26 = por %p24, %p25
    %p27 = scmp.ne.s32.totalorder %s19, %s22
    %p28 = scmp.eq.s32.totalorder %s9, 0
    %p29 = por %p27, %p28
    %p30 = scmp.ne.s32.totalorder %s19, %s22
    %p31 = scmp.eq.s32.totalorder %s14, 1
    %p32 = por %p30, %p31
    %p33 = scmp.ne.s32.totalorder %s22, %s23
    %p34 = scmp.eq.s32.totalorder %s14, 0
    %p35 = por %p33, %p34
    %p36 = scmp.ne.s32.totalorder %s22, %s23
    %p37 = scmp.eq.s32.totalorder %s15, 1
    %p38 = por %p36, %p37
    %p40 = scmp.ne.s32.totalorder %s23, %s39
    %p41 = scmp.eq.s32.totalorder %s15, 0
    %p42 = por %p40, %p41
    %s44 = sadd.s32 %s43, 1
    %p47 = scmp.eq.s32.totalorder %s9, 1
    %p48 = scmp.ne.s32.totalorder %s43, %s45
    %p49 = scmp.eq.s32.totalorder %s9, 0
    %p50 = por %p48, %p49
    %p51 = scmp.ne.s32.totalorder %s43, %s45
    %p52 = scmp.eq.s32.totalorder %s14, 1
    %p53 = por %p51, %p52
    %p54 = scmp.ne.s32.totalorder %s45, %s46
    %p55 = scmp.eq.s32.totalorder %s14, 0
    %p56 = por %p54, %p55
    %p57 = scmp.ne.s32.totalorder %s45, %s46
    %p58 = scmp.eq.s32.totalorder %s15, 1
    %p59 = por %p57, %p58
    %p61 = scmp.ne.s32.totalorder %s46, %s60
    %p62 = scmp.eq.s32.totalorder %s15, 0
    %p63 = por %p61, %p62
    %s64 = ssub.s32 %s9, %s16
    %p65 = scmp.eq.s32.totalorder %s64, 0
    %s67 = sadd.s32 %s66, 1
    %s68 = scalar_select %p65, %s66, %s67
    %p71 = pneg %p65
    %p72 = scmp.eq.s32.totalorder %s9, 1
    %p73 = por %p71, %p72
    %p74 = scmp.ne.s32.totalorder %s66, %s69
    %p75 = scmp.eq.s32.totalorder %s9, 0
    %p76 = por %p74, %p75
    %p77 = scmp.ne.s32.totalorder %s66, %s69
    %p78 = scmp.eq.s32.totalorder %s14, 1
    %p79 = por %p77, %p78
    %p80 = scmp.ne.s32.totalorder %s69, %s70
    %p81 = scmp.eq.s32.totalorder %s14, 0
    %p82 = por %p80, %p81
    %p83 = scmp.ne.s32.totalorder %s69, %s70
    %p84 = scmp.eq.s32.totalorder %s15, 1
    %p85 = por %p83, %p84
    %p87 = scmp.ne.s32.totalorder %s70, %s86
    %p88 = scmp.eq.s32.totalorder %s15, 0
    %p89 = por %p87, %p88
    %s90 = ssub.s32 %s9, %s16
    %p91 = scmp.eq.s32.totalorder %s90, 0
    %s93 = sadd.s32 %s92, 1
    %s94 = scalar_select %p91, %s92, %s93
    %p97 = pneg %p91
    %p98 = scmp.eq.s32.totalorder %s9, 1
    %p99 = por %p97, %p98
    %p100 = scmp.ne.s32.totalorder %s92, %s95
    %p101 = scmp.eq.s32.totalorder %s9, 0
    %p102 = por %p100, %p101
    %p103 = scmp.ne.s32.totalorder %s92, %s95
    %p104 = scmp.eq.s32.totalorder %s14, 1
    %p105 = por %p103, %p104
    %p106 = scmp.ne.s32.totalorder %s95, %s96
    %p107 = scmp.eq.s32.totalorder %s14, 0
    %p108 = por %p106, %p107
    %p109 = scmp.ne.s32.totalorder %s95, %s96
    %p110 = scmp.eq.s32.totalorder %s15, 1
    %p111 = por %p109, %p110
    %p113 = scmp.ne.s32.totalorder %s96, %s112
    %p114 = scmp.eq.s32.totalorder %s15, 0
    %p115 = por %p113, %p114
    %p116 = scmp.le.s32.totalorder 1, %s9
    %p117 = scmp.lt.s32.totalorder %s9, 3
    %p118 = pnand %p116, %p117
    %p119 = pneg %p118
    // Predicated region
    $region9: #{_lambda_.25} parent=5 // pred_check
      _
    $region10: #{_lambda_.25} parent=5 // pred_check_branch
      %121 = sbr.rel (%p118) target = $region12
    $region11: #{_lambda_.25} parent=5 // pred_region
      %s122 = ssub.s32 %s9, 1
      // Predicated region
      $region13: #{_lambda_.25} parent=11 // pred_check
        %p123 = pneg %p56
      $region14: #{_lambda_.25} parent=11 // pred_check_branch
        %125 = sbr.rel (%p123) target = $region16
      $region15: #{_lambda_.25} parent=11 // pred_region
        _
      $region16: #{_lambda_.25} parent=11 // pred_fallthru
        _
    $region12: #{_lambda_.25} parent=5 // pred_fallthru
      _
    %p126 = scmp.lt.s32.totalorder %s9, 2
    // Predicated region
    $region17: #{_lambda_.25} parent=5 // pred_check
      %p127 = pneg %p126
    $region18: #{_lambda_.25} parent=5 // pred_check_branch
      %129 = sbr.rel (%p127) target = $region20
    $region19: #{_lambda_.25} parent=5 // pred_region
      // Predicated region
      $region21: #{_lambda_.25} parent=19 // pred_check
        %p130 = pneg %p29
      $region22: #{_lambda_.25} parent=19 // pred_check_branch
        %132 = sbr.rel (%p130) target = $region24
      $region23: #{_lambda_.25} parent=19 // pred_region
        %s133 = smul.u32 2, %s9
        %p134 = scmp.lt.s32.totalorder %s133, 3
        %s135 = scalar_select %p134, %s133, 3
        %s136 = smul.addr %s135, 2
        %s137 = scalar_lea.vmem %s0, %s136
        %s138 = smul.u32 2, %s9
      $region24: #{_lambda_.25} parent=19 // pred_fallthru
        _
      // Predicated region
      $region25: #{_lambda_.25} parent=19 // pred_check
        %p139 = pneg %p76
      $region26: #{_lambda_.25} parent=19 // pred_check_branch
        %141 = sbr.rel (%p139) target = $region28
      $region27: #{_lambda_.25} parent=19 // pred_region
        %s142 = smul.u32 2, %s9
        %p143 = scmp.lt.s32.totalorder %s142, 3
        %s144 = scalar_select %p143, %s142, 3
        %s145 = scalar_lea.vmem %s2, %s144
        %s146 = smul.u32 2, %s9
      $region28: #{_lambda_.25} parent=19 // pred_fallthru
        _
    $region20: #{_lambda_.25} parent=5 // pred_fallthru
      _
    %p147 = scmp.le.s32.totalorder 1, %s9
    %p148 = scmp.lt.s32.totalorder %s9, 3
    %p149 = pnand %p147, %p148
    %p150 = pneg %p149
    // Predicated region
    $region29: #{_lambda_.25} parent=5 // pred_check
      _
    $region30: #{_lambda_.25} parent=5 // pred_check_branch
      %152 = sbr.rel (%p149) target = $region32
    $region31: #{_lambda_.25} parent=5 // pred_region
      %s153 = ssub.s32 %s9, 1
      %s154 = smul.u32 2, %s14
      %p155 = scmp.lt.s32.totalorder %s154, 3
      %s156 = scalar_select %p155, %s154, 3
      %s157 = smul.addr %s156, 2
      %s158 = scalar_lea.vmem %s0, %s157
      %p159 = pneg %p35
      %p160 = pneg %p32
      %p161 = pneg %p56
      %p162 = pneg %p53
      %s163 = smul.u32 2, %s14
      %p164 = scmp.lt.s32.totalorder %s163, 3
      %s165 = scalar_select %p164, %s163, 3
      %s166 = scalar_lea.vmem %s2, %s165
      %p167 = pneg %p82
      %p168 = pneg %p79
      %p169 = pneg %p108
      %p170 = pneg %p105
      %s171 = smul.u32 2, %s14
      %p172 = scmp.lt.s32.totalorder %s171, 3
      %s173 = scalar_select %p172, %s171, 3
      %s174 = scalar_lea.vmem %s3, %s173
      %s175 = smul.u32 2, %s14
      %p176 = scmp.lt.s32.totalorder %s175, 3
      %s177 = scalar_select %p176, %s175, 3
      %s178 = smul.addr %s177, 2
      %s179 = scalar_lea.vmem %s0, %s178
      %s180 = smul.u32 2, %s14
      %s181 = smul.u32 2, %s14
      %p182 = scmp.lt.s32.totalorder %s181, 3
      %s183 = scalar_select %p182, %s181, 3
      %s184 = scalar_lea.vmem %s2, %s183
      %s185 = smul.u32 2, %s14
      %s186 = smul.u32 2, %s14
      %p187 = scmp.lt.s32.totalorder %s186, 3
      %s188 = scalar_select %p187, %s186, 3
      %s189 = scalar_lea.vmem %s3, %s188
      %s190 = smul.u32 2, %s14
      %v192 = vld [vmem:[%s179] sm:$0x1]
      %v193 = vld [vmem:[%s179 + $0x2] sm:$0x1]
      %v194 = vld [vmem:[%s1] sm:$0xf]
      %v195 = vld [vmem:[%s1 + $0x4] sm:$0xf]
      %v196 = vld [vmem:[%s1 + $0x8] sm:$0xf]
      %v197 = vld [vmem:[%s1 + $0xc] sm:$0xf]
      %v198 = vld [vmem:[%s1 + $0x10] sm:$0xf]
      %v199 = vld [vmem:[%s1 + $0x14] sm:$0xf]
      %v200 = vld [vmem:[%s1 + $0x18] sm:$0xf]
      %v201 = vld [vmem:[%s1 + $0x1c] sm:$0xf]
      %v202 = vld [vmem:[%s1 + $0x20] sm:$0xf]
      %v203 = vld [vmem:[%s1 + $0x24] sm:$0xf]
      %v204 = vld [vmem:[%s1 + $0x28] sm:$0xf]
      %v205 = vld [vmem:[%s1 + $0x2c] sm:$0xf]
      %v206 = vld [vmem:[%s1 + $0x30] sm:$0xf]
      %v207 = vld [vmem:[%s1 + $0x34] sm:$0xf]
      %v208 = vld [vmem:[%s1 + $0x38] sm:$0xf]
      %v209 = vld [vmem:[%s1 + $0x3c] sm:$0xf]
      %v210 = vld [vmem:[%s179] sm:$0x3]
      %v211 = vld [vmem:[%s179 + $0x2] sm:$0x3]
      %v215 = vunpack.c.l.s4 1966171168
      %v216 = vunpack.c.0.s8 %v215
      %v217 = vlaneseq
      %v218 = vshrl.u32 %v217, 7
      %v219 = vsub.s32 %v216, %v218
      %v220 = vrot.slane %v210, %v219
      %v221 = vcombine.high %v220, %v220
      %v223 = vunpack.c.l.s4 1966171168
      %v224 = vunpack.c.0.s8 %v223
      %v225 = vlaneseq
      %v226 = vshrl.u32 %v225, 7
      %v227 = vsub.s32 %v224, %v226
      %v228 = vrot.slane %v211, %v227
      %v229 = vcombine.high %v228, %v228
      %vm230 = vsmask.f32 256
      %vm231 = vsmask.f32 1284
      %vm232 = vmor %vm230, %vm231
      %vm233 = vsmask.f32 2312
      %vm234 = vmor %vm232, %vm233
      %vm235 = vsmask.f32 3340
      %vm236 = vmor %vm234, %vm235
      %vm237 = vsmask.f32 4368
      %vm238 = vmor %vm236, %vm237
      %vm239 = vsmask.f32 5396
      %vm240 = vmor %vm238, %vm239
      %vm241 = vsmask.f32 6424
      %vm242 = vmor %vm240, %vm241
      %vm243 = vsmask.f32 7452
      %vm244 = vmor %vm242, %vm243
      %v246 = vshrl.u32 %v220, 16
      %v248 = vrot.slane %v246, 7
      %v249 = vrot.slane %v248, 1
      %v251 = vshll.u32 %v221, 16
      %v253 = vsel %vm244, %v249, %v251
      %v255 = vshrl.u32 %v228, 16
      %v257 = vrot.slane %v255, 7
      %v258 = vrot.slane %v257, 1
      %v260 = vshll.u32 %v229, 16
      %v262 = vsel %vm244, %v258, %v260
      %s263 = scalar_lea.vmem %s1, 64
      %v264 = vld [vmem:[%s263] sm:$0xf]
      %v265 = vld [vmem:[%s263 + $0x4] sm:$0xf]
      %v266 = vld [vmem:[%s263 + $0x8] sm:$0xf]
      %v267 = vld [vmem:[%s263 + $0xc] sm:$0xf]
      %v268 = vld [vmem:[%s263 + $0x10] sm:$0xf]
      %v269 = vld [vmem:[%s263 + $0x14] sm:$0xf]
      %v270 = vld [vmem:[%s263 + $0x18] sm:$0xf]
      %v271 = vld [vmem:[%s263 + $0x1c] sm:$0xf]
      %v272 = vld [vmem:[%s263 + $0x20] sm:$0xf]
      %v273 = vld [vmem:[%s263 + $0x24] sm:$0xf]
      %v274 = vld [vmem:[%s263 + $0x28] sm:$0xf]
      %v275 = vld [vmem:[%s263 + $0x2c] sm:$0xf]
      %v276 = vld [vmem:[%s263 + $0x30] sm:$0xf]
      %v277 = vld [vmem:[%s263 + $0x34] sm:$0xf]
      %v278 = vld [vmem:[%s263 + $0x38] sm:$0xf]
      %v279 = vld [vmem:[%s263 + $0x3c] sm:$0xf]
      %v280 = vcombine.low %v253, %v262
      %v282 = vunpack.c.l.s4 1966171168
      %v283 = vunpack.c.0.s8 %v282
      %v284 = vlaneseq
      %v285 = vshrl.u32 %v284, 7
      %v286 = vsub.s32 %v283, %v285
      %v287 = vrot.slane %v280, %v286
      %v289 = vunpack.c.l.s4 1966171168
      %v290 = vunpack.c.0.s8 %v289
      %v291 = vlaneseq
      %v292 = vshrl.u32 %v291, 7
      %v293 = vsub.s32 %v290, %v292
      %v294 = vrot.slane %v287, %v293
      %v312 = vunpack.c.l.b16 %v264
      %v313 = vunpack.c.l.b16 %v265
      %v314 = vunpack.c.l.b16 %v266
      %v315 = vunpack.c.l.b16 %v267
      %v316 = vunpack.c.l.b16 %v268
      %v317 = vunpack.c.l.b16 %v269
      %v318 = vunpack.c.l.b16 %v270
      %v319 = vunpack.c.l.b16 %v271
      %v320 = vunpack.c.l.b16 %v272
      %v321 = vunpack.c.l.b16 %v273
      %v322 = vunpack.c.l.b16 %v274
      %v323 = vunpack.c.l.b16 %v275
      %v324 = vunpack.c.l.b16 %v276
      %v325 = vunpack.c.l.b16 %v277
      %v326 = vunpack.c.l.b16 %v278
      %v327 = vunpack.c.l.b16 %v279
      %v328 = vpack.c.b16 %v313, %v312
      %v329 = vpack.c.b16 %v315, %v314
      %v330 = vpack.c.b16 %v317, %v316
      %v331 = vpack.c.b16 %v319, %v318
      %v332 = vpack.c.b16 %v321, %v320
      %v333 = vpack.c.b16 %v323, %v322
      %v334 = vpack.c.b16 %v325, %v324
      %v335 = vpack.c.b16 %v327, %v326
      %344 = vmatprep.subr.bf16.mxu0 0
      %345 = vmatpush1.bf16.msra.mxu0 %v335
      %346 = vmatprep.subr.bf16.mxu0 0
      %347 = vmatpush1.bf16.msra.mxu0 %v334
      %348 = vmatprep.subr.bf16.mxu0 0
      %349 = vmatpush1.bf16.msra.mxu0 %v333
      %350 = vmatprep.subr.bf16.mxu0 0
      %351 = vmatpush1.bf16.msra.mxu0 %v332
      %352 = vmatprep.subr.bf16.mxu0 0
      %353 = vmatpush1.bf16.msra.mxu0 %v331
      %354 = vmatprep.subr.bf16.mxu0 0
      %355 = vmatpush1.bf16.msra.mxu0 %v330
      %356 = vmatprep.subr.bf16.mxu0 0
      %357 = vmatpush1.bf16.msra.mxu0 %v329
      %358 = vmatprep.subr.bf16.mxu0 0
      %359 = vmatpush1.bf16.msra.mxu0 %v328
      %360 = vmatprep.subr.bf16.mxu0 0
      %361 = vmatpush2.bf16.msra.mxu0 0
      %362 = vmatprep.subr.bf16.mxu0 0
      %363 = vmatpush2.bf16.msra.mxu0 0
      %364 = vmatprep.subr.bf16.mxu0 0
      %365 = vmatpush2.bf16.msra.mxu0 0
      %366 = vmatprep.subr.bf16.mxu0 0
      %367 = vmatpush2.bf16.msra.mxu0 0
      %368 = vmatprep.subr.bf16.mxu0 0
      %369 = vmatpush2.bf16.msra.mxu0 0
      %370 = vmatprep.subr.bf16.mxu0 0
      %371 = vmatpush2.bf16.msra.mxu0 0
      %372 = vmatprep.subr.bf16.mxu0 0
      %373 = vmatpush2.bf16.msra.mxu0 0
      %374 = vmatprep.subr.bf16.mxu0 0
      %375 = vmatpush2.bf16.msra.mxu0 0
      %376 = vmatprep.mubr.bf16.mxu0 0
      %377 = vmatmul.mubr.bf16.gmra.mxu0 %v294
      %v378 = vpop.f32.mrf.mxu0
      %v379 = vadd.f32 0.0, %v378
      %v380 = vpop.f32.mrf.mxu0
      %v381 = vpop.f32.mrf.mxu0
      %v382 = vpop.f32.mrf.mxu0
      %383 = vdwg.mxu0
      %v386 = vcombine.low %v192, %v193
      %v388 = vunpack.c.l.s4 1966171168
      %v389 = vunpack.c.0.s8 %v388
      %v390 = vlaneseq
      %v391 = vshrl.u32 %v390, 7
      %v392 = vsub.s32 %v389, %v391
      %v393 = vrot.slane %v386, %v392
      %v395 = vunpack.c.l.s4 1966171168
      %v396 = vunpack.c.0.s8 %v395
      %v397 = vlaneseq
      %v398 = vshrl.u32 %v397, 7
      %v399 = vsub.s32 %v396, %v398
      %v400 = vrot.slane %v393, %v399
      %v418 = vunpack.c.l.b16 %v194
      %v419 = vunpack.c.l.b16 %v195
      %v420 = vunpack.c.l.b16 %v196
      %v421 = vunpack.c.l.b16 %v197
      %v422 = vunpack.c.l.b16 %v198
      %v423 = vunpack.c.l.b16 %v199
      %v424 = vunpack.c.l.b16 %v200
      %v425 = vunpack.c.l.b16 %v201
      %v426 = vunpack.c.l.b16 %v202
      %v427 = vunpack.c.l.b16 %v203
      %v428 = vunpack.c.l.b16 %v204
      %v429 = vunpack.c.l.b16 %v205
      %v430 = vunpack.c.l.b16 %v206
      %v431 = vunpack.c.l.b16 %v207
      %v432 = vunpack.c.l.b16 %v208
      %v433 = vunpack.c.l.b16 %v209
      %v434 = vpack.c.b16 %v419, %v418
      %v435 = vpack.c.b16 %v421, %v420
      %v436 = vpack.c.b16 %v423, %v422
      %v437 = vpack.c.b16 %v425, %v424
      %v438 = vpack.c.b16 %v427, %v426
      %v439 = vpack.c.b16 %v429, %v428
      %v440 = vpack.c.b16 %v431, %v430
      %v441 = vpack.c.b16 %v433, %v432
      %450 = vmatprep.subr.bf16.mxu0 0
      %451 = vmatpush1.bf16.msra.mxu0 %v441
      %452 = vmatprep.subr.bf16.mxu0 0
      %453 = vmatpush1.bf16.msra.mxu0 %v440
      %454 = vmatprep.subr.bf16.mxu0 0
      %455 = vmatpush1.bf16.msra.mxu0 %v439
      %456 = vmatprep.subr.bf16.mxu0 0
      %457 = vmatpush1.bf16.msra.mxu0 %v438
      %458 = vmatprep.subr.bf16.mxu0 0
      %459 = vmatpush1.bf16.msra.mxu0 %v437
      %460 = vmatprep.subr.bf16.mxu0 0
      %461 = vmatpush1.bf16.msra.mxu0 %v436
      %462 = vmatprep.subr.bf16.mxu0 0
      %463 = vmatpush1.bf16.msra.mxu0 %v435
      %464 = vmatprep.subr.bf16.mxu0 0
      %465 = vmatpush1.bf16.msra.mxu0 %v434
      %466 = vmatprep.subr.bf16.mxu0 0
      %467 = vmatpush2.bf16.msra.mxu0 0
      %468 = vmatprep.subr.bf16.mxu0 0
      %469 = vmatpush2.bf16.msra.mxu0 0
      %470 = vmatprep.subr.bf16.mxu0 0
      %471 = vmatpush2.bf16.msra.mxu0 0
      %472 = vmatprep.subr.bf16.mxu0 0
      %473 = vmatpush2.bf16.msra.mxu0 0
      %474 = vmatprep.subr.bf16.mxu0 0
      %475 = vmatpush2.bf16.msra.mxu0 0
      %476 = vmatprep.subr.bf16.mxu0 0
      %477 = vmatpush2.bf16.msra.mxu0 0
      %478 = vmatprep.subr.bf16.mxu0 0
      %479 = vmatpush2.bf16.msra.mxu0 0
      %480 = vmatprep.subr.bf16.mxu0 0
      %481 = vmatpush2.bf16.msra.mxu0 0
      %482 = vmatprep.mubr.bf16.mxu0 0
      %483 = vmatmul.mubr.bf16.gmra.mxu0 %v400
      %v484 = vpop.f32.mrf.mxu0
      %v485 = vadd.f32 %v379, %v484
      %v486 = vpop.f32.mrf.mxu0
      %v487 = vpop.f32.mrf.mxu0
      %v488 = vpop.f32.mrf.mxu0
      %489 = vdwg.mxu0
      %v490 = vld [vmem:[%s179] sm:$0x2]
      %v491 = vld [vmem:[%s179 + $0x2] sm:$0x2]
      %v495 = vunpack.c.l.s4 1966171168
      %v496 = vunpack.c.0.s8 %v495
      %v497 = vlaneseq
      %v498 = vshrl.u32 %v497, 7
      %v499 = vsub.s32 %v496, %v498
      %v500 = vrot.slane %v490, %v499
      %v501 = vcombine.high %v500, %v500
      %v503 = vunpack.c.l.s4 1966171168
      %v504 = vunpack.c.0.s8 %v503
      %v505 = vlaneseq
      %v506 = vshrl.u32 %v505, 7
      %v507 = vsub.s32 %v504, %v506
      %v508 = vrot.slane %v491, %v507
      %v509 = vcombine.high %v508, %v508
      %s510 = scalar_lea.vmem %s1, 128
      %v511 = vld [vmem:[%s510] sm:$0xf]
      %v512 = vld [vmem:[%s510 + $0x4] sm:$0xf]
      %v513 = vld [vmem:[%s510 + $0x8] sm:$0xf]
      %v514 = vld [vmem:[%s510 + $0xc] sm:$0xf]
      %v515 = vld [vmem:[%s510 + $0x10] sm:$0xf]
      %v516 = vld [vmem:[%s510 + $0x14] sm:$0xf]
      %v517 = vld [vmem:[%s510 + $0x18] sm:$0xf]
      %v518 = vld [vmem:[%s510 + $0x1c] sm:$0xf]
      %v519 = vld [vmem:[%s510 + $0x20] sm:$0xf]
      %v520 = vld [vmem:[%s510 + $0x24] sm:$0xf]
      %v521 = vld [vmem:[%s510 + $0x28] sm:$0xf]
      %v522 = vld [vmem:[%s510 + $0x2c] sm:$0xf]
      %v523 = vld [vmem:[%s510 + $0x30] sm:$0xf]
      %v524 = vld [vmem:[%s510 + $0x34] sm:$0xf]
      %v525 = vld [vmem:[%s510 + $0x38] sm:$0xf]
      %v526 = vld [vmem:[%s510 + $0x3c] sm:$0xf]
      %v527 = vcombine.low %v501, %v509
      %v529 = vunpack.c.l.s4 1966171168
      %v530 = vunpack.c.0.s8 %v529
      %v531 = vlaneseq
      %v532 = vshrl.u32 %v531, 7
      %v533 = vsub.s32 %v530, %v532
      %v534 = vrot.slane %v527, %v533
      %v536 = vunpack.c.l.s4 1966171168
      %v537 = vunpack.c.0.s8 %v536
      %v538 = vlaneseq
      %v539 = vshrl.u32 %v538, 7
      %v540 = vsub.s32 %v537, %v539
      %v541 = vrot.slane %v534, %v540
      %v559 = vunpack.c.l.b16 %v511
      %v560 = vunpack.c.l.b16 %v512
      %v561 = vunpack.c.l.b16 %v513
      %v562 = vunpack.c.l.b16 %v514
      %v563 = vunpack.c.l.b16 %v515
      %v564 = vunpack.c.l.b16 %v516
      %v565 = vunpack.c.l.b16 %v517
      %v566 = vunpack.c.l.b16 %v518
      %v567 = vunpack.c.l.b16 %v519
      %v568 = vunpack.c.l.b16 %v520
      %v569 = vunpack.c.l.b16 %v521
      %v570 = vunpack.c.l.b16 %v522
      %v571 = vunpack.c.l.b16 %v523
      %v572 = vunpack.c.l.b16 %v524
      %v573 = vunpack.c.l.b16 %v525
      %v574 = vunpack.c.l.b16 %v526
      %v575 = vpack.c.b16 %v560, %v559
      %v576 = vpack.c.b16 %v562, %v561
      %v577 = vpack.c.b16 %v564, %v563
      %v578 = vpack.c.b16 %v566, %v565
      %v579 = vpack.c.b16 %v568, %v567
      %v580 = vpack.c.b16 %v570, %v569
      %v581 = vpack.c.b16 %v572, %v571
      %v582 = vpack.c.b16 %v574, %v573
      %591 = vmatprep.subr.bf16.mxu0 0
      %592 = vmatpush1.bf16.msra.mxu0 %v582
      %593 = vmatprep.subr.bf16.mxu0 0
      %594 = vmatpush1.bf16.msra.mxu0 %v581
      %595 = vmatprep.subr.bf16.mxu0 0
      %596 = vmatpush1.bf16.msra.mxu0 %v580
      %597 = vmatprep.subr.bf16.mxu0 0
      %598 = vmatpush1.bf16.msra.mxu0 %v579
      %599 = vmatprep.subr.bf16.mxu0 0
      %600 = vmatpush1.bf16.msra.mxu0 %v578
      %601 = vmatprep.subr.bf16.mxu0 0
      %602 = vmatpush1.bf16.msra.mxu0 %v577
      %603 = vmatprep.subr.bf16.mxu0 0
      %604 = vmatpush1.bf16.msra.mxu0 %v576
      %605 = vmatprep.subr.bf16.mxu0 0
      %606 = vmatpush1.bf16.msra.mxu0 %v575
      %607 = vmatprep.subr.bf16.mxu0 0
      %608 = vmatpush2.bf16.msra.mxu0 0
      %609 = vmatprep.subr.bf16.mxu0 0
      %610 = vmatpush2.bf16.msra.mxu0 0
      %611 = vmatprep.subr.bf16.mxu0 0
      %612 = vmatpush2.bf16.msra.mxu0 0
      %613 = vmatprep.subr.bf16.mxu0 0
      %614 = vmatpush2.bf16.msra.mxu0 0
      %615 = vmatprep.subr.bf16.mxu0 0
      %616 = vmatpush2.bf16.msra.mxu0 0
      %617 = vmatprep.subr.bf16.mxu0 0
      %618 = vmatpush2.bf16.msra.mxu0 0
      %619 = vmatprep.subr.bf16.mxu0 0
      %620 = vmatpush2.bf16.msra.mxu0 0
      %621 = vmatprep.subr.bf16.mxu0 0
      %622 = vmatpush2.bf16.msra.mxu0 0
      %623 = vmatprep.mubr.bf16.mxu0 0
      %624 = vmatmul.mubr.bf16.gmra.mxu0 %v541
      %v625 = vpop.f32.mrf.mxu0
      %v626 = vadd.f32 0.0, %v625
      %v627 = vpop.f32.mrf.mxu0
      %v628 = vpop.f32.mrf.mxu0
      %v629 = vpop.f32.mrf.mxu0
      %630 = vdwg.mxu0
      %v631 = vadd.f32 %v485, %v626
      %v634 = vunpack.c.l.s4 1983009808
      %v635 = vunpack.c.0.s8 %v634
      %v636 = vlaneseq
      %v637 = vshrl.u32 %v636, 7
      %v638 = vsub.s32 %v635, %v637
      %v639 = vrot.slane %v631, %v638
      %v640 = vcombine.high %v639, %v639
      %vm643 = vcmask 1041408
      %v644 = vsel %vm643, %v639, 0.0
      %645 = vadd.xlane.f32.xlu0 %v644
      %v646 = vpop.xlane.xlu0 %645
      %v647 = vsel %vm643, %v640, 0.0
      %648 = vadd.xlane.f32.xlu0 %v647
      %v649 = vpop.xlane.xlu0 %648
      %v650 = vsel %vm643, %v646, 0.0
      %v651 = vrot.slane %v650, 4
      %v652 = vadd.f32 %v650, %v651
      %v653 = vrot.slane %v652, 2
      %v654 = vadd.f32 %v652, %v653
      %v655 = vrot.slane %v654, 1
      %v656 = vadd.f32 %v654, %v655
      %v657 = vsel %vm643, %v649, 0.0
      %v658 = vrot.slane %v657, 4
      %v659 = vadd.f32 %v657, %v658
      %v660 = vrot.slane %v659, 2
      %v661 = vadd.f32 %v659, %v660
      %v662 = vrot.slane %v661, 1
      %v663 = vadd.f32 %v661, %v662
      %v664 = vmul.f32 %v639, %v639
      %v665 = vmul.f32 %v640, %v640
      %v666 = vsel %vm643, %v664, 0.0
      %667 = vadd.xlane.f32.xlu0 %v666
      %v668 = vpop.xlane.xlu0 %667
      %v669 = vsel %vm643, %v665, 0.0
      %670 = vadd.xlane.f32.xlu0 %v669
      %v671 = vpop.xlane.xlu0 %670
      %v672 = vsel %vm643, %v668, 0.0
      %v673 = vrot.slane %v672, 4
      %v674 = vadd.f32 %v672, %v673
      %v675 = vrot.slane %v674, 2
      %v676 = vadd.f32 %v674, %v675
      %v677 = vrot.slane %v676, 1
      %v678 = vadd.f32 %v676, %v677
      %v679 = vsel %vm643, %v671, 0.0
      %v680 = vrot.slane %v679, 4
      %v681 = vadd.f32 %v679, %v680
      %v682 = vrot.slane %v681, 2
      %v683 = vadd.f32 %v681, %v682
      %v684 = vrot.slane %v683, 1
      %v685 = vadd.f32 %v683, %v684
      %v686 = vmul.f32 %v656, 0.0078125
      %v687 = vmul.f32 %v663, 0.0078125
      %v688 = vmul.f32 %v678, 0.0078125
      %v689 = vmul.f32 %v685, 0.0078125
      %v690 = vmul.f32 %v686, %v686
      %v691 = vmul.f32 %v687, %v687
      %v692 = vsub.f32 %v688, %v690
      %v693 = vsub.f32 %v689, %v691
      %v694 = vsub.f32 %v639, %v686
      %v695 = vsub.f32 %v640, %v687
      %v696 = vadd.f32 %v692, 1e-05
      %v697 = vadd.f32 %v693, 1e-05
      %v698 = vrsqrt.pop %v696
      %v699 = vrsqrt.pop %v697
      %v700 = vmul.f32 %v694, %v698
      %v701 = vmul.f32 %v695, %v699
      %v702 = vlaneseq
      %v703 = vand.u32 %v702, 127
      %vm704 = vcmp.lt.s32.totalorder %v703, 64
      %v705 = vsel %vm704, %v700, 0.0
      %v706 = vsel %vm704, %v701, 0.0
      %v707 = vld [vmem:[%s184] sm:$0x1]
      %v708 = vld [vmem:[%s184 + $0x1] sm:$0x1]
      %v709 = vunpack.c.l.bf16 %v707
      %v710 = vunpack.c.l.bf16 %v708
      %v711 = vadd.f32 %v705, %v709
      %v712 = vadd.f32 %v706, %v710
      %v713 = vmax.f32 %v711, 0.0
      %v714 = vmax.f32 %v712, 0.0
      %v715 = vsel %vm643, %v713, 0.0
      %v716 = vrot.slane %v715, 4
      %v717 = vadd.f32 %v715, %v716
      %v718 = vrot.slane %v717, 2
      %v719 = vadd.f32 %v717, %v718
      %v720 = vrot.slane %v719, 1
      %v721 = vadd.f32 %v719, %v720
      %v722 = vsel %vm643, %v714, 0.0
      %v723 = vrot.slane %v722, 4
      %v724 = vadd.f32 %v722, %v723
      %v725 = vrot.slane %v724, 2
      %v726 = vadd.f32 %v724, %v725
      %v727 = vrot.slane %v726, 1
      %v728 = vadd.f32 %v726, %v727
      %v729 = vmul.f32 %v721, 0.5
      %v730 = vmul.f32 %v728, 0.5
      %731 = vst [vmem:[%s189] sm:$0x1] %v729
      %732 = vst [vmem:[%s189 + $0x1] sm:$0x1] %v730
      %s733 = smul.u32 2, %s14
      %p734 = scmp.lt.s32.totalorder %s733, 3
      %s735 = scalar_select %p734, %s733, 3
      %s736 = scalar_lea.vmem %s3, %s735
      // Predicated region
      $region33: #{_lambda_.25} parent=31 // pred_check
        %p737 = pneg %p105
      $region34: #{_lambda_.25} parent=31 // pred_check_branch
        %739 = sbr.rel (%p737) target = $region36
      $region35: #{_lambda_.25} parent=31 // pred_region
        %s740 = smul.u32 2, %s14
      $region36: #{_lambda_.25} parent=31 // pred_fallthru
        _
    $region32: #{_lambda_.25} parent=5 // pred_fallthru
      _
    %p741 = scmp.le.s32.totalorder 2, %s9
    // Predicated region
    $region37: #{_lambda_.25} parent=5 // pred_check
      %p742 = pneg %p741
    $region38: #{_lambda_.25} parent=5 // pred_check_branch
      %744 = sbr.rel (%p742) target = $region40
    $region39: #{_lambda_.25} parent=5 // pred_region
      %s745 = ssub.s32 %s9, 2
      // Predicated region
      $region41: #{_lambda_.25} parent=39 // pred_check
        %p746 = pneg %p111
      $region42: #{_lambda_.25} parent=39 // pred_check_branch
        %748 = sbr.rel (%p746) target = $region44
      $region43: #{_lambda_.25} parent=39 // pred_region
        %s749 = smul.u32 2, %s15
        %p750 = scmp.lt.s32.totalorder %s749, 3
        %s751 = scalar_select %p750, %s749, 3
        %s752 = scalar_lea.vmem %s3, %s751
      $region44: #{_lambda_.25} parent=39 // pred_fallthru
        _
    $region40: #{_lambda_.25} parent=5 // pred_fallthru
      _
  $region6: #{_lambda_.25} parent=0 // loop_footer
    %s13 = sadd.s32 1, %s9
  $region7: #{_lambda_.25} parent=0 // loop_footer_branch
    %8 = sbr.rel target = $region3
  $region8: #{_lambda_.25} parent=0 // loop_exit
    _

// kernel: _lambda_.23
$region0: #{_lambda_.23}
  #allocation0 [shape = 'u32[]', space=smem, size = 0x4, offset = 0x4, fixed_abs, tag = 'smem constant byte address 0x4 - core index']
  #allocation1 [shape = 'u32[144,128]{1,0:T(1,128)}', space=vmem, size = 0x12000, scoped, tag = 'internal scratch']
  %s0 = inlined_call_operand.vmem [shape: bf16[4,3,256], index: 0, kind: input, shape index: {}]
  %s1 = inlined_call_operand.vmem [shape: bf16[2,256,128], index: 1, kind: input, shape index: {}]
  %s2 = inlined_call_operand.vmem [shape: bf16[4,4,128], index: 2, kind: output, shape index: {}]
  %s3 = sld [smem:[#allocation0]]
  $region41: #{_lambda_.23} parent=0
    _
  %s5 = ssub.s32 1, %s3
  %s6 = scalar_select 0, %s5, %s3
  loop: start=0, step=1, limit=4
  $region2: #{_lambda_.23} parent=0 // loop_pre_header
    _
  $region3: #{_lambda_.23} parent=0 // loop_header
    %s8 = sphi 0, %s12
    %p9 = scmp.ge.s32.totalorder %s8, 4
    %s18 = sphi 0, %s20
    %s21 = sphi 0, %s18
    %s22 = sphi 0, %s21
    %s38 = sphi 0, %s22
    %s42 = sphi 0, %s42
    %s44 = sphi 0, %s42
    %s45 = sphi 0, %s44
    %s59 = sphi 0, %s45
    %s65 = sphi 0, %s67
    %s68 = sphi 0, %s65
    %s69 = sphi 0, %s68
    %s85 = sphi 0, %s69
  $region4: #{_lambda_.23} parent=0 // loop_header_branch
    %11 = sbr.rel (%p9) target = $region8
  $region5: #{_lambda_.23} parent=0 // loop_body
    %s13 = ssub.s32 %s8, 1
    %s14 = ssub.s32 %s8, 2
    %s15 = sadd.s32 %s8, 1
    %s16 = ssub.s32 %s8, %s15
    %p17 = scmp.eq.s32.totalorder %s16, 0
    %s19 = sadd.s32 %s18, 1
    %s20 = scalar_select %p17, %s18, %s19
    %p23 = pneg %p17
    %p24 = scmp.eq.s32.totalorder %s8, 1
    %p25 = por %p23, %p24
    %p26 = scmp.ne.s32.totalorder %s18, %s21
    %p27 = scmp.eq.s32.totalorder %s8, 0
    %p28 = por %p26, %p27
    %p29 = scmp.ne.s32.totalorder %s18, %s21
    %p30 = scmp.eq.s32.totalorder %s13, 1
    %p31 = por %p29, %p30
    %p32 = scmp.ne.s32.totalorder %s21, %s22
    %p33 = scmp.eq.s32.totalorder %s13, 0
    %p34 = por %p32, %p33
    %p35 = scmp.ne.s32.totalorder %s21, %s22
    %p36 = scmp.eq.s32.totalorder %s14, 1
    %p37 = por %p35, %p36
    %p39 = scmp.ne.s32.totalorder %s22, %s38
    %p40 = scmp.eq.s32.totalorder %s14, 0
    %p41 = por %p39, %p40
    %s43 = sadd.s32 %s42, 1
    %p46 = scmp.eq.s32.totalorder %s8, 1
    %p47 = scmp.ne.s32.totalorder %s42, %s44
    %p48 = scmp.eq.s32.totalorder %s8, 0
    %p49 = por %p47, %p48
    %p50 = scmp.ne.s32.totalorder %s42, %s44
    %p51 = scmp.eq.s32.totalorder %s13, 1
    %p52 = por %p50, %p51
    %p53 = scmp.ne.s32.totalorder %s44, %s45
    %p54 = scmp.eq.s32.totalorder %s13, 0
    %p55 = por %p53, %p54
    %p56 = scmp.ne.s32.totalorder %s44, %s45
    %p57 = scmp.eq.s32.totalorder %s14, 1
    %p58 = por %p56, %p57
    %p60 = scmp.ne.s32.totalorder %s45, %s59
    %p61 = scmp.eq.s32.totalorder %s14, 0
    %p62 = por %p60, %p61
    %s63 = ssub.s32 %s8, %s15
    %p64 = scmp.eq.s32.totalorder %s63, 0
    %s66 = sadd.s32 %s65, 1
    %s67 = scalar_select %p64, %s65, %s66
    %p70 = pneg %p64
    %p71 = scmp.eq.s32.totalorder %s8, 1
    %p72 = por %p70, %p71
    %p73 = scmp.ne.s32.totalorder %s65, %s68
    %p74 = scmp.eq.s32.totalorder %s8, 0
    %p75 = por %p73, %p74
    %p76 = scmp.ne.s32.totalorder %s65, %s68
    %p77 = scmp.eq.s32.totalorder %s13, 1
    %p78 = por %p76, %p77
    %p79 = scmp.ne.s32.totalorder %s68, %s69
    %p80 = scmp.eq.s32.totalorder %s13, 0
    %p81 = por %p79, %p80
    %p82 = scmp.ne.s32.totalorder %s68, %s69
    %p83 = scmp.eq.s32.totalorder %s14, 1
    %p84 = por %p82, %p83
    %p86 = scmp.ne.s32.totalorder %s69, %s85
    %p87 = scmp.eq.s32.totalorder %s14, 0
    %p88 = por %p86, %p87
    %p89 = scmp.le.s32.totalorder 1, %s8
    %p90 = scmp.lt.s32.totalorder %s8, 3
    %p91 = pnand %p89, %p90
    %p92 = pneg %p91
    // Predicated region
    $region9: #{_lambda_.23} parent=5 // pred_check
      _
    $region10: #{_lambda_.23} parent=5 // pred_check_branch
      %94 = sbr.rel (%p91) target = $region12
    $region11: #{_lambda_.23} parent=5 // pred_region
      %s95 = ssub.s32 %s8, 1
      // Predicated region
      $region13: #{_lambda_.23} parent=11 // pred_check
        %p96 = pneg %p55
      $region14: #{_lambda_.23} parent=11 // pred_check_branch
        %98 = sbr.rel (%p96) target = $region16
      $region15: #{_lambda_.23} parent=11 // pred_region
        _
      $region16: #{_lambda_.23} parent=11 // pred_fallthru
        _
    $region12: #{_lambda_.23} parent=5 // pred_fallthru
      _
    %p99 = scmp.lt.s32.totalorder %s8, 2
    // Predicated region
    $region17: #{_lambda_.23} parent=5 // pred_check
      %p100 = pneg %p99
    $region18: #{_lambda_.23} parent=5 // pred_check_branch
      %102 = sbr.rel (%p100) target = $region20
    $region19: #{_lambda_.23} parent=5 // pred_region
      // Predicated region
      $region21: #{_lambda_.23} parent=19 // pred_check
        %p103 = pneg %p28
      $region22: #{_lambda_.23} parent=19 // pred_check_branch
        %105 = sbr.rel (%p103) target = $region24
      $region23: #{_lambda_.23} parent=19 // pred_region
        %s106 = smul.u32 2, %s8
        %p107 = scmp.lt.s32.totalorder %s106, 3
        %s108 = scalar_select %p107, %s106, 3
        %s109 = smul.addr %s108, 2
        %s110 = smul.addr %s109, 2
        %s111 = scalar_lea.vmem %s0, %s110
        %s112 = smul.u32 2, %s8
      $region24: #{_lambda_.23} parent=19 // pred_fallthru
        _
    $region20: #{_lambda_.23} parent=5 // pred_fallthru
      _
    %p113 = scmp.le.s32.totalorder 1, %s8
    %p114 = scmp.lt.s32.totalorder %s8, 3
    %p115 = pnand %p113, %p114
    %p116 = pneg %p115
    // Predicated region
    $region25: #{_lambda_.23} parent=5 // pred_check
      _
    $region26: #{_lambda_.23} parent=5 // pred_check_branch
      %118 = sbr.rel (%p115) target = $region28
    $region27: #{_lambda_.23} parent=5 // pred_region
      %s119 = ssub.s32 %s8, 1
      %s120 = smul.u32 2, %s13
      %p121 = scmp.lt.s32.totalorder %s120, 3
      %s122 = scalar_select %p121, %s120, 3
      %s123 = smul.addr %s122, 2
      %s124 = smul.addr %s123, 2
      %s125 = scalar_lea.vmem %s0, %s124
      %p126 = pneg %p34
      %p127 = pneg %p31
      %p128 = pneg %p55
      %p129 = pneg %p52
      %p130 = pneg %p81
      %p131 = pneg %p78
      %s132 = smul.u32 2, %s13
      %p133 = scmp.lt.s32.totalorder %s132, 3
      %s134 = scalar_select %p133, %s132, 3
      %s135 = smul.addr %s134, 2
      %s136 = scalar_lea.vmem %s2, %s135
      %s137 = smul.u32 2, %s13
      %p138 = scmp.lt.s32.totalorder %s137, 3
      %s139 = scalar_select %p138, %s137, 3
      %s140 = smul.addr %s139, 2
      %s141 = smul.addr %s140, 2
      %s142 = scalar_lea.vmem %s0, %s141
      %s143 = smul.u32 2, %s13
      %s144 = smul.u32 2, %s13
      %p145 = scmp.lt.s32.totalorder %s144, 3
      %s146 = scalar_select %p145, %s144, 3
      %s147 = smul.addr %s146, 2
      %s148 = scalar_lea.vmem %s2, %s147
      %s149 = smul.u32 2, %s13
      %v151 = vld [vmem:[%s142] sm:$0x5]
      %v152 = vld [vmem:[%s142 + $0x4] sm:$0x5]
      %v156 = vunpack.c.l.s4 1966171168
      %v157 = vunpack.c.0.s8 %v156
      %v158 = vlaneseq
      %v159 = vshrl.u32 %v158, 7
      %v160 = vsub.s32 %v157, %v159
      %v161 = vrot.slane %v151, %v160
      %v163 = vunpack.c.l.s4 1966171168
      %v164 = vunpack.c.0.s8 %v163
      %v165 = vlaneseq
      %v166 = vshrl.u32 %v165, 7
      %v167 = vsub.s32 %v164, %v166
      %v168 = vrot.slane %v152, %v167
      %v169 = vld [vmem:[%s1] sm:$0xf]
      %v170 = vld [vmem:[%s1 + $0x4] sm:$0xf]
      %v171 = vld [vmem:[%s1 + $0x8] sm:$0xf]
      %v172 = vld [vmem:[%s1 + $0xc] sm:$0xf]
      %v173 = vld [vmem:[%s1 + $0x10] sm:$0xf]
      %v174 = vld [vmem:[%s1 + $0x14] sm:$0xf]
      %v175 = vld [vmem:[%s1 + $0x18] sm:$0xf]
      %v176 = vld [vmem:[%s1 + $0x1c] sm:$0xf]
      %v177 = vld [vmem:[%s1 + $0x20] sm:$0xf]
      %v178 = vld [vmem:[%s1 + $0x24] sm:$0xf]
      %v179 = vld [vmem:[%s1 + $0x28] sm:$0xf]
      %v180 = vld [vmem:[%s1 + $0x2c] sm:$0xf]
      %v181 = vld [vmem:[%s1 + $0x30] sm:$0xf]
      %v182 = vld [vmem:[%s1 + $0x34] sm:$0xf]
      %v183 = vld [vmem:[%s1 + $0x38] sm:$0xf]
      %v184 = vld [vmem:[%s1 + $0x3c] sm:$0xf]
      %v185 = vld [vmem:[%s1 + $0x40] sm:$0xf]
      %v186 = vld [vmem:[%s1 + $0x44] sm:$0xf]
      %v187 = vld [vmem:[%s1 + $0x48] sm:$0xf]
      %v188 = vld [vmem:[%s1 + $0x4c] sm:$0xf]
      %v189 = vld [vmem:[%s1 + $0x50] sm:$0xf]
      %v190 = vld [vmem:[%s1 + $0x54] sm:$0xf]
      %v191 = vld [vmem:[%s1 + $0x58] sm:$0xf]
      %v192 = vld [vmem:[%s1 + $0x5c] sm:$0xf]
      %v193 = vld [vmem:[%s1 + $0x60] sm:$0xf]
      %v194 = vld [vmem:[%s1 + $0x64] sm:$0xf]
      %v195 = vld [vmem:[%s1 + $0x68] sm:$0xf]
      %v196 = vld [vmem:[%s1 + $0x6c] sm:$0xf]
      %v197 = vld [vmem:[%s1 + $0x70] sm:$0xf]
      %v198 = vld [vmem:[%s1 + $0x74] sm:$0xf]
      %v199 = vld [vmem:[%s1 + $0x78] sm:$0xf]
      %v200 = vld [vmem:[%s1 + $0x7c] sm:$0xf]
      %v201 = vld [vmem:[%s142] sm:$0xf]
      %v202 = vld [vmem:[%s142 + $0x4] sm:$0xf]
      %v206 = vunpack.c.l.s4 1966171168
      %v207 = vunpack.c.0.s8 %v206
      %v208 = vlaneseq
      %v209 = vshrl.u32 %v208, 7
      %v210 = vsub.s32 %v207, %v209
      %v211 = vrot.slane %v201, %v210
      %v212 = vcombine.high %v211, %v211
      %v214 = vunpack.c.l.s4 1966171168
      %v215 = vunpack.c.0.s8 %v214
      %v216 = vlaneseq
      %v217 = vshrl.u32 %v216, 7
      %v218 = vsub.s32 %v215, %v217
      %v219 = vrot.slane %v202, %v218
      %v220 = vcombine.high %v219, %v219
      %vm221 = vsmask.f32 256
      %vm222 = vsmask.f32 1284
      %vm223 = vmor %vm221, %vm222
      %vm224 = vsmask.f32 2312
      %vm225 = vmor %vm223, %vm224
      %vm226 = vsmask.f32 3340
      %vm227 = vmor %vm225, %vm226
      %vm228 = vsmask.f32 4368
      %vm229 = vmor %vm227, %vm228
      %vm230 = vsmask.f32 5396
      %vm231 = vmor %vm229, %vm230
      %vm232 = vsmask.f32 6424
      %vm233 = vmor %vm231, %vm232
      %vm234 = vsmask.f32 7452
      %vm235 = vmor %vm233, %vm234
      %v237 = vshrl.u32 %v211, 16
      %v239 = vrot.slane %v237, 7
      %v240 = vrot.slane %v239, 1
      %v242 = vshll.u32 %v212, 16
      %v244 = vsel %vm235, %v240, %v242
      %v246 = vshrl.u32 %v219, 16
      %v248 = vrot.slane %v246, 7
      %v249 = vrot.slane %v248, 1
      %v251 = vshll.u32 %v220, 16
      %v253 = vsel %vm235, %v249, %v251
      %s254 = scalar_lea.vmem %s1, 128
      %v255 = vld [vmem:[%s254] sm:$0xf]
      %v256 = vld [vmem:[%s254 + $0x4] sm:$0xf]
      %v257 = vld [vmem:[%s254 + $0x8] sm:$0xf]
      %v258 = vld [vmem:[%s254 + $0xc] sm:$0xf]
      %v259 = vld [vmem:[%s254 + $0x10] sm:$0xf]
      %v260 = vld [vmem:[%s254 + $0x14] sm:$0xf]
      %v261 = vld [vmem:[%s254 + $0x18] sm:$0xf]
      %v262 = vld [vmem:[%s254 + $0x1c] sm:$0xf]
      %v263 = vld [vmem:[%s254 + $0x20] sm:$0xf]
      %v264 = vld [vmem:[%s254 + $0x24] sm:$0xf]
      %v265 = vld [vmem:[%s254 + $0x28] sm:$0xf]
      %v266 = vld [vmem:[%s254 + $0x2c] sm:$0xf]
      %v267 = vld [vmem:[%s254 + $0x30] sm:$0xf]
      %v268 = vld [vmem:[%s254 + $0x34] sm:$0xf]
      %v269 = vld [vmem:[%s254 + $0x38] sm:$0xf]
      %v270 = vld [vmem:[%s254 + $0x3c] sm:$0xf]
      %v271 = vld [vmem:[%s254 + $0x40] sm:$0xf]
      %v272 = vld [vmem:[%s254 + $0x44] sm:$0xf]
      %v273 = vld [vmem:[%s254 + $0x48] sm:$0xf]
      %v274 = vld [vmem:[%s254 + $0x4c] sm:$0xf]
      %v275 = vld [vmem:[%s254 + $0x50] sm:$0xf]
      %v276 = vld [vmem:[%s254 + $0x54] sm:$0xf]
      %v277 = vld [vmem:[%s254 + $0x58] sm:$0xf]
      %v278 = vld [vmem:[%s254 + $0x5c] sm:$0xf]
      %v279 = vld [vmem:[%s254 + $0x60] sm:$0xf]
      %v280 = vld [vmem:[%s254 + $0x64] sm:$0xf]
      %v281 = vld [vmem:[%s254 + $0x68] sm:$0xf]
      %v282 = vld [vmem:[%s254 + $0x6c] sm:$0xf]
      %v283 = vld [vmem:[%s254 + $0x70] sm:$0xf]
      %v284 = vld [vmem:[%s254 + $0x74] sm:$0xf]
      %v285 = vld [vmem:[%s254 + $0x78] sm:$0xf]
      %v286 = vld [vmem:[%s254 + $0x7c] sm:$0xf]
      %v287 = vcombine.low %v244, %v253
      %v289 = vunpack.c.l.s4 1966171168
      %v290 = vunpack.c.0.s8 %v289
      %v291 = vlaneseq
      %v292 = vshrl.u32 %v291, 7
      %v293 = vsub.s32 %v290, %v292
      %v294 = vrot.slane %v287, %v293
      %v295 = vcombine.high %v294, %v294
      %v297 = vunpack.c.l.s4 1966171168
      %v298 = vunpack.c.0.s8 %v297
      %v299 = vlaneseq
      %v300 = vshrl.u32 %v299, 7
      %v301 = vsub.s32 %v298, %v300
      %v302 = vrot.slane %v294, %v301
      %v304 = vunpack.c.l.s4 1966171168
      %v305 = vunpack.c.0.s8 %v304
      %v306 = vlaneseq
      %v307 = vshrl.u32 %v306, 7
      %v308 = vsub.s32 %v305, %v307
      %v309 = vrot.slane %v295, %v308
      %v344 = vunpack.c.l.b16 %v255
      %v345 = vunpack.c.l.b16 %v256
      %v346 = vunpack.c.l.b16 %v257
      %v347 = vunpack.c.l.b16 %v258
      %v348 = vunpack.c.l.b16 %v259
      %v349 = vunpack.c.l.b16 %v260
      %v350 = vunpack.c.l.b16 %v261
      %v351 = vunpack.c.l.b16 %v262
      %v352 = vunpack.c.l.b16 %v263
      %v353 = vunpack.c.l.b16 %v264
      %v354 = vunpack.c.l.b16 %v265
      %v355 = vunpack.c.l.b16 %v266
      %v356 = vunpack.c.l.b16 %v267
      %v357 = vunpack.c.l.b16 %v268
      %v358 = vunpack.c.l.b16 %v269
      %v359 = vunpack.c.l.b16 %v270
      %v360 = vunpack.c.l.b16 %v271
      %v361 = vunpack.c.l.b16 %v272
      %v362 = vunpack.c.l.b16 %v273
      %v363 = vunpack.c.l.b16 %v274
      %v364 = vunpack.c.l.b16 %v275
      %v365 = vunpack.c.l.b16 %v276
      %v366 = vunpack.c.l.b16 %v277
      %v367 = vunpack.c.l.b16 %v278
      %v368 = vunpack.c.l.b16 %v279
      %v369 = vunpack.c.l.b16 %v280
      %v370 = vunpack.c.l.b16 %v281
      %v371 = vunpack.c.l.b16 %v282
      %v372 = vunpack.c.l.b16 %v283
      %v373 = vunpack.c.l.b16 %v284
      %v374 = vunpack.c.l.b16 %v285
      %v375 = vunpack.c.l.b16 %v286
      %v376 = vpack.c.b16 %v345, %v344
      %v377 = vpack.c.b16 %v347, %v346
      %v378 = vpack.c.b16 %v349, %v348
      %v379 = vpack.c.b16 %v351, %v350
      %v380 = vpack.c.b16 %v353, %v352
      %v381 = vpack.c.b16 %v355, %v354
      %v382 = vpack.c.b16 %v357, %v356
      %v383 = vpack.c.b16 %v359, %v358
      %v384 = vpack.c.b16 %v361, %v360
      %v385 = vpack.c.b16 %v363, %v362
      %v386 = vpack.c.b16 %v365, %v364
      %v387 = vpack.c.b16 %v367, %v366
      %v388 = vpack.c.b16 %v369, %v368
      %v389 = vpack.c.b16 %v371, %v370
      %v390 = vpack.c.b16 %v373, %v372
      %v391 = vpack.c.b16 %v375, %v374
      %408 = vmatprep.subr.bf16.mxu0 0
      %409 = vmatpush1.bf16.msra.mxu0 %v383
      %410 = vmatprep.subr.bf16.mxu0 0
      %411 = vmatpush1.bf16.msra.mxu0 %v382
      %412 = vmatprep.subr.bf16.mxu0 0
      %413 = vmatpush1.bf16.msra.mxu0 %v381
      %414 = vmatprep.subr.bf16.mxu0 0
      %415 = vmatpush1.bf16.msra.mxu0 %v380
      %416 = vmatprep.subr.bf16.mxu0 0
      %417 = vmatpush1.bf16.msra.mxu0 %v379
      %418 = vmatprep.subr.bf16.mxu0 0
      %419 = vmatpush1.bf16.msra.mxu0 %v378
      %420 = vmatprep.subr.bf16.mxu0 0
      %421 = vmatpush1.bf16.msra.mxu0 %v377
      %422 = vmatprep.subr.bf16.mxu0 0
      %423 = vmatpush1.bf16.msra.mxu0 %v376
      %424 = vmatprep.subr.bf16.mxu0 0
      %425 = vmatpush2.bf16.msra.mxu0 %v391
      %426 = vmatprep.subr.bf16.mxu0 0
      %427 = vmatpush2.bf16.msra.mxu0 %v390
      %428 = vmatprep.subr.bf16.mxu0 0
      %429 = vmatpush2.bf16.msra.mxu0 %v389
      %430 = vmatprep.subr.bf16.mxu0 0
      %431 = vmatpush2.bf16.msra.mxu0 %v388
      %432 = vmatprep.subr.bf16.mxu0 0
      %433 = vmatpush2.bf16.msra.mxu0 %v387
      %434 = vmatprep.subr.bf16.mxu0 0
      %435 = vmatpush2.bf16.msra.mxu0 %v386
      %436 = vmatprep.subr.bf16.mxu0 0
      %437 = vmatpush2.bf16.msra.mxu0 %v385
      %438 = vmatprep.subr.bf16.mxu0 0
      %439 = vmatpush2.bf16.msra.mxu0 %v384
      %440 = vmatprep.mubr.bf16.mxu0 %v309
      %441 = vmatmul.mubr.bf16.gmra.mxu0 %v302
      %v442 = vpop.f32.mrf.mxu0
      %v443 = vadd.f32 0.0, %v442
      %v444 = vpop.f32.mrf.mxu0
      %v445 = vpop.f32.mrf.mxu0
      %v446 = vpop.f32.mrf.mxu0
      %447 = vdwg.mxu0
      %v448 = vcombine.low %v161, %v168
      %v450 = vunpack.c.l.s4 1966171168
      %v451 = vunpack.c.0.s8 %v450
      %v452 = vlaneseq
      %v453 = vshrl.u32 %v452, 7
      %v454 = vsub.s32 %v451, %v453
      %v455 = vrot.slane %v448, %v454
      %v456 = vcombine.high %v455, %v455
      %v458 = vunpack.c.l.s4 1966171168
      %v459 = vunpack.c.0.s8 %v458
      %v460 = vlaneseq
      %v461 = vshrl.u32 %v460, 7
      %v462 = vsub.s32 %v459, %v461
      %v463 = vrot.slane %v455, %v462
      %v465 = vunpack.c.l.s4 1966171168
      %v466 = vunpack.c.0.s8 %v465
      %v467 = vlaneseq
      %v468 = vshrl.u32 %v467, 7
      %v469 = vsub.s32 %v466, %v468
      %v470 = vrot.slane %v456, %v469
      %v505 = vunpack.c.l.b16 %v169
      %v506 = vunpack.c.l.b16 %v170
      %v507 = vunpack.c.l.b16 %v171
      %v508 = vunpack.c.l.b16 %v172
      %v509 = vunpack.c.l.b16 %v173
      %v510 = vunpack.c.l.b16 %v174
      %v511 = vunpack.c.l.b16 %v175
      %v512 = vunpack.c.l.b16 %v176
      %v513 = vunpack.c.l.b16 %v177
      %v514 = vunpack.c.l.b16 %v178
      %v515 = vunpack.c.l.b16 %v179
      %v516 = vunpack.c.l.b16 %v180
      %v517 = vunpack.c.l.b16 %v181
      %v518 = vunpack.c.l.b16 %v182
      %v519 = vunpack.c.l.b16 %v183
      %v520 = vunpack.c.l.b16 %v184
      %v521 = vunpack.c.l.b16 %v185
      %v522 = vunpack.c.l.b16 %v186
      %v523 = vunpack.c.l.b16 %v187
      %v524 = vunpack.c.l.b16 %v188
      %v525 = vunpack.c.l.b16 %v189
      %v526 = vunpack.c.l.b16 %v190
      %v527 = vunpack.c.l.b16 %v191
      %v528 = vunpack.c.l.b16 %v192
      %v529 = vunpack.c.l.b16 %v193
      %v530 = vunpack.c.l.b16 %v194
      %v531 = vunpack.c.l.b16 %v195
      %v532 = vunpack.c.l.b16 %v196
      %v533 = vunpack.c.l.b16 %v197
      %v534 = vunpack.c.l.b16 %v198
      %v535 = vunpack.c.l.b16 %v199
      %v536 = vunpack.c.l.b16 %v200
      %v537 = vpack.c.b16 %v506, %v505
      %v538 = vpack.c.b16 %v508, %v507
      %v539 = vpack.c.b16 %v510, %v509
      %v540 = vpack.c.b16 %v512, %v511
      %v541 = vpack.c.b16 %v514, %v513
      %v542 = vpack.c.b16 %v516, %v515
      %v543 = vpack.c.b16 %v518, %v517
      %v544 = vpack.c.b16 %v520, %v519
      %v545 = vpack.c.b16 %v522, %v521
      %v546 = vpack.c.b16 %v524, %v523
      %v547 = vpack.c.b16 %v526, %v525
      %v548 = vpack.c.b16 %v528, %v527
      %v549 = vpack.c.b16 %v530, %v529
      %v550 = vpack.c.b16 %v532, %v531
      %v551 = vpack.c.b16 %v534, %v533
      %v552 = vpack.c.b16 %v536, %v535
      %569 = vmatprep.subr.bf16.mxu0 0
      %570 = vmatpush1.bf16.msra.mxu0 %v544
      %571 = vmatprep.subr.bf16.mxu0 0
      %572 = vmatpush1.bf16.msra.mxu0 %v543
      %573 = vmatprep.subr.bf16.mxu0 0
      %574 = vmatpush1.bf16.msra.mxu0 %v542
      %575 = vmatprep.subr.bf16.mxu0 0
      %576 = vmatpush1.bf16.msra.mxu0 %v541
      %577 = vmatprep.subr.bf16.mxu0 0
      %578 = vmatpush1.bf16.msra.mxu0 %v540
      %579 = vmatprep.subr.bf16.mxu0 0
      %580 = vmatpush1.bf16.msra.mxu0 %v539
      %581 = vmatprep.subr.bf16.mxu0 0
      %582 = vmatpush1.bf16.msra.mxu0 %v538
      %583 = vmatprep.subr.bf16.mxu0 0
      %584 = vmatpush1.bf16.msra.mxu0 %v537
      %585 = vmatprep.subr.bf16.mxu0 0
      %586 = vmatpush2.bf16.msra.mxu0 %v552
      %587 = vmatprep.subr.bf16.mxu0 0
      %588 = vmatpush2.bf16.msra.mxu0 %v551
      %589 = vmatprep.subr.bf16.mxu0 0
      %590 = vmatpush2.bf16.msra.mxu0 %v550
      %591 = vmatprep.subr.bf16.mxu0 0
      %592 = vmatpush2.bf16.msra.mxu0 %v549
      %593 = vmatprep.subr.bf16.mxu0 0
      %594 = vmatpush2.bf16.msra.mxu0 %v548
      %595 = vmatprep.subr.bf16.mxu0 0
      %596 = vmatpush2.bf16.msra.mxu0 %v547
      %597 = vmatprep.subr.bf16.mxu0 0
      %598 = vmatpush2.bf16.msra.mxu0 %v546
      %599 = vmatprep.subr.bf16.mxu0 0
      %600 = vmatpush2.bf16.msra.mxu0 %v545
      %601 = vmatprep.mubr.bf16.mxu0 %v470
      %602 = vmatmul.mubr.bf16.gmra.mxu0 %v463
      %v603 = vpop.f32.mrf.mxu0
      %v604 = vadd.f32 %v443, %v603
      %v605 = vpop.f32.mrf.mxu0
      %v606 = vpop.f32.mrf.mxu0
      %v607 = vpop.f32.mrf.mxu0
      %608 = vdwg.mxu0
      %v611 = vunpack.c.l.s4 1983009808
      %v612 = vunpack.c.0.s8 %v611
      %v613 = vlaneseq
      %v614 = vshrl.u32 %v613, 7
      %v615 = vsub.s32 %v612, %v614
      %v616 = vrot.slane %v604, %v615
      %v617 = vcombine.high %v616, %v616
      %vm620 = vcmask 1041408
      %v621 = vsel %vm620, %v616, 0.0
      %622 = vadd.xlane.f32.xlu0 %v621
      %v623 = vpop.xlane.xlu0 %622
      %v624 = vsel %vm620, %v617, 0.0
      %625 = vadd.xlane.f32.xlu0 %v624
      %v626 = vpop.xlane.xlu0 %625
      %v627 = vsel %vm620, %v623, 0.0
      %v628 = vrot.slane %v627, 4
      %v629 = vadd.f32 %v627, %v628
      %v630 = vrot.slane %v629, 2
      %v631 = vadd.f32 %v629, %v630
      %v632 = vrot.slane %v631, 1
      %v633 = vadd.f32 %v631, %v632
      %v634 = vsel %vm620, %v626, 0.0
      %v635 = vrot.slane %v634, 4
      %v636 = vadd.f32 %v634, %v635
      %v637 = vrot.slane %v636, 2
      %v638 = vadd.f32 %v636, %v637
      %v639 = vrot.slane %v638, 1
      %v640 = vadd.f32 %v638, %v639
      %v641 = vmul.f32 %v616, %v616
      %v642 = vmul.f32 %v617, %v617
      %v643 = vsel %vm620, %v641, 0.0
      %644 = vadd.xlane.f32.xlu0 %v643
      %v645 = vpop.xlane.xlu0 %644
      %v646 = vsel %vm620, %v642, 0.0
      %647 = vadd.xlane.f32.xlu0 %v646
      %v648 = vpop.xlane.xlu0 %647
      %v649 = vsel %vm620, %v645, 0.0
      %v650 = vrot.slane %v649, 4
      %v651 = vadd.f32 %v649, %v650
      %v652 = vrot.slane %v651, 2
      %v653 = vadd.f32 %v651, %v652
      %v654 = vrot.slane %v653, 1
      %v655 = vadd.f32 %v653, %v654
      %v656 = vsel %vm620, %v648, 0.0
      %v657 = vrot.slane %v656, 4
      %v658 = vadd.f32 %v656, %v657
      %v659 = vrot.slane %v658, 2
      %v660 = vadd.f32 %v658, %v659
      %v661 = vrot.slane %v660, 1
      %v662 = vadd.f32 %v660, %v661
      %v663 = vmul.f32 %v633, 0.0078125
      %v664 = vmul.f32 %v640, 0.0078125
      %v665 = vmul.f32 %v655, 0.0078125
      %v666 = vmul.f32 %v662, 0.0078125
      %v667 = vmul.f32 %v663, %v663
      %v668 = vmul.f32 %v664, %v664
      %v669 = vsub.f32 %v665, %v667
      %v670 = vsub.f32 %v666, %v668
      %v671 = vsub.f32 %v616, %v663
      %v672 = vsub.f32 %v617, %v664
      %v673 = vadd.f32 %v669, 1e-05
      %v674 = vadd.f32 %v670, 1e-05
      %v675 = vrsqrt.pop %v673
      %v676 = vrsqrt.pop %v674
      %v677 = vmul.f32 %v671, %v675
      %v678 = vmul.f32 %v672, %v676
      %v679 = vlaneseq
      %v680 = vand.u32 %v679, 127
      %vm681 = vcmp.lt.s32.totalorder %v680, 64
      %v682 = vsel %vm681, %v677, 0.0
      %v683 = vsel %vm681, %v678, 0.0
      %v684 = vmax.f32 %v682, 0.0
      %v685 = vmax.f32 %v683, 0.0
      %vm686 = vcmask 1040384
      %vm687 = vmand %vm686, %vm221
      %v688 = vld [vmem:[%s148] sm:$0x1]
      %v689 = vsel %vm687, 0, %v688
      %690 = vst [vmem:[%s148] sm:$0x1] %v689
      %v691 = vld [vmem:[%s148 + $0x2] sm:$0x1]
      %v692 = vsel %vm687, 0, %v691
      %693 = vst [vmem:[%s148 + $0x2] sm:$0x1] %v692
      %vm694 = vcmask 1041409
      %vm695 = vsmask.f32 7942
      %vm696 = vmand %vm694, %vm695
      %v697 = vld [vmem:[%s148] sm:$0x2]
      %v698 = vsel %vm696, 0, %v697
      %699 = vst [vmem:[%s148] sm:$0x2] %v698
      %v700 = vld [vmem:[%s148 + $0x2] sm:$0x2]
      %v701 = vsel %vm696, 0, %v700
      %702 = vst [vmem:[%s148 + $0x2] sm:$0x2] %v701
      %v703 = vpack.c.bf16 %v684, %v684
      %v704 = vpack.c.bf16 %v685, %v685
      %v708 = vunpack.c.l.s4 1983009808
      %v709 = vunpack.c.0.s8 %v708
      %v710 = vlaneseq
      %v711 = vshrl.u32 %v710, 7
      %v712 = vsub.s32 %v709, %v711
      %v713 = vrot.slane %v703, %v712
      %v715 = vunpack.c.l.s4 1983009808
      %v716 = vunpack.c.0.s8 %v715
      %v717 = vlaneseq
      %v718 = vshrl.u32 %v717, 7
      %v719 = vsub.s32 %v716, %v718
      %v720 = vrot.slane %v704, %v719
      %v722 = vshrl.u32 %v713, 16
      %v724 = vrot.slane %v722, 7
      %v725 = vshll.u32 %v713, 16
      %v727 = vor.u32 %v724, %v725
      %v729 = vshrl.u32 %v720, 16
      %v731 = vrot.slane %v729, 7
      %v732 = vshll.u32 %v720, 16
      %v734 = vor.u32 %v731, %v732
      %vm737 = vcmask 1041408
      %vm738 = vsmask.f32 1282
      %vm739 = vmand %vm737, %vm738
      %v740 = vld [vmem:[%s148] sm:$0x3]
      %v741 = vsel %vm739, %v727, %v740
      %742 = vst [vmem:[%s148] sm:$0x3] %v741
      %v743 = vld [vmem:[%s148 + $0x2] sm:$0x3]
      %v744 = vsel %vm739, %v734, %v743
      %745 = vst [vmem:[%s148 + $0x2] sm:$0x3] %v744
      %s746 = smul.u32 2, %s13
      %p747 = scmp.lt.s32.totalorder %s746, 3
      %s748 = scalar_select %p747, %s746, 3
      %s749 = smul.addr %s748, 2
      %s750 = scalar_lea.vmem %s2, %s749
      // Predicated region
      $region29: #{_lambda_.23} parent=27 // pred_check
        %p751 = pneg %p78
      $region30: #{_lambda_.23} parent=27 // pred_check_branch
        %753 = sbr.rel (%p751) target = $region32
      $region31: #{_lambda_.23} parent=27 // pred_region
        %s754 = smul.u32 2, %s13
      $region32: #{_lambda_.23} parent=27 // pred_fallthru
        _
    $region28: #{_lambda_.23} parent=5 // pred_fallthru
      _
    %p755 = scmp.le.s32.totalorder 2, %s8
    // Predicated region
    $region33: #{_lambda_.23} parent=5 // pred_check
      %p756 = pneg %p755
    $region34: #{_lambda_.23} parent=5 // pred_check_branch
      %758 = sbr.rel (%p756) target = $region36
    $region35: #{_lambda_.23} parent=5 // pred_region
      %s759 = ssub.s32 %s8, 2
      // Predicated region
      $region37: #{_lambda_.23} parent=35 // pred_check
        %p760 = pneg %p84
      $region38: #{_lambda_.23} parent=35 // pred_check_branch
        %762 = sbr.rel (%p760) target = $region40
      $region39: #{_lambda_.23} parent=35 // pred_region
        %s763 = smul.u32 2, %s14
        %p764 = scmp.lt.s32.totalorder %s763, 3
        %s765 = scalar_select %p764, %s763, 3
        %s766 = smul.addr %s765, 2
        %s767 = scalar_lea.vmem %s2, %s766
      $region40: #{_lambda_.23} parent=35 // pred_fallthru
        _
    $region36: #{_lambda_.23} parent=5 // pred_fallthru
      _
  $region6: #{_lambda_.23} parent=0 // loop_footer
    %s12 = sadd.s32 1, %s8
  $region7: #{_lambda_.23} parent=0 // loop_footer_branch
    %7 = sbr.rel target = $region3
  $region8: #{_lambda_.23} parent=0 // loop_exit
    _

</llo_original>
